<compile_context>
chip_gen: v5e
topology: v5e:2x2
jax: 0.10.0
libtpu: 0.0.40
codegen_flags: <defaults>
</compile_context>

<pallas_src>
import functools

import jax
import jax.numpy as jnp
from jax.experimental import pallas as pl
from jax.experimental.pallas import tpu as pltpu


def _round_up(v, m):
    return (v + m - 1) // m * m


# ----------------------------------------------------------------------------
# Fused Pallas kernel (one batch element per grid step)
# ----------------------------------------------------------------------------
def _inception_kernel(
    x_ref, w_red_ref, b_red_ref, w3_ref, b3_ref, w5_ref, b5_ref,
    w_pool_ref, b_pool_ref,
    o_ref,
    p3_ref, p5_ref, pool_ref,
    *, H, W, C1, C1p, Cr3, Cr3p, C3, Cr5, C5, Cpool):
    """Whole Inception block for one batch element, fully fused.

    x_ref      : (H, W, Cin)                  input tile (unpadded)
    w_red_ref  : (Cin, C1p+Cr3p+Cr5p)         fused 1x1 weights, 128-aligned groups
    w3_ref     : (3, 3*Cr3, C3)               3x3 weights, per-dy row slabs
    w5_ref     : (5, 5*Cr5, C5)               5x5 weights, per-dy row slabs
    w_pool_ref : (Cin, Cpool)                 pool-projection 1x1 weights
    b*_ref     : (1, Cout_*)                  biases (b_red padded like w_red)
    o_ref      : (H, W, C1+C3+C5+Cpool)       concatenated output tile
    p3_ref     : (H+2, W+2, Cr3)   scratch    zero-padded 3x3-reduce output
    p5_ref     : (H+4, W+4, Cr5)   scratch    zero-padded 5x5-reduce output
    pool_ref   : (H+2, W+2, Cin)   scratch    -inf-padded x for the max-pool
    """
    HW = H * W
    Cin = x_ref.shape[-1]
    cdt = p3_ref.dtype  # compute dtype for MXU operands (f32 or bf16)

    x = x_ref[...]                       # (H, W, Cin)
    x_flat = x.reshape(HW, Cin)

    # ---- Stage A: branch1x1 + 3x3-reduce + 5x5-reduce as ONE shared-LHS
    #      matmul. Weight groups are padded so slices start lane-aligned. ----
    red = jnp.dot(x_flat, w_red_ref[...], preferred_element_type=jnp.float32)
    red = jnp.maximum(red + b_red_ref[0], 0.0)        # (HW, Ctot_padded), f32
    out1 = red[:, :C1]
    r3 = red[:, C1p:C1p + Cr3]
    r5 = red[:, C1p + Cr3p:C1p + Cr3p + Cr5]

    # ---- Stage B: 3x3 'same' conv on the VMEM-resident reduce output. -----
    # Interior store + 4 thin border strips (no full-tile zero fill).
    p3_ref[1:H + 1, 1:W + 1, :] = r3.reshape(H, W, Cr3).astype(cdt)
    zr3 = jnp.zeros((1, W + 2, Cr3), cdt)
    zc3 = jnp.zeros((H, 1, Cr3), cdt)
    p3_ref[0:1, :, :] = zr3
    p3_ref[H + 1:H + 2, :, :] = zr3
    p3_ref[1:H + 1, 0:1, :] = zc3
    p3_ref[1:H + 1, W + 1:W + 2, :] = zc3
    # Row-grouped im2col: concat over dx (one small lane concat), accumulate
    # over dy with 3 matmuls (f32 accumulation). No (HW, 9*Cr3) patch.
    acc3 = None
    for dy in range(3):
        row = jnp.concatenate(
            [p3_ref[dy:dy + H, dx:dx + W, :].reshape(HW, Cr3)
             for dx in range(3)], axis=-1)             # (HW, 3*Cr3)
        t = jnp.dot(row, w3_ref[dy], preferred_element_type=jnp.float32)
        acc3 = t if acc3 is None else acc3 + t
    out3 = jnp.maximum(acc3 + b3_ref[0], 0.0)

    # ---- Stage C: 5x5 'same' conv, same row-grouped accumulation (5 mm). ---
    p5_ref[2:H + 2, 2:W + 2, :] = r5.reshape(H, W, Cr5).astype(cdt)
    zr5 = jnp.zeros((2, W + 4, Cr5), cdt)
    zc5 = jnp.zeros((H, 2, Cr5), cdt)
    p5_ref[0:2, :, :] = zr5
    p5_ref[H + 2:H + 4, :, :] = zr5
    p5_ref[2:H + 2, 0:2, :] = zc5
    p5_ref[2:H + 2, W + 2:W + 4, :] = zc5
    acc5 = None
    for dy in range(5):
        row = jnp.concatenate(
            [p5_ref[dy:dy + H, dx:dx + W, :].reshape(HW, Cr5)
             for dx in range(5)], axis=-1)             # (HW, 5*Cr5)
        t = jnp.dot(row, w5_ref[dy], preferred_element_type=jnp.float32)
        acc5 = t if acc5 is None else acc5 + t
    out5 = jnp.maximum(acc5 + b5_ref[0], 0.0)

    # ---- Stage D: 3x3/s1 max-pool (-inf borders, matches F.max_pool2d),
    #      separable (dx max then dy max), fused with the 1x1 projection. ----
    pool_ref[1:H + 1, 1:W + 1, :] = x.astype(cdt)
    nr = jnp.full((1, W + 2, Cin), -jnp.inf, cdt)
    nc = jnp.full((H, 1, Cin), -jnp.inf, cdt)
    pool_ref[0:1, :, :] = nr
    pool_ref[H + 1:H + 2, :, :] = nr
    pool_ref[1:H + 1, 0:1, :] = nc
    pool_ref[1:H + 1, W + 1:W + 2, :] = nc
    hmax = jnp.maximum(
        jnp.maximum(pool_ref[:, 0:W, :], pool_ref[:, 1:W + 1, :]),
        pool_ref[:, 2:W + 2, :])                       # (H+2, W, Cin)
    pooled = jnp.maximum(jnp.maximum(hmax[0:H], hmax[1:H + 1]), hmax[2:H + 2])
    outp = jnp.dot(pooled.reshape(HW, Cin), w_pool_ref[...],
                   preferred_element_type=jnp.float32)
    outp = jnp.maximum(outp + b_pool_ref[0], 0.0)

    # ---- Single lane-dense concatenated store (== torch.cat(dim=1)). ------
    out = jnp.concatenate([out1, out3, out5, outp], axis=-1)   # (HW, Cout)
    o_ref[...] = out.reshape(H, W, C1 + C3 + C5 + Cpool).astype(o_ref.dtype)


# ----------------------------------------------------------------------------
# Parameters + forward
# ----------------------------------------------------------------------------
def init_inception_params(key, input_channel, filter_nums):
    """Deterministic parameter init (shapes match nn.Conv2d in the module)."""
    assert len(filter_nums) == 6
    f1x1, fr3, f3, fr5, f5, fpool = filter_nums

    def conv_params(key, cin, cout, k):
        kw, kb = jax.random.split(key)
        # (K, K, Cin, Cout) — NHWC/HWIO-friendly weight layout.
        w = jax.random.normal(kw, (k, k, cin, cout), jnp.float32) * 0.1
        b = jax.random.normal(kb, (cout,), jnp.float32) * 0.01
        return {"w": w, "b": b}

    keys = jax.random.split(key, 6)
    return {
        "branch1x1":   conv_params(keys[0], input_channel, f1x1, 1),
        "branch3x3a":  conv_params(keys[1], input_channel, fr3, 1),
        "branch3x3b":  conv_params(keys[2], fr3, f3, 3),
        "branch5x5a":  conv_params(keys[3], input_channel, fr5, 1),
        "branch5x5b":  conv_params(keys[4], fr5, f5, 5),
        "branch_pool": conv_params(keys[5], input_channel, fpool, 1),
    }


def inception_block_forward(params, x_nchw, *, compute_dtype=jnp.float32):
    """Mirrors InceptionBlock.forward. Input/output are NCHW float32.

    compute_dtype: jnp.float32 (exact vs f32 reference) or jnp.bfloat16
    (recommended on v6e/v7x; accumulation stays f32, tolerance loosens).
    """
    N, Cin, H, W = x_nchw.shape
    cdt = compute_dtype
    x = jnp.transpose(x_nchw, (0, 2, 3, 1)).astype(cdt)  # -> NHWC

    p = params
    w1, b1 = p["branch1x1"]["w"], p["branch1x1"]["b"]
    w3a, b3a = p["branch3x3a"]["w"], p["branch3x3a"]["b"]
    w3b, b3b = p["branch3x3b"]["w"], p["branch3x3b"]["b"]
    w5a, b5a = p["branch5x5a"]["w"], p["branch5x5a"]["b"]
    w5b, b5b = p["branch5x5b"]["w"], p["branch5x5b"]["b"]
    wp, bp = p["branch_pool"]["w"], p["branch_pool"]["b"]

    C1, Cr3, C3 = w1.shape[-1], w3a.shape[-1], w3b.shape[-1]
    Cr5, C5, Cpool = w5a.shape[-1], w5b.shape[-1], wp.shape[-1]
    Cout = C1 + C3 + C5 + Cpool

    # Fuse the three 1x1 convs that share x as LHS along Cout, padding each
    # group to a multiple of 128 so in-kernel slices are lane-aligned.
    C1p, Cr3p, Cr5p = _round_up(C1, 128), _round_up(Cr3, 128), _round_up(Cr5, 128)
    Ctotp = C1p + Cr3p + Cr5p
    w_red = jnp.zeros((Cin, Ctotp), cdt)
    w_red = w_red.at[:, :C1].set(w1[0, 0].astype(cdt))
    w_red = w_red.at[:, C1p:C1p + Cr3].set(w3a[0, 0].astype(cdt))
    w_red = w_red.at[:, C1p + Cr3p:C1p + Cr3p + Cr5].set(w5a[0, 0].astype(cdt))
    b_red = jnp.zeros((1, Ctotp), jnp.float32)
    b_red = b_red.at[0, :C1].set(b1)
    b_red = b_red.at[0, C1p:C1p + Cr3].set(b3a)
    b_red = b_red.at[0, C1p + Cr3p:C1p + Cr3p + Cr5].set(b5a)

    # Per-dy weight slabs; HWIO row-major flatten of (dx, Cin) matches the
    # in-kernel concat-over-dx tap order.
    w3_rows = w3b.reshape(3, 3 * Cr3, C3).astype(cdt)
    w5_rows = w5b.reshape(5, 5 * Cr5, C5).astype(cdt)
    w_pool = wp[0, 0].astype(cdt)
    b3_2 = b3b[None, :].astype(jnp.float32)
    b5_2 = b5b[None, :].astype(jnp.float32)
    bp_2 = bp[None, :].astype(jnp.float32)

    kernel = functools.partial(
        _inception_kernel, H=H, W=W, C1=C1, C1p=C1p, Cr3=Cr3, Cr3p=Cr3p,
        C3=C3, Cr5=Cr5, C5=C5, Cpool=Cpool)

    # Constant-resident blocks for weights/biases (same block every step).
    def const(shape):
        zeros = (0,) * len(shape)
        return pl.BlockSpec(shape, lambda n: zeros)

    HW = H * W
    flops = 2 * N * HW * (Cin * Ctotp + 9 * Cr3 * C3 + 25 * Cr5 * C5
                          + Cin * Cpool)

    def nbytes(a):
        return int(a.size) * a.dtype.itemsize

    bytes_accessed = (nbytes(x) + nbytes(w_red) + nbytes(b_red)
                      + nbytes(w3_rows) + nbytes(b3_2) + nbytes(w5_rows)
                      + nbytes(b5_2) + nbytes(w_pool) + nbytes(bp_2)
                      + N * HW * Cout * 4)
    cost = pl.CostEstimate(flops=flops, transcendentals=0,
                           bytes_accessed=bytes_accessed)

    out_nhwc = pl.pallas_call(
        kernel,
        out_shape=jax.ShapeDtypeStruct((N, H, W, Cout), jnp.float32),
        grid=(N,),
        in_specs=[
            pl.BlockSpec((None, H, W, Cin), lambda n: (n, 0, 0, 0)),
            const(w_red.shape), const(b_red.shape),
            const(w3_rows.shape), const(b3_2.shape),
            const(w5_rows.shape), const(b5_2.shape),
            const(w_pool.shape), const(bp_2.shape),
        ],
        out_specs=pl.BlockSpec((None, H, W, Cout), lambda n: (n, 0, 0, 0)),
        scratch_shapes=[
            pltpu.VMEM((H + 2, W + 2, Cr3), cdt),
            pltpu.VMEM((H + 4, W + 4, Cr5), cdt),
            pltpu.VMEM((H + 2, W + 2, Cin), cdt),
        ],
        compiler_params=pltpu.CompilerParams(
            dimension_semantics=("parallel",),
            vmem_limit_bytes=48 * 1024 * 1024),
        cost_estimate=cost,
    )(x, w_red, b_red, w3_rows, b3_2, w5_rows, b5_2, w_pool, bp_2)

    return jnp.transpose(out_nhwc, (0, 3, 1, 2))  # NHWC -> NCHW


# ----------------------------------------------------------------------------
# Pure-JAX reference (for a sanity check)
# ----------------------------------------------------------------------------
def _ref_conv_relu(x_nhwc, w, b):
    y = jax.lax.conv_general_dilated(
        x_nhwc, w, window_strides=(1, 1), padding="SAME",
        dimension_numbers=("NHWC", "HWIO", "NHWC"))
    return jnp.maximum(y + b, 0.0)


def _ref_forward(params, x_nchw):
    x = jnp.transpose(x_nchw, (0, 2, 3, 1))
    b1 = _ref_conv_relu(x, params["branch1x1"]["w"], params["branch1x1"]["b"])
    b3 = _ref_conv_relu(x, params["branch3x3a"]["w"], params["branch3x3a"]["b"])
    b3 = _ref_conv_relu(b3, params["branch3x3b"]["w"], params["branch3x3b"]["b"])
    b5 = _ref_conv_relu(x, params["branch5x5a"]["w"], params["branch5x5a"]["b"])
    b5 = _ref_conv_relu(b5, params["branch5x5b"]["w"], params["branch5x5b"]["b"])
    bp = jax.lax.reduce_window(
        x, -jnp.inf, jax.lax.max,
        window_dimensions=(1, 3, 3, 1), window_strides=(1, 1, 1, 1),
        padding=((0, 0), (1, 1), (1, 1), (0, 0)))
    bp = _ref_conv_relu(bp, params["branch_pool"]["w"], params["branch_pool"]["b"])
    out = jnp.concatenate([b1, b3, b5, bp], axis=-1)
    return jnp.transpose(out, (0, 3, 1, 2))


# ----------------------------------------------------------------------------
if __name__ == "__main__":
    key = jax.random.PRNGKey(0)
    k_x, k_p = jax.random.split(key)

    # Small shapes: batch=2, in_channels=4, spatial=16x16.
    N, C, H, W = 2, 4, 16, 16
    filter_nums = (8, 4, 8, 4, 8, 8)   # -> 8 + 8 + 8 + 8 = 32 output channels

    x = jax.random.normal(k_x, (N, C, H, W), jnp.float32)
    params = init_inception_params(k_p, C, filter_nums)

    fwd = jax.jit(inception_block_forward)
    out = jax.block_until_ready(fwd(params, x))

    expected_cout = filter_nums[0] + filter_nums[2] + filter_nums[4] + filter_nums[5]
    assert out.shape == (N, expected_cout, H, W), out.shape

    ref = jax.block_until_ready(_ref_forward(params, x))
    assert jnp.allclose(out, ref, atol=2e-4, rtol=2e-4), float(
        jnp.max(jnp.abs(out - ref)))

    print("KERNEL_OK")
</pallas_src>

<mosaic_0001>
module attributes {stable_mosaic.version = 11 : i64} {
  func.func @_inception_kernel(%arg0: i32, %arg1: memref<1x16x16x4xf32, #tpu.memory_space<vmem>>, %arg2: memref<4x384xf32, #tpu.memory_space<vmem>>, %arg3: memref<1x384xf32, #tpu.memory_space<vmem>>, %arg4: memref<3x12x8xf32, #tpu.memory_space<vmem>>, %arg5: memref<1x8xf32, #tpu.memory_space<vmem>>, %arg6: memref<5x20x8xf32, #tpu.memory_space<vmem>>, %arg7: memref<1x8xf32, #tpu.memory_space<vmem>>, %arg8: memref<4x8xf32, #tpu.memory_space<vmem>>, %arg9: memref<1x8xf32, #tpu.memory_space<vmem>>, %arg10: memref<1x16x16x32xf32, #tpu.memory_space<vmem>>, %arg11: memref<18x18x4xf32, #tpu.memory_space<vmem>>, %arg12: memref<20x20x4xf32, #tpu.memory_space<vmem>>, %arg13: memref<18x18x4xf32, #tpu.memory_space<vmem>>) attributes {dimension_semantics = [#tpu.dimension_semantics<parallel>], iteration_bounds = array<i64: 2>, scalar_prefetch = 0 : i64, scratch_operands = 3 : i64, tpu.core_type = #tpu.core_type<tc>, window_params = [{transform_indices = @transform_0, window_bounds = array<i64: 1, 16, 16, 4>}, {pipeline_mode = #tpu.pipeline_mode<synchronous>, transform_indices = @transform_1, window_bounds = array<i64: 4, 384>}, {pipeline_mode = #tpu.pipeline_mode<synchronous>, transform_indices = @transform_2, window_bounds = array<i64: 1, 384>}, {pipeline_mode = #tpu.pipeline_mode<synchronous>, transform_indices = @transform_3, window_bounds = array<i64: 3, 12, 8>}, {pipeline_mode = #tpu.pipeline_mode<synchronous>, transform_indices = @transform_4, window_bounds = array<i64: 1, 8>}, {pipeline_mode = #tpu.pipeline_mode<synchronous>, transform_indices = @transform_5, window_bounds = array<i64: 5, 20, 8>}, {pipeline_mode = #tpu.pipeline_mode<synchronous>, transform_indices = @transform_6, window_bounds = array<i64: 1, 8>}, {pipeline_mode = #tpu.pipeline_mode<synchronous>, transform_indices = @transform_7, window_bounds = array<i64: 4, 8>}, {pipeline_mode = #tpu.pipeline_mode<synchronous>, transform_indices = @transform_8, window_bounds = array<i64: 1, 8>}, {transform_indices = @transform_9, window_bounds = array<i64: 1, 16, 16, 32>}]} {
    %c0 = arith.constant 0 : index
    %c0_0 = arith.constant 0 : index
    %c0_1 = arith.constant 0 : index
    %c0_2 = arith.constant 0 : index
    %0 = vector.load %arg1[%c0, %c0_0, %c0_1, %c0_2] : memref<1x16x16x4xf32, #tpu.memory_space<vmem>>, vector<1x16x16x4xf32>
    %1 = vector.shape_cast %0 : vector<1x16x16x4xf32> to vector<16x16x4xf32>
    %2 = vector.shape_cast %1 : vector<16x16x4xf32> to vector<256x4xf32>
    %c0_3 = arith.constant 0 : index
    %c0_4 = arith.constant 0 : index
    %3 = vector.load %arg2[%c0_3, %c0_4] : memref<4x384xf32, #tpu.memory_space<vmem>>, vector<4x384xf32>
    %cst = arith.constant dense<0.000000e+00> : vector<256x384xf32>
    %4 = tpu.matmul %2, %3, %cst {dimension_numbers = #tpu.dot_dimension_numbers<[1], [0], [0], [1], [0, 0, 1, 1], [], []>} : vector<256x4xf32>, vector<4x384xf32>, vector<256x384xf32> -> vector<256x384xf32>
    %c0_5 = arith.constant 0 : index
    %c0_6 = arith.constant 0 : index
    %5 = vector.load %arg3[%c0_5, %c0_6] : memref<1x384xf32, #tpu.memory_space<vmem>>, vector<1x384xf32>
    %6 = vector.shape_cast %5 : vector<1x384xf32> to vector<384xf32>
    %7 = vector.shape_cast %6 : vector<384xf32> to vector<1x384xf32>
    %8 = vector.broadcast %7 : vector<1x384xf32> to vector<256x384xf32>
    %9 = arith.addf %4, %8 : vector<256x384xf32>
    %cst_7 = arith.constant 0.000000e+00 : f32
    %10 = vector.broadcast %cst_7 : f32 to vector<256x384xf32>
    %11 = arith.maximumf %9, %10 : vector<256x384xf32>
    %12 = vector.extract_strided_slice %11 {offsets = [0, 0], sizes = [256, 8], strides = [1, 1]} : vector<256x384xf32> to vector<256x8xf32>
    %13 = vector.extract_strided_slice %11 {offsets = [0, 128], sizes = [256, 4], strides = [1, 1]} : vector<256x384xf32> to vector<256x4xf32>
    %14 = vector.extract_strided_slice %11 {offsets = [0, 256], sizes = [256, 4], strides = [1, 1]} : vector<256x384xf32> to vector<256x4xf32>
    %15 = vector.shape_cast %13 : vector<256x4xf32> to vector<16x16x4xf32>
    %c1 = arith.constant 1 : index
    %c1_8 = arith.constant 1 : index
    %c0_9 = arith.constant 0 : index
    %16 = vector.load %arg11[%c1, %c1_8, %c0_9] : memref<18x18x4xf32, #tpu.memory_space<vmem>>, vector<16x16x4xf32>
    tpu.vector_store %arg11[%c1, %c1_8, %c0_9], %15 {strides = array<i32>} : memref<18x18x4xf32, #tpu.memory_space<vmem>>, vector<16x16x4xf32>,
    %cst_10 = arith.constant 0.000000e+00 : f32
    %17 = vector.broadcast %cst_10 : f32 to vector<1x18x4xf32>
    %cst_11 = arith.constant 0.000000e+00 : f32
    %18 = vector.broadcast %cst_11 : f32 to vector<16x1x4xf32>
    %c0_12 = arith.constant 0 : index
    %c0_13 = arith.constant 0 : index
    %c0_14 = arith.constant 0 : index
    %19 = vector.load %arg11[%c0_12, %c0_13, %c0_14] : memref<18x18x4xf32, #tpu.memory_space<vmem>>, vector<1x18x4xf32>
    tpu.vector_store %arg11[%c0_12, %c0_13, %c0_14], %17 {strides = array<i32>} : memref<18x18x4xf32, #tpu.memory_space<vmem>>, vector<1x18x4xf32>,
    %c17 = arith.constant 17 : index
    %c0_15 = arith.constant 0 : index
    %c0_16 = arith.constant 0 : index
    %20 = vector.load %arg11[%c17, %c0_15, %c0_16] : memref<18x18x4xf32, #tpu.memory_space<vmem>>, vector<1x18x4xf32>
    tpu.vector_store %arg11[%c17, %c0_15, %c0_16], %17 {strides = array<i32>} : memref<18x18x4xf32, #tpu.memory_space<vmem>>, vector<1x18x4xf32>,
    %c1_17 = arith.constant 1 : index
    %c0_18 = arith.constant 0 : index
    %c0_19 = arith.constant 0 : index
    %21 = vector.load %arg11[%c1_17, %c0_18, %c0_19] : memref<18x18x4xf32, #tpu.memory_space<vmem>>, vector<16x1x4xf32>
    tpu.vector_store %arg11[%c1_17, %c0_18, %c0_19], %18 {strides = array<i32>} : memref<18x18x4xf32, #tpu.memory_space<vmem>>, vector<16x1x4xf32>,
    %c1_20 = arith.constant 1 : index
    %c17_21 = arith.constant 17 : index
    %c0_22 = arith.constant 0 : index
    %22 = vector.load %arg11[%c1_20, %c17_21, %c0_22] : memref<18x18x4xf32, #tpu.memory_space<vmem>>, vector<16x1x4xf32>
    tpu.vector_store %arg11[%c1_20, %c17_21, %c0_22], %18 {strides = array<i32>} : memref<18x18x4xf32, #tpu.memory_space<vmem>>, vector<16x1x4xf32>,
    %c0_23 = arith.constant 0 : index
    %c0_24 = arith.constant 0 : index
    %c0_25 = arith.constant 0 : index
    %23 = vector.load %arg11[%c0_23, %c0_24, %c0_25] : memref<18x18x4xf32, #tpu.memory_space<vmem>>, vector<16x16x4xf32>
    %24 = vector.shape_cast %23 : vector<16x16x4xf32> to vector<256x4xf32>
    %c0_26 = arith.constant 0 : index
    %c1_27 = arith.constant 1 : index
    %c0_28 = arith.constant 0 : index
    %25 = vector.load %arg11[%c0_26, %c1_27, %c0_28] : memref<18x18x4xf32, #tpu.memory_space<vmem>>, vector<16x16x4xf32>
    %26 = vector.shape_cast %25 : vector<16x16x4xf32> to vector<256x4xf32>
    %c0_29 = arith.constant 0 : index
    %c2 = arith.constant 2 : index
    %c0_30 = arith.constant 0 : index
    %27 = vector.load %arg11[%c0_29, %c2, %c0_30] : memref<18x18x4xf32, #tpu.memory_space<vmem>>, vector<16x16x4xf32>
    %28 = vector.shape_cast %27 : vector<16x16x4xf32> to vector<256x4xf32>
    %29 = tpu.concatenate %24, %26, %28 in 1 : vector<256x4xf32>, vector<256x4xf32>, vector<256x4xf32> -> vector<256x12xf32>
    %c0_31 = arith.constant 0 : index
    %c0_32 = arith.constant 0 : index
    %c0_33 = arith.constant 0 : index
    %30 = vector.load %arg4[%c0_31, %c0_32, %c0_33] : memref<3x12x8xf32, #tpu.memory_space<vmem>>, vector<1x12x8xf32>
    %31 = vector.shape_cast %30 : vector<1x12x8xf32> to vector<12x8xf32>
    %cst_34 = arith.constant dense<0.000000e+00> : vector<256x8xf32>
    %32 = tpu.matmul %29, %31, %cst_34 {dimension_numbers = #tpu.dot_dimension_numbers<[1], [0], [0], [1], [0, 0, 1, 1], [], []>} : vector<256x12xf32>, vector<12x8xf32>, vector<256x8xf32> -> vector<256x8xf32>
    %c1_35 = arith.constant 1 : index
    %c0_36 = arith.constant 0 : index
    %c0_37 = arith.constant 0 : index
    %33 = vector.load %arg11[%c1_35, %c0_36, %c0_37] : memref<18x18x4xf32, #tpu.memory_space<vmem>>, vector<16x16x4xf32>
    %34 = vector.shape_cast %33 : vector<16x16x4xf32> to vector<256x4xf32>
    %c1_38 = arith.constant 1 : index
    %c1_39 = arith.constant 1 : index
    %c0_40 = arith.constant 0 : index
    %35 = vector.load %arg11[%c1_38, %c1_39, %c0_40] : memref<18x18x4xf32, #tpu.memory_space<vmem>>, vector<16x16x4xf32>
    %36 = vector.shape_cast %35 : vector<16x16x4xf32> to vector<256x4xf32>
    %c1_41 = arith.constant 1 : index
    %c2_42 = arith.constant 2 : index
    %c0_43 = arith.constant 0 : index
    %37 = vector.load %arg11[%c1_41, %c2_42, %c0_43] : memref<18x18x4xf32, #tpu.memory_space<vmem>>, vector<16x16x4xf32>
    %38 = vector.shape_cast %37 : vector<16x16x4xf32> to vector<256x4xf32>
    %39 = tpu.concatenate %34, %36, %38 in 1 : vector<256x4xf32>, vector<256x4xf32>, vector<256x4xf32> -> vector<256x12xf32>
    %c1_44 = arith.constant 1 : index
    %c0_45 = arith.constant 0 : index
    %c0_46 = arith.constant 0 : index
    %40 = vector.load %arg4[%c1_44, %c0_45, %c0_46] : memref<3x12x8xf32, #tpu.memory_space<vmem>>, vector<1x12x8xf32>
    %41 = vector.shape_cast %40 : vector<1x12x8xf32> to vector<12x8xf32>
    %cst_47 = arith.constant dense<0.000000e+00> : vector<256x8xf32>
    %42 = tpu.matmul %39, %41, %cst_47 {dimension_numbers = #tpu.dot_dimension_numbers<[1], [0], [0], [1], [0, 0, 1, 1], [], []>} : vector<256x12xf32>, vector<12x8xf32>, vector<256x8xf32> -> vector<256x8xf32>
    %43 = arith.addf %32, %42 : vector<256x8xf32>
    %c2_48 = arith.constant 2 : index
    %c0_49 = arith.constant 0 : index
    %c0_50 = arith.constant 0 : index
    %44 = vector.load %arg11[%c2_48, %c0_49, %c0_50] : memref<18x18x4xf32, #tpu.memory_space<vmem>>, vector<16x16x4xf32>
    %45 = vector.shape_cast %44 : vector<16x16x4xf32> to vector<256x4xf32>
    %c2_51 = arith.constant 2 : index
    %c1_52 = arith.constant 1 : index
    %c0_53 = arith.constant 0 : index
    %46 = vector.load %arg11[%c2_51, %c1_52, %c0_53] : memref<18x18x4xf32, #tpu.memory_space<vmem>>, vector<16x16x4xf32>
    %47 = vector.shape_cast %46 : vector<16x16x4xf32> to vector<256x4xf32>
    %c2_54 = arith.constant 2 : index
    %c2_55 = arith.constant 2 : index
    %c0_56 = arith.constant 0 : index
    %48 = vector.load %arg11[%c2_54, %c2_55, %c0_56] : memref<18x18x4xf32, #tpu.memory_space<vmem>>, vector<16x16x4xf32>
    %49 = vector.shape_cast %48 : vector<16x16x4xf32> to vector<256x4xf32>
    %50 = tpu.concatenate %45, %47, %49 in 1 : vector<256x4xf32>, vector<256x4xf32>, vector<256x4xf32> -> vector<256x12xf32>
    %c2_57 = arith.constant 2 : index
    %c0_58 = arith.constant 0 : index
    %c0_59 = arith.constant 0 : index
    %51 = vector.load %arg4[%c2_57, %c0_58, %c0_59] : memref<3x12x8xf32, #tpu.memory_space<vmem>>, vector<1x12x8xf32>
    %52 = vector.shape_cast %51 : vector<1x12x8xf32> to vector<12x8xf32>
    %cst_60 = arith.constant dense<0.000000e+00> : vector<256x8xf32>
    %53 = tpu.matmul %50, %52, %cst_60 {dimension_numbers = #tpu.dot_dimension_numbers<[1], [0], [0], [1], [0, 0, 1, 1], [], []>} : vector<256x12xf32>, vector<12x8xf32>, vector<256x8xf32> -> vector<256x8xf32>
    %54 = arith.addf %43, %53 : vector<256x8xf32>
    %c0_61 = arith.constant 0 : index
    %c0_62 = arith.constant 0 : index
    %55 = vector.load %arg5[%c0_61, %c0_62] : memref<1x8xf32, #tpu.memory_space<vmem>>, vector<1x8xf32>
    %56 = vector.shape_cast %55 : vector<1x8xf32> to vector<8xf32>
    %57 = vector.shape_cast %56 : vector<8xf32> to vector<1x8xf32>
    %58 = vector.broadcast %57 : vector<1x8xf32> to vector<256x8xf32>
    %59 = arith.addf %54, %58 : vector<256x8xf32>
    %cst_63 = arith.constant 0.000000e+00 : f32
    %60 = vector.broadcast %cst_63 : f32 to vector<256x8xf32>
    %61 = arith.maximumf %59, %60 : vector<256x8xf32>
    %62 = vector.shape_cast %14 : vector<256x4xf32> to vector<16x16x4xf32>
    %c2_64 = arith.constant 2 : index
    %c2_65 = arith.constant 2 : index
    %c0_66 = arith.constant 0 : index
    %63 = vector.load %arg12[%c2_64, %c2_65, %c0_66] : memref<20x20x4xf32, #tpu.memory_space<vmem>>, vector<16x16x4xf32>
    tpu.vector_store %arg12[%c2_64, %c2_65, %c0_66], %62 {strides = array<i32>} : memref<20x20x4xf32, #tpu.memory_space<vmem>>, vector<16x16x4xf32>,
    %cst_67 = arith.constant 0.000000e+00 : f32
    %64 = vector.broadcast %cst_67 : f32 to vector<2x20x4xf32>
    %cst_68 = arith.constant 0.000000e+00 : f32
    %65 = vector.broadcast %cst_68 : f32 to vector<16x2x4xf32>
    %c0_69 = arith.constant 0 : index
    %c0_70 = arith.constant 0 : index
    %c0_71 = arith.constant 0 : index
    %66 = vector.load %arg12[%c0_69, %c0_70, %c0_71] : memref<20x20x4xf32, #tpu.memory_space<vmem>>, vector<2x20x4xf32>
    tpu.vector_store %arg12[%c0_69, %c0_70, %c0_71], %64 {strides = array<i32>} : memref<20x20x4xf32, #tpu.memory_space<vmem>>, vector<2x20x4xf32>,
    %c18 = arith.constant 18 : index
    %c0_72 = arith.constant 0 : index
    %c0_73 = arith.constant 0 : index
    %67 = vector.load %arg12[%c18, %c0_72, %c0_73] : memref<20x20x4xf32, #tpu.memory_space<vmem>>, vector<2x20x4xf32>
    tpu.vector_store %arg12[%c18, %c0_72, %c0_73], %64 {strides = array<i32>} : memref<20x20x4xf32, #tpu.memory_space<vmem>>, vector<2x20x4xf32>,
    %c2_74 = arith.constant 2 : index
    %c0_75 = arith.constant 0 : index
    %c0_76 = arith.constant 0 : index
    %68 = vector.load %arg12[%c2_74, %c0_75, %c0_76] : memref<20x20x4xf32, #tpu.memory_space<vmem>>, vector<16x2x4xf32>
    tpu.vector_store %arg12[%c2_74, %c0_75, %c0_76], %65 {strides = array<i32>} : memref<20x20x4xf32, #tpu.memory_space<vmem>>, vector<16x2x4xf32>,
    %c2_77 = arith.constant 2 : index
    %c18_78 = arith.constant 18 : index
    %c0_79 = arith.constant 0 : index
    %69 = vector.load %arg12[%c2_77, %c18_78, %c0_79] : memref<20x20x4xf32, #tpu.memory_space<vmem>>, vector<16x2x4xf32>
    tpu.vector_store %arg12[%c2_77, %c18_78, %c0_79], %65 {strides = array<i32>} : memref<20x20x4xf32, #tpu.memory_space<vmem>>, vector<16x2x4xf32>,
    %c0_80 = arith.constant 0 : index
    %c0_81 = arith.constant 0 : index
    %c0_82 = arith.constant 0 : index
    %70 = vector.load %arg12[%c0_80, %c0_81, %c0_82] : memref<20x20x4xf32, #tpu.memory_space<vmem>>, vector<16x16x4xf32>
    %71 = vector.shape_cast %70 : vector<16x16x4xf32> to vector<256x4xf32>
    %c0_83 = arith.constant 0 : index
    %c1_84 = arith.constant 1 : index
    %c0_85 = arith.constant 0 : index
    %72 = vector.load %arg12[%c0_83, %c1_84, %c0_85] : memref<20x20x4xf32, #tpu.memory_space<vmem>>, vector<16x16x4xf32>
    %73 = vector.shape_cast %72 : vector<16x16x4xf32> to vector<256x4xf32>
    %c0_86 = arith.constant 0 : index
    %c2_87 = arith.constant 2 : index
    %c0_88 = arith.constant 0 : index
    %74 = vector.load %arg12[%c0_86, %c2_87, %c0_88] : memref<20x20x4xf32, #tpu.memory_space<vmem>>, vector<16x16x4xf32>
    %75 = vector.shape_cast %74 : vector<16x16x4xf32> to vector<256x4xf32>
    %c0_89 = arith.constant 0 : index
    %c3 = arith.constant 3 : index
    %c0_90 = arith.constant 0 : index
    %76 = vector.load %arg12[%c0_89, %c3, %c0_90] : memref<20x20x4xf32, #tpu.memory_space<vmem>>, vector<16x16x4xf32>
    %77 = vector.shape_cast %76 : vector<16x16x4xf32> to vector<256x4xf32>
    %c0_91 = arith.constant 0 : index
    %c4 = arith.constant 4 : index
    %c0_92 = arith.constant 0 : index
    %78 = vector.load %arg12[%c0_91, %c4, %c0_92] : memref<20x20x4xf32, #tpu.memory_space<vmem>>, vector<16x16x4xf32>
    %79 = vector.shape_cast %78 : vector<16x16x4xf32> to vector<256x4xf32>
    %80 = tpu.concatenate %71, %73, %75, %77, %79 in 1 : vector<256x4xf32>, vector<256x4xf32>, vector<256x4xf32>, vector<256x4xf32>, vector<256x4xf32> -> vector<256x20xf32>
    %c0_93 = arith.constant 0 : index
    %c0_94 = arith.constant 0 : index
    %c0_95 = arith.constant 0 : index
    %81 = vector.load %arg6[%c0_93, %c0_94, %c0_95] : memref<5x20x8xf32, #tpu.memory_space<vmem>>, vector<1x20x8xf32>
    %82 = vector.shape_cast %81 : vector<1x20x8xf32> to vector<20x8xf32>
    %cst_96 = arith.constant dense<0.000000e+00> : vector<256x8xf32>
    %83 = tpu.matmul %80, %82, %cst_96 {dimension_numbers = #tpu.dot_dimension_numbers<[1], [0], [0], [1], [0, 0, 1, 1], [], []>} : vector<256x20xf32>, vector<20x8xf32>, vector<256x8xf32> -> vector<256x8xf32>
    %c1_97 = arith.constant 1 : index
    %c0_98 = arith.constant 0 : index
    %c0_99 = arith.constant 0 : index
    %84 = vector.load %arg12[%c1_97, %c0_98, %c0_99] : memref<20x20x4xf32, #tpu.memory_space<vmem>>, vector<16x16x4xf32>
    %85 = vector.shape_cast %84 : vector<16x16x4xf32> to vector<256x4xf32>
    %c1_100 = arith.constant 1 : index
    %c1_101 = arith.constant 1 : index
    %c0_102 = arith.constant 0 : index
    %86 = vector.load %arg12[%c1_100, %c1_101, %c0_102] : memref<20x20x4xf32, #tpu.memory_space<vmem>>, vector<16x16x4xf32>
    %87 = vector.shape_cast %86 : vector<16x16x4xf32> to vector<256x4xf32>
    %c1_103 = arith.constant 1 : index
    %c2_104 = arith.constant 2 : index
    %c0_105 = arith.constant 0 : index
    %88 = vector.load %arg12[%c1_103, %c2_104, %c0_105] : memref<20x20x4xf32, #tpu.memory_space<vmem>>, vector<16x16x4xf32>
    %89 = vector.shape_cast %88 : vector<16x16x4xf32> to vector<256x4xf32>
    %c1_106 = arith.constant 1 : index
    %c3_107 = arith.constant 3 : index
    %c0_108 = arith.constant 0 : index
    %90 = vector.load %arg12[%c1_106, %c3_107, %c0_108] : memref<20x20x4xf32, #tpu.memory_space<vmem>>, vector<16x16x4xf32>
    %91 = vector.shape_cast %90 : vector<16x16x4xf32> to vector<256x4xf32>
    %c1_109 = arith.constant 1 : index
    %c4_110 = arith.constant 4 : index
    %c0_111 = arith.constant 0 : index
    %92 = vector.load %arg12[%c1_109, %c4_110, %c0_111] : memref<20x20x4xf32, #tpu.memory_space<vmem>>, vector<16x16x4xf32>
    %93 = vector.shape_cast %92 : vector<16x16x4xf32> to vector<256x4xf32>
    %94 = tpu.concatenate %85, %87, %89, %91, %93 in 1 : vector<256x4xf32>, vector<256x4xf32>, vector<256x4xf32>, vector<256x4xf32>, vector<256x4xf32> -> vector<256x20xf32>
    %c1_112 = arith.constant 1 : index
    %c0_113 = arith.constant 0 : index
    %c0_114 = arith.constant 0 : index
    %95 = vector.load %arg6[%c1_112, %c0_113, %c0_114] : memref<5x20x8xf32, #tpu.memory_space<vmem>>, vector<1x20x8xf32>
    %96 = vector.shape_cast %95 : vector<1x20x8xf32> to vector<20x8xf32>
    %cst_115 = arith.constant dense<0.000000e+00> : vector<256x8xf32>
    %97 = tpu.matmul %94, %96, %cst_115 {dimension_numbers = #tpu.dot_dimension_numbers<[1], [0], [0], [1], [0, 0, 1, 1], [], []>} : vector<256x20xf32>, vector<20x8xf32>, vector<256x8xf32> -> vector<256x8xf32>
    %98 = arith.addf %83, %97 : vector<256x8xf32>
    %c2_116 = arith.constant 2 : index
    %c0_117 = arith.constant 0 : index
    %c0_118 = arith.constant 0 : index
    %99 = vector.load %arg12[%c2_116, %c0_117, %c0_118] : memref<20x20x4xf32, #tpu.memory_space<vmem>>, vector<16x16x4xf32>
    %100 = vector.shape_cast %99 : vector<16x16x4xf32> to vector<256x4xf32>
    %c2_119 = arith.constant 2 : index
    %c1_120 = arith.constant 1 : index
    %c0_121 = arith.constant 0 : index
    %101 = vector.load %arg12[%c2_119, %c1_120, %c0_121] : memref<20x20x4xf32, #tpu.memory_space<vmem>>, vector<16x16x4xf32>
    %102 = vector.shape_cast %101 : vector<16x16x4xf32> to vector<256x4xf32>
    %c2_122 = arith.constant 2 : index
    %c2_123 = arith.constant 2 : index
    %c0_124 = arith.constant 0 : index
    %103 = vector.load %arg12[%c2_122, %c2_123, %c0_124] : memref<20x20x4xf32, #tpu.memory_space<vmem>>, vector<16x16x4xf32>
    %104 = vector.shape_cast %103 : vector<16x16x4xf32> to vector<256x4xf32>
    %c2_125 = arith.constant 2 : index
    %c3_126 = arith.constant 3 : index
    %c0_127 = arith.constant 0 : index
    %105 = vector.load %arg12[%c2_125, %c3_126, %c0_127] : memref<20x20x4xf32, #tpu.memory_space<vmem>>, vector<16x16x4xf32>
    %106 = vector.shape_cast %105 : vector<16x16x4xf32> to vector<256x4xf32>
    %c2_128 = arith.constant 2 : index
    %c4_129 = arith.constant 4 : index
    %c0_130 = arith.constant 0 : index
    %107 = vector.load %arg12[%c2_128, %c4_129, %c0_130] : memref<20x20x4xf32, #tpu.memory_space<vmem>>, vector<16x16x4xf32>
    %108 = vector.shape_cast %107 : vector<16x16x4xf32> to vector<256x4xf32>
    %109 = tpu.concatenate %100, %102, %104, %106, %108 in 1 : vector<256x4xf32>, vector<256x4xf32>, vector<256x4xf32>, vector<256x4xf32>, vector<256x4xf32> -> vector<256x20xf32>
    %c2_131 = arith.constant 2 : index
    %c0_132 = arith.constant 0 : index
    %c0_133 = arith.constant 0 : index
    %110 = vector.load %arg6[%c2_131, %c0_132, %c0_133] : memref<5x20x8xf32, #tpu.memory_space<vmem>>, vector<1x20x8xf32>
    %111 = vector.shape_cast %110 : vector<1x20x8xf32> to vector<20x8xf32>
    %cst_134 = arith.constant dense<0.000000e+00> : vector<256x8xf32>
    %112 = tpu.matmul %109, %111, %cst_134 {dimension_numbers = #tpu.dot_dimension_numbers<[1], [0], [0], [1], [0, 0, 1, 1], [], []>} : vector<256x20xf32>, vector<20x8xf32>, vector<256x8xf32> -> vector<256x8xf32>
    %113 = arith.addf %98, %112 : vector<256x8xf32>
    %c3_135 = arith.constant 3 : index
    %c0_136 = arith.constant 0 : index
    %c0_137 = arith.constant 0 : index
    %114 = vector.load %arg12[%c3_135, %c0_136, %c0_137] : memref<20x20x4xf32, #tpu.memory_space<vmem>>, vector<16x16x4xf32>
    %115 = vector.shape_cast %114 : vector<16x16x4xf32> to vector<256x4xf32>
    %c3_138 = arith.constant 3 : index
    %c1_139 = arith.constant 1 : index
    %c0_140 = arith.constant 0 : index
    %116 = vector.load %arg12[%c3_138, %c1_139, %c0_140] : memref<20x20x4xf32, #tpu.memory_space<vmem>>, vector<16x16x4xf32>
    %117 = vector.shape_cast %116 : vector<16x16x4xf32> to vector<256x4xf32>
    %c3_141 = arith.constant 3 : index
    %c2_142 = arith.constant 2 : index
    %c0_143 = arith.constant 0 : index
    %118 = vector.load %arg12[%c3_141, %c2_142, %c0_143] : memref<20x20x4xf32, #tpu.memory_space<vmem>>, vector<16x16x4xf32>
    %119 = vector.shape_cast %118 : vector<16x16x4xf32> to vector<256x4xf32>
    %c3_144 = arith.constant 3 : index
    %c3_145 = arith.constant 3 : index
    %c0_146 = arith.constant 0 : index
    %120 = vector.load %arg12[%c3_144, %c3_145, %c0_146] : memref<20x20x4xf32, #tpu.memory_space<vmem>>, vector<16x16x4xf32>
    %121 = vector.shape_cast %120 : vector<16x16x4xf32> to vector<256x4xf32>
    %c3_147 = arith.constant 3 : index
    %c4_148 = arith.constant 4 : index
    %c0_149 = arith.constant 0 : index
    %122 = vector.load %arg12[%c3_147, %c4_148, %c0_149] : memref<20x20x4xf32, #tpu.memory_space<vmem>>, vector<16x16x4xf32>
    %123 = vector.shape_cast %122 : vector<16x16x4xf32> to vector<256x4xf32>
    %124 = tpu.concatenate %115, %117, %119, %121, %123 in 1 : vector<256x4xf32>, vector<256x4xf32>, vector<256x4xf32>, vector<256x4xf32>, vector<256x4xf32> -> vector<256x20xf32>
    %c3_150 = arith.constant 3 : index
    %c0_151 = arith.constant 0 : index
    %c0_152 = arith.constant 0 : index
    %125 = vector.load %arg6[%c3_150, %c0_151, %c0_152] : memref<5x20x8xf32, #tpu.memory_space<vmem>>, vector<1x20x8xf32>
    %126 = vector.shape_cast %125 : vector<1x20x8xf32> to vector<20x8xf32>
    %cst_153 = arith.constant dense<0.000000e+00> : vector<256x8xf32>
    %127 = tpu.matmul %124, %126, %cst_153 {dimension_numbers = #tpu.dot_dimension_numbers<[1], [0], [0], [1], [0, 0, 1, 1], [], []>} : vector<256x20xf32>, vector<20x8xf32>, vector<256x8xf32> -> vector<256x8xf32>
    %128 = arith.addf %113, %127 : vector<256x8xf32>
    %c4_154 = arith.constant 4 : index
    %c0_155 = arith.constant 0 : index
    %c0_156 = arith.constant 0 : index
    %129 = vector.load %arg12[%c4_154, %c0_155, %c0_156] : memref<20x20x4xf32, #tpu.memory_space<vmem>>, vector<16x16x4xf32>
    %130 = vector.shape_cast %129 : vector<16x16x4xf32> to vector<256x4xf32>
    %c4_157 = arith.constant 4 : index
    %c1_158 = arith.constant 1 : index
    %c0_159 = arith.constant 0 : index
    %131 = vector.load %arg12[%c4_157, %c1_158, %c0_159] : memref<20x20x4xf32, #tpu.memory_space<vmem>>, vector<16x16x4xf32>
    %132 = vector.shape_cast %131 : vector<16x16x4xf32> to vector<256x4xf32>
    %c4_160 = arith.constant 4 : index
    %c2_161 = arith.constant 2 : index
    %c0_162 = arith.constant 0 : index
    %133 = vector.load %arg12[%c4_160, %c2_161, %c0_162] : memref<20x20x4xf32, #tpu.memory_space<vmem>>, vector<16x16x4xf32>
    %134 = vector.shape_cast %133 : vector<16x16x4xf32> to vector<256x4xf32>
    %c4_163 = arith.constant 4 : index
    %c3_164 = arith.constant 3 : index
    %c0_165 = arith.constant 0 : index
    %135 = vector.load %arg12[%c4_163, %c3_164, %c0_165] : memref<20x20x4xf32, #tpu.memory_space<vmem>>, vector<16x16x4xf32>
    %136 = vector.shape_cast %135 : vector<16x16x4xf32> to vector<256x4xf32>
    %c4_166 = arith.constant 4 : index
    %c4_167 = arith.constant 4 : index
    %c0_168 = arith.constant 0 : index
    %137 = vector.load %arg12[%c4_166, %c4_167, %c0_168] : memref<20x20x4xf32, #tpu.memory_space<vmem>>, vector<16x16x4xf32>
    %138 = vector.shape_cast %137 : vector<16x16x4xf32> to vector<256x4xf32>
    %139 = tpu.concatenate %130, %132, %134, %136, %138 in 1 : vector<256x4xf32>, vector<256x4xf32>, vector<256x4xf32>, vector<256x4xf32>, vector<256x4xf32> -> vector<256x20xf32>
    %c4_169 = arith.constant 4 : index
    %c0_170 = arith.constant 0 : index
    %c0_171 = arith.constant 0 : index
    %140 = vector.load %arg6[%c4_169, %c0_170, %c0_171] : memref<5x20x8xf32, #tpu.memory_space<vmem>>, vector<1x20x8xf32>
    %141 = vector.shape_cast %140 : vector<1x20x8xf32> to vector<20x8xf32>
    %cst_172 = arith.constant dense<0.000000e+00> : vector<256x8xf32>
    %142 = tpu.matmul %139, %141, %cst_172 {dimension_numbers = #tpu.dot_dimension_numbers<[1], [0], [0], [1], [0, 0, 1, 1], [], []>} : vector<256x20xf32>, vector<20x8xf32>, vector<256x8xf32> -> vector<256x8xf32>
    %143 = arith.addf %128, %142 : vector<256x8xf32>
    %c0_173 = arith.constant 0 : index
    %c0_174 = arith.constant 0 : index
    %144 = vector.load %arg7[%c0_173, %c0_174] : memref<1x8xf32, #tpu.memory_space<vmem>>, vector<1x8xf32>
    %145 = vector.shape_cast %144 : vector<1x8xf32> to vector<8xf32>
    %146 = vector.shape_cast %145 : vector<8xf32> to vector<1x8xf32>
    %147 = vector.broadcast %146 : vector<1x8xf32> to vector<256x8xf32>
    %148 = arith.addf %143, %147 : vector<256x8xf32>
    %cst_175 = arith.constant 0.000000e+00 : f32
    %149 = vector.broadcast %cst_175 : f32 to vector<256x8xf32>
    %150 = arith.maximumf %148, %149 : vector<256x8xf32>
    %c1_176 = arith.constant 1 : index
    %c1_177 = arith.constant 1 : index
    %c0_178 = arith.constant 0 : index
    %151 = vector.load %arg13[%c1_176, %c1_177, %c0_178] : memref<18x18x4xf32, #tpu.memory_space<vmem>>, vector<16x16x4xf32>
    tpu.vector_store %arg13[%c1_176, %c1_177, %c0_178], %1 {strides = array<i32>} : memref<18x18x4xf32, #tpu.memory_space<vmem>>, vector<16x16x4xf32>,
    %cst_179 = arith.constant 0xFF800000 : f32
    %152 = vector.broadcast %cst_179 : f32 to vector<1x18x4xf32>
    %cst_180 = arith.constant 0xFF800000 : f32
    %153 = vector.broadcast %cst_180 : f32 to vector<16x1x4xf32>
    %c0_181 = arith.constant 0 : index
    %c0_182 = arith.constant 0 : index
    %c0_183 = arith.constant 0 : index
    %154 = vector.load %arg13[%c0_181, %c0_182, %c0_183] : memref<18x18x4xf32, #tpu.memory_space<vmem>>, vector<1x18x4xf32>
    tpu.vector_store %arg13[%c0_181, %c0_182, %c0_183], %152 {strides = array<i32>} : memref<18x18x4xf32, #tpu.memory_space<vmem>>, vector<1x18x4xf32>,
    %c17_184 = arith.constant 17 : index
    %c0_185 = arith.constant 0 : index
    %c0_186 = arith.constant 0 : index
    %155 = vector.load %arg13[%c17_184, %c0_185, %c0_186] : memref<18x18x4xf32, #tpu.memory_space<vmem>>, vector<1x18x4xf32>
    tpu.vector_store %arg13[%c17_184, %c0_185, %c0_186], %152 {strides = array<i32>} : memref<18x18x4xf32, #tpu.memory_space<vmem>>, vector<1x18x4xf32>,
    %c1_187 = arith.constant 1 : index
    %c0_188 = arith.constant 0 : index
    %c0_189 = arith.constant 0 : index
    %156 = vector.load %arg13[%c1_187, %c0_188, %c0_189] : memref<18x18x4xf32, #tpu.memory_space<vmem>>, vector<16x1x4xf32>
    tpu.vector_store %arg13[%c1_187, %c0_188, %c0_189], %153 {strides = array<i32>} : memref<18x18x4xf32, #tpu.memory_space<vmem>>, vector<16x1x4xf32>,
    %c1_190 = arith.constant 1 : index
    %c17_191 = arith.constant 17 : index
    %c0_192 = arith.constant 0 : index
    %157 = vector.load %arg13[%c1_190, %c17_191, %c0_192] : memref<18x18x4xf32, #tpu.memory_space<vmem>>, vector<16x1x4xf32>
    tpu.vector_store %arg13[%c1_190, %c17_191, %c0_192], %153 {strides = array<i32>} : memref<18x18x4xf32, #tpu.memory_space<vmem>>, vector<16x1x4xf32>,
    %c0_193 = arith.constant 0 : index
    %c0_194 = arith.constant 0 : index
    %c0_195 = arith.constant 0 : index
    %158 = vector.load %arg13[%c0_193, %c0_194, %c0_195] : memref<18x18x4xf32, #tpu.memory_space<vmem>>, vector<18x16x4xf32>
    %c0_196 = arith.constant 0 : index
    %c1_197 = arith.constant 1 : index
    %c0_198 = arith.constant 0 : index
    %159 = vector.load %arg13[%c0_196, %c1_197, %c0_198] : memref<18x18x4xf32, #tpu.memory_space<vmem>>, vector<18x16x4xf32>
    %160 = arith.maximumf %158, %159 : vector<18x16x4xf32>
    %c0_199 = arith.constant 0 : index
    %c2_200 = arith.constant 2 : index
    %c0_201 = arith.constant 0 : index
    %161 = vector.load %arg13[%c0_199, %c2_200, %c0_201] : memref<18x18x4xf32, #tpu.memory_space<vmem>>, vector<18x16x4xf32>
    %162 = arith.maximumf %160, %161 : vector<18x16x4xf32>
    %163 = vector.extract_strided_slice %162 {offsets = [0, 0, 0], sizes = [16, 16, 4], strides = [1, 1, 1]} : vector<18x16x4xf32> to vector<16x16x4xf32>
    %164 = vector.extract_strided_slice %162 {offsets = [1, 0, 0], sizes = [16, 16, 4], strides = [1, 1, 1]} : vector<18x16x4xf32> to vector<16x16x4xf32>
    %165 = arith.maximumf %163, %164 : vector<16x16x4xf32>
    %166 = vector.extract_strided_slice %162 {offsets = [2, 0, 0], sizes = [16, 16, 4], strides = [1, 1, 1]} : vector<18x16x4xf32> to vector<16x16x4xf32>
    %167 = arith.maximumf %165, %166 : vector<16x16x4xf32>
    %168 = vector.shape_cast %167 : vector<16x16x4xf32> to vector<256x4xf32>
    %c0_202 = arith.constant 0 : index
    %c0_203 = arith.constant 0 : index
    %169 = vector.load %arg8[%c0_202, %c0_203] : memref<4x8xf32, #tpu.memory_space<vmem>>, vector<4x8xf32>
    %cst_204 = arith.constant dense<0.000000e+00> : vector<256x8xf32>
    %170 = tpu.matmul %168, %169, %cst_204 {dimension_numbers = #tpu.dot_dimension_numbers<[1], [0], [0], [1], [0, 0, 1, 1], [], []>} : vector<256x4xf32>, vector<4x8xf32>, vector<256x8xf32> -> vector<256x8xf32>
    %c0_205 = arith.constant 0 : index
    %c0_206 = arith.constant 0 : index
    %171 = vector.load %arg9[%c0_205, %c0_206] : memref<1x8xf32, #tpu.memory_space<vmem>>, vector<1x8xf32>
    %172 = vector.shape_cast %171 : vector<1x8xf32> to vector<8xf32>
    %173 = vector.shape_cast %172 : vector<8xf32> to vector<1x8xf32>
    %174 = vector.broadcast %173 : vector<1x8xf32> to vector<256x8xf32>
    %175 = arith.addf %170, %174 : vector<256x8xf32>
    %cst_207 = arith.constant 0.000000e+00 : f32
    %176 = vector.broadcast %cst_207 : f32 to vector<256x8xf32>
    %177 = arith.maximumf %175, %176 : vector<256x8xf32>
    %178 = tpu.concatenate %12, %61, %150, %177 in 1 : vector<256x8xf32>, vector<256x8xf32>, vector<256x8xf32>, vector<256x8xf32> -> vector<256x32xf32>
    %179 = vector.shape_cast %178 : vector<256x32xf32> to vector<16x16x32xf32>
    %c0_208 = arith.constant 0 : index
    %c0_209 = arith.constant 0 : index
    %c0_210 = arith.constant 0 : index
    %c0_211 = arith.constant 0 : index
    %180 = vector.load %arg10[%c0_208, %c0_209, %c0_210, %c0_211] : memref<1x16x16x32xf32, #tpu.memory_space<vmem>>, vector<1x16x16x32xf32>
    %181 = vector.shape_cast %180 : vector<1x16x16x32xf32> to vector<16x16x32xf32>
    %182 = vector.shape_cast %179 : vector<16x16x32xf32> to vector<1x16x16x32xf32>
    tpu.vector_store %arg10[%c0_208, %c0_209, %c0_210, %c0_211], %182 {strides = array<i32>} : memref<1x16x16x32xf32, #tpu.memory_space<vmem>>, vector<1x16x16x32xf32>,
    return
  }
  func.func @transform_0(%arg0: i32) -> (i32, i32, i32, i32) {
    %c0_i32 = arith.constant 0 : i32
    %c0_i32_0 = arith.constant 0 : i32
    %c0_i32_1 = arith.constant 0 : i32
    %c0_i32_2 = arith.constant 0 : i32
    return %arg0, %c0_i32, %c0_i32_0, %c0_i32_1 : i32, i32, i32, i32
  }
  func.func @transform_1(%arg0: i32) -> (i32, i32) {
    %c0_i32 = arith.constant 0 : i32
    %c0_i32_0 = arith.constant 0 : i32
    %c0_i32_1 = arith.constant 0 : i32
    return %c0_i32, %c0_i32_0 : i32, i32
  }
  func.func @transform_2(%arg0: i32) -> (i32, i32) {
    %c0_i32 = arith.constant 0 : i32
    %c0_i32_0 = arith.constant 0 : i32
    %c0_i32_1 = arith.constant 0 : i32
    return %c0_i32, %c0_i32_0 : i32, i32
  }
  func.func @transform_3(%arg0: i32) -> (i32, i32, i32) {
    %c0_i32 = arith.constant 0 : i32
    %c0_i32_0 = arith.constant 0 : i32
    %c0_i32_1 = arith.constant 0 : i32
    %c0_i32_2 = arith.constant 0 : i32
    return %c0_i32, %c0_i32_0, %c0_i32_1 : i32, i32, i32
  }
  func.func @transform_4(%arg0: i32) -> (i32, i32) {
    %c0_i32 = arith.constant 0 : i32
    %c0_i32_0 = arith.constant 0 : i32
    %c0_i32_1 = arith.constant 0 : i32
    return %c0_i32, %c0_i32_0 : i32, i32
  }
  func.func @transform_5(%arg0: i32) -> (i32, i32, i32) {
    %c0_i32 = arith.constant 0 : i32
    %c0_i32_0 = arith.constant 0 : i32
    %c0_i32_1 = arith.constant 0 : i32
    %c0_i32_2 = arith.constant 0 : i32
    return %c0_i32, %c0_i32_0, %c0_i32_1 : i32, i32, i32
  }
  func.func @transform_6(%arg0: i32) -> (i32, i32) {
    %c0_i32 = arith.constant 0 : i32
    %c0_i32_0 = arith.constant 0 : i32
    %c0_i32_1 = arith.constant 0 : i32
    return %c0_i32, %c0_i32_0 : i32, i32
  }
  func.func @transform_7(%arg0: i32) -> (i32, i32) {
    %c0_i32 = arith.constant 0 : i32
    %c0_i32_0 = arith.constant 0 : i32
    %c0_i32_1 = arith.constant 0 : i32
    return %c0_i32, %c0_i32_0 : i32, i32
  }
  func.func @transform_8(%arg0: i32) -> (i32, i32) {
    %c0_i32 = arith.constant 0 : i32
    %c0_i32_0 = arith.constant 0 : i32
    %c0_i32_1 = arith.constant 0 : i32
    return %c0_i32, %c0_i32_0 : i32, i32
  }
  func.func @transform_9(%arg0: i32) -> (i32, i32, i32, i32) {
    %c0_i32 = arith.constant 0 : i32
    %c0_i32_0 = arith.constant 0 : i32
    %c0_i32_1 = arith.constant 0 : i32
    %c0_i32_2 = arith.constant 0 : i32
    return %arg0, %c0_i32, %c0_i32_0, %c0_i32_1 : i32, i32, i32, i32
  }
}

</mosaic_0001>

<llo_original>
// kernel: inception_block_forward.1
$region0: #{inception_block_forward.1}
  #allocation0 [shape = 'u32[]', space=smem, size = 0x4, offset = 0x4, fixed_abs, tag = 'smem constant byte address 0x4 - core index']
  #allocation1 [shape = 'u32[72,128]{1,0:T(1,128)}', space=vmem, size = 0x9000, scoped, tag = 'internal scratch']
  #allocation2 [shape = 'f32[18,18,4]{2,1,0:T(8,128)}', space=vmem, size = 0x36000, scoped, tag = 'scratch operand']
  #allocation3 [shape = 'f32[20,20,4]{2,1,0:T(8,128)}', space=vmem, size = 0x3c000, scoped, tag = 'scratch operand']
  #allocation4 [shape = 'f32[18,18,4]{2,1,0:T(8,128)}', space=vmem, size = 0x36000, scoped, tag = 'scratch operand']
  %s0 = inlined_call_operand.vmem [shape: f32[2,16,16,4], index: 0, kind: input, shape index: {}]
  %s1 = inlined_call_operand.vmem [shape: f32[4,384], index: 1, kind: input, shape index: {}]
  %s2 = inlined_call_operand.vmem [shape: f32[1,384], index: 2, kind: input, shape index: {}]
  %s3 = inlined_call_operand.vmem [shape: f32[3,12,8], index: 3, kind: input, shape index: {}]
  %s4 = inlined_call_operand.vmem [shape: f32[1,8], index: 4, kind: input, shape index: {}]
  %s5 = inlined_call_operand.vmem [shape: f32[5,20,8], index: 5, kind: input, shape index: {}]
  %s6 = inlined_call_operand.vmem [shape: f32[1,8], index: 6, kind: input, shape index: {}]
  %s7 = inlined_call_operand.vmem [shape: f32[4,8], index: 7, kind: input, shape index: {}]
  %s8 = inlined_call_operand.vmem [shape: f32[1,8], index: 8, kind: input, shape index: {}]
  %s9 = inlined_call_operand.hbm [shape: f32[2,16,16,32], index: 9, kind: output, shape index: {}]
  %s10 = sld [smem:[#allocation0]]
  $region69: #{inception_block_forward.1} parent=0
    _
  %s12 = ssub.s32 1, %s10
  %s13 = scalar_select 0, %s12, %s10
  $region1: #{inception_block_forward.1} parent=0
    #allocation5 [shape = 'u8[262144]{0}', space=vmem, size = 0x40000, scoped, tag = 'output window, operand 0']
    #allocation6 [shape = 's32[2]{0}', space=sflag, size = 0x8, scoped, tag = 'scoped memory for inception_block_forward.1']
    %14 = vsyncpa [#allocation6], 0
    %s15 = scalar_lea.sflag [#allocation6], 1
    %16 = vsyncpa %s15, 0
    loop: start=0, step=1, limit=4
    $region2: #{inception_block_forward.1} parent=1 // loop_pre_header
      _
    $region3: #{inception_block_forward.1} parent=1 // loop_header
      %s18 = sphi 0, %s22
      %p19 = scmp.ge.s32.totalorder %s18, 4
      %s28 = sphi 0, %s30
      %s31 = sphi 0, %s28
      %s32 = sphi 0, %s31
      %s48 = sphi 0, %s32
      %s52 = sphi 0, %s52
      %s54 = sphi 0, %s52
      %s55 = sphi 0, %s54
      %s69 = sphi 0, %s55
      %s73 = sphi 0, %s73
      %s75 = sphi 0, %s73
      %s76 = sphi 0, %s75
      %s90 = sphi 0, %s76
      %s94 = sphi 0, %s94
      %s96 = sphi 0, %s94
      %s97 = sphi 0, %s96
      %s111 = sphi 0, %s97
      %s115 = sphi 0, %s115
      %s117 = sphi 0, %s115
      %s118 = sphi 0, %s117
      %s132 = sphi 0, %s118
      %s136 = sphi 0, %s136
      %s138 = sphi 0, %s136
      %s139 = sphi 0, %s138
      %s153 = sphi 0, %s139
      %s157 = sphi 0, %s157
      %s159 = sphi 0, %s157
      %s160 = sphi 0, %s159
      %s174 = sphi 0, %s160
      %s178 = sphi 0, %s178
      %s180 = sphi 0, %s178
      %s181 = sphi 0, %s180
      %s195 = sphi 0, %s181
      %s199 = sphi 0, %s199
      %s201 = sphi 0, %s199
      %s202 = sphi 0, %s201
      %s216 = sphi 0, %s202
      %s222 = sphi 0, %s224
      %s225 = sphi 0, %s222
      %s226 = sphi 0, %s225
      %s242 = sphi 0, %s226
    $region4: #{inception_block_forward.1} parent=1 // loop_header_branch
      %21 = sbr.rel (%p19) target = $region8
    $region5: #{inception_block_forward.1} parent=1 // loop_body
      %s23 = ssub.s32 %s18, 1
      %s24 = ssub.s32 %s18, 2
      %s25 = sadd.s32 %s18, 1
      %s26 = ssub.s32 %s18, %s25
      %p27 = scmp.eq.s32.totalorder %s26, 0
      %s29 = sadd.s32 %s28, 1
      %s30 = scalar_select %p27, %s28, %s29
      %p33 = pneg %p27
      %p34 = scmp.eq.s32.totalorder %s18, 1
      %p35 = por %p33, %p34
      %p36 = scmp.ne.s32.totalorder %s28, %s31
      %p37 = scmp.eq.s32.totalorder %s18, 0
      %p38 = por %p36, %p37
      %p39 = scmp.ne.s32.totalorder %s28, %s31
      %p40 = scmp.eq.s32.totalorder %s23, 1
      %p41 = por %p39, %p40
      %p42 = scmp.ne.s32.totalorder %s31, %s32
      %p43 = scmp.eq.s32.totalorder %s23, 0
      %p44 = por %p42, %p43
      %p45 = scmp.ne.s32.totalorder %s31, %s32
      %p46 = scmp.eq.s32.totalorder %s24, 1
      %p47 = por %p45, %p46
      %p49 = scmp.ne.s32.totalorder %s32, %s48
      %p50 = scmp.eq.s32.totalorder %s24, 0
      %p51 = por %p49, %p50
      %s53 = sadd.s32 %s52, 1
      %p56 = scmp.eq.s32.totalorder %s18, 1
      %p57 = scmp.ne.s32.totalorder %s52, %s54
      %p58 = scmp.eq.s32.totalorder %s18, 0
      %p59 = por %p57, %p58
      %p60 = scmp.ne.s32.totalorder %s52, %s54
      %p61 = scmp.eq.s32.totalorder %s23, 1
      %p62 = por %p60, %p61
      %p63 = scmp.ne.s32.totalorder %s54, %s55
      %p64 = scmp.eq.s32.totalorder %s23, 0
      %p65 = por %p63, %p64
      %p66 = scmp.ne.s32.totalorder %s54, %s55
      %p67 = scmp.eq.s32.totalorder %s24, 1
      %p68 = por %p66, %p67
      %p70 = scmp.ne.s32.totalorder %s55, %s69
      %p71 = scmp.eq.s32.totalorder %s24, 0
      %p72 = por %p70, %p71
      %s74 = sadd.s32 %s73, 1
      %p77 = scmp.eq.s32.totalorder %s18, 1
      %p78 = scmp.ne.s32.totalorder %s73, %s75
      %p79 = scmp.eq.s32.totalorder %s18, 0
      %p80 = por %p78, %p79
      %p81 = scmp.ne.s32.totalorder %s73, %s75
      %p82 = scmp.eq.s32.totalorder %s23, 1
      %p83 = por %p81, %p82
      %p84 = scmp.ne.s32.totalorder %s75, %s76
      %p85 = scmp.eq.s32.totalorder %s23, 0
      %p86 = por %p84, %p85
      %p87 = scmp.ne.s32.totalorder %s75, %s76
      %p88 = scmp.eq.s32.totalorder %s24, 1
      %p89 = por %p87, %p88
      %p91 = scmp.ne.s32.totalorder %s76, %s90
      %p92 = scmp.eq.s32.totalorder %s24, 0
      %p93 = por %p91, %p92
      %s95 = sadd.s32 %s94, 1
      %p98 = scmp.eq.s32.totalorder %s18, 1
      %p99 = scmp.ne.s32.totalorder %s94, %s96
      %p100 = scmp.eq.s32.totalorder %s18, 0
      %p101 = por %p99, %p100
      %p102 = scmp.ne.s32.totalorder %s94, %s96
      %p103 = scmp.eq.s32.totalorder %s23, 1
      %p104 = por %p102, %p103
      %p105 = scmp.ne.s32.totalorder %s96, %s97
      %p106 = scmp.eq.s32.totalorder %s23, 0
      %p107 = por %p105, %p106
      %p108 = scmp.ne.s32.totalorder %s96, %s97
      %p109 = scmp.eq.s32.totalorder %s24, 1
      %p110 = por %p108, %p109
      %p112 = scmp.ne.s32.totalorder %s97, %s111
      %p113 = scmp.eq.s32.totalorder %s24, 0
      %p114 = por %p112, %p113
      %s116 = sadd.s32 %s115, 1
      %p119 = scmp.eq.s32.totalorder %s18, 1
      %p120 = scmp.ne.s32.totalorder %s115, %s117
      %p121 = scmp.eq.s32.totalorder %s18, 0
      %p122 = por %p120, %p121
      %p123 = scmp.ne.s32.totalorder %s115, %s117
      %p124 = scmp.eq.s32.totalorder %s23, 1
      %p125 = por %p123, %p124
      %p126 = scmp.ne.s32.totalorder %s117, %s118
      %p127 = scmp.eq.s32.totalorder %s23, 0
      %p128 = por %p126, %p127
      %p129 = scmp.ne.s32.totalorder %s117, %s118
      %p130 = scmp.eq.s32.totalorder %s24, 1
      %p131 = por %p129, %p130
      %p133 = scmp.ne.s32.totalorder %s118, %s132
      %p134 = scmp.eq.s32.totalorder %s24, 0
      %p135 = por %p133, %p134
      %s137 = sadd.s32 %s136, 1
      %p140 = scmp.eq.s32.totalorder %s18, 1
      %p141 = scmp.ne.s32.totalorder %s136, %s138
      %p142 = scmp.eq.s32.totalorder %s18, 0
      %p143 = por %p141, %p142
      %p144 = scmp.ne.s32.totalorder %s136, %s138
      %p145 = scmp.eq.s32.totalorder %s23, 1
      %p146 = por %p144, %p145
      %p147 = scmp.ne.s32.totalorder %s138, %s139
      %p148 = scmp.eq.s32.totalorder %s23, 0
      %p149 = por %p147, %p148
      %p150 = scmp.ne.s32.totalorder %s138, %s139
      %p151 = scmp.eq.s32.totalorder %s24, 1
      %p152 = por %p150, %p151
      %p154 = scmp.ne.s32.totalorder %s139, %s153
      %p155 = scmp.eq.s32.totalorder %s24, 0
      %p156 = por %p154, %p155
      %s158 = sadd.s32 %s157, 1
      %p161 = scmp.eq.s32.totalorder %s18, 1
      %p162 = scmp.ne.s32.totalorder %s157, %s159
      %p163 = scmp.eq.s32.totalorder %s18, 0
      %p164 = por %p162, %p163
      %p165 = scmp.ne.s32.totalorder %s157, %s159
      %p166 = scmp.eq.s32.totalorder %s23, 1
      %p167 = por %p165, %p166
      %p168 = scmp.ne.s32.totalorder %s159, %s160
      %p169 = scmp.eq.s32.totalorder %s23, 0
      %p170 = por %p168, %p169
      %p171 = scmp.ne.s32.totalorder %s159, %s160
      %p172 = scmp.eq.s32.totalorder %s24, 1
      %p173 = por %p171, %p172
      %p175 = scmp.ne.s32.totalorder %s160, %s174
      %p176 = scmp.eq.s32.totalorder %s24, 0
      %p177 = por %p175, %p176
      %s179 = sadd.s32 %s178, 1
      %p182 = scmp.eq.s32.totalorder %s18, 1
      %p183 = scmp.ne.s32.totalorder %s178, %s180
      %p184 = scmp.eq.s32.totalorder %s18, 0
      %p185 = por %p183, %p184
      %p186 = scmp.ne.s32.totalorder %s178, %s180
      %p187 = scmp.eq.s32.totalorder %s23, 1
      %p188 = por %p186, %p187
      %p189 = scmp.ne.s32.totalorder %s180, %s181
      %p190 = scmp.eq.s32.totalorder %s23, 0
      %p191 = por %p189, %p190
      %p192 = scmp.ne.s32.totalorder %s180, %s181
      %p193 = scmp.eq.s32.totalorder %s24, 1
      %p194 = por %p192, %p193
      %p196 = scmp.ne.s32.totalorder %s181, %s195
      %p197 = scmp.eq.s32.totalorder %s24, 0
      %p198 = por %p196, %p197
      %s200 = sadd.s32 %s199, 1
      %p203 = scmp.eq.s32.totalorder %s18, 1
      %p204 = scmp.ne.s32.totalorder %s199, %s201
      %p205 = scmp.eq.s32.totalorder %s18, 0
      %p206 = por %p204, %p205
      %p207 = scmp.ne.s32.totalorder %s199, %s201
      %p208 = scmp.eq.s32.totalorder %s23, 1
      %p209 = por %p207, %p208
      %p210 = scmp.ne.s32.totalorder %s201, %s202
      %p211 = scmp.eq.s32.totalorder %s23, 0
      %p212 = por %p210, %p211
      %p213 = scmp.ne.s32.totalorder %s201, %s202
      %p214 = scmp.eq.s32.totalorder %s24, 1
      %p215 = por %p213, %p214
      %p217 = scmp.ne.s32.totalorder %s202, %s216
      %p218 = scmp.eq.s32.totalorder %s24, 0
      %p219 = por %p217, %p218
      %s220 = ssub.s32 %s18, %s25
      %p221 = scmp.eq.s32.totalorder %s220, 0
      %s223 = sadd.s32 %s222, 1
      %s224 = scalar_select %p221, %s222, %s223
      %p227 = pneg %p221
      %p228 = scmp.eq.s32.totalorder %s18, 1
      %p229 = por %p227, %p228
      %p230 = scmp.ne.s32.totalorder %s222, %s225
      %p231 = scmp.eq.s32.totalorder %s18, 0
      %p232 = por %p230, %p231
      %p233 = scmp.ne.s32.totalorder %s222, %s225
      %p234 = scmp.eq.s32.totalorder %s23, 1
      %p235 = por %p233, %p234
      %p236 = scmp.ne.s32.totalorder %s225, %s226
      %p237 = scmp.eq.s32.totalorder %s23, 0
      %p238 = por %p236, %p237
      %p239 = scmp.ne.s32.totalorder %s225, %s226
      %p240 = scmp.eq.s32.totalorder %s24, 1
      %p241 = por %p239, %p240
      %p243 = scmp.ne.s32.totalorder %s226, %s242
      %p244 = scmp.eq.s32.totalorder %s24, 0
      %p245 = por %p243, %p244
      %p246 = scmp.le.s32.totalorder 1, %s18
      %p247 = scmp.lt.s32.totalorder %s18, 3
      %p248 = pnand %p246, %p247
      %p249 = pneg %p248
      // Predicated region
      $region9: #{inception_block_forward.1} parent=5 // pred_check
        _
      $region10: #{inception_block_forward.1} parent=5 // pred_check_branch
        %251 = sbr.rel (%p248) target = $region12
      $region11: #{inception_block_forward.1} parent=5 // pred_region
        %s252 = ssub.s32 %s18, 1
        // Predicated region
        $region13: #{inception_block_forward.1} parent=11 // pred_check
          %p253 = pneg %p65
        $region14: #{inception_block_forward.1} parent=11 // pred_check_branch
          %255 = sbr.rel (%p253) target = $region16
        $region15: #{inception_block_forward.1} parent=11 // pred_region
          _
        $region16: #{inception_block_forward.1} parent=11 // pred_fallthru
          _
        // Predicated region
        $region17: #{inception_block_forward.1} parent=11 // pred_check
          %p256 = pneg %p86
        $region18: #{inception_block_forward.1} parent=11 // pred_check_branch
          %258 = sbr.rel (%p256) target = $region20
        $region19: #{inception_block_forward.1} parent=11 // pred_region
          _
        $region20: #{inception_block_forward.1} parent=11 // pred_fallthru
          _
        // Predicated region
        $region21: #{inception_block_forward.1} parent=11 // pred_check
          %p259 = pneg %p107
        $region22: #{inception_block_forward.1} parent=11 // pred_check_branch
          %261 = sbr.rel (%p259) target = $region24
        $region23: #{inception_block_forward.1} parent=11 // pred_region
          _
        $region24: #{inception_block_forward.1} parent=11 // pred_fallthru
          _
        // Predicated region
        $region25: #{inception_block_forward.1} parent=11 // pred_check
          %p262 = pneg %p128
        $region26: #{inception_block_forward.1} parent=11 // pred_check_branch
          %264 = sbr.rel (%p262) target = $region28
        $region27: #{inception_block_forward.1} parent=11 // pred_region
          _
        $region28: #{inception_block_forward.1} parent=11 // pred_fallthru
          _
        // Predicated region
        $region29: #{inception_block_forward.1} parent=11 // pred_check
          %p265 = pneg %p149
        $region30: #{inception_block_forward.1} parent=11 // pred_check_branch
          %267 = sbr.rel (%p265) target = $region32
        $region31: #{inception_block_forward.1} parent=11 // pred_region
          _
        $region32: #{inception_block_forward.1} parent=11 // pred_fallthru
          _
        // Predicated region
        $region33: #{inception_block_forward.1} parent=11 // pred_check
          %p268 = pneg %p170
        $region34: #{inception_block_forward.1} parent=11 // pred_check_branch
          %270 = sbr.rel (%p268) target = $region36
        $region35: #{inception_block_forward.1} parent=11 // pred_region
          _
        $region36: #{inception_block_forward.1} parent=11 // pred_fallthru
          _
        // Predicated region
        $region37: #{inception_block_forward.1} parent=11 // pred_check
          %p271 = pneg %p191
        $region38: #{inception_block_forward.1} parent=11 // pred_check_branch
          %273 = sbr.rel (%p271) target = $region40
        $region39: #{inception_block_forward.1} parent=11 // pred_region
          _
        $region40: #{inception_block_forward.1} parent=11 // pred_fallthru
          _
        // Predicated region
        $region41: #{inception_block_forward.1} parent=11 // pred_check
          %p274 = pneg %p212
        $region42: #{inception_block_forward.1} parent=11 // pred_check_branch
          %276 = sbr.rel (%p274) target = $region44
        $region43: #{inception_block_forward.1} parent=11 // pred_region
          _
        $region44: #{inception_block_forward.1} parent=11 // pred_fallthru
          _
      $region12: #{inception_block_forward.1} parent=5 // pred_fallthru
        _
      %p277 = scmp.lt.s32.totalorder %s18, 2
      // Predicated region
      $region45: #{inception_block_forward.1} parent=5 // pred_check
        %p278 = pneg %p277
      $region46: #{inception_block_forward.1} parent=5 // pred_check_branch
        %280 = sbr.rel (%p278) target = $region48
      $region47: #{inception_block_forward.1} parent=5 // pred_region
        // Predicated region
        $region49: #{inception_block_forward.1} parent=47 // pred_check
          %p281 = pneg %p38
        $region50: #{inception_block_forward.1} parent=47 // pred_check_branch
          %283 = sbr.rel (%p281) target = $region52
        $region51: #{inception_block_forward.1} parent=47 // pred_region
          %p284 = scmp.lt.s32.totalorder %s18, 1
          %s285 = scalar_select %p284, %s18, 1
          %s286 = smul.addr %s285, 32
          %s287 = smul.addr %s286, 8
          %s288 = scalar_lea.vmem %s0, %s287
        $region52: #{inception_block_forward.1} parent=47 // pred_fallthru
          _
      $region48: #{inception_block_forward.1} parent=5 // pred_fallthru
        _
      %p289 = scmp.le.s32.totalorder 1, %s18
      %p290 = scmp.lt.s32.totalorder %s18, 3
      %p291 = pnand %p289, %p290
      %p292 = pneg %p291
      // Predicated region
      $region53: #{inception_block_forward.1} parent=5 // pred_check
        _
      $region54: #{inception_block_forward.1} parent=5 // pred_check_branch
        %294 = sbr.rel (%p291) target = $region56
      $region55: #{inception_block_forward.1} parent=5 // pred_region
        %s295 = ssub.s32 %s18, 1
        %p296 = scmp.lt.s32.totalorder %s23, 1
        %s297 = scalar_select %p296, %s23, 1
        %s298 = smul.addr %s297, 32
        %s299 = smul.addr %s298, 8
        %s300 = scalar_lea.vmem %s0, %s299
        %p301 = pneg %p44
        %p302 = pneg %p41
        %p303 = pneg %p65
        %p304 = pneg %p62
        %p305 = pneg %p86
        %p306 = pneg %p83
        %p307 = pneg %p107
        %p308 = pneg %p104
        %p309 = pneg %p128
        %p310 = pneg %p125
        %p311 = pneg %p149
        %p312 = pneg %p146
        %p313 = pneg %p170
        %p314 = pneg %p167
        %p315 = pneg %p191
        %p316 = pneg %p188
        %p317 = pneg %p212
        %p318 = pneg %p209
        %p319 = pneg %p238
        %p320 = pneg %p235
        %s321 = sand.u32 %s225, 1
        %s322 = scalar_lea.sflag [#allocation6], %s321
        %s323 = sand.u32 %s225, 1
        %s324 = smul.addr %s323, 256
        %s325 = scalar_lea.vmem [#allocation5], %s324
        %p326 = scmp.lt.s32.totalorder %s23, 1
        %s327 = scalar_select %p326, %s23, 1
        %s328 = smul.addr %s327, 32
        %s329 = smul.addr %s328, 8
        %s330 = scalar_lea.vmem %s0, %s329
        %v331 = vld [vmem:[%s330] sm:$0xff]
        %v332 = vld [vmem:[%s330 + $0x8] sm:$0xff]
        %v333 = vld [vmem:[%s330 + $0x10] sm:$0xff]
        %v334 = vld [vmem:[%s330 + $0x18] sm:$0xff]
        %v335 = vld [vmem:[%s330 + $0x20] sm:$0xff]
        %v336 = vld [vmem:[%s330 + $0x28] sm:$0xff]
        %v337 = vld [vmem:[%s330 + $0x30] sm:$0xff]
        %v338 = vld [vmem:[%s330 + $0x38] sm:$0xff]
        %v339 = vld [vmem:[%s330 + $0x40] sm:$0xff]
        %v340 = vld [vmem:[%s330 + $0x48] sm:$0xff]
        %v341 = vld [vmem:[%s330 + $0x50] sm:$0xff]
        %v342 = vld [vmem:[%s330 + $0x58] sm:$0xff]
        %v343 = vld [vmem:[%s330 + $0x60] sm:$0xff]
        %v344 = vld [vmem:[%s330 + $0x68] sm:$0xff]
        %v345 = vld [vmem:[%s330 + $0x70] sm:$0xff]
        %v346 = vld [vmem:[%s330 + $0x78] sm:$0xff]
        %v347 = vld [vmem:[%s330 + $0x80] sm:$0xff]
        %v348 = vld [vmem:[%s330 + $0x88] sm:$0xff]
        %v349 = vld [vmem:[%s330 + $0x90] sm:$0xff]
        %v350 = vld [vmem:[%s330 + $0x98] sm:$0xff]
        %v351 = vld [vmem:[%s330 + $0xa0] sm:$0xff]
        %v352 = vld [vmem:[%s330 + $0xa8] sm:$0xff]
        %v353 = vld [vmem:[%s330 + $0xb0] sm:$0xff]
        %v354 = vld [vmem:[%s330 + $0xb8] sm:$0xff]
        %v355 = vld [vmem:[%s330 + $0xc0] sm:$0xff]
        %v356 = vld [vmem:[%s330 + $0xc8] sm:$0xff]
        %v357 = vld [vmem:[%s330 + $0xd0] sm:$0xff]
        %v358 = vld [vmem:[%s330 + $0xd8] sm:$0xff]
        %v359 = vld [vmem:[%s330 + $0xe0] sm:$0xff]
        %v360 = vld [vmem:[%s330 + $0xe8] sm:$0xff]
        %v361 = vld [vmem:[%s330 + $0xf0] sm:$0xff]
        %v362 = vld [vmem:[%s330 + $0xf8] sm:$0xff]
        %v363 = vld [vmem:[%s1] sm:$0xff]
        %v364 = vld [vmem:[%s1 + $0x8] sm:$0xf]
        %v365 = vld [vmem:[%s2] sm:$0x7]
        %v367 = vperm.slane %v365, 0
        %v368 = vperm.slane %v365, 1
        %v369 = vperm.slane %v365, 2
        %375 = vst [vmem:[#allocation1] ss:$2 sm:$0xff] %v363
        %s376 = scalar_lea.vmem [#allocation1], 16
        %377 = vst [vmem:[%s376] ss:$2 sm:$0xff] %v364
        %v378 = vld.sshfl [vmem:[#allocation1] sm:$0xff pattern:$0x75316420]
        %v379 = vld.sshfl [vmem:[#allocation1 + $0x8] sm:$0xff pattern:$0x75316420]
        %v380 = vld.sshfl [vmem:[#allocation1 + $0x10] sm:$0xff pattern:$0x75316420]
        %vm381 = vcmask 31744
        %v383 = vsel %vm381, %v331, 0
        %v386 = vsel %vm381, %v332, 0
        %v389 = vsel %vm381, %v333, 0
        %v392 = vsel %vm381, %v334, 0
        %v395 = vsel %vm381, %v335, 0
        %v398 = vsel %vm381, %v336, 0
        %v401 = vsel %vm381, %v337, 0
        %v404 = vsel %vm381, %v338, 0
        %v407 = vsel %vm381, %v339, 0
        %v410 = vsel %vm381, %v340, 0
        %v413 = vsel %vm381, %v341, 0
        %v416 = vsel %vm381, %v342, 0
        %v419 = vsel %vm381, %v343, 0
        %v422 = vsel %vm381, %v344, 0
        %v425 = vsel %vm381, %v345, 0
        %v428 = vsel %vm381, %v346, 0
        %v431 = vsel %vm381, %v347, 0
        %v434 = vsel %vm381, %v348, 0
        %v437 = vsel %vm381, %v349, 0
        %v440 = vsel %vm381, %v350, 0
        %v443 = vsel %vm381, %v351, 0
        %v446 = vsel %vm381, %v352, 0
        %v449 = vsel %vm381, %v353, 0
        %v452 = vsel %vm381, %v354, 0
        %v455 = vsel %vm381, %v355, 0
        %v458 = vsel %vm381, %v356, 0
        %v461 = vsel %vm381, %v357, 0
        %v464 = vsel %vm381, %v358, 0
        %v467 = vsel %vm381, %v359, 0
        %v470 = vsel %vm381, %v360, 0
        %v473 = vsel %vm381, %v361, 0
        %v476 = vsel %vm381, %v362, 0
        %vm478 = vcmask 1043456
        %v479 = vsel %vm478, %v378, 0
        %v481 = vsel %vm478, %v379, 0
        %v483 = vsel %vm478, %v380, 0
        %485 = vmatpush.msra.mxu0 0.0
        %486 = vmatpush.msra.mxu0 0.0
        %487 = vmatpush.msra.mxu0 0.0
        %488 = vmatpush.msra.mxu0 0.0
        %489 = vmatpush.msra.mxu0 0.0
        %490 = vmatpush.msra.mxu0 0.0
        %491 = vmatpush.msra.mxu0 0.0
        %492 = vmatpush.msra.mxu0 0.0
        %493 = vmatpush.msra.mxu0 0.0
        %494 = vmatpush.msra.mxu0 0.0
        %495 = vmatpush.msra.mxu0 0.0
        %496 = vmatpush.msra.mxu0 0.0
        %497 = vmatpush.msra.mxu0 0.0
        %498 = vmatpush.msra.mxu0 0.0
        %499 = vmatpush.msra.mxu0 0.0
        %500 = vmatpush.msra.mxu0 %v479
        %501 = vmatmul.f32.gmra.mxu0 %v383
        %v502 = vpop.f32.mrf.mxu0
        %v503 = vadd.f32 %v367, %v502
        %504 = vmatmul.f32.gmra.mxu0 %v386
        %v505 = vpop.f32.mrf.mxu0
        %v506 = vadd.f32 %v367, %v505
        %507 = vmatmul.f32.gmra.mxu0 %v389
        %v508 = vpop.f32.mrf.mxu0
        %v509 = vadd.f32 %v367, %v508
        %510 = vmatmul.f32.gmra.mxu0 %v392
        %v511 = vpop.f32.mrf.mxu0
        %v512 = vadd.f32 %v367, %v511
        %513 = vmatmul.f32.gmra.mxu0 %v395
        %v514 = vpop.f32.mrf.mxu0
        %v515 = vadd.f32 %v367, %v514
        %516 = vmatmul.f32.gmra.mxu0 %v398
        %v517 = vpop.f32.mrf.mxu0
        %v518 = vadd.f32 %v367, %v517
        %519 = vmatmul.f32.gmra.mxu0 %v401
        %v520 = vpop.f32.mrf.mxu0
        %v521 = vadd.f32 %v367, %v520
        %522 = vmatmul.f32.gmra.mxu0 %v404
        %v523 = vpop.f32.mrf.mxu0
        %v524 = vadd.f32 %v367, %v523
        %525 = vmatmul.f32.gmra.mxu0 %v407
        %v526 = vpop.f32.mrf.mxu0
        %v527 = vadd.f32 %v367, %v526
        %528 = vmatmul.f32.gmra.mxu0 %v410
        %v529 = vpop.f32.mrf.mxu0
        %v530 = vadd.f32 %v367, %v529
        %531 = vmatmul.f32.gmra.mxu0 %v413
        %v532 = vpop.f32.mrf.mxu0
        %v533 = vadd.f32 %v367, %v532
        %534 = vmatmul.f32.gmra.mxu0 %v416
        %v535 = vpop.f32.mrf.mxu0
        %v536 = vadd.f32 %v367, %v535
        %537 = vmatmul.f32.gmra.mxu0 %v419
        %v538 = vpop.f32.mrf.mxu0
        %v539 = vadd.f32 %v367, %v538
        %540 = vmatmul.f32.gmra.mxu0 %v422
        %v541 = vpop.f32.mrf.mxu0
        %v542 = vadd.f32 %v367, %v541
        %543 = vmatmul.f32.gmra.mxu0 %v425
        %v544 = vpop.f32.mrf.mxu0
        %v545 = vadd.f32 %v367, %v544
        %546 = vmatmul.f32.gmra.mxu0 %v428
        %v547 = vpop.f32.mrf.mxu0
        %v548 = vadd.f32 %v367, %v547
        %549 = vmatmul.f32.gmra.mxu0 %v431
        %v550 = vpop.f32.mrf.mxu0
        %v551 = vadd.f32 %v367, %v550
        %552 = vmatmul.f32.gmra.mxu0 %v434
        %v553 = vpop.f32.mrf.mxu0
        %v554 = vadd.f32 %v367, %v553
        %555 = vmatmul.f32.gmra.mxu0 %v437
        %v556 = vpop.f32.mrf.mxu0
        %v557 = vadd.f32 %v367, %v556
        %558 = vmatmul.f32.gmra.mxu0 %v440
        %v559 = vpop.f32.mrf.mxu0
        %v560 = vadd.f32 %v367, %v559
        %561 = vmatmul.f32.gmra.mxu0 %v443
        %v562 = vpop.f32.mrf.mxu0
        %v563 = vadd.f32 %v367, %v562
        %564 = vmatmul.f32.gmra.mxu0 %v446
        %v565 = vpop.f32.mrf.mxu0
        %v566 = vadd.f32 %v367, %v565
        %567 = vmatmul.f32.gmra.mxu0 %v449
        %v568 = vpop.f32.mrf.mxu0
        %v569 = vadd.f32 %v367, %v568
        %570 = vmatmul.f32.gmra.mxu0 %v452
        %v571 = vpop.f32.mrf.mxu0
        %v572 = vadd.f32 %v367, %v571
        %573 = vmatmul.f32.gmra.mxu0 %v455
        %v574 = vpop.f32.mrf.mxu0
        %v575 = vadd.f32 %v367, %v574
        %576 = vmatmul.f32.gmra.mxu0 %v458
        %v577 = vpop.f32.mrf.mxu0
        %v578 = vadd.f32 %v367, %v577
        %579 = vmatmul.f32.gmra.mxu0 %v461
        %v580 = vpop.f32.mrf.mxu0
        %v581 = vadd.f32 %v367, %v580
        %582 = vmatmul.f32.gmra.mxu0 %v464
        %v583 = vpop.f32.mrf.mxu0
        %v584 = vadd.f32 %v367, %v583
        %585 = vmatmul.f32.gmra.mxu0 %v467
        %v586 = vpop.f32.mrf.mxu0
        %v587 = vadd.f32 %v367, %v586
        %588 = vmatmul.f32.gmra.mxu0 %v470
        %v589 = vpop.f32.mrf.mxu0
        %v590 = vadd.f32 %v367, %v589
        %591 = vmatmul.f32.gmra.mxu0 %v473
        %v592 = vpop.f32.mrf.mxu0
        %v593 = vadd.f32 %v367, %v592
        %594 = vmatmul.f32.gmra.mxu0 %v476
        %v595 = vpop.f32.mrf.mxu0
        %v596 = vadd.f32 %v367, %v595
        %597 = vdwg.mxu0
        %598 = vmatpush.msra.mxu0 0.0
        %599 = vmatpush.msra.mxu0 0.0
        %600 = vmatpush.msra.mxu0 0.0
        %601 = vmatpush.msra.mxu0 0.0
        %602 = vmatpush.msra.mxu0 0.0
        %603 = vmatpush.msra.mxu0 0.0
        %604 = vmatpush.msra.mxu0 0.0
        %605 = vmatpush.msra.mxu0 0.0
        %606 = vmatpush.msra.mxu0 0.0
        %607 = vmatpush.msra.mxu0 0.0
        %608 = vmatpush.msra.mxu0 0.0
        %609 = vmatpush.msra.mxu0 0.0
        %610 = vmatpush.msra.mxu0 0.0
        %611 = vmatpush.msra.mxu0 0.0
        %612 = vmatpush.msra.mxu0 0.0
        %613 = vmatpush.msra.mxu0 %v481
        %614 = vmatmul.f32.gmra.mxu0 %v383
        %v615 = vpop.f32.mrf.mxu0
        %v616 = vadd.f32 %v368, %v615
        %617 = vmatmul.f32.gmra.mxu0 %v386
        %v618 = vpop.f32.mrf.mxu0
        %v619 = vadd.f32 %v368, %v618
        %620 = vmatmul.f32.gmra.mxu0 %v389
        %v621 = vpop.f32.mrf.mxu0
        %v622 = vadd.f32 %v368, %v621
        %623 = vmatmul.f32.gmra.mxu0 %v392
        %v624 = vpop.f32.mrf.mxu0
        %v625 = vadd.f32 %v368, %v624
        %626 = vmatmul.f32.gmra.mxu0 %v395
        %v627 = vpop.f32.mrf.mxu0
        %v628 = vadd.f32 %v368, %v627
        %629 = vmatmul.f32.gmra.mxu0 %v398
        %v630 = vpop.f32.mrf.mxu0
        %v631 = vadd.f32 %v368, %v630
        %632 = vmatmul.f32.gmra.mxu0 %v401
        %v633 = vpop.f32.mrf.mxu0
        %v634 = vadd.f32 %v368, %v633
        %635 = vmatmul.f32.gmra.mxu0 %v404
        %v636 = vpop.f32.mrf.mxu0
        %v637 = vadd.f32 %v368, %v636
        %638 = vmatmul.f32.gmra.mxu0 %v407
        %v639 = vpop.f32.mrf.mxu0
        %v640 = vadd.f32 %v368, %v639
        %641 = vmatmul.f32.gmra.mxu0 %v410
        %v642 = vpop.f32.mrf.mxu0
        %v643 = vadd.f32 %v368, %v642
        %644 = vmatmul.f32.gmra.mxu0 %v413
        %v645 = vpop.f32.mrf.mxu0
        %v646 = vadd.f32 %v368, %v645
        %647 = vmatmul.f32.gmra.mxu0 %v416
        %v648 = vpop.f32.mrf.mxu0
        %v649 = vadd.f32 %v368, %v648
        %650 = vmatmul.f32.gmra.mxu0 %v419
        %v651 = vpop.f32.mrf.mxu0
        %v652 = vadd.f32 %v368, %v651
        %653 = vmatmul.f32.gmra.mxu0 %v422
        %v654 = vpop.f32.mrf.mxu0
        %v655 = vadd.f32 %v368, %v654
        %656 = vmatmul.f32.gmra.mxu0 %v425
        %v657 = vpop.f32.mrf.mxu0
        %v658 = vadd.f32 %v368, %v657
        %659 = vmatmul.f32.gmra.mxu0 %v428
        %v660 = vpop.f32.mrf.mxu0
        %v661 = vadd.f32 %v368, %v660
        %662 = vmatmul.f32.gmra.mxu0 %v431
        %v663 = vpop.f32.mrf.mxu0
        %v664 = vadd.f32 %v368, %v663
        %665 = vmatmul.f32.gmra.mxu0 %v434
        %v666 = vpop.f32.mrf.mxu0
        %v667 = vadd.f32 %v368, %v666
        %668 = vmatmul.f32.gmra.mxu0 %v437
        %v669 = vpop.f32.mrf.mxu0
        %v670 = vadd.f32 %v368, %v669
        %671 = vmatmul.f32.gmra.mxu0 %v440
        %v672 = vpop.f32.mrf.mxu0
        %v673 = vadd.f32 %v368, %v672
        %674 = vmatmul.f32.gmra.mxu0 %v443
        %v675 = vpop.f32.mrf.mxu0
        %v676 = vadd.f32 %v368, %v675
        %677 = vmatmul.f32.gmra.mxu0 %v446
        %v678 = vpop.f32.mrf.mxu0
        %v679 = vadd.f32 %v368, %v678
        %680 = vmatmul.f32.gmra.mxu0 %v449
        %v681 = vpop.f32.mrf.mxu0
        %v682 = vadd.f32 %v368, %v681
        %683 = vmatmul.f32.gmra.mxu0 %v452
        %v684 = vpop.f32.mrf.mxu0
        %v685 = vadd.f32 %v368, %v684
        %686 = vmatmul.f32.gmra.mxu0 %v455
        %v687 = vpop.f32.mrf.mxu0
        %v688 = vadd.f32 %v368, %v687
        %689 = vmatmul.f32.gmra.mxu0 %v458
        %v690 = vpop.f32.mrf.mxu0
        %v691 = vadd.f32 %v368, %v690
        %692 = vmatmul.f32.gmra.mxu0 %v461
        %v693 = vpop.f32.mrf.mxu0
        %v694 = vadd.f32 %v368, %v693
        %695 = vmatmul.f32.gmra.mxu0 %v464
        %v696 = vpop.f32.mrf.mxu0
        %v697 = vadd.f32 %v368, %v696
        %698 = vmatmul.f32.gmra.mxu0 %v467
        %v699 = vpop.f32.mrf.mxu0
        %v700 = vadd.f32 %v368, %v699
        %701 = vmatmul.f32.gmra.mxu0 %v470
        %v702 = vpop.f32.mrf.mxu0
        %v703 = vadd.f32 %v368, %v702
        %704 = vmatmul.f32.gmra.mxu0 %v473
        %v705 = vpop.f32.mrf.mxu0
        %v706 = vadd.f32 %v368, %v705
        %707 = vmatmul.f32.gmra.mxu0 %v476
        %v708 = vpop.f32.mrf.mxu0
        %v709 = vadd.f32 %v368, %v708
        %710 = vdwg.mxu0
        %711 = vmatpush.msra.mxu0 0.0
        %712 = vmatpush.msra.mxu0 0.0
        %713 = vmatpush.msra.mxu0 0.0
        %714 = vmatpush.msra.mxu0 0.0
        %715 = vmatpush.msra.mxu0 0.0
        %716 = vmatpush.msra.mxu0 0.0
        %717 = vmatpush.msra.mxu0 0.0
        %718 = vmatpush.msra.mxu0 0.0
        %719 = vmatpush.msra.mxu0 0.0
        %720 = vmatpush.msra.mxu0 0.0
        %721 = vmatpush.msra.mxu0 0.0
        %722 = vmatpush.msra.mxu0 0.0
        %723 = vmatpush.msra.mxu0 0.0
        %724 = vmatpush.msra.mxu0 0.0
        %725 = vmatpush.msra.mxu0 0.0
        %726 = vmatpush.msra.mxu0 %v483
        %727 = vmatmul.f32.gmra.mxu0 %v383
        %v728 = vpop.f32.mrf.mxu0
        %v729 = vadd.f32 %v369, %v728
        %730 = vmatmul.f32.gmra.mxu0 %v386
        %v731 = vpop.f32.mrf.mxu0
        %v732 = vadd.f32 %v369, %v731
        %733 = vmatmul.f32.gmra.mxu0 %v389
        %v734 = vpop.f32.mrf.mxu0
        %v735 = vadd.f32 %v369, %v734
        %736 = vmatmul.f32.gmra.mxu0 %v392
        %v737 = vpop.f32.mrf.mxu0
        %v738 = vadd.f32 %v369, %v737
        %739 = vmatmul.f32.gmra.mxu0 %v395
        %v740 = vpop.f32.mrf.mxu0
        %v741 = vadd.f32 %v369, %v740
        %742 = vmatmul.f32.gmra.mxu0 %v398
        %v743 = vpop.f32.mrf.mxu0
        %v744 = vadd.f32 %v369, %v743
        %745 = vmatmul.f32.gmra.mxu0 %v401
        %v746 = vpop.f32.mrf.mxu0
        %v747 = vadd.f32 %v369, %v746
        %748 = vmatmul.f32.gmra.mxu0 %v404
        %v749 = vpop.f32.mrf.mxu0
        %v750 = vadd.f32 %v369, %v749
        %751 = vmatmul.f32.gmra.mxu0 %v407
        %v752 = vpop.f32.mrf.mxu0
        %v753 = vadd.f32 %v369, %v752
        %754 = vmatmul.f32.gmra.mxu0 %v410
        %v755 = vpop.f32.mrf.mxu0
        %v756 = vadd.f32 %v369, %v755
        %757 = vmatmul.f32.gmra.mxu0 %v413
        %v758 = vpop.f32.mrf.mxu0
        %v759 = vadd.f32 %v369, %v758
        %760 = vmatmul.f32.gmra.mxu0 %v416
        %v761 = vpop.f32.mrf.mxu0
        %v762 = vadd.f32 %v369, %v761
        %763 = vmatmul.f32.gmra.mxu0 %v419
        %v764 = vpop.f32.mrf.mxu0
        %v765 = vadd.f32 %v369, %v764
        %766 = vmatmul.f32.gmra.mxu0 %v422
        %v767 = vpop.f32.mrf.mxu0
        %v768 = vadd.f32 %v369, %v767
        %769 = vmatmul.f32.gmra.mxu0 %v425
        %v770 = vpop.f32.mrf.mxu0
        %v771 = vadd.f32 %v369, %v770
        %772 = vmatmul.f32.gmra.mxu0 %v428
        %v773 = vpop.f32.mrf.mxu0
        %v774 = vadd.f32 %v369, %v773
        %775 = vmatmul.f32.gmra.mxu0 %v431
        %v776 = vpop.f32.mrf.mxu0
        %v777 = vadd.f32 %v369, %v776
        %778 = vmatmul.f32.gmra.mxu0 %v434
        %v779 = vpop.f32.mrf.mxu0
        %v780 = vadd.f32 %v369, %v779
        %781 = vmatmul.f32.gmra.mxu0 %v437
        %v782 = vpop.f32.mrf.mxu0
        %v783 = vadd.f32 %v369, %v782
        %784 = vmatmul.f32.gmra.mxu0 %v440
        %v785 = vpop.f32.mrf.mxu0
        %v786 = vadd.f32 %v369, %v785
        %787 = vmatmul.f32.gmra.mxu0 %v443
        %v788 = vpop.f32.mrf.mxu0
        %v789 = vadd.f32 %v369, %v788
        %790 = vmatmul.f32.gmra.mxu0 %v446
        %v791 = vpop.f32.mrf.mxu0
        %v792 = vadd.f32 %v369, %v791
        %793 = vmatmul.f32.gmra.mxu0 %v449
        %v794 = vpop.f32.mrf.mxu0
        %v795 = vadd.f32 %v369, %v794
        %796 = vmatmul.f32.gmra.mxu0 %v452
        %v797 = vpop.f32.mrf.mxu0
        %v798 = vadd.f32 %v369, %v797
        %799 = vmatmul.f32.gmra.mxu0 %v455
        %v800 = vpop.f32.mrf.mxu0
        %v801 = vadd.f32 %v369, %v800
        %802 = vmatmul.f32.gmra.mxu0 %v458
        %v803 = vpop.f32.mrf.mxu0
        %v804 = vadd.f32 %v369, %v803
        %805 = vmatmul.f32.gmra.mxu0 %v461
        %v806 = vpop.f32.mrf.mxu0
        %v807 = vadd.f32 %v369, %v806
        %808 = vmatmul.f32.gmra.mxu0 %v464
        %v809 = vpop.f32.mrf.mxu0
        %v810 = vadd.f32 %v369, %v809
        %811 = vmatmul.f32.gmra.mxu0 %v467
        %v812 = vpop.f32.mrf.mxu0
        %v813 = vadd.f32 %v369, %v812
        %814 = vmatmul.f32.gmra.mxu0 %v470
        %v815 = vpop.f32.mrf.mxu0
        %v816 = vadd.f32 %v369, %v815
        %817 = vmatmul.f32.gmra.mxu0 %v473
        %v818 = vpop.f32.mrf.mxu0
        %v819 = vadd.f32 %v369, %v818
        %820 = vmatmul.f32.gmra.mxu0 %v476
        %v821 = vpop.f32.mrf.mxu0
        %v822 = vadd.f32 %v369, %v821
        %823 = vdwg.mxu0
        %v824 = vmax.f32 %v503, 0.0
        %v825 = vmax.f32 %v616, 0.0
        %v826 = vmax.f32 %v729, 0.0
        %v827 = vmax.f32 %v506, 0.0
        %v828 = vmax.f32 %v619, 0.0
        %v829 = vmax.f32 %v732, 0.0
        %v830 = vmax.f32 %v509, 0.0
        %v831 = vmax.f32 %v622, 0.0
        %v832 = vmax.f32 %v735, 0.0
        %v833 = vmax.f32 %v512, 0.0
        %v834 = vmax.f32 %v625, 0.0
        %v835 = vmax.f32 %v738, 0.0
        %v836 = vmax.f32 %v515, 0.0
        %v837 = vmax.f32 %v628, 0.0
        %v838 = vmax.f32 %v741, 0.0
        %v839 = vmax.f32 %v518, 0.0
        %v840 = vmax.f32 %v631, 0.0
        %v841 = vmax.f32 %v744, 0.0
        %v842 = vmax.f32 %v521, 0.0
        %v843 = vmax.f32 %v634, 0.0
        %v844 = vmax.f32 %v747, 0.0
        %v845 = vmax.f32 %v524, 0.0
        %v846 = vmax.f32 %v637, 0.0
        %v847 = vmax.f32 %v750, 0.0
        %v848 = vmax.f32 %v527, 0.0
        %v849 = vmax.f32 %v640, 0.0
        %v850 = vmax.f32 %v753, 0.0
        %v851 = vmax.f32 %v530, 0.0
        %v852 = vmax.f32 %v643, 0.0
        %v853 = vmax.f32 %v756, 0.0
        %v854 = vmax.f32 %v533, 0.0
        %v855 = vmax.f32 %v646, 0.0
        %v856 = vmax.f32 %v759, 0.0
        %v857 = vmax.f32 %v536, 0.0
        %v858 = vmax.f32 %v649, 0.0
        %v859 = vmax.f32 %v762, 0.0
        %v860 = vmax.f32 %v539, 0.0
        %v861 = vmax.f32 %v652, 0.0
        %v862 = vmax.f32 %v765, 0.0
        %v863 = vmax.f32 %v542, 0.0
        %v864 = vmax.f32 %v655, 0.0
        %v865 = vmax.f32 %v768, 0.0
        %v866 = vmax.f32 %v545, 0.0
        %v867 = vmax.f32 %v658, 0.0
        %v868 = vmax.f32 %v771, 0.0
        %v869 = vmax.f32 %v548, 0.0
        %v870 = vmax.f32 %v661, 0.0
        %v871 = vmax.f32 %v774, 0.0
        %v872 = vmax.f32 %v551, 0.0
        %v873 = vmax.f32 %v664, 0.0
        %v874 = vmax.f32 %v777, 0.0
        %v875 = vmax.f32 %v554, 0.0
        %v876 = vmax.f32 %v667, 0.0
        %v877 = vmax.f32 %v780, 0.0
        %v878 = vmax.f32 %v557, 0.0
        %v879 = vmax.f32 %v670, 0.0
        %v880 = vmax.f32 %v783, 0.0
        %v881 = vmax.f32 %v560, 0.0
        %v882 = vmax.f32 %v673, 0.0
        %v883 = vmax.f32 %v786, 0.0
        %v884 = vmax.f32 %v563, 0.0
        %v885 = vmax.f32 %v676, 0.0
        %v886 = vmax.f32 %v789, 0.0
        %v887 = vmax.f32 %v566, 0.0
        %v888 = vmax.f32 %v679, 0.0
        %v889 = vmax.f32 %v792, 0.0
        %v890 = vmax.f32 %v569, 0.0
        %v891 = vmax.f32 %v682, 0.0
        %v892 = vmax.f32 %v795, 0.0
        %v893 = vmax.f32 %v572, 0.0
        %v894 = vmax.f32 %v685, 0.0
        %v895 = vmax.f32 %v798, 0.0
        %v896 = vmax.f32 %v575, 0.0
        %v897 = vmax.f32 %v688, 0.0
        %v898 = vmax.f32 %v801, 0.0
        %v899 = vmax.f32 %v578, 0.0
        %v900 = vmax.f32 %v691, 0.0
        %v901 = vmax.f32 %v804, 0.0
        %v902 = vmax.f32 %v581, 0.0
        %v903 = vmax.f32 %v694, 0.0
        %v904 = vmax.f32 %v807, 0.0
        %v905 = vmax.f32 %v584, 0.0
        %v906 = vmax.f32 %v697, 0.0
        %v907 = vmax.f32 %v810, 0.0
        %v908 = vmax.f32 %v587, 0.0
        %v909 = vmax.f32 %v700, 0.0
        %v910 = vmax.f32 %v813, 0.0
        %v911 = vmax.f32 %v590, 0.0
        %v912 = vmax.f32 %v703, 0.0
        %v913 = vmax.f32 %v816, 0.0
        %v914 = vmax.f32 %v593, 0.0
        %v915 = vmax.f32 %v706, 0.0
        %v916 = vmax.f32 %v819, 0.0
        %v917 = vmax.f32 %v596, 0.0
        %v918 = vmax.f32 %v709, 0.0
        %v919 = vmax.f32 %v822, 0.0
        %s920 = scalar_lea.vmem [#allocation2], 24
        %921 = vst.msk [vmem:[%s920 + $0x1] sm:$0xff] %vm381, %v825
        %922 = vst.msk [vmem:[%s920 + $0x9] sm:$0xff] %vm381, %v828
        %923 = vst.msk [vmem:[%s920 + $0x19] sm:$0xff] %vm381, %v831
        %924 = vst.msk [vmem:[%s920 + $0x21] sm:$0xff] %vm381, %v834
        %925 = vst.msk [vmem:[%s920 + $0x31] sm:$0xff] %vm381, %v837
        %926 = vst.msk [vmem:[%s920 + $0x39] sm:$0xff] %vm381, %v840
        %927 = vst.msk [vmem:[%s920 + $0x49] sm:$0xff] %vm381, %v843
        %928 = vst.msk [vmem:[%s920 + $0x51] sm:$0xff] %vm381, %v846
        %929 = vst.msk [vmem:[%s920 + $0x61] sm:$0xff] %vm381, %v849
        %930 = vst.msk [vmem:[%s920 + $0x69] sm:$0xff] %vm381, %v852
        %931 = vst.msk [vmem:[%s920 + $0x79] sm:$0xff] %vm381, %v855
        %932 = vst.msk [vmem:[%s920 + $0x81] sm:$0xff] %vm381, %v858
        %933 = vst.msk [vmem:[%s920 + $0x91] sm:$0xff] %vm381, %v861
        %934 = vst.msk [vmem:[%s920 + $0x99] sm:$0xff] %vm381, %v864
        %935 = vst.msk [vmem:[%s920 + $0xa9] sm:$0xff] %vm381, %v867
        %936 = vst.msk [vmem:[%s920 + $0xb1] sm:$0xff] %vm381, %v870
        %937 = vst.msk [vmem:[%s920 + $0xc1] sm:$0xff] %vm381, %v873
        %938 = vst.msk [vmem:[%s920 + $0xc9] sm:$0xff] %vm381, %v876
        %939 = vst.msk [vmem:[%s920 + $0xd9] sm:$0xff] %vm381, %v879
        %940 = vst.msk [vmem:[%s920 + $0xe1] sm:$0xff] %vm381, %v882
        %941 = vst.msk [vmem:[%s920 + $0xf1] sm:$0xff] %vm381, %v885
        %942 = vst.msk [vmem:[%s920 + $0xf9] sm:$0xff] %vm381, %v888
        %943 = vst.msk [vmem:[%s920 + $0x109] sm:$0xff] %vm381, %v891
        %944 = vst.msk [vmem:[%s920 + $0x111] sm:$0xff] %vm381, %v894
        %945 = vst.msk [vmem:[%s920 + $0x121] sm:$0xff] %vm381, %v897
        %946 = vst.msk [vmem:[%s920 + $0x129] sm:$0xff] %vm381, %v900
        %947 = vst.msk [vmem:[%s920 + $0x139] sm:$0xff] %vm381, %v903
        %948 = vst.msk [vmem:[%s920 + $0x141] sm:$0xff] %vm381, %v906
        %949 = vst.msk [vmem:[%s920 + $0x151] sm:$0xff] %vm381, %v909
        %950 = vst.msk [vmem:[%s920 + $0x159] sm:$0xff] %vm381, %v912
        %951 = vst.msk [vmem:[%s920 + $0x169] sm:$0xff] %vm381, %v915
        %952 = vst.msk [vmem:[%s920 + $0x171] sm:$0xff] %vm381, %v918
        %953 = vst.msk [vmem:[#allocation2] sm:$0xff] %vm381, 0.0
        %954 = vst.msk [vmem:[#allocation2 + $0x8] sm:$0xff] %vm381, 0.0
        %vm955 = vcmask 25600
        %956 = vst.msk [vmem:[#allocation2 + $0x10] sm:$0x3] %vm955, 0.0
        %s957 = scalar_lea.vmem [#allocation2], 408
        %958 = vst.msk [vmem:[%s957] sm:$0xff] %vm381, 0.0
        %959 = vst.msk [vmem:[%s957 + $0x8] sm:$0xff] %vm381, 0.0
        %960 = vst.msk [vmem:[%s957 + $0x10] sm:$0x3] %vm955, 0.0
        %vm961 = vcmask 24576
        %962 = vst.msk [vmem:[%s920] sm:$0x1] %vm961, 0.0
        %963 = vst.msk [vmem:[%s920 + $0x18] sm:$0x1] %vm961, 0.0
        %964 = vst.msk [vmem:[%s920 + $0x30] sm:$0x1] %vm961, 0.0
        %965 = vst.msk [vmem:[%s920 + $0x48] sm:$0x1] %vm961, 0.0
        %966 = vst.msk [vmem:[%s920 + $0x60] sm:$0x1] %vm961, 0.0
        %967 = vst.msk [vmem:[%s920 + $0x78] sm:$0x1] %vm961, 0.0
        %968 = vst.msk [vmem:[%s920 + $0x90] sm:$0x1] %vm961, 0.0
        %969 = vst.msk [vmem:[%s920 + $0xa8] sm:$0x1] %vm961, 0.0
        %970 = vst.msk [vmem:[%s920 + $0xc0] sm:$0x1] %vm961, 0.0
        %971 = vst.msk [vmem:[%s920 + $0xd8] sm:$0x1] %vm961, 0.0
        %972 = vst.msk [vmem:[%s920 + $0xf0] sm:$0x1] %vm961, 0.0
        %973 = vst.msk [vmem:[%s920 + $0x108] sm:$0x1] %vm961, 0.0
        %974 = vst.msk [vmem:[%s920 + $0x120] sm:$0x1] %vm961, 0.0
        %975 = vst.msk [vmem:[%s920 + $0x138] sm:$0x1] %vm961, 0.0
        %976 = vst.msk [vmem:[%s920 + $0x150] sm:$0x1] %vm961, 0.0
        %977 = vst.msk [vmem:[%s920 + $0x168] sm:$0x1] %vm961, 0.0
        %978 = vst.msk [vmem:[%s920 + $0x11] sm:$0x1] %vm961, 0.0
        %979 = vst.msk [vmem:[%s920 + $0x29] sm:$0x1] %vm961, 0.0
        %980 = vst.msk [vmem:[%s920 + $0x41] sm:$0x1] %vm961, 0.0
        %981 = vst.msk [vmem:[%s920 + $0x59] sm:$0x1] %vm961, 0.0
        %982 = vst.msk [vmem:[%s920 + $0x71] sm:$0x1] %vm961, 0.0
        %983 = vst.msk [vmem:[%s920 + $0x89] sm:$0x1] %vm961, 0.0
        %984 = vst.msk [vmem:[%s920 + $0xa1] sm:$0x1] %vm961, 0.0
        %985 = vst.msk [vmem:[%s920 + $0xb9] sm:$0x1] %vm961, 0.0
        %986 = vst.msk [vmem:[%s920 + $0xd1] sm:$0x1] %vm961, 0.0
        %987 = vst.msk [vmem:[%s920 + $0xe9] sm:$0x1] %vm961, 0.0
        %988 = vst.msk [vmem:[%s920 + $0x101] sm:$0x1] %vm961, 0.0
        %989 = vst.msk [vmem:[%s920 + $0x119] sm:$0x1] %vm961, 0.0
        %990 = vst.msk [vmem:[%s920 + $0x131] sm:$0x1] %vm961, 0.0
        %991 = vst.msk [vmem:[%s920 + $0x149] sm:$0x1] %vm961, 0.0
        %992 = vst.msk [vmem:[%s920 + $0x161] sm:$0x1] %vm961, 0.0
        %993 = vst.msk [vmem:[%s920 + $0x179] sm:$0x1] %vm961, 0.0
        %v994 = vld [vmem:[#allocation2] sm:$0xff]
        %v995 = vld [vmem:[#allocation2 + $0x8] sm:$0xff]
        %v996 = vld [vmem:[#allocation2 + $0x18] sm:$0xff]
        %v997 = vld [vmem:[#allocation2 + $0x20] sm:$0xff]
        %v998 = vld [vmem:[#allocation2 + $0x30] sm:$0xff]
        %v999 = vld [vmem:[#allocation2 + $0x38] sm:$0xff]
        %v1000 = vld [vmem:[#allocation2 + $0x48] sm:$0xff]
        %v1001 = vld [vmem:[#allocation2 + $0x50] sm:$0xff]
        %v1002 = vld [vmem:[#allocation2 + $0x60] sm:$0xff]
        %v1003 = vld [vmem:[#allocation2 + $0x68] sm:$0xff]
        %v1004 = vld [vmem:[#allocation2 + $0x78] sm:$0xff]
        %v1005 = vld [vmem:[#allocation2 + $0x80] sm:$0xff]
        %v1006 = vld [vmem:[#allocation2 + $0x90] sm:$0xff]
        %v1007 = vld [vmem:[#allocation2 + $0x98] sm:$0xff]
        %v1008 = vld [vmem:[#allocation2 + $0xa8] sm:$0xff]
        %v1009 = vld [vmem:[#allocation2 + $0xb0] sm:$0xff]
        %v1010 = vld [vmem:[#allocation2 + $0xc0] sm:$0xff]
        %v1011 = vld [vmem:[#allocation2 + $0xc8] sm:$0xff]
        %v1012 = vld [vmem:[#allocation2 + $0xd8] sm:$0xff]
        %v1013 = vld [vmem:[#allocation2 + $0xe0] sm:$0xff]
        %v1014 = vld [vmem:[#allocation2 + $0xf0] sm:$0xff]
        %v1015 = vld [vmem:[#allocation2 + $0xf8] sm:$0xff]
        %v1016 = vld [vmem:[#allocation2 + $0x108] sm:$0xff]
        %v1017 = vld [vmem:[#allocation2 + $0x110] sm:$0xff]
        %v1018 = vld [vmem:[#allocation2 + $0x120] sm:$0xff]
        %v1019 = vld [vmem:[#allocation2 + $0x128] sm:$0xff]
        %v1020 = vld [vmem:[#allocation2 + $0x138] sm:$0xff]
        %v1021 = vld [vmem:[#allocation2 + $0x140] sm:$0xff]
        %v1022 = vld [vmem:[#allocation2 + $0x150] sm:$0xff]
        %v1023 = vld [vmem:[#allocation2 + $0x158] sm:$0xff]
        %v1024 = vld [vmem:[#allocation2 + $0x168] sm:$0xff]
        %v1025 = vld [vmem:[#allocation2 + $0x170] sm:$0xff]
        %v1026 = vld [vmem:[#allocation2 + $0x1] sm:$0xff]
        %v1027 = vld [vmem:[#allocation2 + $0x9] sm:$0xff]
        %v1028 = vld [vmem:[#allocation2 + $0x19] sm:$0xff]
        %v1029 = vld [vmem:[#allocation2 + $0x21] sm:$0xff]
        %v1030 = vld [vmem:[#allocation2 + $0x31] sm:$0xff]
        %v1031 = vld [vmem:[#allocation2 + $0x39] sm:$0xff]
        %v1032 = vld [vmem:[#allocation2 + $0x49] sm:$0xff]
        %v1033 = vld [vmem:[#allocation2 + $0x51] sm:$0xff]
        %v1034 = vld [vmem:[#allocation2 + $0x61] sm:$0xff]
        %v1035 = vld [vmem:[#allocation2 + $0x69] sm:$0xff]
        %v1036 = vld [vmem:[#allocation2 + $0x79] sm:$0xff]
        %v1037 = vld [vmem:[#allocation2 + $0x81] sm:$0xff]
        %v1038 = vld [vmem:[#allocation2 + $0x91] sm:$0xff]
        %v1039 = vld [vmem:[#allocation2 + $0x99] sm:$0xff]
        %v1040 = vld [vmem:[#allocation2 + $0xa9] sm:$0xff]
        %v1041 = vld [vmem:[#allocation2 + $0xb1] sm:$0xff]
        %v1042 = vld [vmem:[#allocation2 + $0xc1] sm:$0xff]
        %v1043 = vld [vmem:[#allocation2 + $0xc9] sm:$0xff]
        %v1044 = vld [vmem:[#allocation2 + $0xd9] sm:$0xff]
        %v1045 = vld [vmem:[#allocation2 + $0xe1] sm:$0xff]
        %v1046 = vld [vmem:[#allocation2 + $0xf1] sm:$0xff]
        %v1047 = vld [vmem:[#allocation2 + $0xf9] sm:$0xff]
        %v1048 = vld [vmem:[#allocation2 + $0x109] sm:$0xff]
        %v1049 = vld [vmem:[#allocation2 + $0x111] sm:$0xff]
        %v1050 = vld [vmem:[#allocation2 + $0x121] sm:$0xff]
        %v1051 = vld [vmem:[#allocation2 + $0x129] sm:$0xff]
        %v1052 = vld [vmem:[#allocation2 + $0x139] sm:$0xff]
        %v1053 = vld [vmem:[#allocation2 + $0x141] sm:$0xff]
        %v1054 = vld [vmem:[#allocation2 + $0x151] sm:$0xff]
        %v1055 = vld [vmem:[#allocation2 + $0x159] sm:$0xff]
        %v1056 = vld [vmem:[#allocation2 + $0x169] sm:$0xff]
        %v1057 = vld [vmem:[#allocation2 + $0x171] sm:$0xff]
        %v1058 = vld [vmem:[#allocation2 + $0x2] sm:$0xff]
        %v1059 = vld [vmem:[#allocation2 + $0xa] sm:$0xff]
        %v1060 = vld [vmem:[#allocation2 + $0x1a] sm:$0xff]
        %v1061 = vld [vmem:[#allocation2 + $0x22] sm:$0xff]
        %v1062 = vld [vmem:[#allocation2 + $0x32] sm:$0xff]
        %v1063 = vld [vmem:[#allocation2 + $0x3a] sm:$0xff]
        %v1064 = vld [vmem:[#allocation2 + $0x4a] sm:$0xff]
        %v1065 = vld [vmem:[#allocation2 + $0x52] sm:$0xff]
        %v1066 = vld [vmem:[#allocation2 + $0x62] sm:$0xff]
        %v1067 = vld [vmem:[#allocation2 + $0x6a] sm:$0xff]
        %v1068 = vld [vmem:[#allocation2 + $0x7a] sm:$0xff]
        %v1069 = vld [vmem:[#allocation2 + $0x82] sm:$0xff]
        %v1070 = vld [vmem:[#allocation2 + $0x92] sm:$0xff]
        %v1071 = vld [vmem:[#allocation2 + $0x9a] sm:$0xff]
        %v1072 = vld [vmem:[#allocation2 + $0xaa] sm:$0xff]
        %v1073 = vld [vmem:[#allocation2 + $0xb2] sm:$0xff]
        %v1074 = vld [vmem:[#allocation2 + $0xc2] sm:$0xff]
        %v1075 = vld [vmem:[#allocation2 + $0xca] sm:$0xff]
        %v1076 = vld [vmem:[#allocation2 + $0xda] sm:$0xff]
        %v1077 = vld [vmem:[#allocation2 + $0xe2] sm:$0xff]
        %v1078 = vld [vmem:[#allocation2 + $0xf2] sm:$0xff]
        %v1079 = vld [vmem:[#allocation2 + $0xfa] sm:$0xff]
        %v1080 = vld [vmem:[#allocation2 + $0x10a] sm:$0xff]
        %v1081 = vld [vmem:[#allocation2 + $0x112] sm:$0xff]
        %v1082 = vld [vmem:[#allocation2 + $0x122] sm:$0xff]
        %v1083 = vld [vmem:[#allocation2 + $0x12a] sm:$0xff]
        %v1084 = vld [vmem:[#allocation2 + $0x13a] sm:$0xff]
        %v1085 = vld [vmem:[#allocation2 + $0x142] sm:$0xff]
        %v1086 = vld [vmem:[#allocation2 + $0x152] sm:$0xff]
        %v1087 = vld [vmem:[#allocation2 + $0x15a] sm:$0xff]
        %v1088 = vld [vmem:[#allocation2 + $0x16a] sm:$0xff]
        %v1089 = vld [vmem:[#allocation2 + $0x172] sm:$0xff]
        %1122 = vrot.lane.b32.xlu0 %v1026, 4
        %v1123 = vpop.permute.xlu0 %1122
        %1124 = vrot.lane.b32.xlu0 %v1027, 4
        %v1125 = vpop.permute.xlu0 %1124
        %1126 = vrot.lane.b32.xlu0 %v1028, 4
        %v1127 = vpop.permute.xlu0 %1126
        %1128 = vrot.lane.b32.xlu0 %v1029, 4
        %v1129 = vpop.permute.xlu0 %1128
        %1130 = vrot.lane.b32.xlu0 %v1030, 4
        %v1131 = vpop.permute.xlu0 %1130
        %1132 = vrot.lane.b32.xlu0 %v1031, 4
        %v1133 = vpop.permute.xlu0 %1132
        %1134 = vrot.lane.b32.xlu0 %v1032, 4
        %v1135 = vpop.permute.xlu0 %1134
        %1136 = vrot.lane.b32.xlu0 %v1033, 4
        %v1137 = vpop.permute.xlu0 %1136
        %1138 = vrot.lane.b32.xlu0 %v1034, 4
        %v1139 = vpop.permute.xlu0 %1138
        %1140 = vrot.lane.b32.xlu0 %v1035, 4
        %v1141 = vpop.permute.xlu0 %1140
        %1142 = vrot.lane.b32.xlu0 %v1036, 4
        %v1143 = vpop.permute.xlu0 %1142
        %1144 = vrot.lane.b32.xlu0 %v1037, 4
        %v1145 = vpop.permute.xlu0 %1144
        %1146 = vrot.lane.b32.xlu0 %v1038, 4
        %v1147 = vpop.permute.xlu0 %1146
        %1148 = vrot.lane.b32.xlu0 %v1039, 4
        %v1149 = vpop.permute.xlu0 %1148
        %1150 = vrot.lane.b32.xlu0 %v1040, 4
        %v1151 = vpop.permute.xlu0 %1150
        %1152 = vrot.lane.b32.xlu0 %v1041, 4
        %v1153 = vpop.permute.xlu0 %1152
        %1154 = vrot.lane.b32.xlu0 %v1042, 4
        %v1155 = vpop.permute.xlu0 %1154
        %1156 = vrot.lane.b32.xlu0 %v1043, 4
        %v1157 = vpop.permute.xlu0 %1156
        %1158 = vrot.lane.b32.xlu0 %v1044, 4
        %v1159 = vpop.permute.xlu0 %1158
        %1160 = vrot.lane.b32.xlu0 %v1045, 4
        %v1161 = vpop.permute.xlu0 %1160
        %1162 = vrot.lane.b32.xlu0 %v1046, 4
        %v1163 = vpop.permute.xlu0 %1162
        %1164 = vrot.lane.b32.xlu0 %v1047, 4
        %v1165 = vpop.permute.xlu0 %1164
        %1166 = vrot.lane.b32.xlu0 %v1048, 4
        %v1167 = vpop.permute.xlu0 %1166
        %1168 = vrot.lane.b32.xlu0 %v1049, 4
        %v1169 = vpop.permute.xlu0 %1168
        %1170 = vrot.lane.b32.xlu0 %v1050, 4
        %v1171 = vpop.permute.xlu0 %1170
        %1172 = vrot.lane.b32.xlu0 %v1051, 4
        %v1173 = vpop.permute.xlu0 %1172
        %1174 = vrot.lane.b32.xlu0 %v1052, 4
        %v1175 = vpop.permute.xlu0 %1174
        %1176 = vrot.lane.b32.xlu0 %v1053, 4
        %v1177 = vpop.permute.xlu0 %1176
        %1178 = vrot.lane.b32.xlu0 %v1054, 4
        %v1179 = vpop.permute.xlu0 %1178
        %1180 = vrot.lane.b32.xlu0 %v1055, 4
        %v1181 = vpop.permute.xlu0 %1180
        %1182 = vrot.lane.b32.xlu0 %v1056, 4
        %v1183 = vpop.permute.xlu0 %1182
        %1184 = vrot.lane.b32.xlu0 %v1057, 4
        %v1185 = vpop.permute.xlu0 %1184
        %1250 = vrot.lane.b32.xlu0 %v1058, 8
        %v1251 = vpop.permute.xlu0 %1250
        %1252 = vrot.lane.b32.xlu0 %v1059, 8
        %v1253 = vpop.permute.xlu0 %1252
        %1254 = vrot.lane.b32.xlu0 %v1060, 8
        %v1255 = vpop.permute.xlu0 %1254
        %1256 = vrot.lane.b32.xlu0 %v1061, 8
        %v1257 = vpop.permute.xlu0 %1256
        %1258 = vrot.lane.b32.xlu0 %v1062, 8
        %v1259 = vpop.permute.xlu0 %1258
        %1260 = vrot.lane.b32.xlu0 %v1063, 8
        %v1261 = vpop.permute.xlu0 %1260
        %1262 = vrot.lane.b32.xlu0 %v1064, 8
        %v1263 = vpop.permute.xlu0 %1262
        %1264 = vrot.lane.b32.xlu0 %v1065, 8
        %v1265 = vpop.permute.xlu0 %1264
        %1266 = vrot.lane.b32.xlu0 %v1066, 8
        %v1267 = vpop.permute.xlu0 %1266
        %1268 = vrot.lane.b32.xlu0 %v1067, 8
        %v1269 = vpop.permute.xlu0 %1268
        %1270 = vrot.lane.b32.xlu0 %v1068, 8
        %v1271 = vpop.permute.xlu0 %1270
        %1272 = vrot.lane.b32.xlu0 %v1069, 8
        %v1273 = vpop.permute.xlu0 %1272
        %1274 = vrot.lane.b32.xlu0 %v1070, 8
        %v1275 = vpop.permute.xlu0 %1274
        %1276 = vrot.lane.b32.xlu0 %v1071, 8
        %v1277 = vpop.permute.xlu0 %1276
        %1278 = vrot.lane.b32.xlu0 %v1072, 8
        %v1279 = vpop.permute.xlu0 %1278
        %1280 = vrot.lane.b32.xlu0 %v1073, 8
        %v1281 = vpop.permute.xlu0 %1280
        %1282 = vrot.lane.b32.xlu0 %v1074, 8
        %v1283 = vpop.permute.xlu0 %1282
        %1284 = vrot.lane.b32.xlu0 %v1075, 8
        %v1285 = vpop.permute.xlu0 %1284
        %1286 = vrot.lane.b32.xlu0 %v1076, 8
        %v1287 = vpop.permute.xlu0 %1286
        %1288 = vrot.lane.b32.xlu0 %v1077, 8
        %v1289 = vpop.permute.xlu0 %1288
        %1290 = vrot.lane.b32.xlu0 %v1078, 8
        %v1291 = vpop.permute.xlu0 %1290
        %1292 = vrot.lane.b32.xlu0 %v1079, 8
        %v1293 = vpop.permute.xlu0 %1292
        %1294 = vrot.lane.b32.xlu0 %v1080, 8
        %v1295 = vpop.permute.xlu0 %1294
        %1296 = vrot.lane.b32.xlu0 %v1081, 8
        %v1297 = vpop.permute.xlu0 %1296
        %1298 = vrot.lane.b32.xlu0 %v1082, 8
        %v1299 = vpop.permute.xlu0 %1298
        %1300 = vrot.lane.b32.xlu0 %v1083, 8
        %v1301 = vpop.permute.xlu0 %1300
        %1302 = vrot.lane.b32.xlu0 %v1084, 8
        %v1303 = vpop.permute.xlu0 %1302
        %1304 = vrot.lane.b32.xlu0 %v1085, 8
        %v1305 = vpop.permute.xlu0 %1304
        %1306 = vrot.lane.b32.xlu0 %v1086, 8
        %v1307 = vpop.permute.xlu0 %1306
        %1308 = vrot.lane.b32.xlu0 %v1087, 8
        %v1309 = vpop.permute.xlu0 %1308
        %1310 = vrot.lane.b32.xlu0 %v1088, 8
        %v1311 = vpop.permute.xlu0 %1310
        %1312 = vrot.lane.b32.xlu0 %v1089, 8
        %v1313 = vpop.permute.xlu0 %1312
        %v1346 = vsel %vm381, %v994, %v1123
        %v1347 = vsel %vm381, %v995, %v1125
        %v1348 = vsel %vm381, %v996, %v1127
        %v1349 = vsel %vm381, %v997, %v1129
        %v1350 = vsel %vm381, %v998, %v1131
        %v1351 = vsel %vm381, %v999, %v1133
        %v1352 = vsel %vm381, %v1000, %v1135
        %v1353 = vsel %vm381, %v1001, %v1137
        %v1354 = vsel %vm381, %v1002, %v1139
        %v1355 = vsel %vm381, %v1003, %v1141
        %v1356 = vsel %vm381, %v1004, %v1143
        %v1357 = vsel %vm381, %v1005, %v1145
        %v1358 = vsel %vm381, %v1006, %v1147
        %v1359 = vsel %vm381, %v1007, %v1149
        %v1360 = vsel %vm381, %v1008, %v1151
        %v1361 = vsel %vm381, %v1009, %v1153
        %v1362 = vsel %vm381, %v1010, %v1155
        %v1363 = vsel %vm381, %v1011, %v1157
        %v1364 = vsel %vm381, %v1012, %v1159
        %v1365 = vsel %vm381, %v1013, %v1161
        %v1366 = vsel %vm381, %v1014, %v1163
        %v1367 = vsel %vm381, %v1015, %v1165
        %v1368 = vsel %vm381, %v1016, %v1167
        %v1369 = vsel %vm381, %v1017, %v1169
        %v1370 = vsel %vm381, %v1018, %v1171
        %v1371 = vsel %vm381, %v1019, %v1173
        %v1372 = vsel %vm381, %v1020, %v1175
        %v1373 = vsel %vm381, %v1021, %v1177
        %v1374 = vsel %vm381, %v1022, %v1179
        %v1375 = vsel %vm381, %v1023, %v1181
        %v1376 = vsel %vm381, %v1024, %v1183
        %v1377 = vsel %vm381, %v1025, %v1185
        %vm1378 = vcmask 64512
        %v1379 = vsel %vm1378, %v1346, %v1251
        %v1380 = vsel %vm1378, %v1347, %v1253
        %v1381 = vsel %vm1378, %v1348, %v1255
        %v1382 = vsel %vm1378, %v1349, %v1257
        %v1383 = vsel %vm1378, %v1350, %v1259
        %v1384 = vsel %vm1378, %v1351, %v1261
        %v1385 = vsel %vm1378, %v1352, %v1263
        %v1386 = vsel %vm1378, %v1353, %v1265
        %v1387 = vsel %vm1378, %v1354, %v1267
        %v1388 = vsel %vm1378, %v1355, %v1269
        %v1389 = vsel %vm1378, %v1356, %v1271
        %v1390 = vsel %vm1378, %v1357, %v1273
        %v1391 = vsel %vm1378, %v1358, %v1275
        %v1392 = vsel %vm1378, %v1359, %v1277
        %v1393 = vsel %vm1378, %v1360, %v1279
        %v1394 = vsel %vm1378, %v1361, %v1281
        %v1395 = vsel %vm1378, %v1362, %v1283
        %v1396 = vsel %vm1378, %v1363, %v1285
        %v1397 = vsel %vm1378, %v1364, %v1287
        %v1398 = vsel %vm1378, %v1365, %v1289
        %v1399 = vsel %vm1378, %v1366, %v1291
        %v1400 = vsel %vm1378, %v1367, %v1293
        %v1401 = vsel %vm1378, %v1368, %v1295
        %v1402 = vsel %vm1378, %v1369, %v1297
        %v1403 = vsel %vm1378, %v1370, %v1299
        %v1404 = vsel %vm1378, %v1371, %v1301
        %v1405 = vsel %vm1378, %v1372, %v1303
        %v1406 = vsel %vm1378, %v1373, %v1305
        %v1407 = vsel %vm1378, %v1374, %v1307
        %v1408 = vsel %vm1378, %v1375, %v1309
        %v1409 = vsel %vm1378, %v1376, %v1311
        %v1410 = vsel %vm1378, %v1377, %v1313
        %v1411 = vld [vmem:[%s3] sm:$0xff]
        %v1412 = vld [vmem:[%s3 + $0x8] sm:$0xf]
        %v1413 = vld [vmem:[%s920] sm:$0xff]
        %v1414 = vld [vmem:[%s920 + $0x8] sm:$0xff]
        %v1415 = vld [vmem:[%s920 + $0x18] sm:$0xff]
        %v1416 = vld [vmem:[%s920 + $0x20] sm:$0xff]
        %v1417 = vld [vmem:[%s920 + $0x30] sm:$0xff]
        %v1418 = vld [vmem:[%s920 + $0x38] sm:$0xff]
        %v1419 = vld [vmem:[%s920 + $0x48] sm:$0xff]
        %v1420 = vld [vmem:[%s920 + $0x50] sm:$0xff]
        %v1421 = vld [vmem:[%s920 + $0x60] sm:$0xff]
        %v1422 = vld [vmem:[%s920 + $0x68] sm:$0xff]
        %v1423 = vld [vmem:[%s920 + $0x78] sm:$0xff]
        %v1424 = vld [vmem:[%s920 + $0x80] sm:$0xff]
        %v1425 = vld [vmem:[%s920 + $0x90] sm:$0xff]
        %v1426 = vld [vmem:[%s920 + $0x98] sm:$0xff]
        %v1427 = vld [vmem:[%s920 + $0xa8] sm:$0xff]
        %v1428 = vld [vmem:[%s920 + $0xb0] sm:$0xff]
        %v1429 = vld [vmem:[%s920 + $0xc0] sm:$0xff]
        %v1430 = vld [vmem:[%s920 + $0xc8] sm:$0xff]
        %v1431 = vld [vmem:[%s920 + $0xd8] sm:$0xff]
        %v1432 = vld [vmem:[%s920 + $0xe0] sm:$0xff]
        %v1433 = vld [vmem:[%s920 + $0xf0] sm:$0xff]
        %v1434 = vld [vmem:[%s920 + $0xf8] sm:$0xff]
        %v1435 = vld [vmem:[%s920 + $0x108] sm:$0xff]
        %v1436 = vld [vmem:[%s920 + $0x110] sm:$0xff]
        %v1437 = vld [vmem:[%s920 + $0x120] sm:$0xff]
        %v1438 = vld [vmem:[%s920 + $0x128] sm:$0xff]
        %v1439 = vld [vmem:[%s920 + $0x138] sm:$0xff]
        %v1440 = vld [vmem:[%s920 + $0x140] sm:$0xff]
        %v1441 = vld [vmem:[%s920 + $0x150] sm:$0xff]
        %v1442 = vld [vmem:[%s920 + $0x158] sm:$0xff]
        %v1443 = vld [vmem:[%s920 + $0x168] sm:$0xff]
        %v1444 = vld [vmem:[%s920 + $0x170] sm:$0xff]
        %v1445 = vld [vmem:[%s920 + $0x1] sm:$0xff]
        %v1446 = vld [vmem:[%s920 + $0x9] sm:$0xff]
        %v1447 = vld [vmem:[%s920 + $0x19] sm:$0xff]
        %v1448 = vld [vmem:[%s920 + $0x21] sm:$0xff]
        %v1449 = vld [vmem:[%s920 + $0x31] sm:$0xff]
        %v1450 = vld [vmem:[%s920 + $0x39] sm:$0xff]
        %v1451 = vld [vmem:[%s920 + $0x49] sm:$0xff]
        %v1452 = vld [vmem:[%s920 + $0x51] sm:$0xff]
        %v1453 = vld [vmem:[%s920 + $0x61] sm:$0xff]
        %v1454 = vld [vmem:[%s920 + $0x69] sm:$0xff]
        %v1455 = vld [vmem:[%s920 + $0x79] sm:$0xff]
        %v1456 = vld [vmem:[%s920 + $0x81] sm:$0xff]
        %v1457 = vld [vmem:[%s920 + $0x91] sm:$0xff]
        %v1458 = vld [vmem:[%s920 + $0x99] sm:$0xff]
        %v1459 = vld [vmem:[%s920 + $0xa9] sm:$0xff]
        %v1460 = vld [vmem:[%s920 + $0xb1] sm:$0xff]
        %v1461 = vld [vmem:[%s920 + $0xc1] sm:$0xff]
        %v1462 = vld [vmem:[%s920 + $0xc9] sm:$0xff]
        %v1463 = vld [vmem:[%s920 + $0xd9] sm:$0xff]
        %v1464 = vld [vmem:[%s920 + $0xe1] sm:$0xff]
        %v1465 = vld [vmem:[%s920 + $0xf1] sm:$0xff]
        %v1466 = vld [vmem:[%s920 + $0xf9] sm:$0xff]
        %v1467 = vld [vmem:[%s920 + $0x109] sm:$0xff]
        %v1468 = vld [vmem:[%s920 + $0x111] sm:$0xff]
        %v1469 = vld [vmem:[%s920 + $0x121] sm:$0xff]
        %v1470 = vld [vmem:[%s920 + $0x129] sm:$0xff]
        %v1471 = vld [vmem:[%s920 + $0x139] sm:$0xff]
        %v1472 = vld [vmem:[%s920 + $0x141] sm:$0xff]
        %v1473 = vld [vmem:[%s920 + $0x151] sm:$0xff]
        %v1474 = vld [vmem:[%s920 + $0x159] sm:$0xff]
        %v1475 = vld [vmem:[%s920 + $0x169] sm:$0xff]
        %v1476 = vld [vmem:[%s920 + $0x171] sm:$0xff]
        %v1477 = vld [vmem:[%s920 + $0x2] sm:$0xff]
        %v1478 = vld [vmem:[%s920 + $0xa] sm:$0xff]
        %v1479 = vld [vmem:[%s920 + $0x1a] sm:$0xff]
        %v1480 = vld [vmem:[%s920 + $0x22] sm:$0xff]
        %v1481 = vld [vmem:[%s920 + $0x32] sm:$0xff]
        %v1482 = vld [vmem:[%s920 + $0x3a] sm:$0xff]
        %v1483 = vld [vmem:[%s920 + $0x4a] sm:$0xff]
        %v1484 = vld [vmem:[%s920 + $0x52] sm:$0xff]
        %v1485 = vld [vmem:[%s920 + $0x62] sm:$0xff]
        %v1486 = vld [vmem:[%s920 + $0x6a] sm:$0xff]
        %v1487 = vld [vmem:[%s920 + $0x7a] sm:$0xff]
        %v1488 = vld [vmem:[%s920 + $0x82] sm:$0xff]
        %v1489 = vld [vmem:[%s920 + $0x92] sm:$0xff]
        %v1490 = vld [vmem:[%s920 + $0x9a] sm:$0xff]
        %v1491 = vld [vmem:[%s920 + $0xaa] sm:$0xff]
        %v1492 = vld [vmem:[%s920 + $0xb2] sm:$0xff]
        %v1493 = vld [vmem:[%s920 + $0xc2] sm:$0xff]
        %v1494 = vld [vmem:[%s920 + $0xca] sm:$0xff]
        %v1495 = vld [vmem:[%s920 + $0xda] sm:$0xff]
        %v1496 = vld [vmem:[%s920 + $0xe2] sm:$0xff]
        %v1497 = vld [vmem:[%s920 + $0xf2] sm:$0xff]
        %v1498 = vld [vmem:[%s920 + $0xfa] sm:$0xff]
        %v1499 = vld [vmem:[%s920 + $0x10a] sm:$0xff]
        %v1500 = vld [vmem:[%s920 + $0x112] sm:$0xff]
        %v1501 = vld [vmem:[%s920 + $0x122] sm:$0xff]
        %v1502 = vld [vmem:[%s920 + $0x12a] sm:$0xff]
        %v1503 = vld [vmem:[%s920 + $0x13a] sm:$0xff]
        %v1504 = vld [vmem:[%s920 + $0x142] sm:$0xff]
        %v1505 = vld [vmem:[%s920 + $0x152] sm:$0xff]
        %v1506 = vld [vmem:[%s920 + $0x15a] sm:$0xff]
        %v1507 = vld [vmem:[%s920 + $0x16a] sm:$0xff]
        %v1508 = vld [vmem:[%s920 + $0x172] sm:$0xff]
        %1541 = vrot.lane.b32.xlu0 %v1445, 4
        %v1542 = vpop.permute.xlu0 %1541
        %1543 = vrot.lane.b32.xlu0 %v1446, 4
        %v1544 = vpop.permute.xlu0 %1543
        %1545 = vrot.lane.b32.xlu0 %v1447, 4
        %v1546 = vpop.permute.xlu0 %1545
        %1547 = vrot.lane.b32.xlu0 %v1448, 4
        %v1548 = vpop.permute.xlu0 %1547
        %1549 = vrot.lane.b32.xlu0 %v1449, 4
        %v1550 = vpop.permute.xlu0 %1549
        %1551 = vrot.lane.b32.xlu0 %v1450, 4
        %v1552 = vpop.permute.xlu0 %1551
        %1553 = vrot.lane.b32.xlu0 %v1451, 4
        %v1554 = vpop.permute.xlu0 %1553
        %1555 = vrot.lane.b32.xlu0 %v1452, 4
        %v1556 = vpop.permute.xlu0 %1555
        %1557 = vrot.lane.b32.xlu0 %v1453, 4
        %v1558 = vpop.permute.xlu0 %1557
        %1559 = vrot.lane.b32.xlu0 %v1454, 4
        %v1560 = vpop.permute.xlu0 %1559
        %1561 = vrot.lane.b32.xlu0 %v1455, 4
        %v1562 = vpop.permute.xlu0 %1561
        %1563 = vrot.lane.b32.xlu0 %v1456, 4
        %v1564 = vpop.permute.xlu0 %1563
        %1565 = vrot.lane.b32.xlu0 %v1457, 4
        %v1566 = vpop.permute.xlu0 %1565
        %1567 = vrot.lane.b32.xlu0 %v1458, 4
        %v1568 = vpop.permute.xlu0 %1567
        %1569 = vrot.lane.b32.xlu0 %v1459, 4
        %v1570 = vpop.permute.xlu0 %1569
        %1571 = vrot.lane.b32.xlu0 %v1460, 4
        %v1572 = vpop.permute.xlu0 %1571
        %1573 = vrot.lane.b32.xlu0 %v1461, 4
        %v1574 = vpop.permute.xlu0 %1573
        %1575 = vrot.lane.b32.xlu0 %v1462, 4
        %v1576 = vpop.permute.xlu0 %1575
        %1577 = vrot.lane.b32.xlu0 %v1463, 4
        %v1578 = vpop.permute.xlu0 %1577
        %1579 = vrot.lane.b32.xlu0 %v1464, 4
        %v1580 = vpop.permute.xlu0 %1579
        %1581 = vrot.lane.b32.xlu0 %v1465, 4
        %v1582 = vpop.permute.xlu0 %1581
        %1583 = vrot.lane.b32.xlu0 %v1466, 4
        %v1584 = vpop.permute.xlu0 %1583
        %1585 = vrot.lane.b32.xlu0 %v1467, 4
        %v1586 = vpop.permute.xlu0 %1585
        %1587 = vrot.lane.b32.xlu0 %v1468, 4
        %v1588 = vpop.permute.xlu0 %1587
        %1589 = vrot.lane.b32.xlu0 %v1469, 4
        %v1590 = vpop.permute.xlu0 %1589
        %1591 = vrot.lane.b32.xlu0 %v1470, 4
        %v1592 = vpop.permute.xlu0 %1591
        %1593 = vrot.lane.b32.xlu0 %v1471, 4
        %v1594 = vpop.permute.xlu0 %1593
        %1595 = vrot.lane.b32.xlu0 %v1472, 4
        %v1596 = vpop.permute.xlu0 %1595
        %1597 = vrot.lane.b32.xlu0 %v1473, 4
        %v1598 = vpop.permute.xlu0 %1597
        %1599 = vrot.lane.b32.xlu0 %v1474, 4
        %v1600 = vpop.permute.xlu0 %1599
        %1601 = vrot.lane.b32.xlu0 %v1475, 4
        %v1602 = vpop.permute.xlu0 %1601
        %1603 = vrot.lane.b32.xlu0 %v1476, 4
        %v1604 = vpop.permute.xlu0 %1603
        %1669 = vrot.lane.b32.xlu0 %v1477, 8
        %v1670 = vpop.permute.xlu0 %1669
        %1671 = vrot.lane.b32.xlu0 %v1478, 8
        %v1672 = vpop.permute.xlu0 %1671
        %1673 = vrot.lane.b32.xlu0 %v1479, 8
        %v1674 = vpop.permute.xlu0 %1673
        %1675 = vrot.lane.b32.xlu0 %v1480, 8
        %v1676 = vpop.permute.xlu0 %1675
        %1677 = vrot.lane.b32.xlu0 %v1481, 8
        %v1678 = vpop.permute.xlu0 %1677
        %1679 = vrot.lane.b32.xlu0 %v1482, 8
        %v1680 = vpop.permute.xlu0 %1679
        %1681 = vrot.lane.b32.xlu0 %v1483, 8
        %v1682 = vpop.permute.xlu0 %1681
        %1683 = vrot.lane.b32.xlu0 %v1484, 8
        %v1684 = vpop.permute.xlu0 %1683
        %1685 = vrot.lane.b32.xlu0 %v1485, 8
        %v1686 = vpop.permute.xlu0 %1685
        %1687 = vrot.lane.b32.xlu0 %v1486, 8
        %v1688 = vpop.permute.xlu0 %1687
        %1689 = vrot.lane.b32.xlu0 %v1487, 8
        %v1690 = vpop.permute.xlu0 %1689
        %1691 = vrot.lane.b32.xlu0 %v1488, 8
        %v1692 = vpop.permute.xlu0 %1691
        %1693 = vrot.lane.b32.xlu0 %v1489, 8
        %v1694 = vpop.permute.xlu0 %1693
        %1695 = vrot.lane.b32.xlu0 %v1490, 8
        %v1696 = vpop.permute.xlu0 %1695
        %1697 = vrot.lane.b32.xlu0 %v1491, 8
        %v1698 = vpop.permute.xlu0 %1697
        %1699 = vrot.lane.b32.xlu0 %v1492, 8
        %v1700 = vpop.permute.xlu0 %1699
        %1701 = vrot.lane.b32.xlu0 %v1493, 8
        %v1702 = vpop.permute.xlu0 %1701
        %1703 = vrot.lane.b32.xlu0 %v1494, 8
        %v1704 = vpop.permute.xlu0 %1703
        %1705 = vrot.lane.b32.xlu0 %v1495, 8
        %v1706 = vpop.permute.xlu0 %1705
        %1707 = vrot.lane.b32.xlu0 %v1496, 8
        %v1708 = vpop.permute.xlu0 %1707
        %1709 = vrot.lane.b32.xlu0 %v1497, 8
        %v1710 = vpop.permute.xlu0 %1709
        %1711 = vrot.lane.b32.xlu0 %v1498, 8
        %v1712 = vpop.permute.xlu0 %1711
        %1713 = vrot.lane.b32.xlu0 %v1499, 8
        %v1714 = vpop.permute.xlu0 %1713
        %1715 = vrot.lane.b32.xlu0 %v1500, 8
        %v1716 = vpop.permute.xlu0 %1715
        %1717 = vrot.lane.b32.xlu0 %v1501, 8
        %v1718 = vpop.permute.xlu0 %1717
        %1719 = vrot.lane.b32.xlu0 %v1502, 8
        %v1720 = vpop.permute.xlu0 %1719
        %1721 = vrot.lane.b32.xlu0 %v1503, 8
        %v1722 = vpop.permute.xlu0 %1721
        %1723 = vrot.lane.b32.xlu0 %v1504, 8
        %v1724 = vpop.permute.xlu0 %1723
        %1725 = vrot.lane.b32.xlu0 %v1505, 8
        %v1726 = vpop.permute.xlu0 %1725
        %1727 = vrot.lane.b32.xlu0 %v1506, 8
        %v1728 = vpop.permute.xlu0 %1727
        %1729 = vrot.lane.b32.xlu0 %v1507, 8
        %v1730 = vpop.permute.xlu0 %1729
        %1731 = vrot.lane.b32.xlu0 %v1508, 8
        %v1732 = vpop.permute.xlu0 %1731
        %v1765 = vsel %vm381, %v1413, %v1542
        %v1766 = vsel %vm381, %v1414, %v1544
        %v1767 = vsel %vm381, %v1415, %v1546
        %v1768 = vsel %vm381, %v1416, %v1548
        %v1769 = vsel %vm381, %v1417, %v1550
        %v1770 = vsel %vm381, %v1418, %v1552
        %v1771 = vsel %vm381, %v1419, %v1554
        %v1772 = vsel %vm381, %v1420, %v1556
        %v1773 = vsel %vm381, %v1421, %v1558
        %v1774 = vsel %vm381, %v1422, %v1560
        %v1775 = vsel %vm381, %v1423, %v1562
        %v1776 = vsel %vm381, %v1424, %v1564
        %v1777 = vsel %vm381, %v1425, %v1566
        %v1778 = vsel %vm381, %v1426, %v1568
        %v1779 = vsel %vm381, %v1427, %v1570
        %v1780 = vsel %vm381, %v1428, %v1572
        %v1781 = vsel %vm381, %v1429, %v1574
        %v1782 = vsel %vm381, %v1430, %v1576
        %v1783 = vsel %vm381, %v1431, %v1578
        %v1784 = vsel %vm381, %v1432, %v1580
        %v1785 = vsel %vm381, %v1433, %v1582
        %v1786 = vsel %vm381, %v1434, %v1584
        %v1787 = vsel %vm381, %v1435, %v1586
        %v1788 = vsel %vm381, %v1436, %v1588
        %v1789 = vsel %vm381, %v1437, %v1590
        %v1790 = vsel %vm381, %v1438, %v1592
        %v1791 = vsel %vm381, %v1439, %v1594
        %v1792 = vsel %vm381, %v1440, %v1596
        %v1793 = vsel %vm381, %v1441, %v1598
        %v1794 = vsel %vm381, %v1442, %v1600
        %v1795 = vsel %vm381, %v1443, %v1602
        %v1796 = vsel %vm381, %v1444, %v1604
        %v1797 = vsel %vm1378, %v1765, %v1670
        %v1798 = vsel %vm1378, %v1766, %v1672
        %v1799 = vsel %vm1378, %v1767, %v1674
        %v1800 = vsel %vm1378, %v1768, %v1676
        %v1801 = vsel %vm1378, %v1769, %v1678
        %v1802 = vsel %vm1378, %v1770, %v1680
        %v1803 = vsel %vm1378, %v1771, %v1682
        %v1804 = vsel %vm1378, %v1772, %v1684
        %v1805 = vsel %vm1378, %v1773, %v1686
        %v1806 = vsel %vm1378, %v1774, %v1688
        %v1807 = vsel %vm1378, %v1775, %v1690
        %v1808 = vsel %vm1378, %v1776, %v1692
        %v1809 = vsel %vm1378, %v1777, %v1694
        %v1810 = vsel %vm1378, %v1778, %v1696
        %v1811 = vsel %vm1378, %v1779, %v1698
        %v1812 = vsel %vm1378, %v1780, %v1700
        %v1813 = vsel %vm1378, %v1781, %v1702
        %v1814 = vsel %vm1378, %v1782, %v1704
        %v1815 = vsel %vm1378, %v1783, %v1706
        %v1816 = vsel %vm1378, %v1784, %v1708
        %v1817 = vsel %vm1378, %v1785, %v1710
        %v1818 = vsel %vm1378, %v1786, %v1712
        %v1819 = vsel %vm1378, %v1787, %v1714
        %v1820 = vsel %vm1378, %v1788, %v1716
        %v1821 = vsel %vm1378, %v1789, %v1718
        %v1822 = vsel %vm1378, %v1790, %v1720
        %v1823 = vsel %vm1378, %v1791, %v1722
        %v1824 = vsel %vm1378, %v1792, %v1724
        %v1825 = vsel %vm1378, %v1793, %v1726
        %v1826 = vsel %vm1378, %v1794, %v1728
        %v1827 = vsel %vm1378, %v1795, %v1730
        %v1828 = vsel %vm1378, %v1796, %v1732
        %s1829 = scalar_lea.vmem %s3, 16
        %v1830 = vld [vmem:[%s1829] sm:$0xff]
        %v1831 = vld [vmem:[%s1829 + $0x8] sm:$0xf]
        %vm1832 = vcmask 97280
        %v1834 = vsel %vm1832, %v1797, 0
        %v1837 = vsel %vm1832, %v1798, 0
        %v1840 = vsel %vm1832, %v1799, 0
        %v1843 = vsel %vm1832, %v1800, 0
        %v1846 = vsel %vm1832, %v1801, 0
        %v1849 = vsel %vm1832, %v1802, 0
        %v1852 = vsel %vm1832, %v1803, 0
        %v1855 = vsel %vm1832, %v1804, 0
        %v1858 = vsel %vm1832, %v1805, 0
        %v1861 = vsel %vm1832, %v1806, 0
        %v1864 = vsel %vm1832, %v1807, 0
        %v1867 = vsel %vm1832, %v1808, 0
        %v1870 = vsel %vm1832, %v1809, 0
        %v1873 = vsel %vm1832, %v1810, 0
        %v1876 = vsel %vm1832, %v1811, 0
        %v1879 = vsel %vm1832, %v1812, 0
        %v1882 = vsel %vm1832, %v1813, 0
        %v1885 = vsel %vm1832, %v1814, 0
        %v1888 = vsel %vm1832, %v1815, 0
        %v1891 = vsel %vm1832, %v1816, 0
        %v1894 = vsel %vm1832, %v1817, 0
        %v1897 = vsel %vm1832, %v1818, 0
        %v1900 = vsel %vm1832, %v1819, 0
        %v1903 = vsel %vm1832, %v1820, 0
        %v1906 = vsel %vm1832, %v1821, 0
        %v1909 = vsel %vm1832, %v1822, 0
        %v1912 = vsel %vm1832, %v1823, 0
        %v1915 = vsel %vm1832, %v1824, 0
        %v1918 = vsel %vm1832, %v1825, 0
        %v1921 = vsel %vm1832, %v1826, 0
        %v1924 = vsel %vm1832, %v1827, 0
        %v1927 = vsel %vm1832, %v1828, 0
        %v1930 = vsel %vm478, %v1831, 0
        %1932 = vmatpush.msra.mxu0 0.0
        %1933 = vmatpush.msra.mxu0 0.0
        %1934 = vmatpush.msra.mxu0 0.0
        %1935 = vmatpush.msra.mxu0 0.0
        %1936 = vmatpush.msra.mxu0 0.0
        %1937 = vmatpush.msra.mxu0 0.0
        %1938 = vmatpush.msra.mxu0 0.0
        %1939 = vmatpush.msra.mxu0 0.0
        %1940 = vmatpush.msra.mxu0 0.0
        %1941 = vmatpush.msra.mxu0 0.0
        %1942 = vmatpush.msra.mxu0 0.0
        %1943 = vmatpush.msra.mxu0 0.0
        %1944 = vmatpush.msra.mxu0 0.0
        %1945 = vmatpush.msra.mxu0 0.0
        %1946 = vmatpush.msra.mxu0 %v1930
        %1947 = vmatpush.msra.mxu0 %v1830
        %1948 = vmatmul.f32.gmra.mxu0 %v1834
        %v1949 = vpop.f32.mrf.mxu0
        %v1950 = vadd.f32 0.0, %v1949
        %1951 = vmatmul.f32.gmra.mxu0 %v1837
        %v1952 = vpop.f32.mrf.mxu0
        %v1953 = vadd.f32 0.0, %v1952
        %1954 = vmatmul.f32.gmra.mxu0 %v1840
        %v1955 = vpop.f32.mrf.mxu0
        %v1956 = vadd.f32 0.0, %v1955
        %1957 = vmatmul.f32.gmra.mxu0 %v1843
        %v1958 = vpop.f32.mrf.mxu0
        %v1959 = vadd.f32 0.0, %v1958
        %1960 = vmatmul.f32.gmra.mxu0 %v1846
        %v1961 = vpop.f32.mrf.mxu0
        %v1962 = vadd.f32 0.0, %v1961
        %1963 = vmatmul.f32.gmra.mxu0 %v1849
        %v1964 = vpop.f32.mrf.mxu0
        %v1965 = vadd.f32 0.0, %v1964
        %1966 = vmatmul.f32.gmra.mxu0 %v1852
        %v1967 = vpop.f32.mrf.mxu0
        %v1968 = vadd.f32 0.0, %v1967
        %1969 = vmatmul.f32.gmra.mxu0 %v1855
        %v1970 = vpop.f32.mrf.mxu0
        %v1971 = vadd.f32 0.0, %v1970
        %1972 = vmatmul.f32.gmra.mxu0 %v1858
        %v1973 = vpop.f32.mrf.mxu0
        %v1974 = vadd.f32 0.0, %v1973
        %1975 = vmatmul.f32.gmra.mxu0 %v1861
        %v1976 = vpop.f32.mrf.mxu0
        %v1977 = vadd.f32 0.0, %v1976
        %1978 = vmatmul.f32.gmra.mxu0 %v1864
        %v1979 = vpop.f32.mrf.mxu0
        %v1980 = vadd.f32 0.0, %v1979
        %1981 = vmatmul.f32.gmra.mxu0 %v1867
        %v1982 = vpop.f32.mrf.mxu0
        %v1983 = vadd.f32 0.0, %v1982
        %1984 = vmatmul.f32.gmra.mxu0 %v1870
        %v1985 = vpop.f32.mrf.mxu0
        %v1986 = vadd.f32 0.0, %v1985
        %1987 = vmatmul.f32.gmra.mxu0 %v1873
        %v1988 = vpop.f32.mrf.mxu0
        %v1989 = vadd.f32 0.0, %v1988
        %1990 = vmatmul.f32.gmra.mxu0 %v1876
        %v1991 = vpop.f32.mrf.mxu0
        %v1992 = vadd.f32 0.0, %v1991
        %1993 = vmatmul.f32.gmra.mxu0 %v1879
        %v1994 = vpop.f32.mrf.mxu0
        %v1995 = vadd.f32 0.0, %v1994
        %1996 = vmatmul.f32.gmra.mxu0 %v1882
        %v1997 = vpop.f32.mrf.mxu0
        %v1998 = vadd.f32 0.0, %v1997
        %1999 = vmatmul.f32.gmra.mxu0 %v1885
        %v2000 = vpop.f32.mrf.mxu0
        %v2001 = vadd.f32 0.0, %v2000
        %2002 = vmatmul.f32.gmra.mxu0 %v1888
        %v2003 = vpop.f32.mrf.mxu0
        %v2004 = vadd.f32 0.0, %v2003
        %2005 = vmatmul.f32.gmra.mxu0 %v1891
        %v2006 = vpop.f32.mrf.mxu0
        %v2007 = vadd.f32 0.0, %v2006
        %2008 = vmatmul.f32.gmra.mxu0 %v1894
        %v2009 = vpop.f32.mrf.mxu0
        %v2010 = vadd.f32 0.0, %v2009
        %2011 = vmatmul.f32.gmra.mxu0 %v1897
        %v2012 = vpop.f32.mrf.mxu0
        %v2013 = vadd.f32 0.0, %v2012
        %2014 = vmatmul.f32.gmra.mxu0 %v1900
        %v2015 = vpop.f32.mrf.mxu0
        %v2016 = vadd.f32 0.0, %v2015
        %2017 = vmatmul.f32.gmra.mxu0 %v1903
        %v2018 = vpop.f32.mrf.mxu0
        %v2019 = vadd.f32 0.0, %v2018
        %2020 = vmatmul.f32.gmra.mxu0 %v1906
        %v2021 = vpop.f32.mrf.mxu0
        %v2022 = vadd.f32 0.0, %v2021
        %2023 = vmatmul.f32.gmra.mxu0 %v1909
        %v2024 = vpop.f32.mrf.mxu0
        %v2025 = vadd.f32 0.0, %v2024
        %2026 = vmatmul.f32.gmra.mxu0 %v1912
        %v2027 = vpop.f32.mrf.mxu0
        %v2028 = vadd.f32 0.0, %v2027
        %2029 = vmatmul.f32.gmra.mxu0 %v1915
        %v2030 = vpop.f32.mrf.mxu0
        %v2031 = vadd.f32 0.0, %v2030
        %2032 = vmatmul.f32.gmra.mxu0 %v1918
        %v2033 = vpop.f32.mrf.mxu0
        %v2034 = vadd.f32 0.0, %v2033
        %2035 = vmatmul.f32.gmra.mxu0 %v1921
        %v2036 = vpop.f32.mrf.mxu0
        %v2037 = vadd.f32 0.0, %v2036
        %2038 = vmatmul.f32.gmra.mxu0 %v1924
        %v2039 = vpop.f32.mrf.mxu0
        %v2040 = vadd.f32 0.0, %v2039
        %2041 = vmatmul.f32.gmra.mxu0 %v1927
        %v2042 = vpop.f32.mrf.mxu0
        %v2043 = vadd.f32 0.0, %v2042
        %2044 = vdwg.mxu0
        %v2046 = vsel %vm1832, %v1379, 0
        %v2049 = vsel %vm1832, %v1380, 0
        %v2052 = vsel %vm1832, %v1381, 0
        %v2055 = vsel %vm1832, %v1382, 0
        %v2058 = vsel %vm1832, %v1383, 0
        %v2061 = vsel %vm1832, %v1384, 0
        %v2064 = vsel %vm1832, %v1385, 0
        %v2067 = vsel %vm1832, %v1386, 0
        %v2070 = vsel %vm1832, %v1387, 0
        %v2073 = vsel %vm1832, %v1388, 0
        %v2076 = vsel %vm1832, %v1389, 0
        %v2079 = vsel %vm1832, %v1390, 0
        %v2082 = vsel %vm1832, %v1391, 0
        %v2085 = vsel %vm1832, %v1392, 0
        %v2088 = vsel %vm1832, %v1393, 0
        %v2091 = vsel %vm1832, %v1394, 0
        %v2094 = vsel %vm1832, %v1395, 0
        %v2097 = vsel %vm1832, %v1396, 0
        %v2100 = vsel %vm1832, %v1397, 0
        %v2103 = vsel %vm1832, %v1398, 0
        %v2106 = vsel %vm1832, %v1399, 0
        %v2109 = vsel %vm1832, %v1400, 0
        %v2112 = vsel %vm1832, %v1401, 0
        %v2115 = vsel %vm1832, %v1402, 0
        %v2118 = vsel %vm1832, %v1403, 0
        %v2121 = vsel %vm1832, %v1404, 0
        %v2124 = vsel %vm1832, %v1405, 0
        %v2127 = vsel %vm1832, %v1406, 0
        %v2130 = vsel %vm1832, %v1407, 0
        %v2133 = vsel %vm1832, %v1408, 0
        %v2136 = vsel %vm1832, %v1409, 0
        %v2139 = vsel %vm1832, %v1410, 0
        %v2142 = vsel %vm478, %v1412, 0
        %2144 = vmatpush.msra.mxu0 0.0
        %2145 = vmatpush.msra.mxu0 0.0
        %2146 = vmatpush.msra.mxu0 0.0
        %2147 = vmatpush.msra.mxu0 0.0
        %2148 = vmatpush.msra.mxu0 0.0
        %2149 = vmatpush.msra.mxu0 0.0
        %2150 = vmatpush.msra.mxu0 0.0
        %2151 = vmatpush.msra.mxu0 0.0
        %2152 = vmatpush.msra.mxu0 0.0
        %2153 = vmatpush.msra.mxu0 0.0
        %2154 = vmatpush.msra.mxu0 0.0
        %2155 = vmatpush.msra.mxu0 0.0
        %2156 = vmatpush.msra.mxu0 0.0
        %2157 = vmatpush.msra.mxu0 0.0
        %2158 = vmatpush.msra.mxu0 %v2142
        %2159 = vmatpush.msra.mxu0 %v1411
        %2160 = vmatmul.f32.gmra.mxu0 %v2046
        %v2161 = vpop.f32.mrf.mxu0
        %v2162 = vadd.f32 %v1950, %v2161
        %2163 = vmatmul.f32.gmra.mxu0 %v2049
        %v2164 = vpop.f32.mrf.mxu0
        %v2165 = vadd.f32 %v1953, %v2164
        %2166 = vmatmul.f32.gmra.mxu0 %v2052
        %v2167 = vpop.f32.mrf.mxu0
        %v2168 = vadd.f32 %v1956, %v2167
        %2169 = vmatmul.f32.gmra.mxu0 %v2055
        %v2170 = vpop.f32.mrf.mxu0
        %v2171 = vadd.f32 %v1959, %v2170
        %2172 = vmatmul.f32.gmra.mxu0 %v2058
        %v2173 = vpop.f32.mrf.mxu0
        %v2174 = vadd.f32 %v1962, %v2173
        %2175 = vmatmul.f32.gmra.mxu0 %v2061
        %v2176 = vpop.f32.mrf.mxu0
        %v2177 = vadd.f32 %v1965, %v2176
        %2178 = vmatmul.f32.gmra.mxu0 %v2064
        %v2179 = vpop.f32.mrf.mxu0
        %v2180 = vadd.f32 %v1968, %v2179
        %2181 = vmatmul.f32.gmra.mxu0 %v2067
        %v2182 = vpop.f32.mrf.mxu0
        %v2183 = vadd.f32 %v1971, %v2182
        %2184 = vmatmul.f32.gmra.mxu0 %v2070
        %v2185 = vpop.f32.mrf.mxu0
        %v2186 = vadd.f32 %v1974, %v2185
        %2187 = vmatmul.f32.gmra.mxu0 %v2073
        %v2188 = vpop.f32.mrf.mxu0
        %v2189 = vadd.f32 %v1977, %v2188
        %2190 = vmatmul.f32.gmra.mxu0 %v2076
        %v2191 = vpop.f32.mrf.mxu0
        %v2192 = vadd.f32 %v1980, %v2191
        %2193 = vmatmul.f32.gmra.mxu0 %v2079
        %v2194 = vpop.f32.mrf.mxu0
        %v2195 = vadd.f32 %v1983, %v2194
        %2196 = vmatmul.f32.gmra.mxu0 %v2082
        %v2197 = vpop.f32.mrf.mxu0
        %v2198 = vadd.f32 %v1986, %v2197
        %2199 = vmatmul.f32.gmra.mxu0 %v2085
        %v2200 = vpop.f32.mrf.mxu0
        %v2201 = vadd.f32 %v1989, %v2200
        %2202 = vmatmul.f32.gmra.mxu0 %v2088
        %v2203 = vpop.f32.mrf.mxu0
        %v2204 = vadd.f32 %v1992, %v2203
        %2205 = vmatmul.f32.gmra.mxu0 %v2091
        %v2206 = vpop.f32.mrf.mxu0
        %v2207 = vadd.f32 %v1995, %v2206
        %2208 = vmatmul.f32.gmra.mxu0 %v2094
        %v2209 = vpop.f32.mrf.mxu0
        %v2210 = vadd.f32 %v1998, %v2209
        %2211 = vmatmul.f32.gmra.mxu0 %v2097
        %v2212 = vpop.f32.mrf.mxu0
        %v2213 = vadd.f32 %v2001, %v2212
        %2214 = vmatmul.f32.gmra.mxu0 %v2100
        %v2215 = vpop.f32.mrf.mxu0
        %v2216 = vadd.f32 %v2004, %v2215
        %2217 = vmatmul.f32.gmra.mxu0 %v2103
        %v2218 = vpop.f32.mrf.mxu0
        %v2219 = vadd.f32 %v2007, %v2218
        %2220 = vmatmul.f32.gmra.mxu0 %v2106
        %v2221 = vpop.f32.mrf.mxu0
        %v2222 = vadd.f32 %v2010, %v2221
        %2223 = vmatmul.f32.gmra.mxu0 %v2109
        %v2224 = vpop.f32.mrf.mxu0
        %v2225 = vadd.f32 %v2013, %v2224
        %2226 = vmatmul.f32.gmra.mxu0 %v2112
        %v2227 = vpop.f32.mrf.mxu0
        %v2228 = vadd.f32 %v2016, %v2227
        %2229 = vmatmul.f32.gmra.mxu0 %v2115
        %v2230 = vpop.f32.mrf.mxu0
        %v2231 = vadd.f32 %v2019, %v2230
        %2232 = vmatmul.f32.gmra.mxu0 %v2118
        %v2233 = vpop.f32.mrf.mxu0
        %v2234 = vadd.f32 %v2022, %v2233
        %2235 = vmatmul.f32.gmra.mxu0 %v2121
        %v2236 = vpop.f32.mrf.mxu0
        %v2237 = vadd.f32 %v2025, %v2236
        %2238 = vmatmul.f32.gmra.mxu0 %v2124
        %v2239 = vpop.f32.mrf.mxu0
        %v2240 = vadd.f32 %v2028, %v2239
        %2241 = vmatmul.f32.gmra.mxu0 %v2127
        %v2242 = vpop.f32.mrf.mxu0
        %v2243 = vadd.f32 %v2031, %v2242
        %2244 = vmatmul.f32.gmra.mxu0 %v2130
        %v2245 = vpop.f32.mrf.mxu0
        %v2246 = vadd.f32 %v2034, %v2245
        %2247 = vmatmul.f32.gmra.mxu0 %v2133
        %v2248 = vpop.f32.mrf.mxu0
        %v2249 = vadd.f32 %v2037, %v2248
        %2250 = vmatmul.f32.gmra.mxu0 %v2136
        %v2251 = vpop.f32.mrf.mxu0
        %v2252 = vadd.f32 %v2040, %v2251
        %2253 = vmatmul.f32.gmra.mxu0 %v2139
        %v2254 = vpop.f32.mrf.mxu0
        %v2255 = vadd.f32 %v2043, %v2254
        %2256 = vdwg.mxu0
        %s2257 = scalar_lea.vmem [#allocation2], 48
        %v2258 = vld [vmem:[%s2257] sm:$0xff]
        %v2259 = vld [vmem:[%s2257 + $0x8] sm:$0xff]
        %v2260 = vld [vmem:[%s2257 + $0x18] sm:$0xff]
        %v2261 = vld [vmem:[%s2257 + $0x20] sm:$0xff]
        %v2262 = vld [vmem:[%s2257 + $0x30] sm:$0xff]
        %v2263 = vld [vmem:[%s2257 + $0x38] sm:$0xff]
        %v2264 = vld [vmem:[%s2257 + $0x48] sm:$0xff]
        %v2265 = vld [vmem:[%s2257 + $0x50] sm:$0xff]
        %v2266 = vld [vmem:[%s2257 + $0x60] sm:$0xff]
        %v2267 = vld [vmem:[%s2257 + $0x68] sm:$0xff]
        %v2268 = vld [vmem:[%s2257 + $0x78] sm:$0xff]
        %v2269 = vld [vmem:[%s2257 + $0x80] sm:$0xff]
        %v2270 = vld [vmem:[%s2257 + $0x90] sm:$0xff]
        %v2271 = vld [vmem:[%s2257 + $0x98] sm:$0xff]
        %v2272 = vld [vmem:[%s2257 + $0xa8] sm:$0xff]
        %v2273 = vld [vmem:[%s2257 + $0xb0] sm:$0xff]
        %v2274 = vld [vmem:[%s2257 + $0xc0] sm:$0xff]
        %v2275 = vld [vmem:[%s2257 + $0xc8] sm:$0xff]
        %v2276 = vld [vmem:[%s2257 + $0xd8] sm:$0xff]
        %v2277 = vld [vmem:[%s2257 + $0xe0] sm:$0xff]
        %v2278 = vld [vmem:[%s2257 + $0xf0] sm:$0xff]
        %v2279 = vld [vmem:[%s2257 + $0xf8] sm:$0xff]
        %v2280 = vld [vmem:[%s2257 + $0x108] sm:$0xff]
        %v2281 = vld [vmem:[%s2257 + $0x110] sm:$0xff]
        %v2282 = vld [vmem:[%s2257 + $0x120] sm:$0xff]
        %v2283 = vld [vmem:[%s2257 + $0x128] sm:$0xff]
        %v2284 = vld [vmem:[%s2257 + $0x138] sm:$0xff]
        %v2285 = vld [vmem:[%s2257 + $0x140] sm:$0xff]
        %v2286 = vld [vmem:[%s2257 + $0x150] sm:$0xff]
        %v2287 = vld [vmem:[%s2257 + $0x158] sm:$0xff]
        %v2288 = vld [vmem:[%s2257 + $0x168] sm:$0xff]
        %v2289 = vld [vmem:[%s2257 + $0x170] sm:$0xff]
        %v2290 = vld [vmem:[%s2257 + $0x1] sm:$0xff]
        %v2291 = vld [vmem:[%s2257 + $0x9] sm:$0xff]
        %v2292 = vld [vmem:[%s2257 + $0x19] sm:$0xff]
        %v2293 = vld [vmem:[%s2257 + $0x21] sm:$0xff]
        %v2294 = vld [vmem:[%s2257 + $0x31] sm:$0xff]
        %v2295 = vld [vmem:[%s2257 + $0x39] sm:$0xff]
        %v2296 = vld [vmem:[%s2257 + $0x49] sm:$0xff]
        %v2297 = vld [vmem:[%s2257 + $0x51] sm:$0xff]
        %v2298 = vld [vmem:[%s2257 + $0x61] sm:$0xff]
        %v2299 = vld [vmem:[%s2257 + $0x69] sm:$0xff]
        %v2300 = vld [vmem:[%s2257 + $0x79] sm:$0xff]
        %v2301 = vld [vmem:[%s2257 + $0x81] sm:$0xff]
        %v2302 = vld [vmem:[%s2257 + $0x91] sm:$0xff]
        %v2303 = vld [vmem:[%s2257 + $0x99] sm:$0xff]
        %v2304 = vld [vmem:[%s2257 + $0xa9] sm:$0xff]
        %v2305 = vld [vmem:[%s2257 + $0xb1] sm:$0xff]
        %v2306 = vld [vmem:[%s2257 + $0xc1] sm:$0xff]
        %v2307 = vld [vmem:[%s2257 + $0xc9] sm:$0xff]
        %v2308 = vld [vmem:[%s2257 + $0xd9] sm:$0xff]
        %v2309 = vld [vmem:[%s2257 + $0xe1] sm:$0xff]
        %v2310 = vld [vmem:[%s2257 + $0xf1] sm:$0xff]
        %v2311 = vld [vmem:[%s2257 + $0xf9] sm:$0xff]
        %v2312 = vld [vmem:[%s2257 + $0x109] sm:$0xff]
        %v2313 = vld [vmem:[%s2257 + $0x111] sm:$0xff]
        %v2314 = vld [vmem:[%s2257 + $0x121] sm:$0xff]
        %v2315 = vld [vmem:[%s2257 + $0x129] sm:$0xff]
        %v2316 = vld [vmem:[%s2257 + $0x139] sm:$0xff]
        %v2317 = vld [vmem:[%s2257 + $0x141] sm:$0xff]
        %v2318 = vld [vmem:[%s2257 + $0x151] sm:$0xff]
        %v2319 = vld [vmem:[%s2257 + $0x159] sm:$0xff]
        %v2320 = vld [vmem:[%s2257 + $0x169] sm:$0xff]
        %v2321 = vld [vmem:[%s2257 + $0x171] sm:$0xff]
        %v2322 = vld [vmem:[%s2257 + $0x2] sm:$0xff]
        %v2323 = vld [vmem:[%s2257 + $0xa] sm:$0xff]
        %v2324 = vld [vmem:[%s2257 + $0x1a] sm:$0xff]
        %v2325 = vld [vmem:[%s2257 + $0x22] sm:$0xff]
        %v2326 = vld [vmem:[%s2257 + $0x32] sm:$0xff]
        %v2327 = vld [vmem:[%s2257 + $0x3a] sm:$0xff]
        %v2328 = vld [vmem:[%s2257 + $0x4a] sm:$0xff]
        %v2329 = vld [vmem:[%s2257 + $0x52] sm:$0xff]
        %v2330 = vld [vmem:[%s2257 + $0x62] sm:$0xff]
        %v2331 = vld [vmem:[%s2257 + $0x6a] sm:$0xff]
        %v2332 = vld [vmem:[%s2257 + $0x7a] sm:$0xff]
        %v2333 = vld [vmem:[%s2257 + $0x82] sm:$0xff]
        %v2334 = vld [vmem:[%s2257 + $0x92] sm:$0xff]
        %v2335 = vld [vmem:[%s2257 + $0x9a] sm:$0xff]
        %v2336 = vld [vmem:[%s2257 + $0xaa] sm:$0xff]
        %v2337 = vld [vmem:[%s2257 + $0xb2] sm:$0xff]
        %v2338 = vld [vmem:[%s2257 + $0xc2] sm:$0xff]
        %v2339 = vld [vmem:[%s2257 + $0xca] sm:$0xff]
        %v2340 = vld [vmem:[%s2257 + $0xda] sm:$0xff]
        %v2341 = vld [vmem:[%s2257 + $0xe2] sm:$0xff]
        %v2342 = vld [vmem:[%s2257 + $0xf2] sm:$0xff]
        %v2343 = vld [vmem:[%s2257 + $0xfa] sm:$0xff]
        %v2344 = vld [vmem:[%s2257 + $0x10a] sm:$0xff]
        %v2345 = vld [vmem:[%s2257 + $0x112] sm:$0xff]
        %v2346 = vld [vmem:[%s2257 + $0x122] sm:$0xff]
        %v2347 = vld [vmem:[%s2257 + $0x12a] sm:$0xff]
        %v2348 = vld [vmem:[%s2257 + $0x13a] sm:$0xff]
        %v2349 = vld [vmem:[%s2257 + $0x142] sm:$0xff]
        %v2350 = vld [vmem:[%s2257 + $0x152] sm:$0xff]
        %v2351 = vld [vmem:[%s2257 + $0x15a] sm:$0xff]
        %v2352 = vld [vmem:[%s2257 + $0x16a] sm:$0xff]
        %v2353 = vld [vmem:[%s2257 + $0x172] sm:$0xff]
        %2386 = vrot.lane.b32.xlu0 %v2290, 4
        %v2387 = vpop.permute.xlu0 %2386
        %2388 = vrot.lane.b32.xlu0 %v2291, 4
        %v2389 = vpop.permute.xlu0 %2388
        %2390 = vrot.lane.b32.xlu0 %v2292, 4
        %v2391 = vpop.permute.xlu0 %2390
        %2392 = vrot.lane.b32.xlu0 %v2293, 4
        %v2393 = vpop.permute.xlu0 %2392
        %2394 = vrot.lane.b32.xlu0 %v2294, 4
        %v2395 = vpop.permute.xlu0 %2394
        %2396 = vrot.lane.b32.xlu0 %v2295, 4
        %v2397 = vpop.permute.xlu0 %2396
        %2398 = vrot.lane.b32.xlu0 %v2296, 4
        %v2399 = vpop.permute.xlu0 %2398
        %2400 = vrot.lane.b32.xlu0 %v2297, 4
        %v2401 = vpop.permute.xlu0 %2400
        %2402 = vrot.lane.b32.xlu0 %v2298, 4
        %v2403 = vpop.permute.xlu0 %2402
        %2404 = vrot.lane.b32.xlu0 %v2299, 4
        %v2405 = vpop.permute.xlu0 %2404
        %2406 = vrot.lane.b32.xlu0 %v2300, 4
        %v2407 = vpop.permute.xlu0 %2406
        %2408 = vrot.lane.b32.xlu0 %v2301, 4
        %v2409 = vpop.permute.xlu0 %2408
        %2410 = vrot.lane.b32.xlu0 %v2302, 4
        %v2411 = vpop.permute.xlu0 %2410
        %2412 = vrot.lane.b32.xlu0 %v2303, 4
        %v2413 = vpop.permute.xlu0 %2412
        %2414 = vrot.lane.b32.xlu0 %v2304, 4
        %v2415 = vpop.permute.xlu0 %2414
        %2416 = vrot.lane.b32.xlu0 %v2305, 4
        %v2417 = vpop.permute.xlu0 %2416
        %2418 = vrot.lane.b32.xlu0 %v2306, 4
        %v2419 = vpop.permute.xlu0 %2418
        %2420 = vrot.lane.b32.xlu0 %v2307, 4
        %v2421 = vpop.permute.xlu0 %2420
        %2422 = vrot.lane.b32.xlu0 %v2308, 4
        %v2423 = vpop.permute.xlu0 %2422
        %2424 = vrot.lane.b32.xlu0 %v2309, 4
        %v2425 = vpop.permute.xlu0 %2424
        %2426 = vrot.lane.b32.xlu0 %v2310, 4
        %v2427 = vpop.permute.xlu0 %2426
        %2428 = vrot.lane.b32.xlu0 %v2311, 4
        %v2429 = vpop.permute.xlu0 %2428
        %2430 = vrot.lane.b32.xlu0 %v2312, 4
        %v2431 = vpop.permute.xlu0 %2430
        %2432 = vrot.lane.b32.xlu0 %v2313, 4
        %v2433 = vpop.permute.xlu0 %2432
        %2434 = vrot.lane.b32.xlu0 %v2314, 4
        %v2435 = vpop.permute.xlu0 %2434
        %2436 = vrot.lane.b32.xlu0 %v2315, 4
        %v2437 = vpop.permute.xlu0 %2436
        %2438 = vrot.lane.b32.xlu0 %v2316, 4
        %v2439 = vpop.permute.xlu0 %2438
        %2440 = vrot.lane.b32.xlu0 %v2317, 4
        %v2441 = vpop.permute.xlu0 %2440
        %2442 = vrot.lane.b32.xlu0 %v2318, 4
        %v2443 = vpop.permute.xlu0 %2442
        %2444 = vrot.lane.b32.xlu0 %v2319, 4
        %v2445 = vpop.permute.xlu0 %2444
        %2446 = vrot.lane.b32.xlu0 %v2320, 4
        %v2447 = vpop.permute.xlu0 %2446
        %2448 = vrot.lane.b32.xlu0 %v2321, 4
        %v2449 = vpop.permute.xlu0 %2448
        %2514 = vrot.lane.b32.xlu0 %v2322, 8
        %v2515 = vpop.permute.xlu0 %2514
        %2516 = vrot.lane.b32.xlu0 %v2323, 8
        %v2517 = vpop.permute.xlu0 %2516
        %2518 = vrot.lane.b32.xlu0 %v2324, 8
        %v2519 = vpop.permute.xlu0 %2518
        %2520 = vrot.lane.b32.xlu0 %v2325, 8
        %v2521 = vpop.permute.xlu0 %2520
        %2522 = vrot.lane.b32.xlu0 %v2326, 8
        %v2523 = vpop.permute.xlu0 %2522
        %2524 = vrot.lane.b32.xlu0 %v2327, 8
        %v2525 = vpop.permute.xlu0 %2524
        %2526 = vrot.lane.b32.xlu0 %v2328, 8
        %v2527 = vpop.permute.xlu0 %2526
        %2528 = vrot.lane.b32.xlu0 %v2329, 8
        %v2529 = vpop.permute.xlu0 %2528
        %2530 = vrot.lane.b32.xlu0 %v2330, 8
        %v2531 = vpop.permute.xlu0 %2530
        %2532 = vrot.lane.b32.xlu0 %v2331, 8
        %v2533 = vpop.permute.xlu0 %2532
        %2534 = vrot.lane.b32.xlu0 %v2332, 8
        %v2535 = vpop.permute.xlu0 %2534
        %2536 = vrot.lane.b32.xlu0 %v2333, 8
        %v2537 = vpop.permute.xlu0 %2536
        %2538 = vrot.lane.b32.xlu0 %v2334, 8
        %v2539 = vpop.permute.xlu0 %2538
        %2540 = vrot.lane.b32.xlu0 %v2335, 8
        %v2541 = vpop.permute.xlu0 %2540
        %2542 = vrot.lane.b32.xlu0 %v2336, 8
        %v2543 = vpop.permute.xlu0 %2542
        %2544 = vrot.lane.b32.xlu0 %v2337, 8
        %v2545 = vpop.permute.xlu0 %2544
        %2546 = vrot.lane.b32.xlu0 %v2338, 8
        %v2547 = vpop.permute.xlu0 %2546
        %2548 = vrot.lane.b32.xlu0 %v2339, 8
        %v2549 = vpop.permute.xlu0 %2548
        %2550 = vrot.lane.b32.xlu0 %v2340, 8
        %v2551 = vpop.permute.xlu0 %2550
        %2552 = vrot.lane.b32.xlu0 %v2341, 8
        %v2553 = vpop.permute.xlu0 %2552
        %2554 = vrot.lane.b32.xlu0 %v2342, 8
        %v2555 = vpop.permute.xlu0 %2554
        %2556 = vrot.lane.b32.xlu0 %v2343, 8
        %v2557 = vpop.permute.xlu0 %2556
        %2558 = vrot.lane.b32.xlu0 %v2344, 8
        %v2559 = vpop.permute.xlu0 %2558
        %2560 = vrot.lane.b32.xlu0 %v2345, 8
        %v2561 = vpop.permute.xlu0 %2560
        %2562 = vrot.lane.b32.xlu0 %v2346, 8
        %v2563 = vpop.permute.xlu0 %2562
        %2564 = vrot.lane.b32.xlu0 %v2347, 8
        %v2565 = vpop.permute.xlu0 %2564
        %2566 = vrot.lane.b32.xlu0 %v2348, 8
        %v2567 = vpop.permute.xlu0 %2566
        %2568 = vrot.lane.b32.xlu0 %v2349, 8
        %v2569 = vpop.permute.xlu0 %2568
        %2570 = vrot.lane.b32.xlu0 %v2350, 8
        %v2571 = vpop.permute.xlu0 %2570
        %2572 = vrot.lane.b32.xlu0 %v2351, 8
        %v2573 = vpop.permute.xlu0 %2572
        %2574 = vrot.lane.b32.xlu0 %v2352, 8
        %v2575 = vpop.permute.xlu0 %2574
        %2576 = vrot.lane.b32.xlu0 %v2353, 8
        %v2577 = vpop.permute.xlu0 %2576
        %v2610 = vsel %vm381, %v2258, %v2387
        %v2611 = vsel %vm381, %v2259, %v2389
        %v2612 = vsel %vm381, %v2260, %v2391
        %v2613 = vsel %vm381, %v2261, %v2393
        %v2614 = vsel %vm381, %v2262, %v2395
        %v2615 = vsel %vm381, %v2263, %v2397
        %v2616 = vsel %vm381, %v2264, %v2399
        %v2617 = vsel %vm381, %v2265, %v2401
        %v2618 = vsel %vm381, %v2266, %v2403
        %v2619 = vsel %vm381, %v2267, %v2405
        %v2620 = vsel %vm381, %v2268, %v2407
        %v2621 = vsel %vm381, %v2269, %v2409
        %v2622 = vsel %vm381, %v2270, %v2411
        %v2623 = vsel %vm381, %v2271, %v2413
        %v2624 = vsel %vm381, %v2272, %v2415
        %v2625 = vsel %vm381, %v2273, %v2417
        %v2626 = vsel %vm381, %v2274, %v2419
        %v2627 = vsel %vm381, %v2275, %v2421
        %v2628 = vsel %vm381, %v2276, %v2423
        %v2629 = vsel %vm381, %v2277, %v2425
        %v2630 = vsel %vm381, %v2278, %v2427
        %v2631 = vsel %vm381, %v2279, %v2429
        %v2632 = vsel %vm381, %v2280, %v2431
        %v2633 = vsel %vm381, %v2281, %v2433
        %v2634 = vsel %vm381, %v2282, %v2435
        %v2635 = vsel %vm381, %v2283, %v2437
        %v2636 = vsel %vm381, %v2284, %v2439
        %v2637 = vsel %vm381, %v2285, %v2441
        %v2638 = vsel %vm381, %v2286, %v2443
        %v2639 = vsel %vm381, %v2287, %v2445
        %v2640 = vsel %vm381, %v2288, %v2447
        %v2641 = vsel %vm381, %v2289, %v2449
        %v2642 = vsel %vm1378, %v2610, %v2515
        %v2643 = vsel %vm1378, %v2611, %v2517
        %v2644 = vsel %vm1378, %v2612, %v2519
        %v2645 = vsel %vm1378, %v2613, %v2521
        %v2646 = vsel %vm1378, %v2614, %v2523
        %v2647 = vsel %vm1378, %v2615, %v2525
        %v2648 = vsel %vm1378, %v2616, %v2527
        %v2649 = vsel %vm1378, %v2617, %v2529
        %v2650 = vsel %vm1378, %v2618, %v2531
        %v2651 = vsel %vm1378, %v2619, %v2533
        %v2652 = vsel %vm1378, %v2620, %v2535
        %v2653 = vsel %vm1378, %v2621, %v2537
        %v2654 = vsel %vm1378, %v2622, %v2539
        %v2655 = vsel %vm1378, %v2623, %v2541
        %v2656 = vsel %vm1378, %v2624, %v2543
        %v2657 = vsel %vm1378, %v2625, %v2545
        %v2658 = vsel %vm1378, %v2626, %v2547
        %v2659 = vsel %vm1378, %v2627, %v2549
        %v2660 = vsel %vm1378, %v2628, %v2551
        %v2661 = vsel %vm1378, %v2629, %v2553
        %v2662 = vsel %vm1378, %v2630, %v2555
        %v2663 = vsel %vm1378, %v2631, %v2557
        %v2664 = vsel %vm1378, %v2632, %v2559
        %v2665 = vsel %vm1378, %v2633, %v2561
        %v2666 = vsel %vm1378, %v2634, %v2563
        %v2667 = vsel %vm1378, %v2635, %v2565
        %v2668 = vsel %vm1378, %v2636, %v2567
        %v2669 = vsel %vm1378, %v2637, %v2569
        %v2670 = vsel %vm1378, %v2638, %v2571
        %v2671 = vsel %vm1378, %v2639, %v2573
        %v2672 = vsel %vm1378, %v2640, %v2575
        %v2673 = vsel %vm1378, %v2641, %v2577
        %s2674 = scalar_lea.vmem %s3, 32
        %v2675 = vld [vmem:[%s2674] sm:$0xff]
        %v2676 = vld [vmem:[%s2674 + $0x8] sm:$0xf]
        %v2678 = vsel %vm1832, %v2642, 0
        %v2681 = vsel %vm1832, %v2643, 0
        %v2684 = vsel %vm1832, %v2644, 0
        %v2687 = vsel %vm1832, %v2645, 0
        %v2690 = vsel %vm1832, %v2646, 0
        %v2693 = vsel %vm1832, %v2647, 0
        %v2696 = vsel %vm1832, %v2648, 0
        %v2699 = vsel %vm1832, %v2649, 0
        %v2702 = vsel %vm1832, %v2650, 0
        %v2705 = vsel %vm1832, %v2651, 0
        %v2708 = vsel %vm1832, %v2652, 0
        %v2711 = vsel %vm1832, %v2653, 0
        %v2714 = vsel %vm1832, %v2654, 0
        %v2717 = vsel %vm1832, %v2655, 0
        %v2720 = vsel %vm1832, %v2656, 0
        %v2723 = vsel %vm1832, %v2657, 0
        %v2726 = vsel %vm1832, %v2658, 0
        %v2729 = vsel %vm1832, %v2659, 0
        %v2732 = vsel %vm1832, %v2660, 0
        %v2735 = vsel %vm1832, %v2661, 0
        %v2738 = vsel %vm1832, %v2662, 0
        %v2741 = vsel %vm1832, %v2663, 0
        %v2744 = vsel %vm1832, %v2664, 0
        %v2747 = vsel %vm1832, %v2665, 0
        %v2750 = vsel %vm1832, %v2666, 0
        %v2753 = vsel %vm1832, %v2667, 0
        %v2756 = vsel %vm1832, %v2668, 0
        %v2759 = vsel %vm1832, %v2669, 0
        %v2762 = vsel %vm1832, %v2670, 0
        %v2765 = vsel %vm1832, %v2671, 0
        %v2768 = vsel %vm1832, %v2672, 0
        %v2771 = vsel %vm1832, %v2673, 0
        %v2774 = vsel %vm478, %v2676, 0
        %2776 = vmatpush.msra.mxu0 0.0
        %2777 = vmatpush.msra.mxu0 0.0
        %2778 = vmatpush.msra.mxu0 0.0
        %2779 = vmatpush.msra.mxu0 0.0
        %2780 = vmatpush.msra.mxu0 0.0
        %2781 = vmatpush.msra.mxu0 0.0
        %2782 = vmatpush.msra.mxu0 0.0
        %2783 = vmatpush.msra.mxu0 0.0
        %2784 = vmatpush.msra.mxu0 0.0
        %2785 = vmatpush.msra.mxu0 0.0
        %2786 = vmatpush.msra.mxu0 0.0
        %2787 = vmatpush.msra.mxu0 0.0
        %2788 = vmatpush.msra.mxu0 0.0
        %2789 = vmatpush.msra.mxu0 0.0
        %2790 = vmatpush.msra.mxu0 %v2774
        %2791 = vmatpush.msra.mxu0 %v2675
        %2792 = vmatmul.f32.gmra.mxu0 %v2678
        %v2793 = vpop.f32.mrf.mxu0
        %v2794 = vadd.f32 0.0, %v2793
        %2795 = vmatmul.f32.gmra.mxu0 %v2681
        %v2796 = vpop.f32.mrf.mxu0
        %v2797 = vadd.f32 0.0, %v2796
        %2798 = vmatmul.f32.gmra.mxu0 %v2684
        %v2799 = vpop.f32.mrf.mxu0
        %v2800 = vadd.f32 0.0, %v2799
        %2801 = vmatmul.f32.gmra.mxu0 %v2687
        %v2802 = vpop.f32.mrf.mxu0
        %v2803 = vadd.f32 0.0, %v2802
        %2804 = vmatmul.f32.gmra.mxu0 %v2690
        %v2805 = vpop.f32.mrf.mxu0
        %v2806 = vadd.f32 0.0, %v2805
        %2807 = vmatmul.f32.gmra.mxu0 %v2693
        %v2808 = vpop.f32.mrf.mxu0
        %v2809 = vadd.f32 0.0, %v2808
        %2810 = vmatmul.f32.gmra.mxu0 %v2696
        %v2811 = vpop.f32.mrf.mxu0
        %v2812 = vadd.f32 0.0, %v2811
        %2813 = vmatmul.f32.gmra.mxu0 %v2699
        %v2814 = vpop.f32.mrf.mxu0
        %v2815 = vadd.f32 0.0, %v2814
        %2816 = vmatmul.f32.gmra.mxu0 %v2702
        %v2817 = vpop.f32.mrf.mxu0
        %v2818 = vadd.f32 0.0, %v2817
        %2819 = vmatmul.f32.gmra.mxu0 %v2705
        %v2820 = vpop.f32.mrf.mxu0
        %v2821 = vadd.f32 0.0, %v2820
        %2822 = vmatmul.f32.gmra.mxu0 %v2708
        %v2823 = vpop.f32.mrf.mxu0
        %v2824 = vadd.f32 0.0, %v2823
        %2825 = vmatmul.f32.gmra.mxu0 %v2711
        %v2826 = vpop.f32.mrf.mxu0
        %v2827 = vadd.f32 0.0, %v2826
        %2828 = vmatmul.f32.gmra.mxu0 %v2714
        %v2829 = vpop.f32.mrf.mxu0
        %v2830 = vadd.f32 0.0, %v2829
        %2831 = vmatmul.f32.gmra.mxu0 %v2717
        %v2832 = vpop.f32.mrf.mxu0
        %v2833 = vadd.f32 0.0, %v2832
        %2834 = vmatmul.f32.gmra.mxu0 %v2720
        %v2835 = vpop.f32.mrf.mxu0
        %v2836 = vadd.f32 0.0, %v2835
        %2837 = vmatmul.f32.gmra.mxu0 %v2723
        %v2838 = vpop.f32.mrf.mxu0
        %v2839 = vadd.f32 0.0, %v2838
        %2840 = vmatmul.f32.gmra.mxu0 %v2726
        %v2841 = vpop.f32.mrf.mxu0
        %v2842 = vadd.f32 0.0, %v2841
        %2843 = vmatmul.f32.gmra.mxu0 %v2729
        %v2844 = vpop.f32.mrf.mxu0
        %v2845 = vadd.f32 0.0, %v2844
        %2846 = vmatmul.f32.gmra.mxu0 %v2732
        %v2847 = vpop.f32.mrf.mxu0
        %v2848 = vadd.f32 0.0, %v2847
        %2849 = vmatmul.f32.gmra.mxu0 %v2735
        %v2850 = vpop.f32.mrf.mxu0
        %v2851 = vadd.f32 0.0, %v2850
        %2852 = vmatmul.f32.gmra.mxu0 %v2738
        %v2853 = vpop.f32.mrf.mxu0
        %v2854 = vadd.f32 0.0, %v2853
        %2855 = vmatmul.f32.gmra.mxu0 %v2741
        %v2856 = vpop.f32.mrf.mxu0
        %v2857 = vadd.f32 0.0, %v2856
        %2858 = vmatmul.f32.gmra.mxu0 %v2744
        %v2859 = vpop.f32.mrf.mxu0
        %v2860 = vadd.f32 0.0, %v2859
        %2861 = vmatmul.f32.gmra.mxu0 %v2747
        %v2862 = vpop.f32.mrf.mxu0
        %v2863 = vadd.f32 0.0, %v2862
        %2864 = vmatmul.f32.gmra.mxu0 %v2750
        %v2865 = vpop.f32.mrf.mxu0
        %v2866 = vadd.f32 0.0, %v2865
        %2867 = vmatmul.f32.gmra.mxu0 %v2753
        %v2868 = vpop.f32.mrf.mxu0
        %v2869 = vadd.f32 0.0, %v2868
        %2870 = vmatmul.f32.gmra.mxu0 %v2756
        %v2871 = vpop.f32.mrf.mxu0
        %v2872 = vadd.f32 0.0, %v2871
        %2873 = vmatmul.f32.gmra.mxu0 %v2759
        %v2874 = vpop.f32.mrf.mxu0
        %v2875 = vadd.f32 0.0, %v2874
        %2876 = vmatmul.f32.gmra.mxu0 %v2762
        %v2877 = vpop.f32.mrf.mxu0
        %v2878 = vadd.f32 0.0, %v2877
        %2879 = vmatmul.f32.gmra.mxu0 %v2765
        %v2880 = vpop.f32.mrf.mxu0
        %v2881 = vadd.f32 0.0, %v2880
        %2882 = vmatmul.f32.gmra.mxu0 %v2768
        %v2883 = vpop.f32.mrf.mxu0
        %v2884 = vadd.f32 0.0, %v2883
        %2885 = vmatmul.f32.gmra.mxu0 %v2771
        %v2886 = vpop.f32.mrf.mxu0
        %v2887 = vadd.f32 0.0, %v2886
        %2888 = vdwg.mxu0
        %v2889 = vadd.f32 %v2162, %v2794
        %v2890 = vadd.f32 %v2165, %v2797
        %v2891 = vadd.f32 %v2168, %v2800
        %v2892 = vadd.f32 %v2171, %v2803
        %v2893 = vadd.f32 %v2174, %v2806
        %v2894 = vadd.f32 %v2177, %v2809
        %v2895 = vadd.f32 %v2180, %v2812
        %v2896 = vadd.f32 %v2183, %v2815
        %v2897 = vadd.f32 %v2186, %v2818
        %v2898 = vadd.f32 %v2189, %v2821
        %v2899 = vadd.f32 %v2192, %v2824
        %v2900 = vadd.f32 %v2195, %v2827
        %v2901 = vadd.f32 %v2198, %v2830
        %v2902 = vadd.f32 %v2201, %v2833
        %v2903 = vadd.f32 %v2204, %v2836
        %v2904 = vadd.f32 %v2207, %v2839
        %v2905 = vadd.f32 %v2210, %v2842
        %v2906 = vadd.f32 %v2213, %v2845
        %v2907 = vadd.f32 %v2216, %v2848
        %v2908 = vadd.f32 %v2219, %v2851
        %v2909 = vadd.f32 %v2222, %v2854
        %v2910 = vadd.f32 %v2225, %v2857
        %v2911 = vadd.f32 %v2228, %v2860
        %v2912 = vadd.f32 %v2231, %v2863
        %v2913 = vadd.f32 %v2234, %v2866
        %v2914 = vadd.f32 %v2237, %v2869
        %v2915 = vadd.f32 %v2240, %v2872
        %v2916 = vadd.f32 %v2243, %v2875
        %v2917 = vadd.f32 %v2246, %v2878
        %v2918 = vadd.f32 %v2249, %v2881
        %v2919 = vadd.f32 %v2252, %v2884
        %v2920 = vadd.f32 %v2255, %v2887
        %v2921 = vld [vmem:[%s4] sm:$0x1]
        %v2923 = vperm.slane %v2921, 0
        %v2925 = vadd.f32 %v2889, %v2923
        %v2926 = vadd.f32 %v2890, %v2923
        %v2927 = vadd.f32 %v2891, %v2923
        %v2928 = vadd.f32 %v2892, %v2923
        %v2929 = vadd.f32 %v2893, %v2923
        %v2930 = vadd.f32 %v2894, %v2923
        %v2931 = vadd.f32 %v2895, %v2923
        %v2932 = vadd.f32 %v2896, %v2923
        %v2933 = vadd.f32 %v2897, %v2923
        %v2934 = vadd.f32 %v2898, %v2923
        %v2935 = vadd.f32 %v2899, %v2923
        %v2936 = vadd.f32 %v2900, %v2923
        %v2937 = vadd.f32 %v2901, %v2923
        %v2938 = vadd.f32 %v2902, %v2923
        %v2939 = vadd.f32 %v2903, %v2923
        %v2940 = vadd.f32 %v2904, %v2923
        %v2941 = vadd.f32 %v2905, %v2923
        %v2942 = vadd.f32 %v2906, %v2923
        %v2943 = vadd.f32 %v2907, %v2923
        %v2944 = vadd.f32 %v2908, %v2923
        %v2945 = vadd.f32 %v2909, %v2923
        %v2946 = vadd.f32 %v2910, %v2923
        %v2947 = vadd.f32 %v2911, %v2923
        %v2948 = vadd.f32 %v2912, %v2923
        %v2949 = vadd.f32 %v2913, %v2923
        %v2950 = vadd.f32 %v2914, %v2923
        %v2951 = vadd.f32 %v2915, %v2923
        %v2952 = vadd.f32 %v2916, %v2923
        %v2953 = vadd.f32 %v2917, %v2923
        %v2954 = vadd.f32 %v2918, %v2923
        %v2955 = vadd.f32 %v2919, %v2923
        %v2956 = vadd.f32 %v2920, %v2923
        %v2957 = vmax.f32 %v2925, 0.0
        %v2958 = vmax.f32 %v2926, 0.0
        %v2959 = vmax.f32 %v2927, 0.0
        %v2960 = vmax.f32 %v2928, 0.0
        %v2961 = vmax.f32 %v2929, 0.0
        %v2962 = vmax.f32 %v2930, 0.0
        %v2963 = vmax.f32 %v2931, 0.0
        %v2964 = vmax.f32 %v2932, 0.0
        %v2965 = vmax.f32 %v2933, 0.0
        %v2966 = vmax.f32 %v2934, 0.0
        %v2967 = vmax.f32 %v2935, 0.0
        %v2968 = vmax.f32 %v2936, 0.0
        %v2969 = vmax.f32 %v2937, 0.0
        %v2970 = vmax.f32 %v2938, 0.0
        %v2971 = vmax.f32 %v2939, 0.0
        %v2972 = vmax.f32 %v2940, 0.0
        %v2973 = vmax.f32 %v2941, 0.0
        %v2974 = vmax.f32 %v2942, 0.0
        %v2975 = vmax.f32 %v2943, 0.0
        %v2976 = vmax.f32 %v2944, 0.0
        %v2977 = vmax.f32 %v2945, 0.0
        %v2978 = vmax.f32 %v2946, 0.0
        %v2979 = vmax.f32 %v2947, 0.0
        %v2980 = vmax.f32 %v2948, 0.0
        %v2981 = vmax.f32 %v2949, 0.0
        %v2982 = vmax.f32 %v2950, 0.0
        %v2983 = vmax.f32 %v2951, 0.0
        %v2984 = vmax.f32 %v2952, 0.0
        %v2985 = vmax.f32 %v2953, 0.0
        %v2986 = vmax.f32 %v2954, 0.0
        %v2987 = vmax.f32 %v2955, 0.0
        %v2988 = vmax.f32 %v2956, 0.0
        %s2989 = scalar_lea.vmem [#allocation3], 48
        %2990 = vst.msk [vmem:[%s2989 + $0x2] sm:$0xff] %vm381, %v826
        %2991 = vst.msk [vmem:[%s2989 + $0xa] sm:$0xff] %vm381, %v829
        %2992 = vst.msk [vmem:[%s2989 + $0x1a] sm:$0xff] %vm381, %v832
        %2993 = vst.msk [vmem:[%s2989 + $0x22] sm:$0xff] %vm381, %v835
        %2994 = vst.msk [vmem:[%s2989 + $0x32] sm:$0xff] %vm381, %v838
        %2995 = vst.msk [vmem:[%s2989 + $0x3a] sm:$0xff] %vm381, %v841
        %2996 = vst.msk [vmem:[%s2989 + $0x4a] sm:$0xff] %vm381, %v844
        %2997 = vst.msk [vmem:[%s2989 + $0x52] sm:$0xff] %vm381, %v847
        %2998 = vst.msk [vmem:[%s2989 + $0x62] sm:$0xff] %vm381, %v850
        %2999 = vst.msk [vmem:[%s2989 + $0x6a] sm:$0xff] %vm381, %v853
        %3000 = vst.msk [vmem:[%s2989 + $0x7a] sm:$0xff] %vm381, %v856
        %3001 = vst.msk [vmem:[%s2989 + $0x82] sm:$0xff] %vm381, %v859
        %3002 = vst.msk [vmem:[%s2989 + $0x92] sm:$0xff] %vm381, %v862
        %3003 = vst.msk [vmem:[%s2989 + $0x9a] sm:$0xff] %vm381, %v865
        %3004 = vst.msk [vmem:[%s2989 + $0xaa] sm:$0xff] %vm381, %v868
        %3005 = vst.msk [vmem:[%s2989 + $0xb2] sm:$0xff] %vm381, %v871
        %3006 = vst.msk [vmem:[%s2989 + $0xc2] sm:$0xff] %vm381, %v874
        %3007 = vst.msk [vmem:[%s2989 + $0xca] sm:$0xff] %vm381, %v877
        %3008 = vst.msk [vmem:[%s2989 + $0xda] sm:$0xff] %vm381, %v880
        %3009 = vst.msk [vmem:[%s2989 + $0xe2] sm:$0xff] %vm381, %v883
        %3010 = vst.msk [vmem:[%s2989 + $0xf2] sm:$0xff] %vm381, %v886
        %3011 = vst.msk [vmem:[%s2989 + $0xfa] sm:$0xff] %vm381, %v889
        %3012 = vst.msk [vmem:[%s2989 + $0x10a] sm:$0xff] %vm381, %v892
        %3013 = vst.msk [vmem:[%s2989 + $0x112] sm:$0xff] %vm381, %v895
        %3014 = vst.msk [vmem:[%s2989 + $0x122] sm:$0xff] %vm381, %v898
        %3015 = vst.msk [vmem:[%s2989 + $0x12a] sm:$0xff] %vm381, %v901
        %3016 = vst.msk [vmem:[%s2989 + $0x13a] sm:$0xff] %vm381, %v904
        %3017 = vst.msk [vmem:[%s2989 + $0x142] sm:$0xff] %vm381, %v907
        %3018 = vst.msk [vmem:[%s2989 + $0x152] sm:$0xff] %vm381, %v910
        %3019 = vst.msk [vmem:[%s2989 + $0x15a] sm:$0xff] %vm381, %v913
        %3020 = vst.msk [vmem:[%s2989 + $0x16a] sm:$0xff] %vm381, %v916
        %3021 = vst.msk [vmem:[%s2989 + $0x172] sm:$0xff] %vm381, %v919
        %3022 = vst.msk [vmem:[#allocation3] sm:$0xff] %vm381, 0.0
        %3023 = vst.msk [vmem:[#allocation3 + $0x8] sm:$0xff] %vm381, 0.0
        %vm3024 = vcmask 27648
        %3025 = vst.msk [vmem:[#allocation3 + $0x10] sm:$0xf] %vm3024, 0.0
        %3026 = vst.msk [vmem:[#allocation3 + $0x18] sm:$0xff] %vm381, 0.0
        %3027 = vst.msk [vmem:[#allocation3 + $0x20] sm:$0xff] %vm381, 0.0
        %3028 = vst.msk [vmem:[#allocation3 + $0x28] sm:$0xf] %vm3024, 0.0
        %s3029 = scalar_lea.vmem [#allocation3], 432
        %3030 = vst.msk [vmem:[%s3029] sm:$0xff] %vm381, 0.0
        %3031 = vst.msk [vmem:[%s3029 + $0x8] sm:$0xff] %vm381, 0.0
        %3032 = vst.msk [vmem:[%s3029 + $0x10] sm:$0xf] %vm3024, 0.0
        %3033 = vst.msk [vmem:[%s3029 + $0x18] sm:$0xff] %vm381, 0.0
        %3034 = vst.msk [vmem:[%s3029 + $0x20] sm:$0xff] %vm381, 0.0
        %3035 = vst.msk [vmem:[%s3029 + $0x28] sm:$0xf] %vm3024, 0.0
        %3036 = vst.msk [vmem:[%s2989] sm:$0x3] %vm955, 0.0
        %3037 = vst.msk [vmem:[%s2989 + $0x18] sm:$0x3] %vm955, 0.0
        %3038 = vst.msk [vmem:[%s2989 + $0x30] sm:$0x3] %vm955, 0.0
        %3039 = vst.msk [vmem:[%s2989 + $0x48] sm:$0x3] %vm955, 0.0
        %3040 = vst.msk [vmem:[%s2989 + $0x60] sm:$0x3] %vm955, 0.0
        %3041 = vst.msk [vmem:[%s2989 + $0x78] sm:$0x3] %vm955, 0.0
        %3042 = vst.msk [vmem:[%s2989 + $0x90] sm:$0x3] %vm955, 0.0
        %3043 = vst.msk [vmem:[%s2989 + $0xa8] sm:$0x3] %vm955, 0.0
        %3044 = vst.msk [vmem:[%s2989 + $0xc0] sm:$0x3] %vm955, 0.0
        %3045 = vst.msk [vmem:[%s2989 + $0xd8] sm:$0x3] %vm955, 0.0
        %3046 = vst.msk [vmem:[%s2989 + $0xf0] sm:$0x3] %vm955, 0.0
        %3047 = vst.msk [vmem:[%s2989 + $0x108] sm:$0x3] %vm955, 0.0
        %3048 = vst.msk [vmem:[%s2989 + $0x120] sm:$0x3] %vm955, 0.0
        %3049 = vst.msk [vmem:[%s2989 + $0x138] sm:$0x3] %vm955, 0.0
        %3050 = vst.msk [vmem:[%s2989 + $0x150] sm:$0x3] %vm955, 0.0
        %3051 = vst.msk [vmem:[%s2989 + $0x168] sm:$0x3] %vm955, 0.0
        %3052 = vst.msk [vmem:[%s2989 + $0x12] sm:$0x3] %vm955, 0.0
        %3053 = vst.msk [vmem:[%s2989 + $0x2a] sm:$0x3] %vm955, 0.0
        %3054 = vst.msk [vmem:[%s2989 + $0x42] sm:$0x3] %vm955, 0.0
        %3055 = vst.msk [vmem:[%s2989 + $0x5a] sm:$0x3] %vm955, 0.0
        %3056 = vst.msk [vmem:[%s2989 + $0x72] sm:$0x3] %vm955, 0.0
        %3057 = vst.msk [vmem:[%s2989 + $0x8a] sm:$0x3] %vm955, 0.0
        %3058 = vst.msk [vmem:[%s2989 + $0xa2] sm:$0x3] %vm955, 0.0
        %3059 = vst.msk [vmem:[%s2989 + $0xba] sm:$0x3] %vm955, 0.0
        %3060 = vst.msk [vmem:[%s2989 + $0xd2] sm:$0x3] %vm955, 0.0
        %3061 = vst.msk [vmem:[%s2989 + $0xea] sm:$0x3] %vm955, 0.0
        %3062 = vst.msk [vmem:[%s2989 + $0x102] sm:$0x3] %vm955, 0.0
        %3063 = vst.msk [vmem:[%s2989 + $0x11a] sm:$0x3] %vm955, 0.0
        %3064 = vst.msk [vmem:[%s2989 + $0x132] sm:$0x3] %vm955, 0.0
        %3065 = vst.msk [vmem:[%s2989 + $0x14a] sm:$0x3] %vm955, 0.0
        %3066 = vst.msk [vmem:[%s2989 + $0x162] sm:$0x3] %vm955, 0.0
        %3067 = vst.msk [vmem:[%s2989 + $0x17a] sm:$0x3] %vm955, 0.0
        %v3068 = vld [vmem:[#allocation3] sm:$0xff]
        %v3069 = vld [vmem:[#allocation3 + $0x8] sm:$0xff]
        %v3070 = vld [vmem:[#allocation3 + $0x18] sm:$0xff]
        %v3071 = vld [vmem:[#allocation3 + $0x20] sm:$0xff]
        %v3072 = vld [vmem:[#allocation3 + $0x30] sm:$0xff]
        %v3073 = vld [vmem:[#allocation3 + $0x38] sm:$0xff]
        %v3074 = vld [vmem:[#allocation3 + $0x48] sm:$0xff]
        %v3075 = vld [vmem:[#allocation3 + $0x50] sm:$0xff]
        %v3076 = vld [vmem:[#allocation3 + $0x60] sm:$0xff]
        %v3077 = vld [vmem:[#allocation3 + $0x68] sm:$0xff]
        %v3078 = vld [vmem:[#allocation3 + $0x78] sm:$0xff]
        %v3079 = vld [vmem:[#allocation3 + $0x80] sm:$0xff]
        %v3080 = vld [vmem:[#allocation3 + $0x90] sm:$0xff]
        %v3081 = vld [vmem:[#allocation3 + $0x98] sm:$0xff]
        %v3082 = vld [vmem:[#allocation3 + $0xa8] sm:$0xff]
        %v3083 = vld [vmem:[#allocation3 + $0xb0] sm:$0xff]
        %v3084 = vld [vmem:[#allocation3 + $0xc0] sm:$0xff]
        %v3085 = vld [vmem:[#allocation3 + $0xc8] sm:$0xff]
        %v3086 = vld [vmem:[#allocation3 + $0xd8] sm:$0xff]
        %v3087 = vld [vmem:[#allocation3 + $0xe0] sm:$0xff]
        %v3088 = vld [vmem:[#allocation3 + $0xf0] sm:$0xff]
        %v3089 = vld [vmem:[#allocation3 + $0xf8] sm:$0xff]
        %v3090 = vld [vmem:[#allocation3 + $0x108] sm:$0xff]
        %v3091 = vld [vmem:[#allocation3 + $0x110] sm:$0xff]
        %v3092 = vld [vmem:[#allocation3 + $0x120] sm:$0xff]
        %v3093 = vld [vmem:[#allocation3 + $0x128] sm:$0xff]
        %v3094 = vld [vmem:[#allocation3 + $0x138] sm:$0xff]
        %v3095 = vld [vmem:[#allocation3 + $0x140] sm:$0xff]
        %v3096 = vld [vmem:[#allocation3 + $0x150] sm:$0xff]
        %v3097 = vld [vmem:[#allocation3 + $0x158] sm:$0xff]
        %v3098 = vld [vmem:[#allocation3 + $0x168] sm:$0xff]
        %v3099 = vld [vmem:[#allocation3 + $0x170] sm:$0xff]
        %v3100 = vld [vmem:[#allocation3 + $0x1] sm:$0xff]
        %v3101 = vld [vmem:[#allocation3 + $0x9] sm:$0xff]
        %v3102 = vld [vmem:[#allocation3 + $0x19] sm:$0xff]
        %v3103 = vld [vmem:[#allocation3 + $0x21] sm:$0xff]
        %v3104 = vld [vmem:[#allocation3 + $0x31] sm:$0xff]
        %v3105 = vld [vmem:[#allocation3 + $0x39] sm:$0xff]
        %v3106 = vld [vmem:[#allocation3 + $0x49] sm:$0xff]
        %v3107 = vld [vmem:[#allocation3 + $0x51] sm:$0xff]
        %v3108 = vld [vmem:[#allocation3 + $0x61] sm:$0xff]
        %v3109 = vld [vmem:[#allocation3 + $0x69] sm:$0xff]
        %v3110 = vld [vmem:[#allocation3 + $0x79] sm:$0xff]
        %v3111 = vld [vmem:[#allocation3 + $0x81] sm:$0xff]
        %v3112 = vld [vmem:[#allocation3 + $0x91] sm:$0xff]
        %v3113 = vld [vmem:[#allocation3 + $0x99] sm:$0xff]
        %v3114 = vld [vmem:[#allocation3 + $0xa9] sm:$0xff]
        %v3115 = vld [vmem:[#allocation3 + $0xb1] sm:$0xff]
        %v3116 = vld [vmem:[#allocation3 + $0xc1] sm:$0xff]
        %v3117 = vld [vmem:[#allocation3 + $0xc9] sm:$0xff]
        %v3118 = vld [vmem:[#allocation3 + $0xd9] sm:$0xff]
        %v3119 = vld [vmem:[#allocation3 + $0xe1] sm:$0xff]
        %v3120 = vld [vmem:[#allocation3 + $0xf1] sm:$0xff]
        %v3121 = vld [vmem:[#allocation3 + $0xf9] sm:$0xff]
        %v3122 = vld [vmem:[#allocation3 + $0x109] sm:$0xff]
        %v3123 = vld [vmem:[#allocation3 + $0x111] sm:$0xff]
        %v3124 = vld [vmem:[#allocation3 + $0x121] sm:$0xff]
        %v3125 = vld [vmem:[#allocation3 + $0x129] sm:$0xff]
        %v3126 = vld [vmem:[#allocation3 + $0x139] sm:$0xff]
        %v3127 = vld [vmem:[#allocation3 + $0x141] sm:$0xff]
        %v3128 = vld [vmem:[#allocation3 + $0x151] sm:$0xff]
        %v3129 = vld [vmem:[#allocation3 + $0x159] sm:$0xff]
        %v3130 = vld [vmem:[#allocation3 + $0x169] sm:$0xff]
        %v3131 = vld [vmem:[#allocation3 + $0x171] sm:$0xff]
        %v3132 = vld [vmem:[#allocation3 + $0x2] sm:$0xff]
        %v3133 = vld [vmem:[#allocation3 + $0xa] sm:$0xff]
        %v3134 = vld [vmem:[#allocation3 + $0x1a] sm:$0xff]
        %v3135 = vld [vmem:[#allocation3 + $0x22] sm:$0xff]
        %v3136 = vld [vmem:[#allocation3 + $0x32] sm:$0xff]
        %v3137 = vld [vmem:[#allocation3 + $0x3a] sm:$0xff]
        %v3138 = vld [vmem:[#allocation3 + $0x4a] sm:$0xff]
        %v3139 = vld [vmem:[#allocation3 + $0x52] sm:$0xff]
        %v3140 = vld [vmem:[#allocation3 + $0x62] sm:$0xff]
        %v3141 = vld [vmem:[#allocation3 + $0x6a] sm:$0xff]
        %v3142 = vld [vmem:[#allocation3 + $0x7a] sm:$0xff]
        %v3143 = vld [vmem:[#allocation3 + $0x82] sm:$0xff]
        %v3144 = vld [vmem:[#allocation3 + $0x92] sm:$0xff]
        %v3145 = vld [vmem:[#allocation3 + $0x9a] sm:$0xff]
        %v3146 = vld [vmem:[#allocation3 + $0xaa] sm:$0xff]
        %v3147 = vld [vmem:[#allocation3 + $0xb2] sm:$0xff]
        %v3148 = vld [vmem:[#allocation3 + $0xc2] sm:$0xff]
        %v3149 = vld [vmem:[#allocation3 + $0xca] sm:$0xff]
        %v3150 = vld [vmem:[#allocation3 + $0xda] sm:$0xff]
        %v3151 = vld [vmem:[#allocation3 + $0xe2] sm:$0xff]
        %v3152 = vld [vmem:[#allocation3 + $0xf2] sm:$0xff]
        %v3153 = vld [vmem:[#allocation3 + $0xfa] sm:$0xff]
        %v3154 = vld [vmem:[#allocation3 + $0x10a] sm:$0xff]
        %v3155 = vld [vmem:[#allocation3 + $0x112] sm:$0xff]
        %v3156 = vld [vmem:[#allocation3 + $0x122] sm:$0xff]
        %v3157 = vld [vmem:[#allocation3 + $0x12a] sm:$0xff]
        %v3158 = vld [vmem:[#allocation3 + $0x13a] sm:$0xff]
        %v3159 = vld [vmem:[#allocation3 + $0x142] sm:$0xff]
        %v3160 = vld [vmem:[#allocation3 + $0x152] sm:$0xff]
        %v3161 = vld [vmem:[#allocation3 + $0x15a] sm:$0xff]
        %v3162 = vld [vmem:[#allocation3 + $0x16a] sm:$0xff]
        %v3163 = vld [vmem:[#allocation3 + $0x172] sm:$0xff]
        %v3164 = vld [vmem:[#allocation3 + $0x3] sm:$0xff]
        %v3165 = vld [vmem:[#allocation3 + $0xb] sm:$0xff]
        %v3166 = vld [vmem:[#allocation3 + $0x1b] sm:$0xff]
        %v3167 = vld [vmem:[#allocation3 + $0x23] sm:$0xff]
        %v3168 = vld [vmem:[#allocation3 + $0x33] sm:$0xff]
        %v3169 = vld [vmem:[#allocation3 + $0x3b] sm:$0xff]
        %v3170 = vld [vmem:[#allocation3 + $0x4b] sm:$0xff]
        %v3171 = vld [vmem:[#allocation3 + $0x53] sm:$0xff]
        %v3172 = vld [vmem:[#allocation3 + $0x63] sm:$0xff]
        %v3173 = vld [vmem:[#allocation3 + $0x6b] sm:$0xff]
        %v3174 = vld [vmem:[#allocation3 + $0x7b] sm:$0xff]
        %v3175 = vld [vmem:[#allocation3 + $0x83] sm:$0xff]
        %v3176 = vld [vmem:[#allocation3 + $0x93] sm:$0xff]
        %v3177 = vld [vmem:[#allocation3 + $0x9b] sm:$0xff]
        %v3178 = vld [vmem:[#allocation3 + $0xab] sm:$0xff]
        %v3179 = vld [vmem:[#allocation3 + $0xb3] sm:$0xff]
        %v3180 = vld [vmem:[#allocation3 + $0xc3] sm:$0xff]
        %v3181 = vld [vmem:[#allocation3 + $0xcb] sm:$0xff]
        %v3182 = vld [vmem:[#allocation3 + $0xdb] sm:$0xff]
        %v3183 = vld [vmem:[#allocation3 + $0xe3] sm:$0xff]
        %v3184 = vld [vmem:[#allocation3 + $0xf3] sm:$0xff]
        %v3185 = vld [vmem:[#allocation3 + $0xfb] sm:$0xff]
        %v3186 = vld [vmem:[#allocation3 + $0x10b] sm:$0xff]
        %v3187 = vld [vmem:[#allocation3 + $0x113] sm:$0xff]
        %v3188 = vld [vmem:[#allocation3 + $0x123] sm:$0xff]
        %v3189 = vld [vmem:[#allocation3 + $0x12b] sm:$0xff]
        %v3190 = vld [vmem:[#allocation3 + $0x13b] sm:$0xff]
        %v3191 = vld [vmem:[#allocation3 + $0x143] sm:$0xff]
        %v3192 = vld [vmem:[#allocation3 + $0x153] sm:$0xff]
        %v3193 = vld [vmem:[#allocation3 + $0x15b] sm:$0xff]
        %v3194 = vld [vmem:[#allocation3 + $0x16b] sm:$0xff]
        %v3195 = vld [vmem:[#allocation3 + $0x173] sm:$0xff]
        %v3196 = vld [vmem:[#allocation3 + $0x4] sm:$0xff]
        %v3197 = vld [vmem:[#allocation3 + $0xc] sm:$0xff]
        %v3198 = vld [vmem:[#allocation3 + $0x1c] sm:$0xff]
        %v3199 = vld [vmem:[#allocation3 + $0x24] sm:$0xff]
        %v3200 = vld [vmem:[#allocation3 + $0x34] sm:$0xff]
        %v3201 = vld [vmem:[#allocation3 + $0x3c] sm:$0xff]
        %v3202 = vld [vmem:[#allocation3 + $0x4c] sm:$0xff]
        %v3203 = vld [vmem:[#allocation3 + $0x54] sm:$0xff]
        %v3204 = vld [vmem:[#allocation3 + $0x64] sm:$0xff]
        %v3205 = vld [vmem:[#allocation3 + $0x6c] sm:$0xff]
        %v3206 = vld [vmem:[#allocation3 + $0x7c] sm:$0xff]
        %v3207 = vld [vmem:[#allocation3 + $0x84] sm:$0xff]
        %v3208 = vld [vmem:[#allocation3 + $0x94] sm:$0xff]
        %v3209 = vld [vmem:[#allocation3 + $0x9c] sm:$0xff]
        %v3210 = vld [vmem:[#allocation3 + $0xac] sm:$0xff]
        %v3211 = vld [vmem:[#allocation3 + $0xb4] sm:$0xff]
        %v3212 = vld [vmem:[#allocation3 + $0xc4] sm:$0xff]
        %v3213 = vld [vmem:[#allocation3 + $0xcc] sm:$0xff]
        %v3214 = vld [vmem:[#allocation3 + $0xdc] sm:$0xff]
        %v3215 = vld [vmem:[#allocation3 + $0xe4] sm:$0xff]
        %v3216 = vld [vmem:[#allocation3 + $0xf4] sm:$0xff]
        %v3217 = vld [vmem:[#allocation3 + $0xfc] sm:$0xff]
        %v3218 = vld [vmem:[#allocation3 + $0x10c] sm:$0xff]
        %v3219 = vld [vmem:[#allocation3 + $0x114] sm:$0xff]
        %v3220 = vld [vmem:[#allocation3 + $0x124] sm:$0xff]
        %v3221 = vld [vmem:[#allocation3 + $0x12c] sm:$0xff]
        %v3222 = vld [vmem:[#allocation3 + $0x13c] sm:$0xff]
        %v3223 = vld [vmem:[#allocation3 + $0x144] sm:$0xff]
        %v3224 = vld [vmem:[#allocation3 + $0x154] sm:$0xff]
        %v3225 = vld [vmem:[#allocation3 + $0x15c] sm:$0xff]
        %v3226 = vld [vmem:[#allocation3 + $0x16c] sm:$0xff]
        %v3227 = vld [vmem:[#allocation3 + $0x174] sm:$0xff]
        %3260 = vrot.lane.b32.xlu0 %v3100, 4
        %v3261 = vpop.permute.xlu0 %3260
        %3262 = vrot.lane.b32.xlu0 %v3101, 4
        %v3263 = vpop.permute.xlu0 %3262
        %3264 = vrot.lane.b32.xlu0 %v3102, 4
        %v3265 = vpop.permute.xlu0 %3264
        %3266 = vrot.lane.b32.xlu0 %v3103, 4
        %v3267 = vpop.permute.xlu0 %3266
        %3268 = vrot.lane.b32.xlu0 %v3104, 4
        %v3269 = vpop.permute.xlu0 %3268
        %3270 = vrot.lane.b32.xlu0 %v3105, 4
        %v3271 = vpop.permute.xlu0 %3270
        %3272 = vrot.lane.b32.xlu0 %v3106, 4
        %v3273 = vpop.permute.xlu0 %3272
        %3274 = vrot.lane.b32.xlu0 %v3107, 4
        %v3275 = vpop.permute.xlu0 %3274
        %3276 = vrot.lane.b32.xlu0 %v3108, 4
        %v3277 = vpop.permute.xlu0 %3276
        %3278 = vrot.lane.b32.xlu0 %v3109, 4
        %v3279 = vpop.permute.xlu0 %3278
        %3280 = vrot.lane.b32.xlu0 %v3110, 4
        %v3281 = vpop.permute.xlu0 %3280
        %3282 = vrot.lane.b32.xlu0 %v3111, 4
        %v3283 = vpop.permute.xlu0 %3282
        %3284 = vrot.lane.b32.xlu0 %v3112, 4
        %v3285 = vpop.permute.xlu0 %3284
        %3286 = vrot.lane.b32.xlu0 %v3113, 4
        %v3287 = vpop.permute.xlu0 %3286
        %3288 = vrot.lane.b32.xlu0 %v3114, 4
        %v3289 = vpop.permute.xlu0 %3288
        %3290 = vrot.lane.b32.xlu0 %v3115, 4
        %v3291 = vpop.permute.xlu0 %3290
        %3292 = vrot.lane.b32.xlu0 %v3116, 4
        %v3293 = vpop.permute.xlu0 %3292
        %3294 = vrot.lane.b32.xlu0 %v3117, 4
        %v3295 = vpop.permute.xlu0 %3294
        %3296 = vrot.lane.b32.xlu0 %v3118, 4
        %v3297 = vpop.permute.xlu0 %3296
        %3298 = vrot.lane.b32.xlu0 %v3119, 4
        %v3299 = vpop.permute.xlu0 %3298
        %3300 = vrot.lane.b32.xlu0 %v3120, 4
        %v3301 = vpop.permute.xlu0 %3300
        %3302 = vrot.lane.b32.xlu0 %v3121, 4
        %v3303 = vpop.permute.xlu0 %3302
        %3304 = vrot.lane.b32.xlu0 %v3122, 4
        %v3305 = vpop.permute.xlu0 %3304
        %3306 = vrot.lane.b32.xlu0 %v3123, 4
        %v3307 = vpop.permute.xlu0 %3306
        %3308 = vrot.lane.b32.xlu0 %v3124, 4
        %v3309 = vpop.permute.xlu0 %3308
        %3310 = vrot.lane.b32.xlu0 %v3125, 4
        %v3311 = vpop.permute.xlu0 %3310
        %3312 = vrot.lane.b32.xlu0 %v3126, 4
        %v3313 = vpop.permute.xlu0 %3312
        %3314 = vrot.lane.b32.xlu0 %v3127, 4
        %v3315 = vpop.permute.xlu0 %3314
        %3316 = vrot.lane.b32.xlu0 %v3128, 4
        %v3317 = vpop.permute.xlu0 %3316
        %3318 = vrot.lane.b32.xlu0 %v3129, 4
        %v3319 = vpop.permute.xlu0 %3318
        %3320 = vrot.lane.b32.xlu0 %v3130, 4
        %v3321 = vpop.permute.xlu0 %3320
        %3322 = vrot.lane.b32.xlu0 %v3131, 4
        %v3323 = vpop.permute.xlu0 %3322
        %3388 = vrot.lane.b32.xlu0 %v3132, 8
        %v3389 = vpop.permute.xlu0 %3388
        %3390 = vrot.lane.b32.xlu0 %v3133, 8
        %v3391 = vpop.permute.xlu0 %3390
        %3392 = vrot.lane.b32.xlu0 %v3134, 8
        %v3393 = vpop.permute.xlu0 %3392
        %3394 = vrot.lane.b32.xlu0 %v3135, 8
        %v3395 = vpop.permute.xlu0 %3394
        %3396 = vrot.lane.b32.xlu0 %v3136, 8
        %v3397 = vpop.permute.xlu0 %3396
        %3398 = vrot.lane.b32.xlu0 %v3137, 8
        %v3399 = vpop.permute.xlu0 %3398
        %3400 = vrot.lane.b32.xlu0 %v3138, 8
        %v3401 = vpop.permute.xlu0 %3400
        %3402 = vrot.lane.b32.xlu0 %v3139, 8
        %v3403 = vpop.permute.xlu0 %3402
        %3404 = vrot.lane.b32.xlu0 %v3140, 8
        %v3405 = vpop.permute.xlu0 %3404
        %3406 = vrot.lane.b32.xlu0 %v3141, 8
        %v3407 = vpop.permute.xlu0 %3406
        %3408 = vrot.lane.b32.xlu0 %v3142, 8
        %v3409 = vpop.permute.xlu0 %3408
        %3410 = vrot.lane.b32.xlu0 %v3143, 8
        %v3411 = vpop.permute.xlu0 %3410
        %3412 = vrot.lane.b32.xlu0 %v3144, 8
        %v3413 = vpop.permute.xlu0 %3412
        %3414 = vrot.lane.b32.xlu0 %v3145, 8
        %v3415 = vpop.permute.xlu0 %3414
        %3416 = vrot.lane.b32.xlu0 %v3146, 8
        %v3417 = vpop.permute.xlu0 %3416
        %3418 = vrot.lane.b32.xlu0 %v3147, 8
        %v3419 = vpop.permute.xlu0 %3418
        %3420 = vrot.lane.b32.xlu0 %v3148, 8
        %v3421 = vpop.permute.xlu0 %3420
        %3422 = vrot.lane.b32.xlu0 %v3149, 8
        %v3423 = vpop.permute.xlu0 %3422
        %3424 = vrot.lane.b32.xlu0 %v3150, 8
        %v3425 = vpop.permute.xlu0 %3424
        %3426 = vrot.lane.b32.xlu0 %v3151, 8
        %v3427 = vpop.permute.xlu0 %3426
        %3428 = vrot.lane.b32.xlu0 %v3152, 8
        %v3429 = vpop.permute.xlu0 %3428
        %3430 = vrot.lane.b32.xlu0 %v3153, 8
        %v3431 = vpop.permute.xlu0 %3430
        %3432 = vrot.lane.b32.xlu0 %v3154, 8
        %v3433 = vpop.permute.xlu0 %3432
        %3434 = vrot.lane.b32.xlu0 %v3155, 8
        %v3435 = vpop.permute.xlu0 %3434
        %3436 = vrot.lane.b32.xlu0 %v3156, 8
        %v3437 = vpop.permute.xlu0 %3436
        %3438 = vrot.lane.b32.xlu0 %v3157, 8
        %v3439 = vpop.permute.xlu0 %3438
        %3440 = vrot.lane.b32.xlu0 %v3158, 8
        %v3441 = vpop.permute.xlu0 %3440
        %3442 = vrot.lane.b32.xlu0 %v3159, 8
        %v3443 = vpop.permute.xlu0 %3442
        %3444 = vrot.lane.b32.xlu0 %v3160, 8
        %v3445 = vpop.permute.xlu0 %3444
        %3446 = vrot.lane.b32.xlu0 %v3161, 8
        %v3447 = vpop.permute.xlu0 %3446
        %3448 = vrot.lane.b32.xlu0 %v3162, 8
        %v3449 = vpop.permute.xlu0 %3448
        %3450 = vrot.lane.b32.xlu0 %v3163, 8
        %v3451 = vpop.permute.xlu0 %3450
        %3516 = vrot.lane.b32.xlu0 %v3164, 12
        %v3517 = vpop.permute.xlu0 %3516
        %3518 = vrot.lane.b32.xlu0 %v3165, 12
        %v3519 = vpop.permute.xlu0 %3518
        %3520 = vrot.lane.b32.xlu0 %v3166, 12
        %v3521 = vpop.permute.xlu0 %3520
        %3522 = vrot.lane.b32.xlu0 %v3167, 12
        %v3523 = vpop.permute.xlu0 %3522
        %3524 = vrot.lane.b32.xlu0 %v3168, 12
        %v3525 = vpop.permute.xlu0 %3524
        %3526 = vrot.lane.b32.xlu0 %v3169, 12
        %v3527 = vpop.permute.xlu0 %3526
        %3528 = vrot.lane.b32.xlu0 %v3170, 12
        %v3529 = vpop.permute.xlu0 %3528
        %3530 = vrot.lane.b32.xlu0 %v3171, 12
        %v3531 = vpop.permute.xlu0 %3530
        %3532 = vrot.lane.b32.xlu0 %v3172, 12
        %v3533 = vpop.permute.xlu0 %3532
        %3534 = vrot.lane.b32.xlu0 %v3173, 12
        %v3535 = vpop.permute.xlu0 %3534
        %3536 = vrot.lane.b32.xlu0 %v3174, 12
        %v3537 = vpop.permute.xlu0 %3536
        %3538 = vrot.lane.b32.xlu0 %v3175, 12
        %v3539 = vpop.permute.xlu0 %3538
        %3540 = vrot.lane.b32.xlu0 %v3176, 12
        %v3541 = vpop.permute.xlu0 %3540
        %3542 = vrot.lane.b32.xlu0 %v3177, 12
        %v3543 = vpop.permute.xlu0 %3542
        %3544 = vrot.lane.b32.xlu0 %v3178, 12
        %v3545 = vpop.permute.xlu0 %3544
        %3546 = vrot.lane.b32.xlu0 %v3179, 12
        %v3547 = vpop.permute.xlu0 %3546
        %3548 = vrot.lane.b32.xlu0 %v3180, 12
        %v3549 = vpop.permute.xlu0 %3548
        %3550 = vrot.lane.b32.xlu0 %v3181, 12
        %v3551 = vpop.permute.xlu0 %3550
        %3552 = vrot.lane.b32.xlu0 %v3182, 12
        %v3553 = vpop.permute.xlu0 %3552
        %3554 = vrot.lane.b32.xlu0 %v3183, 12
        %v3555 = vpop.permute.xlu0 %3554
        %3556 = vrot.lane.b32.xlu0 %v3184, 12
        %v3557 = vpop.permute.xlu0 %3556
        %3558 = vrot.lane.b32.xlu0 %v3185, 12
        %v3559 = vpop.permute.xlu0 %3558
        %3560 = vrot.lane.b32.xlu0 %v3186, 12
        %v3561 = vpop.permute.xlu0 %3560
        %3562 = vrot.lane.b32.xlu0 %v3187, 12
        %v3563 = vpop.permute.xlu0 %3562
        %3564 = vrot.lane.b32.xlu0 %v3188, 12
        %v3565 = vpop.permute.xlu0 %3564
        %3566 = vrot.lane.b32.xlu0 %v3189, 12
        %v3567 = vpop.permute.xlu0 %3566
        %3568 = vrot.lane.b32.xlu0 %v3190, 12
        %v3569 = vpop.permute.xlu0 %3568
        %3570 = vrot.lane.b32.xlu0 %v3191, 12
        %v3571 = vpop.permute.xlu0 %3570
        %3572 = vrot.lane.b32.xlu0 %v3192, 12
        %v3573 = vpop.permute.xlu0 %3572
        %3574 = vrot.lane.b32.xlu0 %v3193, 12
        %v3575 = vpop.permute.xlu0 %3574
        %3576 = vrot.lane.b32.xlu0 %v3194, 12
        %v3577 = vpop.permute.xlu0 %3576
        %3578 = vrot.lane.b32.xlu0 %v3195, 12
        %v3579 = vpop.permute.xlu0 %3578
        %3644 = vrot.lane.b32.xlu0 %v3196, 16
        %v3645 = vpop.permute.xlu0 %3644
        %3646 = vrot.lane.b32.xlu0 %v3197, 16
        %v3647 = vpop.permute.xlu0 %3646
        %3648 = vrot.lane.b32.xlu0 %v3198, 16
        %v3649 = vpop.permute.xlu0 %3648
        %3650 = vrot.lane.b32.xlu0 %v3199, 16
        %v3651 = vpop.permute.xlu0 %3650
        %3652 = vrot.lane.b32.xlu0 %v3200, 16
        %v3653 = vpop.permute.xlu0 %3652
        %3654 = vrot.lane.b32.xlu0 %v3201, 16
        %v3655 = vpop.permute.xlu0 %3654
        %3656 = vrot.lane.b32.xlu0 %v3202, 16
        %v3657 = vpop.permute.xlu0 %3656
        %3658 = vrot.lane.b32.xlu0 %v3203, 16
        %v3659 = vpop.permute.xlu0 %3658
        %3660 = vrot.lane.b32.xlu0 %v3204, 16
        %v3661 = vpop.permute.xlu0 %3660
        %3662 = vrot.lane.b32.xlu0 %v3205, 16
        %v3663 = vpop.permute.xlu0 %3662
        %3664 = vrot.lane.b32.xlu0 %v3206, 16
        %v3665 = vpop.permute.xlu0 %3664
        %3666 = vrot.lane.b32.xlu0 %v3207, 16
        %v3667 = vpop.permute.xlu0 %3666
        %3668 = vrot.lane.b32.xlu0 %v3208, 16
        %v3669 = vpop.permute.xlu0 %3668
        %3670 = vrot.lane.b32.xlu0 %v3209, 16
        %v3671 = vpop.permute.xlu0 %3670
        %3672 = vrot.lane.b32.xlu0 %v3210, 16
        %v3673 = vpop.permute.xlu0 %3672
        %3674 = vrot.lane.b32.xlu0 %v3211, 16
        %v3675 = vpop.permute.xlu0 %3674
        %3676 = vrot.lane.b32.xlu0 %v3212, 16
        %v3677 = vpop.permute.xlu0 %3676
        %3678 = vrot.lane.b32.xlu0 %v3213, 16
        %v3679 = vpop.permute.xlu0 %3678
        %3680 = vrot.lane.b32.xlu0 %v3214, 16
        %v3681 = vpop.permute.xlu0 %3680
        %3682 = vrot.lane.b32.xlu0 %v3215, 16
        %v3683 = vpop.permute.xlu0 %3682
        %3684 = vrot.lane.b32.xlu0 %v3216, 16
        %v3685 = vpop.permute.xlu0 %3684
        %3686 = vrot.lane.b32.xlu0 %v3217, 16
        %v3687 = vpop.permute.xlu0 %3686
        %3688 = vrot.lane.b32.xlu0 %v3218, 16
        %v3689 = vpop.permute.xlu0 %3688
        %3690 = vrot.lane.b32.xlu0 %v3219, 16
        %v3691 = vpop.permute.xlu0 %3690
        %3692 = vrot.lane.b32.xlu0 %v3220, 16
        %v3693 = vpop.permute.xlu0 %3692
        %3694 = vrot.lane.b32.xlu0 %v3221, 16
        %v3695 = vpop.permute.xlu0 %3694
        %3696 = vrot.lane.b32.xlu0 %v3222, 16
        %v3697 = vpop.permute.xlu0 %3696
        %3698 = vrot.lane.b32.xlu0 %v3223, 16
        %v3699 = vpop.permute.xlu0 %3698
        %3700 = vrot.lane.b32.xlu0 %v3224, 16
        %v3701 = vpop.permute.xlu0 %3700
        %3702 = vrot.lane.b32.xlu0 %v3225, 16
        %v3703 = vpop.permute.xlu0 %3702
        %3704 = vrot.lane.b32.xlu0 %v3226, 16
        %v3705 = vpop.permute.xlu0 %3704
        %3706 = vrot.lane.b32.xlu0 %v3227, 16
        %v3707 = vpop.permute.xlu0 %3706
        %v3740 = vsel %vm381, %v3068, %v3261
        %v3741 = vsel %vm381, %v3069, %v3263
        %v3742 = vsel %vm381, %v3070, %v3265
        %v3743 = vsel %vm381, %v3071, %v3267
        %v3744 = vsel %vm381, %v3072, %v3269
        %v3745 = vsel %vm381, %v3073, %v3271
        %v3746 = vsel %vm381, %v3074, %v3273
        %v3747 = vsel %vm381, %v3075, %v3275
        %v3748 = vsel %vm381, %v3076, %v3277
        %v3749 = vsel %vm381, %v3077, %v3279
        %v3750 = vsel %vm381, %v3078, %v3281
        %v3751 = vsel %vm381, %v3079, %v3283
        %v3752 = vsel %vm381, %v3080, %v3285
        %v3753 = vsel %vm381, %v3081, %v3287
        %v3754 = vsel %vm381, %v3082, %v3289
        %v3755 = vsel %vm381, %v3083, %v3291
        %v3756 = vsel %vm381, %v3084, %v3293
        %v3757 = vsel %vm381, %v3085, %v3295
        %v3758 = vsel %vm381, %v3086, %v3297
        %v3759 = vsel %vm381, %v3087, %v3299
        %v3760 = vsel %vm381, %v3088, %v3301
        %v3761 = vsel %vm381, %v3089, %v3303
        %v3762 = vsel %vm381, %v3090, %v3305
        %v3763 = vsel %vm381, %v3091, %v3307
        %v3764 = vsel %vm381, %v3092, %v3309
        %v3765 = vsel %vm381, %v3093, %v3311
        %v3766 = vsel %vm381, %v3094, %v3313
        %v3767 = vsel %vm381, %v3095, %v3315
        %v3768 = vsel %vm381, %v3096, %v3317
        %v3769 = vsel %vm381, %v3097, %v3319
        %v3770 = vsel %vm381, %v3098, %v3321
        %v3771 = vsel %vm381, %v3099, %v3323
        %v3772 = vsel %vm1378, %v3740, %v3389
        %v3773 = vsel %vm1378, %v3741, %v3391
        %v3774 = vsel %vm1378, %v3742, %v3393
        %v3775 = vsel %vm1378, %v3743, %v3395
        %v3776 = vsel %vm1378, %v3744, %v3397
        %v3777 = vsel %vm1378, %v3745, %v3399
        %v3778 = vsel %vm1378, %v3746, %v3401
        %v3779 = vsel %vm1378, %v3747, %v3403
        %v3780 = vsel %vm1378, %v3748, %v3405
        %v3781 = vsel %vm1378, %v3749, %v3407
        %v3782 = vsel %vm1378, %v3750, %v3409
        %v3783 = vsel %vm1378, %v3751, %v3411
        %v3784 = vsel %vm1378, %v3752, %v3413
        %v3785 = vsel %vm1378, %v3753, %v3415
        %v3786 = vsel %vm1378, %v3754, %v3417
        %v3787 = vsel %vm1378, %v3755, %v3419
        %v3788 = vsel %vm1378, %v3756, %v3421
        %v3789 = vsel %vm1378, %v3757, %v3423
        %v3790 = vsel %vm1378, %v3758, %v3425
        %v3791 = vsel %vm1378, %v3759, %v3427
        %v3792 = vsel %vm1378, %v3760, %v3429
        %v3793 = vsel %vm1378, %v3761, %v3431
        %v3794 = vsel %vm1378, %v3762, %v3433
        %v3795 = vsel %vm1378, %v3763, %v3435
        %v3796 = vsel %vm1378, %v3764, %v3437
        %v3797 = vsel %vm1378, %v3765, %v3439
        %v3798 = vsel %vm1378, %v3766, %v3441
        %v3799 = vsel %vm1378, %v3767, %v3443
        %v3800 = vsel %vm1378, %v3768, %v3445
        %v3801 = vsel %vm1378, %v3769, %v3447
        %v3802 = vsel %vm1378, %v3770, %v3449
        %v3803 = vsel %vm1378, %v3771, %v3451
        %v3804 = vsel %vm1832, %v3772, %v3517
        %v3805 = vsel %vm1832, %v3773, %v3519
        %v3806 = vsel %vm1832, %v3774, %v3521
        %v3807 = vsel %vm1832, %v3775, %v3523
        %v3808 = vsel %vm1832, %v3776, %v3525
        %v3809 = vsel %vm1832, %v3777, %v3527
        %v3810 = vsel %vm1832, %v3778, %v3529
        %v3811 = vsel %vm1832, %v3779, %v3531
        %v3812 = vsel %vm1832, %v3780, %v3533
        %v3813 = vsel %vm1832, %v3781, %v3535
        %v3814 = vsel %vm1832, %v3782, %v3537
        %v3815 = vsel %vm1832, %v3783, %v3539
        %v3816 = vsel %vm1832, %v3784, %v3541
        %v3817 = vsel %vm1832, %v3785, %v3543
        %v3818 = vsel %vm1832, %v3786, %v3545
        %v3819 = vsel %vm1832, %v3787, %v3547
        %v3820 = vsel %vm1832, %v3788, %v3549
        %v3821 = vsel %vm1832, %v3789, %v3551
        %v3822 = vsel %vm1832, %v3790, %v3553
        %v3823 = vsel %vm1832, %v3791, %v3555
        %v3824 = vsel %vm1832, %v3792, %v3557
        %v3825 = vsel %vm1832, %v3793, %v3559
        %v3826 = vsel %vm1832, %v3794, %v3561
        %v3827 = vsel %vm1832, %v3795, %v3563
        %v3828 = vsel %vm1832, %v3796, %v3565
        %v3829 = vsel %vm1832, %v3797, %v3567
        %v3830 = vsel %vm1832, %v3798, %v3569
        %v3831 = vsel %vm1832, %v3799, %v3571
        %v3832 = vsel %vm1832, %v3800, %v3573
        %v3833 = vsel %vm1832, %v3801, %v3575
        %v3834 = vsel %vm1832, %v3802, %v3577
        %v3835 = vsel %vm1832, %v3803, %v3579
        %vm3836 = vcmask 130048
        %v3837 = vsel %vm3836, %v3804, %v3645
        %v3838 = vsel %vm3836, %v3805, %v3647
        %v3839 = vsel %vm3836, %v3806, %v3649
        %v3840 = vsel %vm3836, %v3807, %v3651
        %v3841 = vsel %vm3836, %v3808, %v3653
        %v3842 = vsel %vm3836, %v3809, %v3655
        %v3843 = vsel %vm3836, %v3810, %v3657
        %v3844 = vsel %vm3836, %v3811, %v3659
        %v3845 = vsel %vm3836, %v3812, %v3661
        %v3846 = vsel %vm3836, %v3813, %v3663
        %v3847 = vsel %vm3836, %v3814, %v3665
        %v3848 = vsel %vm3836, %v3815, %v3667
        %v3849 = vsel %vm3836, %v3816, %v3669
        %v3850 = vsel %vm3836, %v3817, %v3671
        %v3851 = vsel %vm3836, %v3818, %v3673
        %v3852 = vsel %vm3836, %v3819, %v3675
        %v3853 = vsel %vm3836, %v3820, %v3677
        %v3854 = vsel %vm3836, %v3821, %v3679
        %v3855 = vsel %vm3836, %v3822, %v3681
        %v3856 = vsel %vm3836, %v3823, %v3683
        %v3857 = vsel %vm3836, %v3824, %v3685
        %v3858 = vsel %vm3836, %v3825, %v3687
        %v3859 = vsel %vm3836, %v3826, %v3689
        %v3860 = vsel %vm3836, %v3827, %v3691
        %v3861 = vsel %vm3836, %v3828, %v3693
        %v3862 = vsel %vm3836, %v3829, %v3695
        %v3863 = vsel %vm3836, %v3830, %v3697
        %v3864 = vsel %vm3836, %v3831, %v3699
        %v3865 = vsel %vm3836, %v3832, %v3701
        %v3866 = vsel %vm3836, %v3833, %v3703
        %v3867 = vsel %vm3836, %v3834, %v3705
        %v3868 = vsel %vm3836, %v3835, %v3707
        %v3869 = vld [vmem:[%s5] sm:$0xff]
        %v3870 = vld [vmem:[%s5 + $0x8] sm:$0xff]
        %v3871 = vld [vmem:[%s5 + $0x10] sm:$0xf]
        %s3872 = scalar_lea.vmem [#allocation3], 24
        %v3873 = vld [vmem:[%s3872] sm:$0xff]
        %v3874 = vld [vmem:[%s3872 + $0x8] sm:$0xff]
        %v3875 = vld [vmem:[%s3872 + $0x18] sm:$0xff]
        %v3876 = vld [vmem:[%s3872 + $0x20] sm:$0xff]
        %v3877 = vld [vmem:[%s3872 + $0x30] sm:$0xff]
        %v3878 = vld [vmem:[%s3872 + $0x38] sm:$0xff]
        %v3879 = vld [vmem:[%s3872 + $0x48] sm:$0xff]
        %v3880 = vld [vmem:[%s3872 + $0x50] sm:$0xff]
        %v3881 = vld [vmem:[%s3872 + $0x60] sm:$0xff]
        %v3882 = vld [vmem:[%s3872 + $0x68] sm:$0xff]
        %v3883 = vld [vmem:[%s3872 + $0x78] sm:$0xff]
        %v3884 = vld [vmem:[%s3872 + $0x80] sm:$0xff]
        %v3885 = vld [vmem:[%s3872 + $0x90] sm:$0xff]
        %v3886 = vld [vmem:[%s3872 + $0x98] sm:$0xff]
        %v3887 = vld [vmem:[%s3872 + $0xa8] sm:$0xff]
        %v3888 = vld [vmem:[%s3872 + $0xb0] sm:$0xff]
        %v3889 = vld [vmem:[%s3872 + $0xc0] sm:$0xff]
        %v3890 = vld [vmem:[%s3872 + $0xc8] sm:$0xff]
        %v3891 = vld [vmem:[%s3872 + $0xd8] sm:$0xff]
        %v3892 = vld [vmem:[%s3872 + $0xe0] sm:$0xff]
        %v3893 = vld [vmem:[%s3872 + $0xf0] sm:$0xff]
        %v3894 = vld [vmem:[%s3872 + $0xf8] sm:$0xff]
        %v3895 = vld [vmem:[%s3872 + $0x108] sm:$0xff]
        %v3896 = vld [vmem:[%s3872 + $0x110] sm:$0xff]
        %v3897 = vld [vmem:[%s3872 + $0x120] sm:$0xff]
        %v3898 = vld [vmem:[%s3872 + $0x128] sm:$0xff]
        %v3899 = vld [vmem:[%s3872 + $0x138] sm:$0xff]
        %v3900 = vld [vmem:[%s3872 + $0x140] sm:$0xff]
        %v3901 = vld [vmem:[%s3872 + $0x150] sm:$0xff]
        %v3902 = vld [vmem:[%s3872 + $0x158] sm:$0xff]
        %v3903 = vld [vmem:[%s3872 + $0x168] sm:$0xff]
        %v3904 = vld [vmem:[%s3872 + $0x170] sm:$0xff]
        %v3905 = vld [vmem:[%s3872 + $0x1] sm:$0xff]
        %v3906 = vld [vmem:[%s3872 + $0x9] sm:$0xff]
        %v3907 = vld [vmem:[%s3872 + $0x19] sm:$0xff]
        %v3908 = vld [vmem:[%s3872 + $0x21] sm:$0xff]
        %v3909 = vld [vmem:[%s3872 + $0x31] sm:$0xff]
        %v3910 = vld [vmem:[%s3872 + $0x39] sm:$0xff]
        %v3911 = vld [vmem:[%s3872 + $0x49] sm:$0xff]
        %v3912 = vld [vmem:[%s3872 + $0x51] sm:$0xff]
        %v3913 = vld [vmem:[%s3872 + $0x61] sm:$0xff]
        %v3914 = vld [vmem:[%s3872 + $0x69] sm:$0xff]
        %v3915 = vld [vmem:[%s3872 + $0x79] sm:$0xff]
        %v3916 = vld [vmem:[%s3872 + $0x81] sm:$0xff]
        %v3917 = vld [vmem:[%s3872 + $0x91] sm:$0xff]
        %v3918 = vld [vmem:[%s3872 + $0x99] sm:$0xff]
        %v3919 = vld [vmem:[%s3872 + $0xa9] sm:$0xff]
        %v3920 = vld [vmem:[%s3872 + $0xb1] sm:$0xff]
        %v3921 = vld [vmem:[%s3872 + $0xc1] sm:$0xff]
        %v3922 = vld [vmem:[%s3872 + $0xc9] sm:$0xff]
        %v3923 = vld [vmem:[%s3872 + $0xd9] sm:$0xff]
        %v3924 = vld [vmem:[%s3872 + $0xe1] sm:$0xff]
        %v3925 = vld [vmem:[%s3872 + $0xf1] sm:$0xff]
        %v3926 = vld [vmem:[%s3872 + $0xf9] sm:$0xff]
        %v3927 = vld [vmem:[%s3872 + $0x109] sm:$0xff]
        %v3928 = vld [vmem:[%s3872 + $0x111] sm:$0xff]
        %v3929 = vld [vmem:[%s3872 + $0x121] sm:$0xff]
        %v3930 = vld [vmem:[%s3872 + $0x129] sm:$0xff]
        %v3931 = vld [vmem:[%s3872 + $0x139] sm:$0xff]
        %v3932 = vld [vmem:[%s3872 + $0x141] sm:$0xff]
        %v3933 = vld [vmem:[%s3872 + $0x151] sm:$0xff]
        %v3934 = vld [vmem:[%s3872 + $0x159] sm:$0xff]
        %v3935 = vld [vmem:[%s3872 + $0x169] sm:$0xff]
        %v3936 = vld [vmem:[%s3872 + $0x171] sm:$0xff]
        %v3937 = vld [vmem:[%s3872 + $0x2] sm:$0xff]
        %v3938 = vld [vmem:[%s3872 + $0xa] sm:$0xff]
        %v3939 = vld [vmem:[%s3872 + $0x1a] sm:$0xff]
        %v3940 = vld [vmem:[%s3872 + $0x22] sm:$0xff]
        %v3941 = vld [vmem:[%s3872 + $0x32] sm:$0xff]
        %v3942 = vld [vmem:[%s3872 + $0x3a] sm:$0xff]
        %v3943 = vld [vmem:[%s3872 + $0x4a] sm:$0xff]
        %v3944 = vld [vmem:[%s3872 + $0x52] sm:$0xff]
        %v3945 = vld [vmem:[%s3872 + $0x62] sm:$0xff]
        %v3946 = vld [vmem:[%s3872 + $0x6a] sm:$0xff]
        %v3947 = vld [vmem:[%s3872 + $0x7a] sm:$0xff]
        %v3948 = vld [vmem:[%s3872 + $0x82] sm:$0xff]
        %v3949 = vld [vmem:[%s3872 + $0x92] sm:$0xff]
        %v3950 = vld [vmem:[%s3872 + $0x9a] sm:$0xff]
        %v3951 = vld [vmem:[%s3872 + $0xaa] sm:$0xff]
        %v3952 = vld [vmem:[%s3872 + $0xb2] sm:$0xff]
        %v3953 = vld [vmem:[%s3872 + $0xc2] sm:$0xff]
        %v3954 = vld [vmem:[%s3872 + $0xca] sm:$0xff]
        %v3955 = vld [vmem:[%s3872 + $0xda] sm:$0xff]
        %v3956 = vld [vmem:[%s3872 + $0xe2] sm:$0xff]
        %v3957 = vld [vmem:[%s3872 + $0xf2] sm:$0xff]
        %v3958 = vld [vmem:[%s3872 + $0xfa] sm:$0xff]
        %v3959 = vld [vmem:[%s3872 + $0x10a] sm:$0xff]
        %v3960 = vld [vmem:[%s3872 + $0x112] sm:$0xff]
        %v3961 = vld [vmem:[%s3872 + $0x122] sm:$0xff]
        %v3962 = vld [vmem:[%s3872 + $0x12a] sm:$0xff]
        %v3963 = vld [vmem:[%s3872 + $0x13a] sm:$0xff]
        %v3964 = vld [vmem:[%s3872 + $0x142] sm:$0xff]
        %v3965 = vld [vmem:[%s3872 + $0x152] sm:$0xff]
        %v3966 = vld [vmem:[%s3872 + $0x15a] sm:$0xff]
        %v3967 = vld [vmem:[%s3872 + $0x16a] sm:$0xff]
        %v3968 = vld [vmem:[%s3872 + $0x172] sm:$0xff]
        %v3969 = vld [vmem:[%s3872 + $0x3] sm:$0xff]
        %v3970 = vld [vmem:[%s3872 + $0xb] sm:$0xff]
        %v3971 = vld [vmem:[%s3872 + $0x1b] sm:$0xff]
        %v3972 = vld [vmem:[%s3872 + $0x23] sm:$0xff]
        %v3973 = vld [vmem:[%s3872 + $0x33] sm:$0xff]
        %v3974 = vld [vmem:[%s3872 + $0x3b] sm:$0xff]
        %v3975 = vld [vmem:[%s3872 + $0x4b] sm:$0xff]
        %v3976 = vld [vmem:[%s3872 + $0x53] sm:$0xff]
        %v3977 = vld [vmem:[%s3872 + $0x63] sm:$0xff]
        %v3978 = vld [vmem:[%s3872 + $0x6b] sm:$0xff]
        %v3979 = vld [vmem:[%s3872 + $0x7b] sm:$0xff]
        %v3980 = vld [vmem:[%s3872 + $0x83] sm:$0xff]
        %v3981 = vld [vmem:[%s3872 + $0x93] sm:$0xff]
        %v3982 = vld [vmem:[%s3872 + $0x9b] sm:$0xff]
        %v3983 = vld [vmem:[%s3872 + $0xab] sm:$0xff]
        %v3984 = vld [vmem:[%s3872 + $0xb3] sm:$0xff]
        %v3985 = vld [vmem:[%s3872 + $0xc3] sm:$0xff]
        %v3986 = vld [vmem:[%s3872 + $0xcb] sm:$0xff]
        %v3987 = vld [vmem:[%s3872 + $0xdb] sm:$0xff]
        %v3988 = vld [vmem:[%s3872 + $0xe3] sm:$0xff]
        %v3989 = vld [vmem:[%s3872 + $0xf3] sm:$0xff]
        %v3990 = vld [vmem:[%s3872 + $0xfb] sm:$0xff]
        %v3991 = vld [vmem:[%s3872 + $0x10b] sm:$0xff]
        %v3992 = vld [vmem:[%s3872 + $0x113] sm:$0xff]
        %v3993 = vld [vmem:[%s3872 + $0x123] sm:$0xff]
        %v3994 = vld [vmem:[%s3872 + $0x12b] sm:$0xff]
        %v3995 = vld [vmem:[%s3872 + $0x13b] sm:$0xff]
        %v3996 = vld [vmem:[%s3872 + $0x143] sm:$0xff]
        %v3997 = vld [vmem:[%s3872 + $0x153] sm:$0xff]
        %v3998 = vld [vmem:[%s3872 + $0x15b] sm:$0xff]
        %v3999 = vld [vmem:[%s3872 + $0x16b] sm:$0xff]
        %v4000 = vld [vmem:[%s3872 + $0x173] sm:$0xff]
        %v4001 = vld [vmem:[%s3872 + $0x4] sm:$0xff]
        %v4002 = vld [vmem:[%s3872 + $0xc] sm:$0xff]
        %v4003 = vld [vmem:[%s3872 + $0x1c] sm:$0xff]
        %v4004 = vld [vmem:[%s3872 + $0x24] sm:$0xff]
        %v4005 = vld [vmem:[%s3872 + $0x34] sm:$0xff]
        %v4006 = vld [vmem:[%s3872 + $0x3c] sm:$0xff]
        %v4007 = vld [vmem:[%s3872 + $0x4c] sm:$0xff]
        %v4008 = vld [vmem:[%s3872 + $0x54] sm:$0xff]
        %v4009 = vld [vmem:[%s3872 + $0x64] sm:$0xff]
        %v4010 = vld [vmem:[%s3872 + $0x6c] sm:$0xff]
        %v4011 = vld [vmem:[%s3872 + $0x7c] sm:$0xff]
        %v4012 = vld [vmem:[%s3872 + $0x84] sm:$0xff]
        %v4013 = vld [vmem:[%s3872 + $0x94] sm:$0xff]
        %v4014 = vld [vmem:[%s3872 + $0x9c] sm:$0xff]
        %v4015 = vld [vmem:[%s3872 + $0xac] sm:$0xff]
        %v4016 = vld [vmem:[%s3872 + $0xb4] sm:$0xff]
        %v4017 = vld [vmem:[%s3872 + $0xc4] sm:$0xff]
        %v4018 = vld [vmem:[%s3872 + $0xcc] sm:$0xff]
        %v4019 = vld [vmem:[%s3872 + $0xdc] sm:$0xff]
        %v4020 = vld [vmem:[%s3872 + $0xe4] sm:$0xff]
        %v4021 = vld [vmem:[%s3872 + $0xf4] sm:$0xff]
        %v4022 = vld [vmem:[%s3872 + $0xfc] sm:$0xff]
        %v4023 = vld [vmem:[%s3872 + $0x10c] sm:$0xff]
        %v4024 = vld [vmem:[%s3872 + $0x114] sm:$0xff]
        %v4025 = vld [vmem:[%s3872 + $0x124] sm:$0xff]
        %v4026 = vld [vmem:[%s3872 + $0x12c] sm:$0xff]
        %v4027 = vld [vmem:[%s3872 + $0x13c] sm:$0xff]
        %v4028 = vld [vmem:[%s3872 + $0x144] sm:$0xff]
        %v4029 = vld [vmem:[%s3872 + $0x154] sm:$0xff]
        %v4030 = vld [vmem:[%s3872 + $0x15c] sm:$0xff]
        %v4031 = vld [vmem:[%s3872 + $0x16c] sm:$0xff]
        %v4032 = vld [vmem:[%s3872 + $0x174] sm:$0xff]
        %4065 = vrot.lane.b32.xlu0 %v3905, 4
        %v4066 = vpop.permute.xlu0 %4065
        %4067 = vrot.lane.b32.xlu0 %v3906, 4
        %v4068 = vpop.permute.xlu0 %4067
        %4069 = vrot.lane.b32.xlu0 %v3907, 4
        %v4070 = vpop.permute.xlu0 %4069
        %4071 = vrot.lane.b32.xlu0 %v3908, 4
        %v4072 = vpop.permute.xlu0 %4071
        %4073 = vrot.lane.b32.xlu0 %v3909, 4
        %v4074 = vpop.permute.xlu0 %4073
        %4075 = vrot.lane.b32.xlu0 %v3910, 4
        %v4076 = vpop.permute.xlu0 %4075
        %4077 = vrot.lane.b32.xlu0 %v3911, 4
        %v4078 = vpop.permute.xlu0 %4077
        %4079 = vrot.lane.b32.xlu0 %v3912, 4
        %v4080 = vpop.permute.xlu0 %4079
        %4081 = vrot.lane.b32.xlu0 %v3913, 4
        %v4082 = vpop.permute.xlu0 %4081
        %4083 = vrot.lane.b32.xlu0 %v3914, 4
        %v4084 = vpop.permute.xlu0 %4083
        %4085 = vrot.lane.b32.xlu0 %v3915, 4
        %v4086 = vpop.permute.xlu0 %4085
        %4087 = vrot.lane.b32.xlu0 %v3916, 4
        %v4088 = vpop.permute.xlu0 %4087
        %4089 = vrot.lane.b32.xlu0 %v3917, 4
        %v4090 = vpop.permute.xlu0 %4089
        %4091 = vrot.lane.b32.xlu0 %v3918, 4
        %v4092 = vpop.permute.xlu0 %4091
        %4093 = vrot.lane.b32.xlu0 %v3919, 4
        %v4094 = vpop.permute.xlu0 %4093
        %4095 = vrot.lane.b32.xlu0 %v3920, 4
        %v4096 = vpop.permute.xlu0 %4095
        %4097 = vrot.lane.b32.xlu0 %v3921, 4
        %v4098 = vpop.permute.xlu0 %4097
        %4099 = vrot.lane.b32.xlu0 %v3922, 4
        %v4100 = vpop.permute.xlu0 %4099
        %4101 = vrot.lane.b32.xlu0 %v3923, 4
        %v4102 = vpop.permute.xlu0 %4101
        %4103 = vrot.lane.b32.xlu0 %v3924, 4
        %v4104 = vpop.permute.xlu0 %4103
        %4105 = vrot.lane.b32.xlu0 %v3925, 4
        %v4106 = vpop.permute.xlu0 %4105
        %4107 = vrot.lane.b32.xlu0 %v3926, 4
        %v4108 = vpop.permute.xlu0 %4107
        %4109 = vrot.lane.b32.xlu0 %v3927, 4
        %v4110 = vpop.permute.xlu0 %4109
        %4111 = vrot.lane.b32.xlu0 %v3928, 4
        %v4112 = vpop.permute.xlu0 %4111
        %4113 = vrot.lane.b32.xlu0 %v3929, 4
        %v4114 = vpop.permute.xlu0 %4113
        %4115 = vrot.lane.b32.xlu0 %v3930, 4
        %v4116 = vpop.permute.xlu0 %4115
        %4117 = vrot.lane.b32.xlu0 %v3931, 4
        %v4118 = vpop.permute.xlu0 %4117
        %4119 = vrot.lane.b32.xlu0 %v3932, 4
        %v4120 = vpop.permute.xlu0 %4119
        %4121 = vrot.lane.b32.xlu0 %v3933, 4
        %v4122 = vpop.permute.xlu0 %4121
        %4123 = vrot.lane.b32.xlu0 %v3934, 4
        %v4124 = vpop.permute.xlu0 %4123
        %4125 = vrot.lane.b32.xlu0 %v3935, 4
        %v4126 = vpop.permute.xlu0 %4125
        %4127 = vrot.lane.b32.xlu0 %v3936, 4
        %v4128 = vpop.permute.xlu0 %4127
        %4193 = vrot.lane.b32.xlu0 %v3937, 8
        %v4194 = vpop.permute.xlu0 %4193
        %4195 = vrot.lane.b32.xlu0 %v3938, 8
        %v4196 = vpop.permute.xlu0 %4195
        %4197 = vrot.lane.b32.xlu0 %v3939, 8
        %v4198 = vpop.permute.xlu0 %4197
        %4199 = vrot.lane.b32.xlu0 %v3940, 8
        %v4200 = vpop.permute.xlu0 %4199
        %4201 = vrot.lane.b32.xlu0 %v3941, 8
        %v4202 = vpop.permute.xlu0 %4201
        %4203 = vrot.lane.b32.xlu0 %v3942, 8
        %v4204 = vpop.permute.xlu0 %4203
        %4205 = vrot.lane.b32.xlu0 %v3943, 8
        %v4206 = vpop.permute.xlu0 %4205
        %4207 = vrot.lane.b32.xlu0 %v3944, 8
        %v4208 = vpop.permute.xlu0 %4207
        %4209 = vrot.lane.b32.xlu0 %v3945, 8
        %v4210 = vpop.permute.xlu0 %4209
        %4211 = vrot.lane.b32.xlu0 %v3946, 8
        %v4212 = vpop.permute.xlu0 %4211
        %4213 = vrot.lane.b32.xlu0 %v3947, 8
        %v4214 = vpop.permute.xlu0 %4213
        %4215 = vrot.lane.b32.xlu0 %v3948, 8
        %v4216 = vpop.permute.xlu0 %4215
        %4217 = vrot.lane.b32.xlu0 %v3949, 8
        %v4218 = vpop.permute.xlu0 %4217
        %4219 = vrot.lane.b32.xlu0 %v3950, 8
        %v4220 = vpop.permute.xlu0 %4219
        %4221 = vrot.lane.b32.xlu0 %v3951, 8
        %v4222 = vpop.permute.xlu0 %4221
        %4223 = vrot.lane.b32.xlu0 %v3952, 8
        %v4224 = vpop.permute.xlu0 %4223
        %4225 = vrot.lane.b32.xlu0 %v3953, 8
        %v4226 = vpop.permute.xlu0 %4225
        %4227 = vrot.lane.b32.xlu0 %v3954, 8
        %v4228 = vpop.permute.xlu0 %4227
        %4229 = vrot.lane.b32.xlu0 %v3955, 8
        %v4230 = vpop.permute.xlu0 %4229
        %4231 = vrot.lane.b32.xlu0 %v3956, 8
        %v4232 = vpop.permute.xlu0 %4231
        %4233 = vrot.lane.b32.xlu0 %v3957, 8
        %v4234 = vpop.permute.xlu0 %4233
        %4235 = vrot.lane.b32.xlu0 %v3958, 8
        %v4236 = vpop.permute.xlu0 %4235
        %4237 = vrot.lane.b32.xlu0 %v3959, 8
        %v4238 = vpop.permute.xlu0 %4237
        %4239 = vrot.lane.b32.xlu0 %v3960, 8
        %v4240 = vpop.permute.xlu0 %4239
        %4241 = vrot.lane.b32.xlu0 %v3961, 8
        %v4242 = vpop.permute.xlu0 %4241
        %4243 = vrot.lane.b32.xlu0 %v3962, 8
        %v4244 = vpop.permute.xlu0 %4243
        %4245 = vrot.lane.b32.xlu0 %v3963, 8
        %v4246 = vpop.permute.xlu0 %4245
        %4247 = vrot.lane.b32.xlu0 %v3964, 8
        %v4248 = vpop.permute.xlu0 %4247
        %4249 = vrot.lane.b32.xlu0 %v3965, 8
        %v4250 = vpop.permute.xlu0 %4249
        %4251 = vrot.lane.b32.xlu0 %v3966, 8
        %v4252 = vpop.permute.xlu0 %4251
        %4253 = vrot.lane.b32.xlu0 %v3967, 8
        %v4254 = vpop.permute.xlu0 %4253
        %4255 = vrot.lane.b32.xlu0 %v3968, 8
        %v4256 = vpop.permute.xlu0 %4255
        %4321 = vrot.lane.b32.xlu0 %v3969, 12
        %v4322 = vpop.permute.xlu0 %4321
        %4323 = vrot.lane.b32.xlu0 %v3970, 12
        %v4324 = vpop.permute.xlu0 %4323
        %4325 = vrot.lane.b32.xlu0 %v3971, 12
        %v4326 = vpop.permute.xlu0 %4325
        %4327 = vrot.lane.b32.xlu0 %v3972, 12
        %v4328 = vpop.permute.xlu0 %4327
        %4329 = vrot.lane.b32.xlu0 %v3973, 12
        %v4330 = vpop.permute.xlu0 %4329
        %4331 = vrot.lane.b32.xlu0 %v3974, 12
        %v4332 = vpop.permute.xlu0 %4331
        %4333 = vrot.lane.b32.xlu0 %v3975, 12
        %v4334 = vpop.permute.xlu0 %4333
        %4335 = vrot.lane.b32.xlu0 %v3976, 12
        %v4336 = vpop.permute.xlu0 %4335
        %4337 = vrot.lane.b32.xlu0 %v3977, 12
        %v4338 = vpop.permute.xlu0 %4337
        %4339 = vrot.lane.b32.xlu0 %v3978, 12
        %v4340 = vpop.permute.xlu0 %4339
        %4341 = vrot.lane.b32.xlu0 %v3979, 12
        %v4342 = vpop.permute.xlu0 %4341
        %4343 = vrot.lane.b32.xlu0 %v3980, 12
        %v4344 = vpop.permute.xlu0 %4343
        %4345 = vrot.lane.b32.xlu0 %v3981, 12
        %v4346 = vpop.permute.xlu0 %4345
        %4347 = vrot.lane.b32.xlu0 %v3982, 12
        %v4348 = vpop.permute.xlu0 %4347
        %4349 = vrot.lane.b32.xlu0 %v3983, 12
        %v4350 = vpop.permute.xlu0 %4349
        %4351 = vrot.lane.b32.xlu0 %v3984, 12
        %v4352 = vpop.permute.xlu0 %4351
        %4353 = vrot.lane.b32.xlu0 %v3985, 12
        %v4354 = vpop.permute.xlu0 %4353
        %4355 = vrot.lane.b32.xlu0 %v3986, 12
        %v4356 = vpop.permute.xlu0 %4355
        %4357 = vrot.lane.b32.xlu0 %v3987, 12
        %v4358 = vpop.permute.xlu0 %4357
        %4359 = vrot.lane.b32.xlu0 %v3988, 12
        %v4360 = vpop.permute.xlu0 %4359
        %4361 = vrot.lane.b32.xlu0 %v3989, 12
        %v4362 = vpop.permute.xlu0 %4361
        %4363 = vrot.lane.b32.xlu0 %v3990, 12
        %v4364 = vpop.permute.xlu0 %4363
        %4365 = vrot.lane.b32.xlu0 %v3991, 12
        %v4366 = vpop.permute.xlu0 %4365
        %4367 = vrot.lane.b32.xlu0 %v3992, 12
        %v4368 = vpop.permute.xlu0 %4367
        %4369 = vrot.lane.b32.xlu0 %v3993, 12
        %v4370 = vpop.permute.xlu0 %4369
        %4371 = vrot.lane.b32.xlu0 %v3994, 12
        %v4372 = vpop.permute.xlu0 %4371
        %4373 = vrot.lane.b32.xlu0 %v3995, 12
        %v4374 = vpop.permute.xlu0 %4373
        %4375 = vrot.lane.b32.xlu0 %v3996, 12
        %v4376 = vpop.permute.xlu0 %4375
        %4377 = vrot.lane.b32.xlu0 %v3997, 12
        %v4378 = vpop.permute.xlu0 %4377
        %4379 = vrot.lane.b32.xlu0 %v3998, 12
        %v4380 = vpop.permute.xlu0 %4379
        %4381 = vrot.lane.b32.xlu0 %v3999, 12
        %v4382 = vpop.permute.xlu0 %4381
        %4383 = vrot.lane.b32.xlu0 %v4000, 12
        %v4384 = vpop.permute.xlu0 %4383
        %4449 = vrot.lane.b32.xlu0 %v4001, 16
        %v4450 = vpop.permute.xlu0 %4449
        %4451 = vrot.lane.b32.xlu0 %v4002, 16
        %v4452 = vpop.permute.xlu0 %4451
        %4453 = vrot.lane.b32.xlu0 %v4003, 16
        %v4454 = vpop.permute.xlu0 %4453
        %4455 = vrot.lane.b32.xlu0 %v4004, 16
        %v4456 = vpop.permute.xlu0 %4455
        %4457 = vrot.lane.b32.xlu0 %v4005, 16
        %v4458 = vpop.permute.xlu0 %4457
        %4459 = vrot.lane.b32.xlu0 %v4006, 16
        %v4460 = vpop.permute.xlu0 %4459
        %4461 = vrot.lane.b32.xlu0 %v4007, 16
        %v4462 = vpop.permute.xlu0 %4461
        %4463 = vrot.lane.b32.xlu0 %v4008, 16
        %v4464 = vpop.permute.xlu0 %4463
        %4465 = vrot.lane.b32.xlu0 %v4009, 16
        %v4466 = vpop.permute.xlu0 %4465
        %4467 = vrot.lane.b32.xlu0 %v4010, 16
        %v4468 = vpop.permute.xlu0 %4467
        %4469 = vrot.lane.b32.xlu0 %v4011, 16
        %v4470 = vpop.permute.xlu0 %4469
        %4471 = vrot.lane.b32.xlu0 %v4012, 16
        %v4472 = vpop.permute.xlu0 %4471
        %4473 = vrot.lane.b32.xlu0 %v4013, 16
        %v4474 = vpop.permute.xlu0 %4473
        %4475 = vrot.lane.b32.xlu0 %v4014, 16
        %v4476 = vpop.permute.xlu0 %4475
        %4477 = vrot.lane.b32.xlu0 %v4015, 16
        %v4478 = vpop.permute.xlu0 %4477
        %4479 = vrot.lane.b32.xlu0 %v4016, 16
        %v4480 = vpop.permute.xlu0 %4479
        %4481 = vrot.lane.b32.xlu0 %v4017, 16
        %v4482 = vpop.permute.xlu0 %4481
        %4483 = vrot.lane.b32.xlu0 %v4018, 16
        %v4484 = vpop.permute.xlu0 %4483
        %4485 = vrot.lane.b32.xlu0 %v4019, 16
        %v4486 = vpop.permute.xlu0 %4485
        %4487 = vrot.lane.b32.xlu0 %v4020, 16
        %v4488 = vpop.permute.xlu0 %4487
        %4489 = vrot.lane.b32.xlu0 %v4021, 16
        %v4490 = vpop.permute.xlu0 %4489
        %4491 = vrot.lane.b32.xlu0 %v4022, 16
        %v4492 = vpop.permute.xlu0 %4491
        %4493 = vrot.lane.b32.xlu0 %v4023, 16
        %v4494 = vpop.permute.xlu0 %4493
        %4495 = vrot.lane.b32.xlu0 %v4024, 16
        %v4496 = vpop.permute.xlu0 %4495
        %4497 = vrot.lane.b32.xlu0 %v4025, 16
        %v4498 = vpop.permute.xlu0 %4497
        %4499 = vrot.lane.b32.xlu0 %v4026, 16
        %v4500 = vpop.permute.xlu0 %4499
        %4501 = vrot.lane.b32.xlu0 %v4027, 16
        %v4502 = vpop.permute.xlu0 %4501
        %4503 = vrot.lane.b32.xlu0 %v4028, 16
        %v4504 = vpop.permute.xlu0 %4503
        %4505 = vrot.lane.b32.xlu0 %v4029, 16
        %v4506 = vpop.permute.xlu0 %4505
        %4507 = vrot.lane.b32.xlu0 %v4030, 16
        %v4508 = vpop.permute.xlu0 %4507
        %4509 = vrot.lane.b32.xlu0 %v4031, 16
        %v4510 = vpop.permute.xlu0 %4509
        %4511 = vrot.lane.b32.xlu0 %v4032, 16
        %v4512 = vpop.permute.xlu0 %4511
        %v4545 = vsel %vm381, %v3873, %v4066
        %v4546 = vsel %vm381, %v3874, %v4068
        %v4547 = vsel %vm381, %v3875, %v4070
        %v4548 = vsel %vm381, %v3876, %v4072
        %v4549 = vsel %vm381, %v3877, %v4074
        %v4550 = vsel %vm381, %v3878, %v4076
        %v4551 = vsel %vm381, %v3879, %v4078
        %v4552 = vsel %vm381, %v3880, %v4080
        %v4553 = vsel %vm381, %v3881, %v4082
        %v4554 = vsel %vm381, %v3882, %v4084
        %v4555 = vsel %vm381, %v3883, %v4086
        %v4556 = vsel %vm381, %v3884, %v4088
        %v4557 = vsel %vm381, %v3885, %v4090
        %v4558 = vsel %vm381, %v3886, %v4092
        %v4559 = vsel %vm381, %v3887, %v4094
        %v4560 = vsel %vm381, %v3888, %v4096
        %v4561 = vsel %vm381, %v3889, %v4098
        %v4562 = vsel %vm381, %v3890, %v4100
        %v4563 = vsel %vm381, %v3891, %v4102
        %v4564 = vsel %vm381, %v3892, %v4104
        %v4565 = vsel %vm381, %v3893, %v4106
        %v4566 = vsel %vm381, %v3894, %v4108
        %v4567 = vsel %vm381, %v3895, %v4110
        %v4568 = vsel %vm381, %v3896, %v4112
        %v4569 = vsel %vm381, %v3897, %v4114
        %v4570 = vsel %vm381, %v3898, %v4116
        %v4571 = vsel %vm381, %v3899, %v4118
        %v4572 = vsel %vm381, %v3900, %v4120
        %v4573 = vsel %vm381, %v3901, %v4122
        %v4574 = vsel %vm381, %v3902, %v4124
        %v4575 = vsel %vm381, %v3903, %v4126
        %v4576 = vsel %vm381, %v3904, %v4128
        %v4577 = vsel %vm1378, %v4545, %v4194
        %v4578 = vsel %vm1378, %v4546, %v4196
        %v4579 = vsel %vm1378, %v4547, %v4198
        %v4580 = vsel %vm1378, %v4548, %v4200
        %v4581 = vsel %vm1378, %v4549, %v4202
        %v4582 = vsel %vm1378, %v4550, %v4204
        %v4583 = vsel %vm1378, %v4551, %v4206
        %v4584 = vsel %vm1378, %v4552, %v4208
        %v4585 = vsel %vm1378, %v4553, %v4210
        %v4586 = vsel %vm1378, %v4554, %v4212
        %v4587 = vsel %vm1378, %v4555, %v4214
        %v4588 = vsel %vm1378, %v4556, %v4216
        %v4589 = vsel %vm1378, %v4557, %v4218
        %v4590 = vsel %vm1378, %v4558, %v4220
        %v4591 = vsel %vm1378, %v4559, %v4222
        %v4592 = vsel %vm1378, %v4560, %v4224
        %v4593 = vsel %vm1378, %v4561, %v4226
        %v4594 = vsel %vm1378, %v4562, %v4228
        %v4595 = vsel %vm1378, %v4563, %v4230
        %v4596 = vsel %vm1378, %v4564, %v4232
        %v4597 = vsel %vm1378, %v4565, %v4234
        %v4598 = vsel %vm1378, %v4566, %v4236
        %v4599 = vsel %vm1378, %v4567, %v4238
        %v4600 = vsel %vm1378, %v4568, %v4240
        %v4601 = vsel %vm1378, %v4569, %v4242
        %v4602 = vsel %vm1378, %v4570, %v4244
        %v4603 = vsel %vm1378, %v4571, %v4246
        %v4604 = vsel %vm1378, %v4572, %v4248
        %v4605 = vsel %vm1378, %v4573, %v4250
        %v4606 = vsel %vm1378, %v4574, %v4252
        %v4607 = vsel %vm1378, %v4575, %v4254
        %v4608 = vsel %vm1378, %v4576, %v4256
        %v4609 = vsel %vm1832, %v4577, %v4322
        %v4610 = vsel %vm1832, %v4578, %v4324
        %v4611 = vsel %vm1832, %v4579, %v4326
        %v4612 = vsel %vm1832, %v4580, %v4328
        %v4613 = vsel %vm1832, %v4581, %v4330
        %v4614 = vsel %vm1832, %v4582, %v4332
        %v4615 = vsel %vm1832, %v4583, %v4334
        %v4616 = vsel %vm1832, %v4584, %v4336
        %v4617 = vsel %vm1832, %v4585, %v4338
        %v4618 = vsel %vm1832, %v4586, %v4340
        %v4619 = vsel %vm1832, %v4587, %v4342
        %v4620 = vsel %vm1832, %v4588, %v4344
        %v4621 = vsel %vm1832, %v4589, %v4346
        %v4622 = vsel %vm1832, %v4590, %v4348
        %v4623 = vsel %vm1832, %v4591, %v4350
        %v4624 = vsel %vm1832, %v4592, %v4352
        %v4625 = vsel %vm1832, %v4593, %v4354
        %v4626 = vsel %vm1832, %v4594, %v4356
        %v4627 = vsel %vm1832, %v4595, %v4358
        %v4628 = vsel %vm1832, %v4596, %v4360
        %v4629 = vsel %vm1832, %v4597, %v4362
        %v4630 = vsel %vm1832, %v4598, %v4364
        %v4631 = vsel %vm1832, %v4599, %v4366
        %v4632 = vsel %vm1832, %v4600, %v4368
        %v4633 = vsel %vm1832, %v4601, %v4370
        %v4634 = vsel %vm1832, %v4602, %v4372
        %v4635 = vsel %vm1832, %v4603, %v4374
        %v4636 = vsel %vm1832, %v4604, %v4376
        %v4637 = vsel %vm1832, %v4605, %v4378
        %v4638 = vsel %vm1832, %v4606, %v4380
        %v4639 = vsel %vm1832, %v4607, %v4382
        %v4640 = vsel %vm1832, %v4608, %v4384
        %v4641 = vsel %vm3836, %v4609, %v4450
        %v4642 = vsel %vm3836, %v4610, %v4452
        %v4643 = vsel %vm3836, %v4611, %v4454
        %v4644 = vsel %vm3836, %v4612, %v4456
        %v4645 = vsel %vm3836, %v4613, %v4458
        %v4646 = vsel %vm3836, %v4614, %v4460
        %v4647 = vsel %vm3836, %v4615, %v4462
        %v4648 = vsel %vm3836, %v4616, %v4464
        %v4649 = vsel %vm3836, %v4617, %v4466
        %v4650 = vsel %vm3836, %v4618, %v4468
        %v4651 = vsel %vm3836, %v4619, %v4470
        %v4652 = vsel %vm3836, %v4620, %v4472
        %v4653 = vsel %vm3836, %v4621, %v4474
        %v4654 = vsel %vm3836, %v4622, %v4476
        %v4655 = vsel %vm3836, %v4623, %v4478
        %v4656 = vsel %vm3836, %v4624, %v4480
        %v4657 = vsel %vm3836, %v4625, %v4482
        %v4658 = vsel %vm3836, %v4626, %v4484
        %v4659 = vsel %vm3836, %v4627, %v4486
        %v4660 = vsel %vm3836, %v4628, %v4488
        %v4661 = vsel %vm3836, %v4629, %v4490
        %v4662 = vsel %vm3836, %v4630, %v4492
        %v4663 = vsel %vm3836, %v4631, %v4494
        %v4664 = vsel %vm3836, %v4632, %v4496
        %v4665 = vsel %vm3836, %v4633, %v4498
        %v4666 = vsel %vm3836, %v4634, %v4500
        %v4667 = vsel %vm3836, %v4635, %v4502
        %v4668 = vsel %vm3836, %v4636, %v4504
        %v4669 = vsel %vm3836, %v4637, %v4506
        %v4670 = vsel %vm3836, %v4638, %v4508
        %v4671 = vsel %vm3836, %v4639, %v4510
        %v4672 = vsel %vm3836, %v4640, %v4512
        %s4673 = scalar_lea.vmem %s5, 24
        %v4674 = vld [vmem:[%s4673] sm:$0xff]
        %v4675 = vld [vmem:[%s4673 + $0x8] sm:$0xff]
        %v4676 = vld [vmem:[%s4673 + $0x10] sm:$0xf]
        %vm4677 = vcmask 162816
        %v4679 = vsel %vm4677, %v4641, 0
        %v4682 = vsel %vm4677, %v4642, 0
        %v4685 = vsel %vm4677, %v4643, 0
        %v4688 = vsel %vm4677, %v4644, 0
        %v4691 = vsel %vm4677, %v4645, 0
        %v4694 = vsel %vm4677, %v4646, 0
        %v4697 = vsel %vm4677, %v4647, 0
        %v4700 = vsel %vm4677, %v4648, 0
        %v4703 = vsel %vm4677, %v4649, 0
        %v4706 = vsel %vm4677, %v4650, 0
        %v4709 = vsel %vm4677, %v4651, 0
        %v4712 = vsel %vm4677, %v4652, 0
        %v4715 = vsel %vm4677, %v4653, 0
        %v4718 = vsel %vm4677, %v4654, 0
        %v4721 = vsel %vm4677, %v4655, 0
        %v4724 = vsel %vm4677, %v4656, 0
        %v4727 = vsel %vm4677, %v4657, 0
        %v4730 = vsel %vm4677, %v4658, 0
        %v4733 = vsel %vm4677, %v4659, 0
        %v4736 = vsel %vm4677, %v4660, 0
        %v4739 = vsel %vm4677, %v4661, 0
        %v4742 = vsel %vm4677, %v4662, 0
        %v4745 = vsel %vm4677, %v4663, 0
        %v4748 = vsel %vm4677, %v4664, 0
        %v4751 = vsel %vm4677, %v4665, 0
        %v4754 = vsel %vm4677, %v4666, 0
        %v4757 = vsel %vm4677, %v4667, 0
        %v4760 = vsel %vm4677, %v4668, 0
        %v4763 = vsel %vm4677, %v4669, 0
        %v4766 = vsel %vm4677, %v4670, 0
        %v4769 = vsel %vm4677, %v4671, 0
        %v4772 = vsel %vm4677, %v4672, 0
        %v4775 = vsel %vm478, %v4676, 0
        %4777 = vmatpush.msra.mxu0 0.0
        %4778 = vmatpush.msra.mxu0 0.0
        %4779 = vmatpush.msra.mxu0 0.0
        %4780 = vmatpush.msra.mxu0 0.0
        %4781 = vmatpush.msra.mxu0 0.0
        %4782 = vmatpush.msra.mxu0 0.0
        %4783 = vmatpush.msra.mxu0 0.0
        %4784 = vmatpush.msra.mxu0 0.0
        %4785 = vmatpush.msra.mxu0 0.0
        %4786 = vmatpush.msra.mxu0 0.0
        %4787 = vmatpush.msra.mxu0 0.0
        %4788 = vmatpush.msra.mxu0 0.0
        %4789 = vmatpush.msra.mxu0 0.0
        %4790 = vmatpush.msra.mxu0 %v4775
        %4791 = vmatpush.msra.mxu0 %v4675
        %4792 = vmatpush.msra.mxu0 %v4674
        %4793 = vmatmul.f32.gmra.mxu0 %v4679
        %v4794 = vpop.f32.mrf.mxu0
        %v4795 = vadd.f32 0.0, %v4794
        %4796 = vmatmul.f32.gmra.mxu0 %v4682
        %v4797 = vpop.f32.mrf.mxu0
        %v4798 = vadd.f32 0.0, %v4797
        %4799 = vmatmul.f32.gmra.mxu0 %v4685
        %v4800 = vpop.f32.mrf.mxu0
        %v4801 = vadd.f32 0.0, %v4800
        %4802 = vmatmul.f32.gmra.mxu0 %v4688
        %v4803 = vpop.f32.mrf.mxu0
        %v4804 = vadd.f32 0.0, %v4803
        %4805 = vmatmul.f32.gmra.mxu0 %v4691
        %v4806 = vpop.f32.mrf.mxu0
        %v4807 = vadd.f32 0.0, %v4806
        %4808 = vmatmul.f32.gmra.mxu0 %v4694
        %v4809 = vpop.f32.mrf.mxu0
        %v4810 = vadd.f32 0.0, %v4809
        %4811 = vmatmul.f32.gmra.mxu0 %v4697
        %v4812 = vpop.f32.mrf.mxu0
        %v4813 = vadd.f32 0.0, %v4812
        %4814 = vmatmul.f32.gmra.mxu0 %v4700
        %v4815 = vpop.f32.mrf.mxu0
        %v4816 = vadd.f32 0.0, %v4815
        %4817 = vmatmul.f32.gmra.mxu0 %v4703
        %v4818 = vpop.f32.mrf.mxu0
        %v4819 = vadd.f32 0.0, %v4818
        %4820 = vmatmul.f32.gmra.mxu0 %v4706
        %v4821 = vpop.f32.mrf.mxu0
        %v4822 = vadd.f32 0.0, %v4821
        %4823 = vmatmul.f32.gmra.mxu0 %v4709
        %v4824 = vpop.f32.mrf.mxu0
        %v4825 = vadd.f32 0.0, %v4824
        %4826 = vmatmul.f32.gmra.mxu0 %v4712
        %v4827 = vpop.f32.mrf.mxu0
        %v4828 = vadd.f32 0.0, %v4827
        %4829 = vmatmul.f32.gmra.mxu0 %v4715
        %v4830 = vpop.f32.mrf.mxu0
        %v4831 = vadd.f32 0.0, %v4830
        %4832 = vmatmul.f32.gmra.mxu0 %v4718
        %v4833 = vpop.f32.mrf.mxu0
        %v4834 = vadd.f32 0.0, %v4833
        %4835 = vmatmul.f32.gmra.mxu0 %v4721
        %v4836 = vpop.f32.mrf.mxu0
        %v4837 = vadd.f32 0.0, %v4836
        %4838 = vmatmul.f32.gmra.mxu0 %v4724
        %v4839 = vpop.f32.mrf.mxu0
        %v4840 = vadd.f32 0.0, %v4839
        %4841 = vmatmul.f32.gmra.mxu0 %v4727
        %v4842 = vpop.f32.mrf.mxu0
        %v4843 = vadd.f32 0.0, %v4842
        %4844 = vmatmul.f32.gmra.mxu0 %v4730
        %v4845 = vpop.f32.mrf.mxu0
        %v4846 = vadd.f32 0.0, %v4845
        %4847 = vmatmul.f32.gmra.mxu0 %v4733
        %v4848 = vpop.f32.mrf.mxu0
        %v4849 = vadd.f32 0.0, %v4848
        %4850 = vmatmul.f32.gmra.mxu0 %v4736
        %v4851 = vpop.f32.mrf.mxu0
        %v4852 = vadd.f32 0.0, %v4851
        %4853 = vmatmul.f32.gmra.mxu0 %v4739
        %v4854 = vpop.f32.mrf.mxu0
        %v4855 = vadd.f32 0.0, %v4854
        %4856 = vmatmul.f32.gmra.mxu0 %v4742
        %v4857 = vpop.f32.mrf.mxu0
        %v4858 = vadd.f32 0.0, %v4857
        %4859 = vmatmul.f32.gmra.mxu0 %v4745
        %v4860 = vpop.f32.mrf.mxu0
        %v4861 = vadd.f32 0.0, %v4860
        %4862 = vmatmul.f32.gmra.mxu0 %v4748
        %v4863 = vpop.f32.mrf.mxu0
        %v4864 = vadd.f32 0.0, %v4863
        %4865 = vmatmul.f32.gmra.mxu0 %v4751
        %v4866 = vpop.f32.mrf.mxu0
        %v4867 = vadd.f32 0.0, %v4866
        %4868 = vmatmul.f32.gmra.mxu0 %v4754
        %v4869 = vpop.f32.mrf.mxu0
        %v4870 = vadd.f32 0.0, %v4869
        %4871 = vmatmul.f32.gmra.mxu0 %v4757
        %v4872 = vpop.f32.mrf.mxu0
        %v4873 = vadd.f32 0.0, %v4872
        %4874 = vmatmul.f32.gmra.mxu0 %v4760
        %v4875 = vpop.f32.mrf.mxu0
        %v4876 = vadd.f32 0.0, %v4875
        %4877 = vmatmul.f32.gmra.mxu0 %v4763
        %v4878 = vpop.f32.mrf.mxu0
        %v4879 = vadd.f32 0.0, %v4878
        %4880 = vmatmul.f32.gmra.mxu0 %v4766
        %v4881 = vpop.f32.mrf.mxu0
        %v4882 = vadd.f32 0.0, %v4881
        %4883 = vmatmul.f32.gmra.mxu0 %v4769
        %v4884 = vpop.f32.mrf.mxu0
        %v4885 = vadd.f32 0.0, %v4884
        %4886 = vmatmul.f32.gmra.mxu0 %v4772
        %v4887 = vpop.f32.mrf.mxu0
        %v4888 = vadd.f32 0.0, %v4887
        %4889 = vdwg.mxu0
        %v4891 = vsel %vm4677, %v3837, 0
        %v4894 = vsel %vm4677, %v3838, 0
        %v4897 = vsel %vm4677, %v3839, 0
        %v4900 = vsel %vm4677, %v3840, 0
        %v4903 = vsel %vm4677, %v3841, 0
        %v4906 = vsel %vm4677, %v3842, 0
        %v4909 = vsel %vm4677, %v3843, 0
        %v4912 = vsel %vm4677, %v3844, 0
        %v4915 = vsel %vm4677, %v3845, 0
        %v4918 = vsel %vm4677, %v3846, 0
        %v4921 = vsel %vm4677, %v3847, 0
        %v4924 = vsel %vm4677, %v3848, 0
        %v4927 = vsel %vm4677, %v3849, 0
        %v4930 = vsel %vm4677, %v3850, 0
        %v4933 = vsel %vm4677, %v3851, 0
        %v4936 = vsel %vm4677, %v3852, 0
        %v4939 = vsel %vm4677, %v3853, 0
        %v4942 = vsel %vm4677, %v3854, 0
        %v4945 = vsel %vm4677, %v3855, 0
        %v4948 = vsel %vm4677, %v3856, 0
        %v4951 = vsel %vm4677, %v3857, 0
        %v4954 = vsel %vm4677, %v3858, 0
        %v4957 = vsel %vm4677, %v3859, 0
        %v4960 = vsel %vm4677, %v3860, 0
        %v4963 = vsel %vm4677, %v3861, 0
        %v4966 = vsel %vm4677, %v3862, 0
        %v4969 = vsel %vm4677, %v3863, 0
        %v4972 = vsel %vm4677, %v3864, 0
        %v4975 = vsel %vm4677, %v3865, 0
        %v4978 = vsel %vm4677, %v3866, 0
        %v4981 = vsel %vm4677, %v3867, 0
        %v4984 = vsel %vm4677, %v3868, 0
        %v4987 = vsel %vm478, %v3871, 0
        %4989 = vmatpush.msra.mxu0 0.0
        %4990 = vmatpush.msra.mxu0 0.0
        %4991 = vmatpush.msra.mxu0 0.0
        %4992 = vmatpush.msra.mxu0 0.0
        %4993 = vmatpush.msra.mxu0 0.0
        %4994 = vmatpush.msra.mxu0 0.0
        %4995 = vmatpush.msra.mxu0 0.0
        %4996 = vmatpush.msra.mxu0 0.0
        %4997 = vmatpush.msra.mxu0 0.0
        %4998 = vmatpush.msra.mxu0 0.0
        %4999 = vmatpush.msra.mxu0 0.0
        %5000 = vmatpush.msra.mxu0 0.0
        %5001 = vmatpush.msra.mxu0 0.0
        %5002 = vmatpush.msra.mxu0 %v4987
        %5003 = vmatpush.msra.mxu0 %v3870
        %5004 = vmatpush.msra.mxu0 %v3869
        %5005 = vmatmul.f32.gmra.mxu0 %v4891
        %v5006 = vpop.f32.mrf.mxu0
        %v5007 = vadd.f32 %v4795, %v5006
        %5008 = vmatmul.f32.gmra.mxu0 %v4894
        %v5009 = vpop.f32.mrf.mxu0
        %v5010 = vadd.f32 %v4798, %v5009
        %5011 = vmatmul.f32.gmra.mxu0 %v4897
        %v5012 = vpop.f32.mrf.mxu0
        %v5013 = vadd.f32 %v4801, %v5012
        %5014 = vmatmul.f32.gmra.mxu0 %v4900
        %v5015 = vpop.f32.mrf.mxu0
        %v5016 = vadd.f32 %v4804, %v5015
        %5017 = vmatmul.f32.gmra.mxu0 %v4903
        %v5018 = vpop.f32.mrf.mxu0
        %v5019 = vadd.f32 %v4807, %v5018
        %5020 = vmatmul.f32.gmra.mxu0 %v4906
        %v5021 = vpop.f32.mrf.mxu0
        %v5022 = vadd.f32 %v4810, %v5021
        %5023 = vmatmul.f32.gmra.mxu0 %v4909
        %v5024 = vpop.f32.mrf.mxu0
        %v5025 = vadd.f32 %v4813, %v5024
        %5026 = vmatmul.f32.gmra.mxu0 %v4912
        %v5027 = vpop.f32.mrf.mxu0
        %v5028 = vadd.f32 %v4816, %v5027
        %5029 = vmatmul.f32.gmra.mxu0 %v4915
        %v5030 = vpop.f32.mrf.mxu0
        %v5031 = vadd.f32 %v4819, %v5030
        %5032 = vmatmul.f32.gmra.mxu0 %v4918
        %v5033 = vpop.f32.mrf.mxu0
        %v5034 = vadd.f32 %v4822, %v5033
        %5035 = vmatmul.f32.gmra.mxu0 %v4921
        %v5036 = vpop.f32.mrf.mxu0
        %v5037 = vadd.f32 %v4825, %v5036
        %5038 = vmatmul.f32.gmra.mxu0 %v4924
        %v5039 = vpop.f32.mrf.mxu0
        %v5040 = vadd.f32 %v4828, %v5039
        %5041 = vmatmul.f32.gmra.mxu0 %v4927
        %v5042 = vpop.f32.mrf.mxu0
        %v5043 = vadd.f32 %v4831, %v5042
        %5044 = vmatmul.f32.gmra.mxu0 %v4930
        %v5045 = vpop.f32.mrf.mxu0
        %v5046 = vadd.f32 %v4834, %v5045
        %5047 = vmatmul.f32.gmra.mxu0 %v4933
        %v5048 = vpop.f32.mrf.mxu0
        %v5049 = vadd.f32 %v4837, %v5048
        %5050 = vmatmul.f32.gmra.mxu0 %v4936
        %v5051 = vpop.f32.mrf.mxu0
        %v5052 = vadd.f32 %v4840, %v5051
        %5053 = vmatmul.f32.gmra.mxu0 %v4939
        %v5054 = vpop.f32.mrf.mxu0
        %v5055 = vadd.f32 %v4843, %v5054
        %5056 = vmatmul.f32.gmra.mxu0 %v4942
        %v5057 = vpop.f32.mrf.mxu0
        %v5058 = vadd.f32 %v4846, %v5057
        %5059 = vmatmul.f32.gmra.mxu0 %v4945
        %v5060 = vpop.f32.mrf.mxu0
        %v5061 = vadd.f32 %v4849, %v5060
        %5062 = vmatmul.f32.gmra.mxu0 %v4948
        %v5063 = vpop.f32.mrf.mxu0
        %v5064 = vadd.f32 %v4852, %v5063
        %5065 = vmatmul.f32.gmra.mxu0 %v4951
        %v5066 = vpop.f32.mrf.mxu0
        %v5067 = vadd.f32 %v4855, %v5066
        %5068 = vmatmul.f32.gmra.mxu0 %v4954
        %v5069 = vpop.f32.mrf.mxu0
        %v5070 = vadd.f32 %v4858, %v5069
        %5071 = vmatmul.f32.gmra.mxu0 %v4957
        %v5072 = vpop.f32.mrf.mxu0
        %v5073 = vadd.f32 %v4861, %v5072
        %5074 = vmatmul.f32.gmra.mxu0 %v4960
        %v5075 = vpop.f32.mrf.mxu0
        %v5076 = vadd.f32 %v4864, %v5075
        %5077 = vmatmul.f32.gmra.mxu0 %v4963
        %v5078 = vpop.f32.mrf.mxu0
        %v5079 = vadd.f32 %v4867, %v5078
        %5080 = vmatmul.f32.gmra.mxu0 %v4966
        %v5081 = vpop.f32.mrf.mxu0
        %v5082 = vadd.f32 %v4870, %v5081
        %5083 = vmatmul.f32.gmra.mxu0 %v4969
        %v5084 = vpop.f32.mrf.mxu0
        %v5085 = vadd.f32 %v4873, %v5084
        %5086 = vmatmul.f32.gmra.mxu0 %v4972
        %v5087 = vpop.f32.mrf.mxu0
        %v5088 = vadd.f32 %v4876, %v5087
        %5089 = vmatmul.f32.gmra.mxu0 %v4975
        %v5090 = vpop.f32.mrf.mxu0
        %v5091 = vadd.f32 %v4879, %v5090
        %5092 = vmatmul.f32.gmra.mxu0 %v4978
        %v5093 = vpop.f32.mrf.mxu0
        %v5094 = vadd.f32 %v4882, %v5093
        %5095 = vmatmul.f32.gmra.mxu0 %v4981
        %v5096 = vpop.f32.mrf.mxu0
        %v5097 = vadd.f32 %v4885, %v5096
        %5098 = vmatmul.f32.gmra.mxu0 %v4984
        %v5099 = vpop.f32.mrf.mxu0
        %v5100 = vadd.f32 %v4888, %v5099
        %5101 = vdwg.mxu0
        %v5102 = vld [vmem:[%s2989] sm:$0xff]
        %v5103 = vld [vmem:[%s2989 + $0x8] sm:$0xff]
        %v5104 = vld [vmem:[%s2989 + $0x18] sm:$0xff]
        %v5105 = vld [vmem:[%s2989 + $0x20] sm:$0xff]
        %v5106 = vld [vmem:[%s2989 + $0x30] sm:$0xff]
        %v5107 = vld [vmem:[%s2989 + $0x38] sm:$0xff]
        %v5108 = vld [vmem:[%s2989 + $0x48] sm:$0xff]
        %v5109 = vld [vmem:[%s2989 + $0x50] sm:$0xff]
        %v5110 = vld [vmem:[%s2989 + $0x60] sm:$0xff]
        %v5111 = vld [vmem:[%s2989 + $0x68] sm:$0xff]
        %v5112 = vld [vmem:[%s2989 + $0x78] sm:$0xff]
        %v5113 = vld [vmem:[%s2989 + $0x80] sm:$0xff]
        %v5114 = vld [vmem:[%s2989 + $0x90] sm:$0xff]
        %v5115 = vld [vmem:[%s2989 + $0x98] sm:$0xff]
        %v5116 = vld [vmem:[%s2989 + $0xa8] sm:$0xff]
        %v5117 = vld [vmem:[%s2989 + $0xb0] sm:$0xff]
        %v5118 = vld [vmem:[%s2989 + $0xc0] sm:$0xff]
        %v5119 = vld [vmem:[%s2989 + $0xc8] sm:$0xff]
        %v5120 = vld [vmem:[%s2989 + $0xd8] sm:$0xff]
        %v5121 = vld [vmem:[%s2989 + $0xe0] sm:$0xff]
        %v5122 = vld [vmem:[%s2989 + $0xf0] sm:$0xff]
        %v5123 = vld [vmem:[%s2989 + $0xf8] sm:$0xff]
        %v5124 = vld [vmem:[%s2989 + $0x108] sm:$0xff]
        %v5125 = vld [vmem:[%s2989 + $0x110] sm:$0xff]
        %v5126 = vld [vmem:[%s2989 + $0x120] sm:$0xff]
        %v5127 = vld [vmem:[%s2989 + $0x128] sm:$0xff]
        %v5128 = vld [vmem:[%s2989 + $0x138] sm:$0xff]
        %v5129 = vld [vmem:[%s2989 + $0x140] sm:$0xff]
        %v5130 = vld [vmem:[%s2989 + $0x150] sm:$0xff]
        %v5131 = vld [vmem:[%s2989 + $0x158] sm:$0xff]
        %v5132 = vld [vmem:[%s2989 + $0x168] sm:$0xff]
        %v5133 = vld [vmem:[%s2989 + $0x170] sm:$0xff]
        %v5134 = vld [vmem:[%s2989 + $0x1] sm:$0xff]
        %v5135 = vld [vmem:[%s2989 + $0x9] sm:$0xff]
        %v5136 = vld [vmem:[%s2989 + $0x19] sm:$0xff]
        %v5137 = vld [vmem:[%s2989 + $0x21] sm:$0xff]
        %v5138 = vld [vmem:[%s2989 + $0x31] sm:$0xff]
        %v5139 = vld [vmem:[%s2989 + $0x39] sm:$0xff]
        %v5140 = vld [vmem:[%s2989 + $0x49] sm:$0xff]
        %v5141 = vld [vmem:[%s2989 + $0x51] sm:$0xff]
        %v5142 = vld [vmem:[%s2989 + $0x61] sm:$0xff]
        %v5143 = vld [vmem:[%s2989 + $0x69] sm:$0xff]
        %v5144 = vld [vmem:[%s2989 + $0x79] sm:$0xff]
        %v5145 = vld [vmem:[%s2989 + $0x81] sm:$0xff]
        %v5146 = vld [vmem:[%s2989 + $0x91] sm:$0xff]
        %v5147 = vld [vmem:[%s2989 + $0x99] sm:$0xff]
        %v5148 = vld [vmem:[%s2989 + $0xa9] sm:$0xff]
        %v5149 = vld [vmem:[%s2989 + $0xb1] sm:$0xff]
        %v5150 = vld [vmem:[%s2989 + $0xc1] sm:$0xff]
        %v5151 = vld [vmem:[%s2989 + $0xc9] sm:$0xff]
        %v5152 = vld [vmem:[%s2989 + $0xd9] sm:$0xff]
        %v5153 = vld [vmem:[%s2989 + $0xe1] sm:$0xff]
        %v5154 = vld [vmem:[%s2989 + $0xf1] sm:$0xff]
        %v5155 = vld [vmem:[%s2989 + $0xf9] sm:$0xff]
        %v5156 = vld [vmem:[%s2989 + $0x109] sm:$0xff]
        %v5157 = vld [vmem:[%s2989 + $0x111] sm:$0xff]
        %v5158 = vld [vmem:[%s2989 + $0x121] sm:$0xff]
        %v5159 = vld [vmem:[%s2989 + $0x129] sm:$0xff]
        %v5160 = vld [vmem:[%s2989 + $0x139] sm:$0xff]
        %v5161 = vld [vmem:[%s2989 + $0x141] sm:$0xff]
        %v5162 = vld [vmem:[%s2989 + $0x151] sm:$0xff]
        %v5163 = vld [vmem:[%s2989 + $0x159] sm:$0xff]
        %v5164 = vld [vmem:[%s2989 + $0x169] sm:$0xff]
        %v5165 = vld [vmem:[%s2989 + $0x171] sm:$0xff]
        %v5166 = vld [vmem:[%s2989 + $0x2] sm:$0xff]
        %v5167 = vld [vmem:[%s2989 + $0xa] sm:$0xff]
        %v5168 = vld [vmem:[%s2989 + $0x1a] sm:$0xff]
        %v5169 = vld [vmem:[%s2989 + $0x22] sm:$0xff]
        %v5170 = vld [vmem:[%s2989 + $0x32] sm:$0xff]
        %v5171 = vld [vmem:[%s2989 + $0x3a] sm:$0xff]
        %v5172 = vld [vmem:[%s2989 + $0x4a] sm:$0xff]
        %v5173 = vld [vmem:[%s2989 + $0x52] sm:$0xff]
        %v5174 = vld [vmem:[%s2989 + $0x62] sm:$0xff]
        %v5175 = vld [vmem:[%s2989 + $0x6a] sm:$0xff]
        %v5176 = vld [vmem:[%s2989 + $0x7a] sm:$0xff]
        %v5177 = vld [vmem:[%s2989 + $0x82] sm:$0xff]
        %v5178 = vld [vmem:[%s2989 + $0x92] sm:$0xff]
        %v5179 = vld [vmem:[%s2989 + $0x9a] sm:$0xff]
        %v5180 = vld [vmem:[%s2989 + $0xaa] sm:$0xff]
        %v5181 = vld [vmem:[%s2989 + $0xb2] sm:$0xff]
        %v5182 = vld [vmem:[%s2989 + $0xc2] sm:$0xff]
        %v5183 = vld [vmem:[%s2989 + $0xca] sm:$0xff]
        %v5184 = vld [vmem:[%s2989 + $0xda] sm:$0xff]
        %v5185 = vld [vmem:[%s2989 + $0xe2] sm:$0xff]
        %v5186 = vld [vmem:[%s2989 + $0xf2] sm:$0xff]
        %v5187 = vld [vmem:[%s2989 + $0xfa] sm:$0xff]
        %v5188 = vld [vmem:[%s2989 + $0x10a] sm:$0xff]
        %v5189 = vld [vmem:[%s2989 + $0x112] sm:$0xff]
        %v5190 = vld [vmem:[%s2989 + $0x122] sm:$0xff]
        %v5191 = vld [vmem:[%s2989 + $0x12a] sm:$0xff]
        %v5192 = vld [vmem:[%s2989 + $0x13a] sm:$0xff]
        %v5193 = vld [vmem:[%s2989 + $0x142] sm:$0xff]
        %v5194 = vld [vmem:[%s2989 + $0x152] sm:$0xff]
        %v5195 = vld [vmem:[%s2989 + $0x15a] sm:$0xff]
        %v5196 = vld [vmem:[%s2989 + $0x16a] sm:$0xff]
        %v5197 = vld [vmem:[%s2989 + $0x172] sm:$0xff]
        %v5198 = vld [vmem:[%s2989 + $0x3] sm:$0xff]
        %v5199 = vld [vmem:[%s2989 + $0xb] sm:$0xff]
        %v5200 = vld [vmem:[%s2989 + $0x1b] sm:$0xff]
        %v5201 = vld [vmem:[%s2989 + $0x23] sm:$0xff]
        %v5202 = vld [vmem:[%s2989 + $0x33] sm:$0xff]
        %v5203 = vld [vmem:[%s2989 + $0x3b] sm:$0xff]
        %v5204 = vld [vmem:[%s2989 + $0x4b] sm:$0xff]
        %v5205 = vld [vmem:[%s2989 + $0x53] sm:$0xff]
        %v5206 = vld [vmem:[%s2989 + $0x63] sm:$0xff]
        %v5207 = vld [vmem:[%s2989 + $0x6b] sm:$0xff]
        %v5208 = vld [vmem:[%s2989 + $0x7b] sm:$0xff]
        %v5209 = vld [vmem:[%s2989 + $0x83] sm:$0xff]
        %v5210 = vld [vmem:[%s2989 + $0x93] sm:$0xff]
        %v5211 = vld [vmem:[%s2989 + $0x9b] sm:$0xff]
        %v5212 = vld [vmem:[%s2989 + $0xab] sm:$0xff]
        %v5213 = vld [vmem:[%s2989 + $0xb3] sm:$0xff]
        %v5214 = vld [vmem:[%s2989 + $0xc3] sm:$0xff]
        %v5215 = vld [vmem:[%s2989 + $0xcb] sm:$0xff]
        %v5216 = vld [vmem:[%s2989 + $0xdb] sm:$0xff]
        %v5217 = vld [vmem:[%s2989 + $0xe3] sm:$0xff]
        %v5218 = vld [vmem:[%s2989 + $0xf3] sm:$0xff]
        %v5219 = vld [vmem:[%s2989 + $0xfb] sm:$0xff]
        %v5220 = vld [vmem:[%s2989 + $0x10b] sm:$0xff]
        %v5221 = vld [vmem:[%s2989 + $0x113] sm:$0xff]
        %v5222 = vld [vmem:[%s2989 + $0x123] sm:$0xff]
        %v5223 = vld [vmem:[%s2989 + $0x12b] sm:$0xff]
        %v5224 = vld [vmem:[%s2989 + $0x13b] sm:$0xff]
        %v5225 = vld [vmem:[%s2989 + $0x143] sm:$0xff]
        %v5226 = vld [vmem:[%s2989 + $0x153] sm:$0xff]
        %v5227 = vld [vmem:[%s2989 + $0x15b] sm:$0xff]
        %v5228 = vld [vmem:[%s2989 + $0x16b] sm:$0xff]
        %v5229 = vld [vmem:[%s2989 + $0x173] sm:$0xff]
        %v5230 = vld [vmem:[%s2989 + $0x4] sm:$0xff]
        %v5231 = vld [vmem:[%s2989 + $0xc] sm:$0xff]
        %v5232 = vld [vmem:[%s2989 + $0x1c] sm:$0xff]
        %v5233 = vld [vmem:[%s2989 + $0x24] sm:$0xff]
        %v5234 = vld [vmem:[%s2989 + $0x34] sm:$0xff]
        %v5235 = vld [vmem:[%s2989 + $0x3c] sm:$0xff]
        %v5236 = vld [vmem:[%s2989 + $0x4c] sm:$0xff]
        %v5237 = vld [vmem:[%s2989 + $0x54] sm:$0xff]
        %v5238 = vld [vmem:[%s2989 + $0x64] sm:$0xff]
        %v5239 = vld [vmem:[%s2989 + $0x6c] sm:$0xff]
        %v5240 = vld [vmem:[%s2989 + $0x7c] sm:$0xff]
        %v5241 = vld [vmem:[%s2989 + $0x84] sm:$0xff]
        %v5242 = vld [vmem:[%s2989 + $0x94] sm:$0xff]
        %v5243 = vld [vmem:[%s2989 + $0x9c] sm:$0xff]
        %v5244 = vld [vmem:[%s2989 + $0xac] sm:$0xff]
        %v5245 = vld [vmem:[%s2989 + $0xb4] sm:$0xff]
        %v5246 = vld [vmem:[%s2989 + $0xc4] sm:$0xff]
        %v5247 = vld [vmem:[%s2989 + $0xcc] sm:$0xff]
        %v5248 = vld [vmem:[%s2989 + $0xdc] sm:$0xff]
        %v5249 = vld [vmem:[%s2989 + $0xe4] sm:$0xff]
        %v5250 = vld [vmem:[%s2989 + $0xf4] sm:$0xff]
        %v5251 = vld [vmem:[%s2989 + $0xfc] sm:$0xff]
        %v5252 = vld [vmem:[%s2989 + $0x10c] sm:$0xff]
        %v5253 = vld [vmem:[%s2989 + $0x114] sm:$0xff]
        %v5254 = vld [vmem:[%s2989 + $0x124] sm:$0xff]
        %v5255 = vld [vmem:[%s2989 + $0x12c] sm:$0xff]
        %v5256 = vld [vmem:[%s2989 + $0x13c] sm:$0xff]
        %v5257 = vld [vmem:[%s2989 + $0x144] sm:$0xff]
        %v5258 = vld [vmem:[%s2989 + $0x154] sm:$0xff]
        %v5259 = vld [vmem:[%s2989 + $0x15c] sm:$0xff]
        %v5260 = vld [vmem:[%s2989 + $0x16c] sm:$0xff]
        %v5261 = vld [vmem:[%s2989 + $0x174] sm:$0xff]
        %5294 = vrot.lane.b32.xlu0 %v5134, 4
        %v5295 = vpop.permute.xlu0 %5294
        %5296 = vrot.lane.b32.xlu0 %v5135, 4
        %v5297 = vpop.permute.xlu0 %5296
        %5298 = vrot.lane.b32.xlu0 %v5136, 4
        %v5299 = vpop.permute.xlu0 %5298
        %5300 = vrot.lane.b32.xlu0 %v5137, 4
        %v5301 = vpop.permute.xlu0 %5300
        %5302 = vrot.lane.b32.xlu0 %v5138, 4
        %v5303 = vpop.permute.xlu0 %5302
        %5304 = vrot.lane.b32.xlu0 %v5139, 4
        %v5305 = vpop.permute.xlu0 %5304
        %5306 = vrot.lane.b32.xlu0 %v5140, 4
        %v5307 = vpop.permute.xlu0 %5306
        %5308 = vrot.lane.b32.xlu0 %v5141, 4
        %v5309 = vpop.permute.xlu0 %5308
        %5310 = vrot.lane.b32.xlu0 %v5142, 4
        %v5311 = vpop.permute.xlu0 %5310
        %5312 = vrot.lane.b32.xlu0 %v5143, 4
        %v5313 = vpop.permute.xlu0 %5312
        %5314 = vrot.lane.b32.xlu0 %v5144, 4
        %v5315 = vpop.permute.xlu0 %5314
        %5316 = vrot.lane.b32.xlu0 %v5145, 4
        %v5317 = vpop.permute.xlu0 %5316
        %5318 = vrot.lane.b32.xlu0 %v5146, 4
        %v5319 = vpop.permute.xlu0 %5318
        %5320 = vrot.lane.b32.xlu0 %v5147, 4
        %v5321 = vpop.permute.xlu0 %5320
        %5322 = vrot.lane.b32.xlu0 %v5148, 4
        %v5323 = vpop.permute.xlu0 %5322
        %5324 = vrot.lane.b32.xlu0 %v5149, 4
        %v5325 = vpop.permute.xlu0 %5324
        %5326 = vrot.lane.b32.xlu0 %v5150, 4
        %v5327 = vpop.permute.xlu0 %5326
        %5328 = vrot.lane.b32.xlu0 %v5151, 4
        %v5329 = vpop.permute.xlu0 %5328
        %5330 = vrot.lane.b32.xlu0 %v5152, 4
        %v5331 = vpop.permute.xlu0 %5330
        %5332 = vrot.lane.b32.xlu0 %v5153, 4
        %v5333 = vpop.permute.xlu0 %5332
        %5334 = vrot.lane.b32.xlu0 %v5154, 4
        %v5335 = vpop.permute.xlu0 %5334
        %5336 = vrot.lane.b32.xlu0 %v5155, 4
        %v5337 = vpop.permute.xlu0 %5336
        %5338 = vrot.lane.b32.xlu0 %v5156, 4
        %v5339 = vpop.permute.xlu0 %5338
        %5340 = vrot.lane.b32.xlu0 %v5157, 4
        %v5341 = vpop.permute.xlu0 %5340
        %5342 = vrot.lane.b32.xlu0 %v5158, 4
        %v5343 = vpop.permute.xlu0 %5342
        %5344 = vrot.lane.b32.xlu0 %v5159, 4
        %v5345 = vpop.permute.xlu0 %5344
        %5346 = vrot.lane.b32.xlu0 %v5160, 4
        %v5347 = vpop.permute.xlu0 %5346
        %5348 = vrot.lane.b32.xlu0 %v5161, 4
        %v5349 = vpop.permute.xlu0 %5348
        %5350 = vrot.lane.b32.xlu0 %v5162, 4
        %v5351 = vpop.permute.xlu0 %5350
        %5352 = vrot.lane.b32.xlu0 %v5163, 4
        %v5353 = vpop.permute.xlu0 %5352
        %5354 = vrot.lane.b32.xlu0 %v5164, 4
        %v5355 = vpop.permute.xlu0 %5354
        %5356 = vrot.lane.b32.xlu0 %v5165, 4
        %v5357 = vpop.permute.xlu0 %5356
        %5422 = vrot.lane.b32.xlu0 %v5166, 8
        %v5423 = vpop.permute.xlu0 %5422
        %5424 = vrot.lane.b32.xlu0 %v5167, 8
        %v5425 = vpop.permute.xlu0 %5424
        %5426 = vrot.lane.b32.xlu0 %v5168, 8
        %v5427 = vpop.permute.xlu0 %5426
        %5428 = vrot.lane.b32.xlu0 %v5169, 8
        %v5429 = vpop.permute.xlu0 %5428
        %5430 = vrot.lane.b32.xlu0 %v5170, 8
        %v5431 = vpop.permute.xlu0 %5430
        %5432 = vrot.lane.b32.xlu0 %v5171, 8
        %v5433 = vpop.permute.xlu0 %5432
        %5434 = vrot.lane.b32.xlu0 %v5172, 8
        %v5435 = vpop.permute.xlu0 %5434
        %5436 = vrot.lane.b32.xlu0 %v5173, 8
        %v5437 = vpop.permute.xlu0 %5436
        %5438 = vrot.lane.b32.xlu0 %v5174, 8
        %v5439 = vpop.permute.xlu0 %5438
        %5440 = vrot.lane.b32.xlu0 %v5175, 8
        %v5441 = vpop.permute.xlu0 %5440
        %5442 = vrot.lane.b32.xlu0 %v5176, 8
        %v5443 = vpop.permute.xlu0 %5442
        %5444 = vrot.lane.b32.xlu0 %v5177, 8
        %v5445 = vpop.permute.xlu0 %5444
        %5446 = vrot.lane.b32.xlu0 %v5178, 8
        %v5447 = vpop.permute.xlu0 %5446
        %5448 = vrot.lane.b32.xlu0 %v5179, 8
        %v5449 = vpop.permute.xlu0 %5448
        %5450 = vrot.lane.b32.xlu0 %v5180, 8
        %v5451 = vpop.permute.xlu0 %5450
        %5452 = vrot.lane.b32.xlu0 %v5181, 8
        %v5453 = vpop.permute.xlu0 %5452
        %5454 = vrot.lane.b32.xlu0 %v5182, 8
        %v5455 = vpop.permute.xlu0 %5454
        %5456 = vrot.lane.b32.xlu0 %v5183, 8
        %v5457 = vpop.permute.xlu0 %5456
        %5458 = vrot.lane.b32.xlu0 %v5184, 8
        %v5459 = vpop.permute.xlu0 %5458
        %5460 = vrot.lane.b32.xlu0 %v5185, 8
        %v5461 = vpop.permute.xlu0 %5460
        %5462 = vrot.lane.b32.xlu0 %v5186, 8
        %v5463 = vpop.permute.xlu0 %5462
        %5464 = vrot.lane.b32.xlu0 %v5187, 8
        %v5465 = vpop.permute.xlu0 %5464
        %5466 = vrot.lane.b32.xlu0 %v5188, 8
        %v5467 = vpop.permute.xlu0 %5466
        %5468 = vrot.lane.b32.xlu0 %v5189, 8
        %v5469 = vpop.permute.xlu0 %5468
        %5470 = vrot.lane.b32.xlu0 %v5190, 8
        %v5471 = vpop.permute.xlu0 %5470
        %5472 = vrot.lane.b32.xlu0 %v5191, 8
        %v5473 = vpop.permute.xlu0 %5472
        %5474 = vrot.lane.b32.xlu0 %v5192, 8
        %v5475 = vpop.permute.xlu0 %5474
        %5476 = vrot.lane.b32.xlu0 %v5193, 8
        %v5477 = vpop.permute.xlu0 %5476
        %5478 = vrot.lane.b32.xlu0 %v5194, 8
        %v5479 = vpop.permute.xlu0 %5478
        %5480 = vrot.lane.b32.xlu0 %v5195, 8
        %v5481 = vpop.permute.xlu0 %5480
        %5482 = vrot.lane.b32.xlu0 %v5196, 8
        %v5483 = vpop.permute.xlu0 %5482
        %5484 = vrot.lane.b32.xlu0 %v5197, 8
        %v5485 = vpop.permute.xlu0 %5484
        %5550 = vrot.lane.b32.xlu0 %v5198, 12
        %v5551 = vpop.permute.xlu0 %5550
        %5552 = vrot.lane.b32.xlu0 %v5199, 12
        %v5553 = vpop.permute.xlu0 %5552
        %5554 = vrot.lane.b32.xlu0 %v5200, 12
        %v5555 = vpop.permute.xlu0 %5554
        %5556 = vrot.lane.b32.xlu0 %v5201, 12
        %v5557 = vpop.permute.xlu0 %5556
        %5558 = vrot.lane.b32.xlu0 %v5202, 12
        %v5559 = vpop.permute.xlu0 %5558
        %5560 = vrot.lane.b32.xlu0 %v5203, 12
        %v5561 = vpop.permute.xlu0 %5560
        %5562 = vrot.lane.b32.xlu0 %v5204, 12
        %v5563 = vpop.permute.xlu0 %5562
        %5564 = vrot.lane.b32.xlu0 %v5205, 12
        %v5565 = vpop.permute.xlu0 %5564
        %5566 = vrot.lane.b32.xlu0 %v5206, 12
        %v5567 = vpop.permute.xlu0 %5566
        %5568 = vrot.lane.b32.xlu0 %v5207, 12
        %v5569 = vpop.permute.xlu0 %5568
        %5570 = vrot.lane.b32.xlu0 %v5208, 12
        %v5571 = vpop.permute.xlu0 %5570
        %5572 = vrot.lane.b32.xlu0 %v5209, 12
        %v5573 = vpop.permute.xlu0 %5572
        %5574 = vrot.lane.b32.xlu0 %v5210, 12
        %v5575 = vpop.permute.xlu0 %5574
        %5576 = vrot.lane.b32.xlu0 %v5211, 12
        %v5577 = vpop.permute.xlu0 %5576
        %5578 = vrot.lane.b32.xlu0 %v5212, 12
        %v5579 = vpop.permute.xlu0 %5578
        %5580 = vrot.lane.b32.xlu0 %v5213, 12
        %v5581 = vpop.permute.xlu0 %5580
        %5582 = vrot.lane.b32.xlu0 %v5214, 12
        %v5583 = vpop.permute.xlu0 %5582
        %5584 = vrot.lane.b32.xlu0 %v5215, 12
        %v5585 = vpop.permute.xlu0 %5584
        %5586 = vrot.lane.b32.xlu0 %v5216, 12
        %v5587 = vpop.permute.xlu0 %5586
        %5588 = vrot.lane.b32.xlu0 %v5217, 12
        %v5589 = vpop.permute.xlu0 %5588
        %5590 = vrot.lane.b32.xlu0 %v5218, 12
        %v5591 = vpop.permute.xlu0 %5590
        %5592 = vrot.lane.b32.xlu0 %v5219, 12
        %v5593 = vpop.permute.xlu0 %5592
        %5594 = vrot.lane.b32.xlu0 %v5220, 12
        %v5595 = vpop.permute.xlu0 %5594
        %5596 = vrot.lane.b32.xlu0 %v5221, 12
        %v5597 = vpop.permute.xlu0 %5596
        %5598 = vrot.lane.b32.xlu0 %v5222, 12
        %v5599 = vpop.permute.xlu0 %5598
        %5600 = vrot.lane.b32.xlu0 %v5223, 12
        %v5601 = vpop.permute.xlu0 %5600
        %5602 = vrot.lane.b32.xlu0 %v5224, 12
        %v5603 = vpop.permute.xlu0 %5602
        %5604 = vrot.lane.b32.xlu0 %v5225, 12
        %v5605 = vpop.permute.xlu0 %5604
        %5606 = vrot.lane.b32.xlu0 %v5226, 12
        %v5607 = vpop.permute.xlu0 %5606
        %5608 = vrot.lane.b32.xlu0 %v5227, 12
        %v5609 = vpop.permute.xlu0 %5608
        %5610 = vrot.lane.b32.xlu0 %v5228, 12
        %v5611 = vpop.permute.xlu0 %5610
        %5612 = vrot.lane.b32.xlu0 %v5229, 12
        %v5613 = vpop.permute.xlu0 %5612
        %5678 = vrot.lane.b32.xlu0 %v5230, 16
        %v5679 = vpop.permute.xlu0 %5678
        %5680 = vrot.lane.b32.xlu0 %v5231, 16
        %v5681 = vpop.permute.xlu0 %5680
        %5682 = vrot.lane.b32.xlu0 %v5232, 16
        %v5683 = vpop.permute.xlu0 %5682
        %5684 = vrot.lane.b32.xlu0 %v5233, 16
        %v5685 = vpop.permute.xlu0 %5684
        %5686 = vrot.lane.b32.xlu0 %v5234, 16
        %v5687 = vpop.permute.xlu0 %5686
        %5688 = vrot.lane.b32.xlu0 %v5235, 16
        %v5689 = vpop.permute.xlu0 %5688
        %5690 = vrot.lane.b32.xlu0 %v5236, 16
        %v5691 = vpop.permute.xlu0 %5690
        %5692 = vrot.lane.b32.xlu0 %v5237, 16
        %v5693 = vpop.permute.xlu0 %5692
        %5694 = vrot.lane.b32.xlu0 %v5238, 16
        %v5695 = vpop.permute.xlu0 %5694
        %5696 = vrot.lane.b32.xlu0 %v5239, 16
        %v5697 = vpop.permute.xlu0 %5696
        %5698 = vrot.lane.b32.xlu0 %v5240, 16
        %v5699 = vpop.permute.xlu0 %5698
        %5700 = vrot.lane.b32.xlu0 %v5241, 16
        %v5701 = vpop.permute.xlu0 %5700
        %5702 = vrot.lane.b32.xlu0 %v5242, 16
        %v5703 = vpop.permute.xlu0 %5702
        %5704 = vrot.lane.b32.xlu0 %v5243, 16
        %v5705 = vpop.permute.xlu0 %5704
        %5706 = vrot.lane.b32.xlu0 %v5244, 16
        %v5707 = vpop.permute.xlu0 %5706
        %5708 = vrot.lane.b32.xlu0 %v5245, 16
        %v5709 = vpop.permute.xlu0 %5708
        %5710 = vrot.lane.b32.xlu0 %v5246, 16
        %v5711 = vpop.permute.xlu0 %5710
        %5712 = vrot.lane.b32.xlu0 %v5247, 16
        %v5713 = vpop.permute.xlu0 %5712
        %5714 = vrot.lane.b32.xlu0 %v5248, 16
        %v5715 = vpop.permute.xlu0 %5714
        %5716 = vrot.lane.b32.xlu0 %v5249, 16
        %v5717 = vpop.permute.xlu0 %5716
        %5718 = vrot.lane.b32.xlu0 %v5250, 16
        %v5719 = vpop.permute.xlu0 %5718
        %5720 = vrot.lane.b32.xlu0 %v5251, 16
        %v5721 = vpop.permute.xlu0 %5720
        %5722 = vrot.lane.b32.xlu0 %v5252, 16
        %v5723 = vpop.permute.xlu0 %5722
        %5724 = vrot.lane.b32.xlu0 %v5253, 16
        %v5725 = vpop.permute.xlu0 %5724
        %5726 = vrot.lane.b32.xlu0 %v5254, 16
        %v5727 = vpop.permute.xlu0 %5726
        %5728 = vrot.lane.b32.xlu0 %v5255, 16
        %v5729 = vpop.permute.xlu0 %5728
        %5730 = vrot.lane.b32.xlu0 %v5256, 16
        %v5731 = vpop.permute.xlu0 %5730
        %5732 = vrot.lane.b32.xlu0 %v5257, 16
        %v5733 = vpop.permute.xlu0 %5732
        %5734 = vrot.lane.b32.xlu0 %v5258, 16
        %v5735 = vpop.permute.xlu0 %5734
        %5736 = vrot.lane.b32.xlu0 %v5259, 16
        %v5737 = vpop.permute.xlu0 %5736
        %5738 = vrot.lane.b32.xlu0 %v5260, 16
        %v5739 = vpop.permute.xlu0 %5738
        %5740 = vrot.lane.b32.xlu0 %v5261, 16
        %v5741 = vpop.permute.xlu0 %5740
        %v5774 = vsel %vm381, %v5102, %v5295
        %v5775 = vsel %vm381, %v5103, %v5297
        %v5776 = vsel %vm381, %v5104, %v5299
        %v5777 = vsel %vm381, %v5105, %v5301
        %v5778 = vsel %vm381, %v5106, %v5303
        %v5779 = vsel %vm381, %v5107, %v5305
        %v5780 = vsel %vm381, %v5108, %v5307
        %v5781 = vsel %vm381, %v5109, %v5309
        %v5782 = vsel %vm381, %v5110, %v5311
        %v5783 = vsel %vm381, %v5111, %v5313
        %v5784 = vsel %vm381, %v5112, %v5315
        %v5785 = vsel %vm381, %v5113, %v5317
        %v5786 = vsel %vm381, %v5114, %v5319
        %v5787 = vsel %vm381, %v5115, %v5321
        %v5788 = vsel %vm381, %v5116, %v5323
        %v5789 = vsel %vm381, %v5117, %v5325
        %v5790 = vsel %vm381, %v5118, %v5327
        %v5791 = vsel %vm381, %v5119, %v5329
        %v5792 = vsel %vm381, %v5120, %v5331
        %v5793 = vsel %vm381, %v5121, %v5333
        %v5794 = vsel %vm381, %v5122, %v5335
        %v5795 = vsel %vm381, %v5123, %v5337
        %v5796 = vsel %vm381, %v5124, %v5339
        %v5797 = vsel %vm381, %v5125, %v5341
        %v5798 = vsel %vm381, %v5126, %v5343
        %v5799 = vsel %vm381, %v5127, %v5345
        %v5800 = vsel %vm381, %v5128, %v5347
        %v5801 = vsel %vm381, %v5129, %v5349
        %v5802 = vsel %vm381, %v5130, %v5351
        %v5803 = vsel %vm381, %v5131, %v5353
        %v5804 = vsel %vm381, %v5132, %v5355
        %v5805 = vsel %vm381, %v5133, %v5357
        %v5806 = vsel %vm1378, %v5774, %v5423
        %v5807 = vsel %vm1378, %v5775, %v5425
        %v5808 = vsel %vm1378, %v5776, %v5427
        %v5809 = vsel %vm1378, %v5777, %v5429
        %v5810 = vsel %vm1378, %v5778, %v5431
        %v5811 = vsel %vm1378, %v5779, %v5433
        %v5812 = vsel %vm1378, %v5780, %v5435
        %v5813 = vsel %vm1378, %v5781, %v5437
        %v5814 = vsel %vm1378, %v5782, %v5439
        %v5815 = vsel %vm1378, %v5783, %v5441
        %v5816 = vsel %vm1378, %v5784, %v5443
        %v5817 = vsel %vm1378, %v5785, %v5445
        %v5818 = vsel %vm1378, %v5786, %v5447
        %v5819 = vsel %vm1378, %v5787, %v5449
        %v5820 = vsel %vm1378, %v5788, %v5451
        %v5821 = vsel %vm1378, %v5789, %v5453
        %v5822 = vsel %vm1378, %v5790, %v5455
        %v5823 = vsel %vm1378, %v5791, %v5457
        %v5824 = vsel %vm1378, %v5792, %v5459
        %v5825 = vsel %vm1378, %v5793, %v5461
        %v5826 = vsel %vm1378, %v5794, %v5463
        %v5827 = vsel %vm1378, %v5795, %v5465
        %v5828 = vsel %vm1378, %v5796, %v5467
        %v5829 = vsel %vm1378, %v5797, %v5469
        %v5830 = vsel %vm1378, %v5798, %v5471
        %v5831 = vsel %vm1378, %v5799, %v5473
        %v5832 = vsel %vm1378, %v5800, %v5475
        %v5833 = vsel %vm1378, %v5801, %v5477
        %v5834 = vsel %vm1378, %v5802, %v5479
        %v5835 = vsel %vm1378, %v5803, %v5481
        %v5836 = vsel %vm1378, %v5804, %v5483
        %v5837 = vsel %vm1378, %v5805, %v5485
        %v5838 = vsel %vm1832, %v5806, %v5551
        %v5839 = vsel %vm1832, %v5807, %v5553
        %v5840 = vsel %vm1832, %v5808, %v5555
        %v5841 = vsel %vm1832, %v5809, %v5557
        %v5842 = vsel %vm1832, %v5810, %v5559
        %v5843 = vsel %vm1832, %v5811, %v5561
        %v5844 = vsel %vm1832, %v5812, %v5563
        %v5845 = vsel %vm1832, %v5813, %v5565
        %v5846 = vsel %vm1832, %v5814, %v5567
        %v5847 = vsel %vm1832, %v5815, %v5569
        %v5848 = vsel %vm1832, %v5816, %v5571
        %v5849 = vsel %vm1832, %v5817, %v5573
        %v5850 = vsel %vm1832, %v5818, %v5575
        %v5851 = vsel %vm1832, %v5819, %v5577
        %v5852 = vsel %vm1832, %v5820, %v5579
        %v5853 = vsel %vm1832, %v5821, %v5581
        %v5854 = vsel %vm1832, %v5822, %v5583
        %v5855 = vsel %vm1832, %v5823, %v5585
        %v5856 = vsel %vm1832, %v5824, %v5587
        %v5857 = vsel %vm1832, %v5825, %v5589
        %v5858 = vsel %vm1832, %v5826, %v5591
        %v5859 = vsel %vm1832, %v5827, %v5593
        %v5860 = vsel %vm1832, %v5828, %v5595
        %v5861 = vsel %vm1832, %v5829, %v5597
        %v5862 = vsel %vm1832, %v5830, %v5599
        %v5863 = vsel %vm1832, %v5831, %v5601
        %v5864 = vsel %vm1832, %v5832, %v5603
        %v5865 = vsel %vm1832, %v5833, %v5605
        %v5866 = vsel %vm1832, %v5834, %v5607
        %v5867 = vsel %vm1832, %v5835, %v5609
        %v5868 = vsel %vm1832, %v5836, %v5611
        %v5869 = vsel %vm1832, %v5837, %v5613
        %v5870 = vsel %vm3836, %v5838, %v5679
        %v5871 = vsel %vm3836, %v5839, %v5681
        %v5872 = vsel %vm3836, %v5840, %v5683
        %v5873 = vsel %vm3836, %v5841, %v5685
        %v5874 = vsel %vm3836, %v5842, %v5687
        %v5875 = vsel %vm3836, %v5843, %v5689
        %v5876 = vsel %vm3836, %v5844, %v5691
        %v5877 = vsel %vm3836, %v5845, %v5693
        %v5878 = vsel %vm3836, %v5846, %v5695
        %v5879 = vsel %vm3836, %v5847, %v5697
        %v5880 = vsel %vm3836, %v5848, %v5699
        %v5881 = vsel %vm3836, %v5849, %v5701
        %v5882 = vsel %vm3836, %v5850, %v5703
        %v5883 = vsel %vm3836, %v5851, %v5705
        %v5884 = vsel %vm3836, %v5852, %v5707
        %v5885 = vsel %vm3836, %v5853, %v5709
        %v5886 = vsel %vm3836, %v5854, %v5711
        %v5887 = vsel %vm3836, %v5855, %v5713
        %v5888 = vsel %vm3836, %v5856, %v5715
        %v5889 = vsel %vm3836, %v5857, %v5717
        %v5890 = vsel %vm3836, %v5858, %v5719
        %v5891 = vsel %vm3836, %v5859, %v5721
        %v5892 = vsel %vm3836, %v5860, %v5723
        %v5893 = vsel %vm3836, %v5861, %v5725
        %v5894 = vsel %vm3836, %v5862, %v5727
        %v5895 = vsel %vm3836, %v5863, %v5729
        %v5896 = vsel %vm3836, %v5864, %v5731
        %v5897 = vsel %vm3836, %v5865, %v5733
        %v5898 = vsel %vm3836, %v5866, %v5735
        %v5899 = vsel %vm3836, %v5867, %v5737
        %v5900 = vsel %vm3836, %v5868, %v5739
        %v5901 = vsel %vm3836, %v5869, %v5741
        %s5902 = scalar_lea.vmem %s5, 48
        %v5903 = vld [vmem:[%s5902] sm:$0xff]
        %v5904 = vld [vmem:[%s5902 + $0x8] sm:$0xff]
        %v5905 = vld [vmem:[%s5902 + $0x10] sm:$0xf]
        %v5907 = vsel %vm4677, %v5870, 0
        %v5910 = vsel %vm4677, %v5871, 0
        %v5913 = vsel %vm4677, %v5872, 0
        %v5916 = vsel %vm4677, %v5873, 0
        %v5919 = vsel %vm4677, %v5874, 0
        %v5922 = vsel %vm4677, %v5875, 0
        %v5925 = vsel %vm4677, %v5876, 0
        %v5928 = vsel %vm4677, %v5877, 0
        %v5931 = vsel %vm4677, %v5878, 0
        %v5934 = vsel %vm4677, %v5879, 0
        %v5937 = vsel %vm4677, %v5880, 0
        %v5940 = vsel %vm4677, %v5881, 0
        %v5943 = vsel %vm4677, %v5882, 0
        %v5946 = vsel %vm4677, %v5883, 0
        %v5949 = vsel %vm4677, %v5884, 0
        %v5952 = vsel %vm4677, %v5885, 0
        %v5955 = vsel %vm4677, %v5886, 0
        %v5958 = vsel %vm4677, %v5887, 0
        %v5961 = vsel %vm4677, %v5888, 0
        %v5964 = vsel %vm4677, %v5889, 0
        %v5967 = vsel %vm4677, %v5890, 0
        %v5970 = vsel %vm4677, %v5891, 0
        %v5973 = vsel %vm4677, %v5892, 0
        %v5976 = vsel %vm4677, %v5893, 0
        %v5979 = vsel %vm4677, %v5894, 0
        %v5982 = vsel %vm4677, %v5895, 0
        %v5985 = vsel %vm4677, %v5896, 0
        %v5988 = vsel %vm4677, %v5897, 0
        %v5991 = vsel %vm4677, %v5898, 0
        %v5994 = vsel %vm4677, %v5899, 0
        %v5997 = vsel %vm4677, %v5900, 0
        %v6000 = vsel %vm4677, %v5901, 0
        %v6003 = vsel %vm478, %v5905, 0
        %6005 = vmatpush.msra.mxu0 0.0
        %6006 = vmatpush.msra.mxu0 0.0
        %6007 = vmatpush.msra.mxu0 0.0
        %6008 = vmatpush.msra.mxu0 0.0
        %6009 = vmatpush.msra.mxu0 0.0
        %6010 = vmatpush.msra.mxu0 0.0
        %6011 = vmatpush.msra.mxu0 0.0
        %6012 = vmatpush.msra.mxu0 0.0
        %6013 = vmatpush.msra.mxu0 0.0
        %6014 = vmatpush.msra.mxu0 0.0
        %6015 = vmatpush.msra.mxu0 0.0
        %6016 = vmatpush.msra.mxu0 0.0
        %6017 = vmatpush.msra.mxu0 0.0
        %6018 = vmatpush.msra.mxu0 %v6003
        %6019 = vmatpush.msra.mxu0 %v5904
        %6020 = vmatpush.msra.mxu0 %v5903
        %6021 = vmatmul.f32.gmra.mxu0 %v5907
        %v6022 = vpop.f32.mrf.mxu0
        %v6023 = vadd.f32 0.0, %v6022
        %6024 = vmatmul.f32.gmra.mxu0 %v5910
        %v6025 = vpop.f32.mrf.mxu0
        %v6026 = vadd.f32 0.0, %v6025
        %6027 = vmatmul.f32.gmra.mxu0 %v5913
        %v6028 = vpop.f32.mrf.mxu0
        %v6029 = vadd.f32 0.0, %v6028
        %6030 = vmatmul.f32.gmra.mxu0 %v5916
        %v6031 = vpop.f32.mrf.mxu0
        %v6032 = vadd.f32 0.0, %v6031
        %6033 = vmatmul.f32.gmra.mxu0 %v5919
        %v6034 = vpop.f32.mrf.mxu0
        %v6035 = vadd.f32 0.0, %v6034
        %6036 = vmatmul.f32.gmra.mxu0 %v5922
        %v6037 = vpop.f32.mrf.mxu0
        %v6038 = vadd.f32 0.0, %v6037
        %6039 = vmatmul.f32.gmra.mxu0 %v5925
        %v6040 = vpop.f32.mrf.mxu0
        %v6041 = vadd.f32 0.0, %v6040
        %6042 = vmatmul.f32.gmra.mxu0 %v5928
        %v6043 = vpop.f32.mrf.mxu0
        %v6044 = vadd.f32 0.0, %v6043
        %6045 = vmatmul.f32.gmra.mxu0 %v5931
        %v6046 = vpop.f32.mrf.mxu0
        %v6047 = vadd.f32 0.0, %v6046
        %6048 = vmatmul.f32.gmra.mxu0 %v5934
        %v6049 = vpop.f32.mrf.mxu0
        %v6050 = vadd.f32 0.0, %v6049
        %6051 = vmatmul.f32.gmra.mxu0 %v5937
        %v6052 = vpop.f32.mrf.mxu0
        %v6053 = vadd.f32 0.0, %v6052
        %6054 = vmatmul.f32.gmra.mxu0 %v5940
        %v6055 = vpop.f32.mrf.mxu0
        %v6056 = vadd.f32 0.0, %v6055
        %6057 = vmatmul.f32.gmra.mxu0 %v5943
        %v6058 = vpop.f32.mrf.mxu0
        %v6059 = vadd.f32 0.0, %v6058
        %6060 = vmatmul.f32.gmra.mxu0 %v5946
        %v6061 = vpop.f32.mrf.mxu0
        %v6062 = vadd.f32 0.0, %v6061
        %6063 = vmatmul.f32.gmra.mxu0 %v5949
        %v6064 = vpop.f32.mrf.mxu0
        %v6065 = vadd.f32 0.0, %v6064
        %6066 = vmatmul.f32.gmra.mxu0 %v5952
        %v6067 = vpop.f32.mrf.mxu0
        %v6068 = vadd.f32 0.0, %v6067
        %6069 = vmatmul.f32.gmra.mxu0 %v5955
        %v6070 = vpop.f32.mrf.mxu0
        %v6071 = vadd.f32 0.0, %v6070
        %6072 = vmatmul.f32.gmra.mxu0 %v5958
        %v6073 = vpop.f32.mrf.mxu0
        %v6074 = vadd.f32 0.0, %v6073
        %6075 = vmatmul.f32.gmra.mxu0 %v5961
        %v6076 = vpop.f32.mrf.mxu0
        %v6077 = vadd.f32 0.0, %v6076
        %6078 = vmatmul.f32.gmra.mxu0 %v5964
        %v6079 = vpop.f32.mrf.mxu0
        %v6080 = vadd.f32 0.0, %v6079
        %6081 = vmatmul.f32.gmra.mxu0 %v5967
        %v6082 = vpop.f32.mrf.mxu0
        %v6083 = vadd.f32 0.0, %v6082
        %6084 = vmatmul.f32.gmra.mxu0 %v5970
        %v6085 = vpop.f32.mrf.mxu0
        %v6086 = vadd.f32 0.0, %v6085
        %6087 = vmatmul.f32.gmra.mxu0 %v5973
        %v6088 = vpop.f32.mrf.mxu0
        %v6089 = vadd.f32 0.0, %v6088
        %6090 = vmatmul.f32.gmra.mxu0 %v5976
        %v6091 = vpop.f32.mrf.mxu0
        %v6092 = vadd.f32 0.0, %v6091
        %6093 = vmatmul.f32.gmra.mxu0 %v5979
        %v6094 = vpop.f32.mrf.mxu0
        %v6095 = vadd.f32 0.0, %v6094
        %6096 = vmatmul.f32.gmra.mxu0 %v5982
        %v6097 = vpop.f32.mrf.mxu0
        %v6098 = vadd.f32 0.0, %v6097
        %6099 = vmatmul.f32.gmra.mxu0 %v5985
        %v6100 = vpop.f32.mrf.mxu0
        %v6101 = vadd.f32 0.0, %v6100
        %6102 = vmatmul.f32.gmra.mxu0 %v5988
        %v6103 = vpop.f32.mrf.mxu0
        %v6104 = vadd.f32 0.0, %v6103
        %6105 = vmatmul.f32.gmra.mxu0 %v5991
        %v6106 = vpop.f32.mrf.mxu0
        %v6107 = vadd.f32 0.0, %v6106
        %6108 = vmatmul.f32.gmra.mxu0 %v5994
        %v6109 = vpop.f32.mrf.mxu0
        %v6110 = vadd.f32 0.0, %v6109
        %6111 = vmatmul.f32.gmra.mxu0 %v5997
        %v6112 = vpop.f32.mrf.mxu0
        %v6113 = vadd.f32 0.0, %v6112
        %6114 = vmatmul.f32.gmra.mxu0 %v6000
        %v6115 = vpop.f32.mrf.mxu0
        %v6116 = vadd.f32 0.0, %v6115
        %6117 = vdwg.mxu0
        %v6118 = vadd.f32 %v5007, %v6023
        %v6119 = vadd.f32 %v5010, %v6026
        %v6120 = vadd.f32 %v5013, %v6029
        %v6121 = vadd.f32 %v5016, %v6032
        %v6122 = vadd.f32 %v5019, %v6035
        %v6123 = vadd.f32 %v5022, %v6038
        %v6124 = vadd.f32 %v5025, %v6041
        %v6125 = vadd.f32 %v5028, %v6044
        %v6126 = vadd.f32 %v5031, %v6047
        %v6127 = vadd.f32 %v5034, %v6050
        %v6128 = vadd.f32 %v5037, %v6053
        %v6129 = vadd.f32 %v5040, %v6056
        %v6130 = vadd.f32 %v5043, %v6059
        %v6131 = vadd.f32 %v5046, %v6062
        %v6132 = vadd.f32 %v5049, %v6065
        %v6133 = vadd.f32 %v5052, %v6068
        %v6134 = vadd.f32 %v5055, %v6071
        %v6135 = vadd.f32 %v5058, %v6074
        %v6136 = vadd.f32 %v5061, %v6077
        %v6137 = vadd.f32 %v5064, %v6080
        %v6138 = vadd.f32 %v5067, %v6083
        %v6139 = vadd.f32 %v5070, %v6086
        %v6140 = vadd.f32 %v5073, %v6089
        %v6141 = vadd.f32 %v5076, %v6092
        %v6142 = vadd.f32 %v5079, %v6095
        %v6143 = vadd.f32 %v5082, %v6098
        %v6144 = vadd.f32 %v5085, %v6101
        %v6145 = vadd.f32 %v5088, %v6104
        %v6146 = vadd.f32 %v5091, %v6107
        %v6147 = vadd.f32 %v5094, %v6110
        %v6148 = vadd.f32 %v5097, %v6113
        %v6149 = vadd.f32 %v5100, %v6116
        %s6150 = scalar_lea.vmem [#allocation3], 72
        %v6151 = vld [vmem:[%s6150] sm:$0xff]
        %v6152 = vld [vmem:[%s6150 + $0x8] sm:$0xff]
        %v6153 = vld [vmem:[%s6150 + $0x18] sm:$0xff]
        %v6154 = vld [vmem:[%s6150 + $0x20] sm:$0xff]
        %v6155 = vld [vmem:[%s6150 + $0x30] sm:$0xff]
        %v6156 = vld [vmem:[%s6150 + $0x38] sm:$0xff]
        %v6157 = vld [vmem:[%s6150 + $0x48] sm:$0xff]
        %v6158 = vld [vmem:[%s6150 + $0x50] sm:$0xff]
        %v6159 = vld [vmem:[%s6150 + $0x60] sm:$0xff]
        %v6160 = vld [vmem:[%s6150 + $0x68] sm:$0xff]
        %v6161 = vld [vmem:[%s6150 + $0x78] sm:$0xff]
        %v6162 = vld [vmem:[%s6150 + $0x80] sm:$0xff]
        %v6163 = vld [vmem:[%s6150 + $0x90] sm:$0xff]
        %v6164 = vld [vmem:[%s6150 + $0x98] sm:$0xff]
        %v6165 = vld [vmem:[%s6150 + $0xa8] sm:$0xff]
        %v6166 = vld [vmem:[%s6150 + $0xb0] sm:$0xff]
        %v6167 = vld [vmem:[%s6150 + $0xc0] sm:$0xff]
        %v6168 = vld [vmem:[%s6150 + $0xc8] sm:$0xff]
        %v6169 = vld [vmem:[%s6150 + $0xd8] sm:$0xff]
        %v6170 = vld [vmem:[%s6150 + $0xe0] sm:$0xff]
        %v6171 = vld [vmem:[%s6150 + $0xf0] sm:$0xff]
        %v6172 = vld [vmem:[%s6150 + $0xf8] sm:$0xff]
        %v6173 = vld [vmem:[%s6150 + $0x108] sm:$0xff]
        %v6174 = vld [vmem:[%s6150 + $0x110] sm:$0xff]
        %v6175 = vld [vmem:[%s6150 + $0x120] sm:$0xff]
        %v6176 = vld [vmem:[%s6150 + $0x128] sm:$0xff]
        %v6177 = vld [vmem:[%s6150 + $0x138] sm:$0xff]
        %v6178 = vld [vmem:[%s6150 + $0x140] sm:$0xff]
        %v6179 = vld [vmem:[%s6150 + $0x150] sm:$0xff]
        %v6180 = vld [vmem:[%s6150 + $0x158] sm:$0xff]
        %v6181 = vld [vmem:[%s6150 + $0x168] sm:$0xff]
        %v6182 = vld [vmem:[%s6150 + $0x170] sm:$0xff]
        %v6183 = vld [vmem:[%s6150 + $0x1] sm:$0xff]
        %v6184 = vld [vmem:[%s6150 + $0x9] sm:$0xff]
        %v6185 = vld [vmem:[%s6150 + $0x19] sm:$0xff]
        %v6186 = vld [vmem:[%s6150 + $0x21] sm:$0xff]
        %v6187 = vld [vmem:[%s6150 + $0x31] sm:$0xff]
        %v6188 = vld [vmem:[%s6150 + $0x39] sm:$0xff]
        %v6189 = vld [vmem:[%s6150 + $0x49] sm:$0xff]
        %v6190 = vld [vmem:[%s6150 + $0x51] sm:$0xff]
        %v6191 = vld [vmem:[%s6150 + $0x61] sm:$0xff]
        %v6192 = vld [vmem:[%s6150 + $0x69] sm:$0xff]
        %v6193 = vld [vmem:[%s6150 + $0x79] sm:$0xff]
        %v6194 = vld [vmem:[%s6150 + $0x81] sm:$0xff]
        %v6195 = vld [vmem:[%s6150 + $0x91] sm:$0xff]
        %v6196 = vld [vmem:[%s6150 + $0x99] sm:$0xff]
        %v6197 = vld [vmem:[%s6150 + $0xa9] sm:$0xff]
        %v6198 = vld [vmem:[%s6150 + $0xb1] sm:$0xff]
        %v6199 = vld [vmem:[%s6150 + $0xc1] sm:$0xff]
        %v6200 = vld [vmem:[%s6150 + $0xc9] sm:$0xff]
        %v6201 = vld [vmem:[%s6150 + $0xd9] sm:$0xff]
        %v6202 = vld [vmem:[%s6150 + $0xe1] sm:$0xff]
        %v6203 = vld [vmem:[%s6150 + $0xf1] sm:$0xff]
        %v6204 = vld [vmem:[%s6150 + $0xf9] sm:$0xff]
        %v6205 = vld [vmem:[%s6150 + $0x109] sm:$0xff]
        %v6206 = vld [vmem:[%s6150 + $0x111] sm:$0xff]
        %v6207 = vld [vmem:[%s6150 + $0x121] sm:$0xff]
        %v6208 = vld [vmem:[%s6150 + $0x129] sm:$0xff]
        %v6209 = vld [vmem:[%s6150 + $0x139] sm:$0xff]
        %v6210 = vld [vmem:[%s6150 + $0x141] sm:$0xff]
        %v6211 = vld [vmem:[%s6150 + $0x151] sm:$0xff]
        %v6212 = vld [vmem:[%s6150 + $0x159] sm:$0xff]
        %v6213 = vld [vmem:[%s6150 + $0x169] sm:$0xff]
        %v6214 = vld [vmem:[%s6150 + $0x171] sm:$0xff]
        %v6215 = vld [vmem:[%s6150 + $0x2] sm:$0xff]
        %v6216 = vld [vmem:[%s6150 + $0xa] sm:$0xff]
        %v6217 = vld [vmem:[%s6150 + $0x1a] sm:$0xff]
        %v6218 = vld [vmem:[%s6150 + $0x22] sm:$0xff]
        %v6219 = vld [vmem:[%s6150 + $0x32] sm:$0xff]
        %v6220 = vld [vmem:[%s6150 + $0x3a] sm:$0xff]
        %v6221 = vld [vmem:[%s6150 + $0x4a] sm:$0xff]
        %v6222 = vld [vmem:[%s6150 + $0x52] sm:$0xff]
        %v6223 = vld [vmem:[%s6150 + $0x62] sm:$0xff]
        %v6224 = vld [vmem:[%s6150 + $0x6a] sm:$0xff]
        %v6225 = vld [vmem:[%s6150 + $0x7a] sm:$0xff]
        %v6226 = vld [vmem:[%s6150 + $0x82] sm:$0xff]
        %v6227 = vld [vmem:[%s6150 + $0x92] sm:$0xff]
        %v6228 = vld [vmem:[%s6150 + $0x9a] sm:$0xff]
        %v6229 = vld [vmem:[%s6150 + $0xaa] sm:$0xff]
        %v6230 = vld [vmem:[%s6150 + $0xb2] sm:$0xff]
        %v6231 = vld [vmem:[%s6150 + $0xc2] sm:$0xff]
        %v6232 = vld [vmem:[%s6150 + $0xca] sm:$0xff]
        %v6233 = vld [vmem:[%s6150 + $0xda] sm:$0xff]
        %v6234 = vld [vmem:[%s6150 + $0xe2] sm:$0xff]
        %v6235 = vld [vmem:[%s6150 + $0xf2] sm:$0xff]
        %v6236 = vld [vmem:[%s6150 + $0xfa] sm:$0xff]
        %v6237 = vld [vmem:[%s6150 + $0x10a] sm:$0xff]
        %v6238 = vld [vmem:[%s6150 + $0x112] sm:$0xff]
        %v6239 = vld [vmem:[%s6150 + $0x122] sm:$0xff]
        %v6240 = vld [vmem:[%s6150 + $0x12a] sm:$0xff]
        %v6241 = vld [vmem:[%s6150 + $0x13a] sm:$0xff]
        %v6242 = vld [vmem:[%s6150 + $0x142] sm:$0xff]
        %v6243 = vld [vmem:[%s6150 + $0x152] sm:$0xff]
        %v6244 = vld [vmem:[%s6150 + $0x15a] sm:$0xff]
        %v6245 = vld [vmem:[%s6150 + $0x16a] sm:$0xff]
        %v6246 = vld [vmem:[%s6150 + $0x172] sm:$0xff]
        %v6247 = vld [vmem:[%s6150 + $0x3] sm:$0xff]
        %v6248 = vld [vmem:[%s6150 + $0xb] sm:$0xff]
        %v6249 = vld [vmem:[%s6150 + $0x1b] sm:$0xff]
        %v6250 = vld [vmem:[%s6150 + $0x23] sm:$0xff]
        %v6251 = vld [vmem:[%s6150 + $0x33] sm:$0xff]
        %v6252 = vld [vmem:[%s6150 + $0x3b] sm:$0xff]
        %v6253 = vld [vmem:[%s6150 + $0x4b] sm:$0xff]
        %v6254 = vld [vmem:[%s6150 + $0x53] sm:$0xff]
        %v6255 = vld [vmem:[%s6150 + $0x63] sm:$0xff]
        %v6256 = vld [vmem:[%s6150 + $0x6b] sm:$0xff]
        %v6257 = vld [vmem:[%s6150 + $0x7b] sm:$0xff]
        %v6258 = vld [vmem:[%s6150 + $0x83] sm:$0xff]
        %v6259 = vld [vmem:[%s6150 + $0x93] sm:$0xff]
        %v6260 = vld [vmem:[%s6150 + $0x9b] sm:$0xff]
        %v6261 = vld [vmem:[%s6150 + $0xab] sm:$0xff]
        %v6262 = vld [vmem:[%s6150 + $0xb3] sm:$0xff]
        %v6263 = vld [vmem:[%s6150 + $0xc3] sm:$0xff]
        %v6264 = vld [vmem:[%s6150 + $0xcb] sm:$0xff]
        %v6265 = vld [vmem:[%s6150 + $0xdb] sm:$0xff]
        %v6266 = vld [vmem:[%s6150 + $0xe3] sm:$0xff]
        %v6267 = vld [vmem:[%s6150 + $0xf3] sm:$0xff]
        %v6268 = vld [vmem:[%s6150 + $0xfb] sm:$0xff]
        %v6269 = vld [vmem:[%s6150 + $0x10b] sm:$0xff]
        %v6270 = vld [vmem:[%s6150 + $0x113] sm:$0xff]
        %v6271 = vld [vmem:[%s6150 + $0x123] sm:$0xff]
        %v6272 = vld [vmem:[%s6150 + $0x12b] sm:$0xff]
        %v6273 = vld [vmem:[%s6150 + $0x13b] sm:$0xff]
        %v6274 = vld [vmem:[%s6150 + $0x143] sm:$0xff]
        %v6275 = vld [vmem:[%s6150 + $0x153] sm:$0xff]
        %v6276 = vld [vmem:[%s6150 + $0x15b] sm:$0xff]
        %v6277 = vld [vmem:[%s6150 + $0x16b] sm:$0xff]
        %v6278 = vld [vmem:[%s6150 + $0x173] sm:$0xff]
        %v6279 = vld [vmem:[%s6150 + $0x4] sm:$0xff]
        %v6280 = vld [vmem:[%s6150 + $0xc] sm:$0xff]
        %v6281 = vld [vmem:[%s6150 + $0x1c] sm:$0xff]
        %v6282 = vld [vmem:[%s6150 + $0x24] sm:$0xff]
        %v6283 = vld [vmem:[%s6150 + $0x34] sm:$0xff]
        %v6284 = vld [vmem:[%s6150 + $0x3c] sm:$0xff]
        %v6285 = vld [vmem:[%s6150 + $0x4c] sm:$0xff]
        %v6286 = vld [vmem:[%s6150 + $0x54] sm:$0xff]
        %v6287 = vld [vmem:[%s6150 + $0x64] sm:$0xff]
        %v6288 = vld [vmem:[%s6150 + $0x6c] sm:$0xff]
        %v6289 = vld [vmem:[%s6150 + $0x7c] sm:$0xff]
        %v6290 = vld [vmem:[%s6150 + $0x84] sm:$0xff]
        %v6291 = vld [vmem:[%s6150 + $0x94] sm:$0xff]
        %v6292 = vld [vmem:[%s6150 + $0x9c] sm:$0xff]
        %v6293 = vld [vmem:[%s6150 + $0xac] sm:$0xff]
        %v6294 = vld [vmem:[%s6150 + $0xb4] sm:$0xff]
        %v6295 = vld [vmem:[%s6150 + $0xc4] sm:$0xff]
        %v6296 = vld [vmem:[%s6150 + $0xcc] sm:$0xff]
        %v6297 = vld [vmem:[%s6150 + $0xdc] sm:$0xff]
        %v6298 = vld [vmem:[%s6150 + $0xe4] sm:$0xff]
        %v6299 = vld [vmem:[%s6150 + $0xf4] sm:$0xff]
        %v6300 = vld [vmem:[%s6150 + $0xfc] sm:$0xff]
        %v6301 = vld [vmem:[%s6150 + $0x10c] sm:$0xff]
        %v6302 = vld [vmem:[%s6150 + $0x114] sm:$0xff]
        %v6303 = vld [vmem:[%s6150 + $0x124] sm:$0xff]
        %v6304 = vld [vmem:[%s6150 + $0x12c] sm:$0xff]
        %v6305 = vld [vmem:[%s6150 + $0x13c] sm:$0xff]
        %v6306 = vld [vmem:[%s6150 + $0x144] sm:$0xff]
        %v6307 = vld [vmem:[%s6150 + $0x154] sm:$0xff]
        %v6308 = vld [vmem:[%s6150 + $0x15c] sm:$0xff]
        %v6309 = vld [vmem:[%s6150 + $0x16c] sm:$0xff]
        %v6310 = vld [vmem:[%s6150 + $0x174] sm:$0xff]
        %6343 = vrot.lane.b32.xlu0 %v6183, 4
        %v6344 = vpop.permute.xlu0 %6343
        %6345 = vrot.lane.b32.xlu0 %v6184, 4
        %v6346 = vpop.permute.xlu0 %6345
        %6347 = vrot.lane.b32.xlu0 %v6185, 4
        %v6348 = vpop.permute.xlu0 %6347
        %6349 = vrot.lane.b32.xlu0 %v6186, 4
        %v6350 = vpop.permute.xlu0 %6349
        %6351 = vrot.lane.b32.xlu0 %v6187, 4
        %v6352 = vpop.permute.xlu0 %6351
        %6353 = vrot.lane.b32.xlu0 %v6188, 4
        %v6354 = vpop.permute.xlu0 %6353
        %6355 = vrot.lane.b32.xlu0 %v6189, 4
        %v6356 = vpop.permute.xlu0 %6355
        %6357 = vrot.lane.b32.xlu0 %v6190, 4
        %v6358 = vpop.permute.xlu0 %6357
        %6359 = vrot.lane.b32.xlu0 %v6191, 4
        %v6360 = vpop.permute.xlu0 %6359
        %6361 = vrot.lane.b32.xlu0 %v6192, 4
        %v6362 = vpop.permute.xlu0 %6361
        %6363 = vrot.lane.b32.xlu0 %v6193, 4
        %v6364 = vpop.permute.xlu0 %6363
        %6365 = vrot.lane.b32.xlu0 %v6194, 4
        %v6366 = vpop.permute.xlu0 %6365
        %6367 = vrot.lane.b32.xlu0 %v6195, 4
        %v6368 = vpop.permute.xlu0 %6367
        %6369 = vrot.lane.b32.xlu0 %v6196, 4
        %v6370 = vpop.permute.xlu0 %6369
        %6371 = vrot.lane.b32.xlu0 %v6197, 4
        %v6372 = vpop.permute.xlu0 %6371
        %6373 = vrot.lane.b32.xlu0 %v6198, 4
        %v6374 = vpop.permute.xlu0 %6373
        %6375 = vrot.lane.b32.xlu0 %v6199, 4
        %v6376 = vpop.permute.xlu0 %6375
        %6377 = vrot.lane.b32.xlu0 %v6200, 4
        %v6378 = vpop.permute.xlu0 %6377
        %6379 = vrot.lane.b32.xlu0 %v6201, 4
        %v6380 = vpop.permute.xlu0 %6379
        %6381 = vrot.lane.b32.xlu0 %v6202, 4
        %v6382 = vpop.permute.xlu0 %6381
        %6383 = vrot.lane.b32.xlu0 %v6203, 4
        %v6384 = vpop.permute.xlu0 %6383
        %6385 = vrot.lane.b32.xlu0 %v6204, 4
        %v6386 = vpop.permute.xlu0 %6385
        %6387 = vrot.lane.b32.xlu0 %v6205, 4
        %v6388 = vpop.permute.xlu0 %6387
        %6389 = vrot.lane.b32.xlu0 %v6206, 4
        %v6390 = vpop.permute.xlu0 %6389
        %6391 = vrot.lane.b32.xlu0 %v6207, 4
        %v6392 = vpop.permute.xlu0 %6391
        %6393 = vrot.lane.b32.xlu0 %v6208, 4
        %v6394 = vpop.permute.xlu0 %6393
        %6395 = vrot.lane.b32.xlu0 %v6209, 4
        %v6396 = vpop.permute.xlu0 %6395
        %6397 = vrot.lane.b32.xlu0 %v6210, 4
        %v6398 = vpop.permute.xlu0 %6397
        %6399 = vrot.lane.b32.xlu0 %v6211, 4
        %v6400 = vpop.permute.xlu0 %6399
        %6401 = vrot.lane.b32.xlu0 %v6212, 4
        %v6402 = vpop.permute.xlu0 %6401
        %6403 = vrot.lane.b32.xlu0 %v6213, 4
        %v6404 = vpop.permute.xlu0 %6403
        %6405 = vrot.lane.b32.xlu0 %v6214, 4
        %v6406 = vpop.permute.xlu0 %6405
        %6471 = vrot.lane.b32.xlu0 %v6215, 8
        %v6472 = vpop.permute.xlu0 %6471
        %6473 = vrot.lane.b32.xlu0 %v6216, 8
        %v6474 = vpop.permute.xlu0 %6473
        %6475 = vrot.lane.b32.xlu0 %v6217, 8
        %v6476 = vpop.permute.xlu0 %6475
        %6477 = vrot.lane.b32.xlu0 %v6218, 8
        %v6478 = vpop.permute.xlu0 %6477
        %6479 = vrot.lane.b32.xlu0 %v6219, 8
        %v6480 = vpop.permute.xlu0 %6479
        %6481 = vrot.lane.b32.xlu0 %v6220, 8
        %v6482 = vpop.permute.xlu0 %6481
        %6483 = vrot.lane.b32.xlu0 %v6221, 8
        %v6484 = vpop.permute.xlu0 %6483
        %6485 = vrot.lane.b32.xlu0 %v6222, 8
        %v6486 = vpop.permute.xlu0 %6485
        %6487 = vrot.lane.b32.xlu0 %v6223, 8
        %v6488 = vpop.permute.xlu0 %6487
        %6489 = vrot.lane.b32.xlu0 %v6224, 8
        %v6490 = vpop.permute.xlu0 %6489
        %6491 = vrot.lane.b32.xlu0 %v6225, 8
        %v6492 = vpop.permute.xlu0 %6491
        %6493 = vrot.lane.b32.xlu0 %v6226, 8
        %v6494 = vpop.permute.xlu0 %6493
        %6495 = vrot.lane.b32.xlu0 %v6227, 8
        %v6496 = vpop.permute.xlu0 %6495
        %6497 = vrot.lane.b32.xlu0 %v6228, 8
        %v6498 = vpop.permute.xlu0 %6497
        %6499 = vrot.lane.b32.xlu0 %v6229, 8
        %v6500 = vpop.permute.xlu0 %6499
        %6501 = vrot.lane.b32.xlu0 %v6230, 8
        %v6502 = vpop.permute.xlu0 %6501
        %6503 = vrot.lane.b32.xlu0 %v6231, 8
        %v6504 = vpop.permute.xlu0 %6503
        %6505 = vrot.lane.b32.xlu0 %v6232, 8
        %v6506 = vpop.permute.xlu0 %6505
        %6507 = vrot.lane.b32.xlu0 %v6233, 8
        %v6508 = vpop.permute.xlu0 %6507
        %6509 = vrot.lane.b32.xlu0 %v6234, 8
        %v6510 = vpop.permute.xlu0 %6509
        %6511 = vrot.lane.b32.xlu0 %v6235, 8
        %v6512 = vpop.permute.xlu0 %6511
        %6513 = vrot.lane.b32.xlu0 %v6236, 8
        %v6514 = vpop.permute.xlu0 %6513
        %6515 = vrot.lane.b32.xlu0 %v6237, 8
        %v6516 = vpop.permute.xlu0 %6515
        %6517 = vrot.lane.b32.xlu0 %v6238, 8
        %v6518 = vpop.permute.xlu0 %6517
        %6519 = vrot.lane.b32.xlu0 %v6239, 8
        %v6520 = vpop.permute.xlu0 %6519
        %6521 = vrot.lane.b32.xlu0 %v6240, 8
        %v6522 = vpop.permute.xlu0 %6521
        %6523 = vrot.lane.b32.xlu0 %v6241, 8
        %v6524 = vpop.permute.xlu0 %6523
        %6525 = vrot.lane.b32.xlu0 %v6242, 8
        %v6526 = vpop.permute.xlu0 %6525
        %6527 = vrot.lane.b32.xlu0 %v6243, 8
        %v6528 = vpop.permute.xlu0 %6527
        %6529 = vrot.lane.b32.xlu0 %v6244, 8
        %v6530 = vpop.permute.xlu0 %6529
        %6531 = vrot.lane.b32.xlu0 %v6245, 8
        %v6532 = vpop.permute.xlu0 %6531
        %6533 = vrot.lane.b32.xlu0 %v6246, 8
        %v6534 = vpop.permute.xlu0 %6533
        %6599 = vrot.lane.b32.xlu0 %v6247, 12
        %v6600 = vpop.permute.xlu0 %6599
        %6601 = vrot.lane.b32.xlu0 %v6248, 12
        %v6602 = vpop.permute.xlu0 %6601
        %6603 = vrot.lane.b32.xlu0 %v6249, 12
        %v6604 = vpop.permute.xlu0 %6603
        %6605 = vrot.lane.b32.xlu0 %v6250, 12
        %v6606 = vpop.permute.xlu0 %6605
        %6607 = vrot.lane.b32.xlu0 %v6251, 12
        %v6608 = vpop.permute.xlu0 %6607
        %6609 = vrot.lane.b32.xlu0 %v6252, 12
        %v6610 = vpop.permute.xlu0 %6609
        %6611 = vrot.lane.b32.xlu0 %v6253, 12
        %v6612 = vpop.permute.xlu0 %6611
        %6613 = vrot.lane.b32.xlu0 %v6254, 12
        %v6614 = vpop.permute.xlu0 %6613
        %6615 = vrot.lane.b32.xlu0 %v6255, 12
        %v6616 = vpop.permute.xlu0 %6615
        %6617 = vrot.lane.b32.xlu0 %v6256, 12
        %v6618 = vpop.permute.xlu0 %6617
        %6619 = vrot.lane.b32.xlu0 %v6257, 12
        %v6620 = vpop.permute.xlu0 %6619
        %6621 = vrot.lane.b32.xlu0 %v6258, 12
        %v6622 = vpop.permute.xlu0 %6621
        %6623 = vrot.lane.b32.xlu0 %v6259, 12
        %v6624 = vpop.permute.xlu0 %6623
        %6625 = vrot.lane.b32.xlu0 %v6260, 12
        %v6626 = vpop.permute.xlu0 %6625
        %6627 = vrot.lane.b32.xlu0 %v6261, 12
        %v6628 = vpop.permute.xlu0 %6627
        %6629 = vrot.lane.b32.xlu0 %v6262, 12
        %v6630 = vpop.permute.xlu0 %6629
        %6631 = vrot.lane.b32.xlu0 %v6263, 12
        %v6632 = vpop.permute.xlu0 %6631
        %6633 = vrot.lane.b32.xlu0 %v6264, 12
        %v6634 = vpop.permute.xlu0 %6633
        %6635 = vrot.lane.b32.xlu0 %v6265, 12
        %v6636 = vpop.permute.xlu0 %6635
        %6637 = vrot.lane.b32.xlu0 %v6266, 12
        %v6638 = vpop.permute.xlu0 %6637
        %6639 = vrot.lane.b32.xlu0 %v6267, 12
        %v6640 = vpop.permute.xlu0 %6639
        %6641 = vrot.lane.b32.xlu0 %v6268, 12
        %v6642 = vpop.permute.xlu0 %6641
        %6643 = vrot.lane.b32.xlu0 %v6269, 12
        %v6644 = vpop.permute.xlu0 %6643
        %6645 = vrot.lane.b32.xlu0 %v6270, 12
        %v6646 = vpop.permute.xlu0 %6645
        %6647 = vrot.lane.b32.xlu0 %v6271, 12
        %v6648 = vpop.permute.xlu0 %6647
        %6649 = vrot.lane.b32.xlu0 %v6272, 12
        %v6650 = vpop.permute.xlu0 %6649
        %6651 = vrot.lane.b32.xlu0 %v6273, 12
        %v6652 = vpop.permute.xlu0 %6651
        %6653 = vrot.lane.b32.xlu0 %v6274, 12
        %v6654 = vpop.permute.xlu0 %6653
        %6655 = vrot.lane.b32.xlu0 %v6275, 12
        %v6656 = vpop.permute.xlu0 %6655
        %6657 = vrot.lane.b32.xlu0 %v6276, 12
        %v6658 = vpop.permute.xlu0 %6657
        %6659 = vrot.lane.b32.xlu0 %v6277, 12
        %v6660 = vpop.permute.xlu0 %6659
        %6661 = vrot.lane.b32.xlu0 %v6278, 12
        %v6662 = vpop.permute.xlu0 %6661
        %6727 = vrot.lane.b32.xlu0 %v6279, 16
        %v6728 = vpop.permute.xlu0 %6727
        %6729 = vrot.lane.b32.xlu0 %v6280, 16
        %v6730 = vpop.permute.xlu0 %6729
        %6731 = vrot.lane.b32.xlu0 %v6281, 16
        %v6732 = vpop.permute.xlu0 %6731
        %6733 = vrot.lane.b32.xlu0 %v6282, 16
        %v6734 = vpop.permute.xlu0 %6733
        %6735 = vrot.lane.b32.xlu0 %v6283, 16
        %v6736 = vpop.permute.xlu0 %6735
        %6737 = vrot.lane.b32.xlu0 %v6284, 16
        %v6738 = vpop.permute.xlu0 %6737
        %6739 = vrot.lane.b32.xlu0 %v6285, 16
        %v6740 = vpop.permute.xlu0 %6739
        %6741 = vrot.lane.b32.xlu0 %v6286, 16
        %v6742 = vpop.permute.xlu0 %6741
        %6743 = vrot.lane.b32.xlu0 %v6287, 16
        %v6744 = vpop.permute.xlu0 %6743
        %6745 = vrot.lane.b32.xlu0 %v6288, 16
        %v6746 = vpop.permute.xlu0 %6745
        %6747 = vrot.lane.b32.xlu0 %v6289, 16
        %v6748 = vpop.permute.xlu0 %6747
        %6749 = vrot.lane.b32.xlu0 %v6290, 16
        %v6750 = vpop.permute.xlu0 %6749
        %6751 = vrot.lane.b32.xlu0 %v6291, 16
        %v6752 = vpop.permute.xlu0 %6751
        %6753 = vrot.lane.b32.xlu0 %v6292, 16
        %v6754 = vpop.permute.xlu0 %6753
        %6755 = vrot.lane.b32.xlu0 %v6293, 16
        %v6756 = vpop.permute.xlu0 %6755
        %6757 = vrot.lane.b32.xlu0 %v6294, 16
        %v6758 = vpop.permute.xlu0 %6757
        %6759 = vrot.lane.b32.xlu0 %v6295, 16
        %v6760 = vpop.permute.xlu0 %6759
        %6761 = vrot.lane.b32.xlu0 %v6296, 16
        %v6762 = vpop.permute.xlu0 %6761
        %6763 = vrot.lane.b32.xlu0 %v6297, 16
        %v6764 = vpop.permute.xlu0 %6763
        %6765 = vrot.lane.b32.xlu0 %v6298, 16
        %v6766 = vpop.permute.xlu0 %6765
        %6767 = vrot.lane.b32.xlu0 %v6299, 16
        %v6768 = vpop.permute.xlu0 %6767
        %6769 = vrot.lane.b32.xlu0 %v6300, 16
        %v6770 = vpop.permute.xlu0 %6769
        %6771 = vrot.lane.b32.xlu0 %v6301, 16
        %v6772 = vpop.permute.xlu0 %6771
        %6773 = vrot.lane.b32.xlu0 %v6302, 16
        %v6774 = vpop.permute.xlu0 %6773
        %6775 = vrot.lane.b32.xlu0 %v6303, 16
        %v6776 = vpop.permute.xlu0 %6775
        %6777 = vrot.lane.b32.xlu0 %v6304, 16
        %v6778 = vpop.permute.xlu0 %6777
        %6779 = vrot.lane.b32.xlu0 %v6305, 16
        %v6780 = vpop.permute.xlu0 %6779
        %6781 = vrot.lane.b32.xlu0 %v6306, 16
        %v6782 = vpop.permute.xlu0 %6781
        %6783 = vrot.lane.b32.xlu0 %v6307, 16
        %v6784 = vpop.permute.xlu0 %6783
        %6785 = vrot.lane.b32.xlu0 %v6308, 16
        %v6786 = vpop.permute.xlu0 %6785
        %6787 = vrot.lane.b32.xlu0 %v6309, 16
        %v6788 = vpop.permute.xlu0 %6787
        %6789 = vrot.lane.b32.xlu0 %v6310, 16
        %v6790 = vpop.permute.xlu0 %6789
        %v6823 = vsel %vm381, %v6151, %v6344
        %v6824 = vsel %vm381, %v6152, %v6346
        %v6825 = vsel %vm381, %v6153, %v6348
        %v6826 = vsel %vm381, %v6154, %v6350
        %v6827 = vsel %vm381, %v6155, %v6352
        %v6828 = vsel %vm381, %v6156, %v6354
        %v6829 = vsel %vm381, %v6157, %v6356
        %v6830 = vsel %vm381, %v6158, %v6358
        %v6831 = vsel %vm381, %v6159, %v6360
        %v6832 = vsel %vm381, %v6160, %v6362
        %v6833 = vsel %vm381, %v6161, %v6364
        %v6834 = vsel %vm381, %v6162, %v6366
        %v6835 = vsel %vm381, %v6163, %v6368
        %v6836 = vsel %vm381, %v6164, %v6370
        %v6837 = vsel %vm381, %v6165, %v6372
        %v6838 = vsel %vm381, %v6166, %v6374
        %v6839 = vsel %vm381, %v6167, %v6376
        %v6840 = vsel %vm381, %v6168, %v6378
        %v6841 = vsel %vm381, %v6169, %v6380
        %v6842 = vsel %vm381, %v6170, %v6382
        %v6843 = vsel %vm381, %v6171, %v6384
        %v6844 = vsel %vm381, %v6172, %v6386
        %v6845 = vsel %vm381, %v6173, %v6388
        %v6846 = vsel %vm381, %v6174, %v6390
        %v6847 = vsel %vm381, %v6175, %v6392
        %v6848 = vsel %vm381, %v6176, %v6394
        %v6849 = vsel %vm381, %v6177, %v6396
        %v6850 = vsel %vm381, %v6178, %v6398
        %v6851 = vsel %vm381, %v6179, %v6400
        %v6852 = vsel %vm381, %v6180, %v6402
        %v6853 = vsel %vm381, %v6181, %v6404
        %v6854 = vsel %vm381, %v6182, %v6406
        %v6855 = vsel %vm1378, %v6823, %v6472
        %v6856 = vsel %vm1378, %v6824, %v6474
        %v6857 = vsel %vm1378, %v6825, %v6476
        %v6858 = vsel %vm1378, %v6826, %v6478
        %v6859 = vsel %vm1378, %v6827, %v6480
        %v6860 = vsel %vm1378, %v6828, %v6482
        %v6861 = vsel %vm1378, %v6829, %v6484
        %v6862 = vsel %vm1378, %v6830, %v6486
        %v6863 = vsel %vm1378, %v6831, %v6488
        %v6864 = vsel %vm1378, %v6832, %v6490
        %v6865 = vsel %vm1378, %v6833, %v6492
        %v6866 = vsel %vm1378, %v6834, %v6494
        %v6867 = vsel %vm1378, %v6835, %v6496
        %v6868 = vsel %vm1378, %v6836, %v6498
        %v6869 = vsel %vm1378, %v6837, %v6500
        %v6870 = vsel %vm1378, %v6838, %v6502
        %v6871 = vsel %vm1378, %v6839, %v6504
        %v6872 = vsel %vm1378, %v6840, %v6506
        %v6873 = vsel %vm1378, %v6841, %v6508
        %v6874 = vsel %vm1378, %v6842, %v6510
        %v6875 = vsel %vm1378, %v6843, %v6512
        %v6876 = vsel %vm1378, %v6844, %v6514
        %v6877 = vsel %vm1378, %v6845, %v6516
        %v6878 = vsel %vm1378, %v6846, %v6518
        %v6879 = vsel %vm1378, %v6847, %v6520
        %v6880 = vsel %vm1378, %v6848, %v6522
        %v6881 = vsel %vm1378, %v6849, %v6524
        %v6882 = vsel %vm1378, %v6850, %v6526
        %v6883 = vsel %vm1378, %v6851, %v6528
        %v6884 = vsel %vm1378, %v6852, %v6530
        %v6885 = vsel %vm1378, %v6853, %v6532
        %v6886 = vsel %vm1378, %v6854, %v6534
        %v6887 = vsel %vm1832, %v6855, %v6600
        %v6888 = vsel %vm1832, %v6856, %v6602
        %v6889 = vsel %vm1832, %v6857, %v6604
        %v6890 = vsel %vm1832, %v6858, %v6606
        %v6891 = vsel %vm1832, %v6859, %v6608
        %v6892 = vsel %vm1832, %v6860, %v6610
        %v6893 = vsel %vm1832, %v6861, %v6612
        %v6894 = vsel %vm1832, %v6862, %v6614
        %v6895 = vsel %vm1832, %v6863, %v6616
        %v6896 = vsel %vm1832, %v6864, %v6618
        %v6897 = vsel %vm1832, %v6865, %v6620
        %v6898 = vsel %vm1832, %v6866, %v6622
        %v6899 = vsel %vm1832, %v6867, %v6624
        %v6900 = vsel %vm1832, %v6868, %v6626
        %v6901 = vsel %vm1832, %v6869, %v6628
        %v6902 = vsel %vm1832, %v6870, %v6630
        %v6903 = vsel %vm1832, %v6871, %v6632
        %v6904 = vsel %vm1832, %v6872, %v6634
        %v6905 = vsel %vm1832, %v6873, %v6636
        %v6906 = vsel %vm1832, %v6874, %v6638
        %v6907 = vsel %vm1832, %v6875, %v6640
        %v6908 = vsel %vm1832, %v6876, %v6642
        %v6909 = vsel %vm1832, %v6877, %v6644
        %v6910 = vsel %vm1832, %v6878, %v6646
        %v6911 = vsel %vm1832, %v6879, %v6648
        %v6912 = vsel %vm1832, %v6880, %v6650
        %v6913 = vsel %vm1832, %v6881, %v6652
        %v6914 = vsel %vm1832, %v6882, %v6654
        %v6915 = vsel %vm1832, %v6883, %v6656
        %v6916 = vsel %vm1832, %v6884, %v6658
        %v6917 = vsel %vm1832, %v6885, %v6660
        %v6918 = vsel %vm1832, %v6886, %v6662
        %v6919 = vsel %vm3836, %v6887, %v6728
        %v6920 = vsel %vm3836, %v6888, %v6730
        %v6921 = vsel %vm3836, %v6889, %v6732
        %v6922 = vsel %vm3836, %v6890, %v6734
        %v6923 = vsel %vm3836, %v6891, %v6736
        %v6924 = vsel %vm3836, %v6892, %v6738
        %v6925 = vsel %vm3836, %v6893, %v6740
        %v6926 = vsel %vm3836, %v6894, %v6742
        %v6927 = vsel %vm3836, %v6895, %v6744
        %v6928 = vsel %vm3836, %v6896, %v6746
        %v6929 = vsel %vm3836, %v6897, %v6748
        %v6930 = vsel %vm3836, %v6898, %v6750
        %v6931 = vsel %vm3836, %v6899, %v6752
        %v6932 = vsel %vm3836, %v6900, %v6754
        %v6933 = vsel %vm3836, %v6901, %v6756
        %v6934 = vsel %vm3836, %v6902, %v6758
        %v6935 = vsel %vm3836, %v6903, %v6760
        %v6936 = vsel %vm3836, %v6904, %v6762
        %v6937 = vsel %vm3836, %v6905, %v6764
        %v6938 = vsel %vm3836, %v6906, %v6766
        %v6939 = vsel %vm3836, %v6907, %v6768
        %v6940 = vsel %vm3836, %v6908, %v6770
        %v6941 = vsel %vm3836, %v6909, %v6772
        %v6942 = vsel %vm3836, %v6910, %v6774
        %v6943 = vsel %vm3836, %v6911, %v6776
        %v6944 = vsel %vm3836, %v6912, %v6778
        %v6945 = vsel %vm3836, %v6913, %v6780
        %v6946 = vsel %vm3836, %v6914, %v6782
        %v6947 = vsel %vm3836, %v6915, %v6784
        %v6948 = vsel %vm3836, %v6916, %v6786
        %v6949 = vsel %vm3836, %v6917, %v6788
        %v6950 = vsel %vm3836, %v6918, %v6790
        %s6951 = scalar_lea.vmem %s5, 72
        %v6952 = vld [vmem:[%s6951] sm:$0xff]
        %v6953 = vld [vmem:[%s6951 + $0x8] sm:$0xff]
        %v6954 = vld [vmem:[%s6951 + $0x10] sm:$0xf]
        %v6956 = vsel %vm4677, %v6919, 0
        %v6959 = vsel %vm4677, %v6920, 0
        %v6962 = vsel %vm4677, %v6921, 0
        %v6965 = vsel %vm4677, %v6922, 0
        %v6968 = vsel %vm4677, %v6923, 0
        %v6971 = vsel %vm4677, %v6924, 0
        %v6974 = vsel %vm4677, %v6925, 0
        %v6977 = vsel %vm4677, %v6926, 0
        %v6980 = vsel %vm4677, %v6927, 0
        %v6983 = vsel %vm4677, %v6928, 0
        %v6986 = vsel %vm4677, %v6929, 0
        %v6989 = vsel %vm4677, %v6930, 0
        %v6992 = vsel %vm4677, %v6931, 0
        %v6995 = vsel %vm4677, %v6932, 0
        %v6998 = vsel %vm4677, %v6933, 0
        %v7001 = vsel %vm4677, %v6934, 0
        %v7004 = vsel %vm4677, %v6935, 0
        %v7007 = vsel %vm4677, %v6936, 0
        %v7010 = vsel %vm4677, %v6937, 0
        %v7013 = vsel %vm4677, %v6938, 0
        %v7016 = vsel %vm4677, %v6939, 0
        %v7019 = vsel %vm4677, %v6940, 0
        %v7022 = vsel %vm4677, %v6941, 0
        %v7025 = vsel %vm4677, %v6942, 0
        %v7028 = vsel %vm4677, %v6943, 0
        %v7031 = vsel %vm4677, %v6944, 0
        %v7034 = vsel %vm4677, %v6945, 0
        %v7037 = vsel %vm4677, %v6946, 0
        %v7040 = vsel %vm4677, %v6947, 0
        %v7043 = vsel %vm4677, %v6948, 0
        %v7046 = vsel %vm4677, %v6949, 0
        %v7049 = vsel %vm4677, %v6950, 0
        %v7052 = vsel %vm478, %v6954, 0
        %7054 = vmatpush.msra.mxu0 0.0
        %7055 = vmatpush.msra.mxu0 0.0
        %7056 = vmatpush.msra.mxu0 0.0
        %7057 = vmatpush.msra.mxu0 0.0
        %7058 = vmatpush.msra.mxu0 0.0
        %7059 = vmatpush.msra.mxu0 0.0
        %7060 = vmatpush.msra.mxu0 0.0
        %7061 = vmatpush.msra.mxu0 0.0
        %7062 = vmatpush.msra.mxu0 0.0
        %7063 = vmatpush.msra.mxu0 0.0
        %7064 = vmatpush.msra.mxu0 0.0
        %7065 = vmatpush.msra.mxu0 0.0
        %7066 = vmatpush.msra.mxu0 0.0
        %7067 = vmatpush.msra.mxu0 %v7052
        %7068 = vmatpush.msra.mxu0 %v6953
        %7069 = vmatpush.msra.mxu0 %v6952
        %7070 = vmatmul.f32.gmra.mxu0 %v6956
        %v7071 = vpop.f32.mrf.mxu0
        %v7072 = vadd.f32 0.0, %v7071
        %7073 = vmatmul.f32.gmra.mxu0 %v6959
        %v7074 = vpop.f32.mrf.mxu0
        %v7075 = vadd.f32 0.0, %v7074
        %7076 = vmatmul.f32.gmra.mxu0 %v6962
        %v7077 = vpop.f32.mrf.mxu0
        %v7078 = vadd.f32 0.0, %v7077
        %7079 = vmatmul.f32.gmra.mxu0 %v6965
        %v7080 = vpop.f32.mrf.mxu0
        %v7081 = vadd.f32 0.0, %v7080
        %7082 = vmatmul.f32.gmra.mxu0 %v6968
        %v7083 = vpop.f32.mrf.mxu0
        %v7084 = vadd.f32 0.0, %v7083
        %7085 = vmatmul.f32.gmra.mxu0 %v6971
        %v7086 = vpop.f32.mrf.mxu0
        %v7087 = vadd.f32 0.0, %v7086
        %7088 = vmatmul.f32.gmra.mxu0 %v6974
        %v7089 = vpop.f32.mrf.mxu0
        %v7090 = vadd.f32 0.0, %v7089
        %7091 = vmatmul.f32.gmra.mxu0 %v6977
        %v7092 = vpop.f32.mrf.mxu0
        %v7093 = vadd.f32 0.0, %v7092
        %7094 = vmatmul.f32.gmra.mxu0 %v6980
        %v7095 = vpop.f32.mrf.mxu0
        %v7096 = vadd.f32 0.0, %v7095
        %7097 = vmatmul.f32.gmra.mxu0 %v6983
        %v7098 = vpop.f32.mrf.mxu0
        %v7099 = vadd.f32 0.0, %v7098
        %7100 = vmatmul.f32.gmra.mxu0 %v6986
        %v7101 = vpop.f32.mrf.mxu0
        %v7102 = vadd.f32 0.0, %v7101
        %7103 = vmatmul.f32.gmra.mxu0 %v6989
        %v7104 = vpop.f32.mrf.mxu0
        %v7105 = vadd.f32 0.0, %v7104
        %7106 = vmatmul.f32.gmra.mxu0 %v6992
        %v7107 = vpop.f32.mrf.mxu0
        %v7108 = vadd.f32 0.0, %v7107
        %7109 = vmatmul.f32.gmra.mxu0 %v6995
        %v7110 = vpop.f32.mrf.mxu0
        %v7111 = vadd.f32 0.0, %v7110
        %7112 = vmatmul.f32.gmra.mxu0 %v6998
        %v7113 = vpop.f32.mrf.mxu0
        %v7114 = vadd.f32 0.0, %v7113
        %7115 = vmatmul.f32.gmra.mxu0 %v7001
        %v7116 = vpop.f32.mrf.mxu0
        %v7117 = vadd.f32 0.0, %v7116
        %7118 = vmatmul.f32.gmra.mxu0 %v7004
        %v7119 = vpop.f32.mrf.mxu0
        %v7120 = vadd.f32 0.0, %v7119
        %7121 = vmatmul.f32.gmra.mxu0 %v7007
        %v7122 = vpop.f32.mrf.mxu0
        %v7123 = vadd.f32 0.0, %v7122
        %7124 = vmatmul.f32.gmra.mxu0 %v7010
        %v7125 = vpop.f32.mrf.mxu0
        %v7126 = vadd.f32 0.0, %v7125
        %7127 = vmatmul.f32.gmra.mxu0 %v7013
        %v7128 = vpop.f32.mrf.mxu0
        %v7129 = vadd.f32 0.0, %v7128
        %7130 = vmatmul.f32.gmra.mxu0 %v7016
        %v7131 = vpop.f32.mrf.mxu0
        %v7132 = vadd.f32 0.0, %v7131
        %7133 = vmatmul.f32.gmra.mxu0 %v7019
        %v7134 = vpop.f32.mrf.mxu0
        %v7135 = vadd.f32 0.0, %v7134
        %7136 = vmatmul.f32.gmra.mxu0 %v7022
        %v7137 = vpop.f32.mrf.mxu0
        %v7138 = vadd.f32 0.0, %v7137
        %7139 = vmatmul.f32.gmra.mxu0 %v7025
        %v7140 = vpop.f32.mrf.mxu0
        %v7141 = vadd.f32 0.0, %v7140
        %7142 = vmatmul.f32.gmra.mxu0 %v7028
        %v7143 = vpop.f32.mrf.mxu0
        %v7144 = vadd.f32 0.0, %v7143
        %7145 = vmatmul.f32.gmra.mxu0 %v7031
        %v7146 = vpop.f32.mrf.mxu0
        %v7147 = vadd.f32 0.0, %v7146
        %7148 = vmatmul.f32.gmra.mxu0 %v7034
        %v7149 = vpop.f32.mrf.mxu0
        %v7150 = vadd.f32 0.0, %v7149
        %7151 = vmatmul.f32.gmra.mxu0 %v7037
        %v7152 = vpop.f32.mrf.mxu0
        %v7153 = vadd.f32 0.0, %v7152
        %7154 = vmatmul.f32.gmra.mxu0 %v7040
        %v7155 = vpop.f32.mrf.mxu0
        %v7156 = vadd.f32 0.0, %v7155
        %7157 = vmatmul.f32.gmra.mxu0 %v7043
        %v7158 = vpop.f32.mrf.mxu0
        %v7159 = vadd.f32 0.0, %v7158
        %7160 = vmatmul.f32.gmra.mxu0 %v7046
        %v7161 = vpop.f32.mrf.mxu0
        %v7162 = vadd.f32 0.0, %v7161
        %7163 = vmatmul.f32.gmra.mxu0 %v7049
        %v7164 = vpop.f32.mrf.mxu0
        %v7165 = vadd.f32 0.0, %v7164
        %7166 = vdwg.mxu0
        %v7167 = vadd.f32 %v6118, %v7072
        %v7168 = vadd.f32 %v6119, %v7075
        %v7169 = vadd.f32 %v6120, %v7078
        %v7170 = vadd.f32 %v6121, %v7081
        %v7171 = vadd.f32 %v6122, %v7084
        %v7172 = vadd.f32 %v6123, %v7087
        %v7173 = vadd.f32 %v6124, %v7090
        %v7174 = vadd.f32 %v6125, %v7093
        %v7175 = vadd.f32 %v6126, %v7096
        %v7176 = vadd.f32 %v6127, %v7099
        %v7177 = vadd.f32 %v6128, %v7102
        %v7178 = vadd.f32 %v6129, %v7105
        %v7179 = vadd.f32 %v6130, %v7108
        %v7180 = vadd.f32 %v6131, %v7111
        %v7181 = vadd.f32 %v6132, %v7114
        %v7182 = vadd.f32 %v6133, %v7117
        %v7183 = vadd.f32 %v6134, %v7120
        %v7184 = vadd.f32 %v6135, %v7123
        %v7185 = vadd.f32 %v6136, %v7126
        %v7186 = vadd.f32 %v6137, %v7129
        %v7187 = vadd.f32 %v6138, %v7132
        %v7188 = vadd.f32 %v6139, %v7135
        %v7189 = vadd.f32 %v6140, %v7138
        %v7190 = vadd.f32 %v6141, %v7141
        %v7191 = vadd.f32 %v6142, %v7144
        %v7192 = vadd.f32 %v6143, %v7147
        %v7193 = vadd.f32 %v6144, %v7150
        %v7194 = vadd.f32 %v6145, %v7153
        %v7195 = vadd.f32 %v6146, %v7156
        %v7196 = vadd.f32 %v6147, %v7159
        %v7197 = vadd.f32 %v6148, %v7162
        %v7198 = vadd.f32 %v6149, %v7165
        %s7199 = scalar_lea.vmem [#allocation3], 96
        %v7200 = vld [vmem:[%s7199] sm:$0xff]
        %v7201 = vld [vmem:[%s7199 + $0x8] sm:$0xff]
        %v7202 = vld [vmem:[%s7199 + $0x18] sm:$0xff]
        %v7203 = vld [vmem:[%s7199 + $0x20] sm:$0xff]
        %v7204 = vld [vmem:[%s7199 + $0x30] sm:$0xff]
        %v7205 = vld [vmem:[%s7199 + $0x38] sm:$0xff]
        %v7206 = vld [vmem:[%s7199 + $0x48] sm:$0xff]
        %v7207 = vld [vmem:[%s7199 + $0x50] sm:$0xff]
        %v7208 = vld [vmem:[%s7199 + $0x60] sm:$0xff]
        %v7209 = vld [vmem:[%s7199 + $0x68] sm:$0xff]
        %v7210 = vld [vmem:[%s7199 + $0x78] sm:$0xff]
        %v7211 = vld [vmem:[%s7199 + $0x80] sm:$0xff]
        %v7212 = vld [vmem:[%s7199 + $0x90] sm:$0xff]
        %v7213 = vld [vmem:[%s7199 + $0x98] sm:$0xff]
        %v7214 = vld [vmem:[%s7199 + $0xa8] sm:$0xff]
        %v7215 = vld [vmem:[%s7199 + $0xb0] sm:$0xff]
        %v7216 = vld [vmem:[%s7199 + $0xc0] sm:$0xff]
        %v7217 = vld [vmem:[%s7199 + $0xc8] sm:$0xff]
        %v7218 = vld [vmem:[%s7199 + $0xd8] sm:$0xff]
        %v7219 = vld [vmem:[%s7199 + $0xe0] sm:$0xff]
        %v7220 = vld [vmem:[%s7199 + $0xf0] sm:$0xff]
        %v7221 = vld [vmem:[%s7199 + $0xf8] sm:$0xff]
        %v7222 = vld [vmem:[%s7199 + $0x108] sm:$0xff]
        %v7223 = vld [vmem:[%s7199 + $0x110] sm:$0xff]
        %v7224 = vld [vmem:[%s7199 + $0x120] sm:$0xff]
        %v7225 = vld [vmem:[%s7199 + $0x128] sm:$0xff]
        %v7226 = vld [vmem:[%s7199 + $0x138] sm:$0xff]
        %v7227 = vld [vmem:[%s7199 + $0x140] sm:$0xff]
        %v7228 = vld [vmem:[%s7199 + $0x150] sm:$0xff]
        %v7229 = vld [vmem:[%s7199 + $0x158] sm:$0xff]
        %v7230 = vld [vmem:[%s7199 + $0x168] sm:$0xff]
        %v7231 = vld [vmem:[%s7199 + $0x170] sm:$0xff]
        %v7232 = vld [vmem:[%s7199 + $0x1] sm:$0xff]
        %v7233 = vld [vmem:[%s7199 + $0x9] sm:$0xff]
        %v7234 = vld [vmem:[%s7199 + $0x19] sm:$0xff]
        %v7235 = vld [vmem:[%s7199 + $0x21] sm:$0xff]
        %v7236 = vld [vmem:[%s7199 + $0x31] sm:$0xff]
        %v7237 = vld [vmem:[%s7199 + $0x39] sm:$0xff]
        %v7238 = vld [vmem:[%s7199 + $0x49] sm:$0xff]
        %v7239 = vld [vmem:[%s7199 + $0x51] sm:$0xff]
        %v7240 = vld [vmem:[%s7199 + $0x61] sm:$0xff]
        %v7241 = vld [vmem:[%s7199 + $0x69] sm:$0xff]
        %v7242 = vld [vmem:[%s7199 + $0x79] sm:$0xff]
        %v7243 = vld [vmem:[%s7199 + $0x81] sm:$0xff]
        %v7244 = vld [vmem:[%s7199 + $0x91] sm:$0xff]
        %v7245 = vld [vmem:[%s7199 + $0x99] sm:$0xff]
        %v7246 = vld [vmem:[%s7199 + $0xa9] sm:$0xff]
        %v7247 = vld [vmem:[%s7199 + $0xb1] sm:$0xff]
        %v7248 = vld [vmem:[%s7199 + $0xc1] sm:$0xff]
        %v7249 = vld [vmem:[%s7199 + $0xc9] sm:$0xff]
        %v7250 = vld [vmem:[%s7199 + $0xd9] sm:$0xff]
        %v7251 = vld [vmem:[%s7199 + $0xe1] sm:$0xff]
        %v7252 = vld [vmem:[%s7199 + $0xf1] sm:$0xff]
        %v7253 = vld [vmem:[%s7199 + $0xf9] sm:$0xff]
        %v7254 = vld [vmem:[%s7199 + $0x109] sm:$0xff]
        %v7255 = vld [vmem:[%s7199 + $0x111] sm:$0xff]
        %v7256 = vld [vmem:[%s7199 + $0x121] sm:$0xff]
        %v7257 = vld [vmem:[%s7199 + $0x129] sm:$0xff]
        %v7258 = vld [vmem:[%s7199 + $0x139] sm:$0xff]
        %v7259 = vld [vmem:[%s7199 + $0x141] sm:$0xff]
        %v7260 = vld [vmem:[%s7199 + $0x151] sm:$0xff]
        %v7261 = vld [vmem:[%s7199 + $0x159] sm:$0xff]
        %v7262 = vld [vmem:[%s7199 + $0x169] sm:$0xff]
        %v7263 = vld [vmem:[%s7199 + $0x171] sm:$0xff]
        %v7264 = vld [vmem:[%s7199 + $0x2] sm:$0xff]
        %v7265 = vld [vmem:[%s7199 + $0xa] sm:$0xff]
        %v7266 = vld [vmem:[%s7199 + $0x1a] sm:$0xff]
        %v7267 = vld [vmem:[%s7199 + $0x22] sm:$0xff]
        %v7268 = vld [vmem:[%s7199 + $0x32] sm:$0xff]
        %v7269 = vld [vmem:[%s7199 + $0x3a] sm:$0xff]
        %v7270 = vld [vmem:[%s7199 + $0x4a] sm:$0xff]
        %v7271 = vld [vmem:[%s7199 + $0x52] sm:$0xff]
        %v7272 = vld [vmem:[%s7199 + $0x62] sm:$0xff]
        %v7273 = vld [vmem:[%s7199 + $0x6a] sm:$0xff]
        %v7274 = vld [vmem:[%s7199 + $0x7a] sm:$0xff]
        %v7275 = vld [vmem:[%s7199 + $0x82] sm:$0xff]
        %v7276 = vld [vmem:[%s7199 + $0x92] sm:$0xff]
        %v7277 = vld [vmem:[%s7199 + $0x9a] sm:$0xff]
        %v7278 = vld [vmem:[%s7199 + $0xaa] sm:$0xff]
        %v7279 = vld [vmem:[%s7199 + $0xb2] sm:$0xff]
        %v7280 = vld [vmem:[%s7199 + $0xc2] sm:$0xff]
        %v7281 = vld [vmem:[%s7199 + $0xca] sm:$0xff]
        %v7282 = vld [vmem:[%s7199 + $0xda] sm:$0xff]
        %v7283 = vld [vmem:[%s7199 + $0xe2] sm:$0xff]
        %v7284 = vld [vmem:[%s7199 + $0xf2] sm:$0xff]
        %v7285 = vld [vmem:[%s7199 + $0xfa] sm:$0xff]
        %v7286 = vld [vmem:[%s7199 + $0x10a] sm:$0xff]
        %v7287 = vld [vmem:[%s7199 + $0x112] sm:$0xff]
        %v7288 = vld [vmem:[%s7199 + $0x122] sm:$0xff]
        %v7289 = vld [vmem:[%s7199 + $0x12a] sm:$0xff]
        %v7290 = vld [vmem:[%s7199 + $0x13a] sm:$0xff]
        %v7291 = vld [vmem:[%s7199 + $0x142] sm:$0xff]
        %v7292 = vld [vmem:[%s7199 + $0x152] sm:$0xff]
        %v7293 = vld [vmem:[%s7199 + $0x15a] sm:$0xff]
        %v7294 = vld [vmem:[%s7199 + $0x16a] sm:$0xff]
        %v7295 = vld [vmem:[%s7199 + $0x172] sm:$0xff]
        %v7296 = vld [vmem:[%s7199 + $0x3] sm:$0xff]
        %v7297 = vld [vmem:[%s7199 + $0xb] sm:$0xff]
        %v7298 = vld [vmem:[%s7199 + $0x1b] sm:$0xff]
        %v7299 = vld [vmem:[%s7199 + $0x23] sm:$0xff]
        %v7300 = vld [vmem:[%s7199 + $0x33] sm:$0xff]
        %v7301 = vld [vmem:[%s7199 + $0x3b] sm:$0xff]
        %v7302 = vld [vmem:[%s7199 + $0x4b] sm:$0xff]
        %v7303 = vld [vmem:[%s7199 + $0x53] sm:$0xff]
        %v7304 = vld [vmem:[%s7199 + $0x63] sm:$0xff]
        %v7305 = vld [vmem:[%s7199 + $0x6b] sm:$0xff]
        %v7306 = vld [vmem:[%s7199 + $0x7b] sm:$0xff]
        %v7307 = vld [vmem:[%s7199 + $0x83] sm:$0xff]
        %v7308 = vld [vmem:[%s7199 + $0x93] sm:$0xff]
        %v7309 = vld [vmem:[%s7199 + $0x9b] sm:$0xff]
        %v7310 = vld [vmem:[%s7199 + $0xab] sm:$0xff]
        %v7311 = vld [vmem:[%s7199 + $0xb3] sm:$0xff]
        %v7312 = vld [vmem:[%s7199 + $0xc3] sm:$0xff]
        %v7313 = vld [vmem:[%s7199 + $0xcb] sm:$0xff]
        %v7314 = vld [vmem:[%s7199 + $0xdb] sm:$0xff]
        %v7315 = vld [vmem:[%s7199 + $0xe3] sm:$0xff]
        %v7316 = vld [vmem:[%s7199 + $0xf3] sm:$0xff]
        %v7317 = vld [vmem:[%s7199 + $0xfb] sm:$0xff]
        %v7318 = vld [vmem:[%s7199 + $0x10b] sm:$0xff]
        %v7319 = vld [vmem:[%s7199 + $0x113] sm:$0xff]
        %v7320 = vld [vmem:[%s7199 + $0x123] sm:$0xff]
        %v7321 = vld [vmem:[%s7199 + $0x12b] sm:$0xff]
        %v7322 = vld [vmem:[%s7199 + $0x13b] sm:$0xff]
        %v7323 = vld [vmem:[%s7199 + $0x143] sm:$0xff]
        %v7324 = vld [vmem:[%s7199 + $0x153] sm:$0xff]
        %v7325 = vld [vmem:[%s7199 + $0x15b] sm:$0xff]
        %v7326 = vld [vmem:[%s7199 + $0x16b] sm:$0xff]
        %v7327 = vld [vmem:[%s7199 + $0x173] sm:$0xff]
        %v7328 = vld [vmem:[%s7199 + $0x4] sm:$0xff]
        %v7329 = vld [vmem:[%s7199 + $0xc] sm:$0xff]
        %v7330 = vld [vmem:[%s7199 + $0x1c] sm:$0xff]
        %v7331 = vld [vmem:[%s7199 + $0x24] sm:$0xff]
        %v7332 = vld [vmem:[%s7199 + $0x34] sm:$0xff]
        %v7333 = vld [vmem:[%s7199 + $0x3c] sm:$0xff]
        %v7334 = vld [vmem:[%s7199 + $0x4c] sm:$0xff]
        %v7335 = vld [vmem:[%s7199 + $0x54] sm:$0xff]
        %v7336 = vld [vmem:[%s7199 + $0x64] sm:$0xff]
        %v7337 = vld [vmem:[%s7199 + $0x6c] sm:$0xff]
        %v7338 = vld [vmem:[%s7199 + $0x7c] sm:$0xff]
        %v7339 = vld [vmem:[%s7199 + $0x84] sm:$0xff]
        %v7340 = vld [vmem:[%s7199 + $0x94] sm:$0xff]
        %v7341 = vld [vmem:[%s7199 + $0x9c] sm:$0xff]
        %v7342 = vld [vmem:[%s7199 + $0xac] sm:$0xff]
        %v7343 = vld [vmem:[%s7199 + $0xb4] sm:$0xff]
        %v7344 = vld [vmem:[%s7199 + $0xc4] sm:$0xff]
        %v7345 = vld [vmem:[%s7199 + $0xcc] sm:$0xff]
        %v7346 = vld [vmem:[%s7199 + $0xdc] sm:$0xff]
        %v7347 = vld [vmem:[%s7199 + $0xe4] sm:$0xff]
        %v7348 = vld [vmem:[%s7199 + $0xf4] sm:$0xff]
        %v7349 = vld [vmem:[%s7199 + $0xfc] sm:$0xff]
        %v7350 = vld [vmem:[%s7199 + $0x10c] sm:$0xff]
        %v7351 = vld [vmem:[%s7199 + $0x114] sm:$0xff]
        %v7352 = vld [vmem:[%s7199 + $0x124] sm:$0xff]
        %v7353 = vld [vmem:[%s7199 + $0x12c] sm:$0xff]
        %v7354 = vld [vmem:[%s7199 + $0x13c] sm:$0xff]
        %v7355 = vld [vmem:[%s7199 + $0x144] sm:$0xff]
        %v7356 = vld [vmem:[%s7199 + $0x154] sm:$0xff]
        %v7357 = vld [vmem:[%s7199 + $0x15c] sm:$0xff]
        %v7358 = vld [vmem:[%s7199 + $0x16c] sm:$0xff]
        %v7359 = vld [vmem:[%s7199 + $0x174] sm:$0xff]
        %7392 = vrot.lane.b32.xlu0 %v7232, 4
        %v7393 = vpop.permute.xlu0 %7392
        %7394 = vrot.lane.b32.xlu0 %v7233, 4
        %v7395 = vpop.permute.xlu0 %7394
        %7396 = vrot.lane.b32.xlu0 %v7234, 4
        %v7397 = vpop.permute.xlu0 %7396
        %7398 = vrot.lane.b32.xlu0 %v7235, 4
        %v7399 = vpop.permute.xlu0 %7398
        %7400 = vrot.lane.b32.xlu0 %v7236, 4
        %v7401 = vpop.permute.xlu0 %7400
        %7402 = vrot.lane.b32.xlu0 %v7237, 4
        %v7403 = vpop.permute.xlu0 %7402
        %7404 = vrot.lane.b32.xlu0 %v7238, 4
        %v7405 = vpop.permute.xlu0 %7404
        %7406 = vrot.lane.b32.xlu0 %v7239, 4
        %v7407 = vpop.permute.xlu0 %7406
        %7408 = vrot.lane.b32.xlu0 %v7240, 4
        %v7409 = vpop.permute.xlu0 %7408
        %7410 = vrot.lane.b32.xlu0 %v7241, 4
        %v7411 = vpop.permute.xlu0 %7410
        %7412 = vrot.lane.b32.xlu0 %v7242, 4
        %v7413 = vpop.permute.xlu0 %7412
        %7414 = vrot.lane.b32.xlu0 %v7243, 4
        %v7415 = vpop.permute.xlu0 %7414
        %7416 = vrot.lane.b32.xlu0 %v7244, 4
        %v7417 = vpop.permute.xlu0 %7416
        %7418 = vrot.lane.b32.xlu0 %v7245, 4
        %v7419 = vpop.permute.xlu0 %7418
        %7420 = vrot.lane.b32.xlu0 %v7246, 4
        %v7421 = vpop.permute.xlu0 %7420
        %7422 = vrot.lane.b32.xlu0 %v7247, 4
        %v7423 = vpop.permute.xlu0 %7422
        %7424 = vrot.lane.b32.xlu0 %v7248, 4
        %v7425 = vpop.permute.xlu0 %7424
        %7426 = vrot.lane.b32.xlu0 %v7249, 4
        %v7427 = vpop.permute.xlu0 %7426
        %7428 = vrot.lane.b32.xlu0 %v7250, 4
        %v7429 = vpop.permute.xlu0 %7428
        %7430 = vrot.lane.b32.xlu0 %v7251, 4
        %v7431 = vpop.permute.xlu0 %7430
        %7432 = vrot.lane.b32.xlu0 %v7252, 4
        %v7433 = vpop.permute.xlu0 %7432
        %7434 = vrot.lane.b32.xlu0 %v7253, 4
        %v7435 = vpop.permute.xlu0 %7434
        %7436 = vrot.lane.b32.xlu0 %v7254, 4
        %v7437 = vpop.permute.xlu0 %7436
        %7438 = vrot.lane.b32.xlu0 %v7255, 4
        %v7439 = vpop.permute.xlu0 %7438
        %7440 = vrot.lane.b32.xlu0 %v7256, 4
        %v7441 = vpop.permute.xlu0 %7440
        %7442 = vrot.lane.b32.xlu0 %v7257, 4
        %v7443 = vpop.permute.xlu0 %7442
        %7444 = vrot.lane.b32.xlu0 %v7258, 4
        %v7445 = vpop.permute.xlu0 %7444
        %7446 = vrot.lane.b32.xlu0 %v7259, 4
        %v7447 = vpop.permute.xlu0 %7446
        %7448 = vrot.lane.b32.xlu0 %v7260, 4
        %v7449 = vpop.permute.xlu0 %7448
        %7450 = vrot.lane.b32.xlu0 %v7261, 4
        %v7451 = vpop.permute.xlu0 %7450
        %7452 = vrot.lane.b32.xlu0 %v7262, 4
        %v7453 = vpop.permute.xlu0 %7452
        %7454 = vrot.lane.b32.xlu0 %v7263, 4
        %v7455 = vpop.permute.xlu0 %7454
        %7520 = vrot.lane.b32.xlu0 %v7264, 8
        %v7521 = vpop.permute.xlu0 %7520
        %7522 = vrot.lane.b32.xlu0 %v7265, 8
        %v7523 = vpop.permute.xlu0 %7522
        %7524 = vrot.lane.b32.xlu0 %v7266, 8
        %v7525 = vpop.permute.xlu0 %7524
        %7526 = vrot.lane.b32.xlu0 %v7267, 8
        %v7527 = vpop.permute.xlu0 %7526
        %7528 = vrot.lane.b32.xlu0 %v7268, 8
        %v7529 = vpop.permute.xlu0 %7528
        %7530 = vrot.lane.b32.xlu0 %v7269, 8
        %v7531 = vpop.permute.xlu0 %7530
        %7532 = vrot.lane.b32.xlu0 %v7270, 8
        %v7533 = vpop.permute.xlu0 %7532
        %7534 = vrot.lane.b32.xlu0 %v7271, 8
        %v7535 = vpop.permute.xlu0 %7534
        %7536 = vrot.lane.b32.xlu0 %v7272, 8
        %v7537 = vpop.permute.xlu0 %7536
        %7538 = vrot.lane.b32.xlu0 %v7273, 8
        %v7539 = vpop.permute.xlu0 %7538
        %7540 = vrot.lane.b32.xlu0 %v7274, 8
        %v7541 = vpop.permute.xlu0 %7540
        %7542 = vrot.lane.b32.xlu0 %v7275, 8
        %v7543 = vpop.permute.xlu0 %7542
        %7544 = vrot.lane.b32.xlu0 %v7276, 8
        %v7545 = vpop.permute.xlu0 %7544
        %7546 = vrot.lane.b32.xlu0 %v7277, 8
        %v7547 = vpop.permute.xlu0 %7546
        %7548 = vrot.lane.b32.xlu0 %v7278, 8
        %v7549 = vpop.permute.xlu0 %7548
        %7550 = vrot.lane.b32.xlu0 %v7279, 8
        %v7551 = vpop.permute.xlu0 %7550
        %7552 = vrot.lane.b32.xlu0 %v7280, 8
        %v7553 = vpop.permute.xlu0 %7552
        %7554 = vrot.lane.b32.xlu0 %v7281, 8
        %v7555 = vpop.permute.xlu0 %7554
        %7556 = vrot.lane.b32.xlu0 %v7282, 8
        %v7557 = vpop.permute.xlu0 %7556
        %7558 = vrot.lane.b32.xlu0 %v7283, 8
        %v7559 = vpop.permute.xlu0 %7558
        %7560 = vrot.lane.b32.xlu0 %v7284, 8
        %v7561 = vpop.permute.xlu0 %7560
        %7562 = vrot.lane.b32.xlu0 %v7285, 8
        %v7563 = vpop.permute.xlu0 %7562
        %7564 = vrot.lane.b32.xlu0 %v7286, 8
        %v7565 = vpop.permute.xlu0 %7564
        %7566 = vrot.lane.b32.xlu0 %v7287, 8
        %v7567 = vpop.permute.xlu0 %7566
        %7568 = vrot.lane.b32.xlu0 %v7288, 8
        %v7569 = vpop.permute.xlu0 %7568
        %7570 = vrot.lane.b32.xlu0 %v7289, 8
        %v7571 = vpop.permute.xlu0 %7570
        %7572 = vrot.lane.b32.xlu0 %v7290, 8
        %v7573 = vpop.permute.xlu0 %7572
        %7574 = vrot.lane.b32.xlu0 %v7291, 8
        %v7575 = vpop.permute.xlu0 %7574
        %7576 = vrot.lane.b32.xlu0 %v7292, 8
        %v7577 = vpop.permute.xlu0 %7576
        %7578 = vrot.lane.b32.xlu0 %v7293, 8
        %v7579 = vpop.permute.xlu0 %7578
        %7580 = vrot.lane.b32.xlu0 %v7294, 8
        %v7581 = vpop.permute.xlu0 %7580
        %7582 = vrot.lane.b32.xlu0 %v7295, 8
        %v7583 = vpop.permute.xlu0 %7582
        %7648 = vrot.lane.b32.xlu0 %v7296, 12
        %v7649 = vpop.permute.xlu0 %7648
        %7650 = vrot.lane.b32.xlu0 %v7297, 12
        %v7651 = vpop.permute.xlu0 %7650
        %7652 = vrot.lane.b32.xlu0 %v7298, 12
        %v7653 = vpop.permute.xlu0 %7652
        %7654 = vrot.lane.b32.xlu0 %v7299, 12
        %v7655 = vpop.permute.xlu0 %7654
        %7656 = vrot.lane.b32.xlu0 %v7300, 12
        %v7657 = vpop.permute.xlu0 %7656
        %7658 = vrot.lane.b32.xlu0 %v7301, 12
        %v7659 = vpop.permute.xlu0 %7658
        %7660 = vrot.lane.b32.xlu0 %v7302, 12
        %v7661 = vpop.permute.xlu0 %7660
        %7662 = vrot.lane.b32.xlu0 %v7303, 12
        %v7663 = vpop.permute.xlu0 %7662
        %7664 = vrot.lane.b32.xlu0 %v7304, 12
        %v7665 = vpop.permute.xlu0 %7664
        %7666 = vrot.lane.b32.xlu0 %v7305, 12
        %v7667 = vpop.permute.xlu0 %7666
        %7668 = vrot.lane.b32.xlu0 %v7306, 12
        %v7669 = vpop.permute.xlu0 %7668
        %7670 = vrot.lane.b32.xlu0 %v7307, 12
        %v7671 = vpop.permute.xlu0 %7670
        %7672 = vrot.lane.b32.xlu0 %v7308, 12
        %v7673 = vpop.permute.xlu0 %7672
        %7674 = vrot.lane.b32.xlu0 %v7309, 12
        %v7675 = vpop.permute.xlu0 %7674
        %7676 = vrot.lane.b32.xlu0 %v7310, 12
        %v7677 = vpop.permute.xlu0 %7676
        %7678 = vrot.lane.b32.xlu0 %v7311, 12
        %v7679 = vpop.permute.xlu0 %7678
        %7680 = vrot.lane.b32.xlu0 %v7312, 12
        %v7681 = vpop.permute.xlu0 %7680
        %7682 = vrot.lane.b32.xlu0 %v7313, 12
        %v7683 = vpop.permute.xlu0 %7682
        %7684 = vrot.lane.b32.xlu0 %v7314, 12
        %v7685 = vpop.permute.xlu0 %7684
        %7686 = vrot.lane.b32.xlu0 %v7315, 12
        %v7687 = vpop.permute.xlu0 %7686
        %7688 = vrot.lane.b32.xlu0 %v7316, 12
        %v7689 = vpop.permute.xlu0 %7688
        %7690 = vrot.lane.b32.xlu0 %v7317, 12
        %v7691 = vpop.permute.xlu0 %7690
        %7692 = vrot.lane.b32.xlu0 %v7318, 12
        %v7693 = vpop.permute.xlu0 %7692
        %7694 = vrot.lane.b32.xlu0 %v7319, 12
        %v7695 = vpop.permute.xlu0 %7694
        %7696 = vrot.lane.b32.xlu0 %v7320, 12
        %v7697 = vpop.permute.xlu0 %7696
        %7698 = vrot.lane.b32.xlu0 %v7321, 12
        %v7699 = vpop.permute.xlu0 %7698
        %7700 = vrot.lane.b32.xlu0 %v7322, 12
        %v7701 = vpop.permute.xlu0 %7700
        %7702 = vrot.lane.b32.xlu0 %v7323, 12
        %v7703 = vpop.permute.xlu0 %7702
        %7704 = vrot.lane.b32.xlu0 %v7324, 12
        %v7705 = vpop.permute.xlu0 %7704
        %7706 = vrot.lane.b32.xlu0 %v7325, 12
        %v7707 = vpop.permute.xlu0 %7706
        %7708 = vrot.lane.b32.xlu0 %v7326, 12
        %v7709 = vpop.permute.xlu0 %7708
        %7710 = vrot.lane.b32.xlu0 %v7327, 12
        %v7711 = vpop.permute.xlu0 %7710
        %7776 = vrot.lane.b32.xlu0 %v7328, 16
        %v7777 = vpop.permute.xlu0 %7776
        %7778 = vrot.lane.b32.xlu0 %v7329, 16
        %v7779 = vpop.permute.xlu0 %7778
        %7780 = vrot.lane.b32.xlu0 %v7330, 16
        %v7781 = vpop.permute.xlu0 %7780
        %7782 = vrot.lane.b32.xlu0 %v7331, 16
        %v7783 = vpop.permute.xlu0 %7782
        %7784 = vrot.lane.b32.xlu0 %v7332, 16
        %v7785 = vpop.permute.xlu0 %7784
        %7786 = vrot.lane.b32.xlu0 %v7333, 16
        %v7787 = vpop.permute.xlu0 %7786
        %7788 = vrot.lane.b32.xlu0 %v7334, 16
        %v7789 = vpop.permute.xlu0 %7788
        %7790 = vrot.lane.b32.xlu0 %v7335, 16
        %v7791 = vpop.permute.xlu0 %7790
        %7792 = vrot.lane.b32.xlu0 %v7336, 16
        %v7793 = vpop.permute.xlu0 %7792
        %7794 = vrot.lane.b32.xlu0 %v7337, 16
        %v7795 = vpop.permute.xlu0 %7794
        %7796 = vrot.lane.b32.xlu0 %v7338, 16
        %v7797 = vpop.permute.xlu0 %7796
        %7798 = vrot.lane.b32.xlu0 %v7339, 16
        %v7799 = vpop.permute.xlu0 %7798
        %7800 = vrot.lane.b32.xlu0 %v7340, 16
        %v7801 = vpop.permute.xlu0 %7800
        %7802 = vrot.lane.b32.xlu0 %v7341, 16
        %v7803 = vpop.permute.xlu0 %7802
        %7804 = vrot.lane.b32.xlu0 %v7342, 16
        %v7805 = vpop.permute.xlu0 %7804
        %7806 = vrot.lane.b32.xlu0 %v7343, 16
        %v7807 = vpop.permute.xlu0 %7806
        %7808 = vrot.lane.b32.xlu0 %v7344, 16
        %v7809 = vpop.permute.xlu0 %7808
        %7810 = vrot.lane.b32.xlu0 %v7345, 16
        %v7811 = vpop.permute.xlu0 %7810
        %7812 = vrot.lane.b32.xlu0 %v7346, 16
        %v7813 = vpop.permute.xlu0 %7812
        %7814 = vrot.lane.b32.xlu0 %v7347, 16
        %v7815 = vpop.permute.xlu0 %7814
        %7816 = vrot.lane.b32.xlu0 %v7348, 16
        %v7817 = vpop.permute.xlu0 %7816
        %7818 = vrot.lane.b32.xlu0 %v7349, 16
        %v7819 = vpop.permute.xlu0 %7818
        %7820 = vrot.lane.b32.xlu0 %v7350, 16
        %v7821 = vpop.permute.xlu0 %7820
        %7822 = vrot.lane.b32.xlu0 %v7351, 16
        %v7823 = vpop.permute.xlu0 %7822
        %7824 = vrot.lane.b32.xlu0 %v7352, 16
        %v7825 = vpop.permute.xlu0 %7824
        %7826 = vrot.lane.b32.xlu0 %v7353, 16
        %v7827 = vpop.permute.xlu0 %7826
        %7828 = vrot.lane.b32.xlu0 %v7354, 16
        %v7829 = vpop.permute.xlu0 %7828
        %7830 = vrot.lane.b32.xlu0 %v7355, 16
        %v7831 = vpop.permute.xlu0 %7830
        %7832 = vrot.lane.b32.xlu0 %v7356, 16
        %v7833 = vpop.permute.xlu0 %7832
        %7834 = vrot.lane.b32.xlu0 %v7357, 16
        %v7835 = vpop.permute.xlu0 %7834
        %7836 = vrot.lane.b32.xlu0 %v7358, 16
        %v7837 = vpop.permute.xlu0 %7836
        %7838 = vrot.lane.b32.xlu0 %v7359, 16
        %v7839 = vpop.permute.xlu0 %7838
        %v7872 = vsel %vm381, %v7200, %v7393
        %v7873 = vsel %vm381, %v7201, %v7395
        %v7874 = vsel %vm381, %v7202, %v7397
        %v7875 = vsel %vm381, %v7203, %v7399
        %v7876 = vsel %vm381, %v7204, %v7401
        %v7877 = vsel %vm381, %v7205, %v7403
        %v7878 = vsel %vm381, %v7206, %v7405
        %v7879 = vsel %vm381, %v7207, %v7407
        %v7880 = vsel %vm381, %v7208, %v7409
        %v7881 = vsel %vm381, %v7209, %v7411
        %v7882 = vsel %vm381, %v7210, %v7413
        %v7883 = vsel %vm381, %v7211, %v7415
        %v7884 = vsel %vm381, %v7212, %v7417
        %v7885 = vsel %vm381, %v7213, %v7419
        %v7886 = vsel %vm381, %v7214, %v7421
        %v7887 = vsel %vm381, %v7215, %v7423
        %v7888 = vsel %vm381, %v7216, %v7425
        %v7889 = vsel %vm381, %v7217, %v7427
        %v7890 = vsel %vm381, %v7218, %v7429
        %v7891 = vsel %vm381, %v7219, %v7431
        %v7892 = vsel %vm381, %v7220, %v7433
        %v7893 = vsel %vm381, %v7221, %v7435
        %v7894 = vsel %vm381, %v7222, %v7437
        %v7895 = vsel %vm381, %v7223, %v7439
        %v7896 = vsel %vm381, %v7224, %v7441
        %v7897 = vsel %vm381, %v7225, %v7443
        %v7898 = vsel %vm381, %v7226, %v7445
        %v7899 = vsel %vm381, %v7227, %v7447
        %v7900 = vsel %vm381, %v7228, %v7449
        %v7901 = vsel %vm381, %v7229, %v7451
        %v7902 = vsel %vm381, %v7230, %v7453
        %v7903 = vsel %vm381, %v7231, %v7455
        %v7904 = vsel %vm1378, %v7872, %v7521
        %v7905 = vsel %vm1378, %v7873, %v7523
        %v7906 = vsel %vm1378, %v7874, %v7525
        %v7907 = vsel %vm1378, %v7875, %v7527
        %v7908 = vsel %vm1378, %v7876, %v7529
        %v7909 = vsel %vm1378, %v7877, %v7531
        %v7910 = vsel %vm1378, %v7878, %v7533
        %v7911 = vsel %vm1378, %v7879, %v7535
        %v7912 = vsel %vm1378, %v7880, %v7537
        %v7913 = vsel %vm1378, %v7881, %v7539
        %v7914 = vsel %vm1378, %v7882, %v7541
        %v7915 = vsel %vm1378, %v7883, %v7543
        %v7916 = vsel %vm1378, %v7884, %v7545
        %v7917 = vsel %vm1378, %v7885, %v7547
        %v7918 = vsel %vm1378, %v7886, %v7549
        %v7919 = vsel %vm1378, %v7887, %v7551
        %v7920 = vsel %vm1378, %v7888, %v7553
        %v7921 = vsel %vm1378, %v7889, %v7555
        %v7922 = vsel %vm1378, %v7890, %v7557
        %v7923 = vsel %vm1378, %v7891, %v7559
        %v7924 = vsel %vm1378, %v7892, %v7561
        %v7925 = vsel %vm1378, %v7893, %v7563
        %v7926 = vsel %vm1378, %v7894, %v7565
        %v7927 = vsel %vm1378, %v7895, %v7567
        %v7928 = vsel %vm1378, %v7896, %v7569
        %v7929 = vsel %vm1378, %v7897, %v7571
        %v7930 = vsel %vm1378, %v7898, %v7573
        %v7931 = vsel %vm1378, %v7899, %v7575
        %v7932 = vsel %vm1378, %v7900, %v7577
        %v7933 = vsel %vm1378, %v7901, %v7579
        %v7934 = vsel %vm1378, %v7902, %v7581
        %v7935 = vsel %vm1378, %v7903, %v7583
        %v7936 = vsel %vm1832, %v7904, %v7649
        %v7937 = vsel %vm1832, %v7905, %v7651
        %v7938 = vsel %vm1832, %v7906, %v7653
        %v7939 = vsel %vm1832, %v7907, %v7655
        %v7940 = vsel %vm1832, %v7908, %v7657
        %v7941 = vsel %vm1832, %v7909, %v7659
        %v7942 = vsel %vm1832, %v7910, %v7661
        %v7943 = vsel %vm1832, %v7911, %v7663
        %v7944 = vsel %vm1832, %v7912, %v7665
        %v7945 = vsel %vm1832, %v7913, %v7667
        %v7946 = vsel %vm1832, %v7914, %v7669
        %v7947 = vsel %vm1832, %v7915, %v7671
        %v7948 = vsel %vm1832, %v7916, %v7673
        %v7949 = vsel %vm1832, %v7917, %v7675
        %v7950 = vsel %vm1832, %v7918, %v7677
        %v7951 = vsel %vm1832, %v7919, %v7679
        %v7952 = vsel %vm1832, %v7920, %v7681
        %v7953 = vsel %vm1832, %v7921, %v7683
        %v7954 = vsel %vm1832, %v7922, %v7685
        %v7955 = vsel %vm1832, %v7923, %v7687
        %v7956 = vsel %vm1832, %v7924, %v7689
        %v7957 = vsel %vm1832, %v7925, %v7691
        %v7958 = vsel %vm1832, %v7926, %v7693
        %v7959 = vsel %vm1832, %v7927, %v7695
        %v7960 = vsel %vm1832, %v7928, %v7697
        %v7961 = vsel %vm1832, %v7929, %v7699
        %v7962 = vsel %vm1832, %v7930, %v7701
        %v7963 = vsel %vm1832, %v7931, %v7703
        %v7964 = vsel %vm1832, %v7932, %v7705
        %v7965 = vsel %vm1832, %v7933, %v7707
        %v7966 = vsel %vm1832, %v7934, %v7709
        %v7967 = vsel %vm1832, %v7935, %v7711
        %v7968 = vsel %vm3836, %v7936, %v7777
        %v7969 = vsel %vm3836, %v7937, %v7779
        %v7970 = vsel %vm3836, %v7938, %v7781
        %v7971 = vsel %vm3836, %v7939, %v7783
        %v7972 = vsel %vm3836, %v7940, %v7785
        %v7973 = vsel %vm3836, %v7941, %v7787
        %v7974 = vsel %vm3836, %v7942, %v7789
        %v7975 = vsel %vm3836, %v7943, %v7791
        %v7976 = vsel %vm3836, %v7944, %v7793
        %v7977 = vsel %vm3836, %v7945, %v7795
        %v7978 = vsel %vm3836, %v7946, %v7797
        %v7979 = vsel %vm3836, %v7947, %v7799
        %v7980 = vsel %vm3836, %v7948, %v7801
        %v7981 = vsel %vm3836, %v7949, %v7803
        %v7982 = vsel %vm3836, %v7950, %v7805
        %v7983 = vsel %vm3836, %v7951, %v7807
        %v7984 = vsel %vm3836, %v7952, %v7809
        %v7985 = vsel %vm3836, %v7953, %v7811
        %v7986 = vsel %vm3836, %v7954, %v7813
        %v7987 = vsel %vm3836, %v7955, %v7815
        %v7988 = vsel %vm3836, %v7956, %v7817
        %v7989 = vsel %vm3836, %v7957, %v7819
        %v7990 = vsel %vm3836, %v7958, %v7821
        %v7991 = vsel %vm3836, %v7959, %v7823
        %v7992 = vsel %vm3836, %v7960, %v7825
        %v7993 = vsel %vm3836, %v7961, %v7827
        %v7994 = vsel %vm3836, %v7962, %v7829
        %v7995 = vsel %vm3836, %v7963, %v7831
        %v7996 = vsel %vm3836, %v7964, %v7833
        %v7997 = vsel %vm3836, %v7965, %v7835
        %v7998 = vsel %vm3836, %v7966, %v7837
        %v7999 = vsel %vm3836, %v7967, %v7839
        %s8000 = scalar_lea.vmem %s5, 96
        %v8001 = vld [vmem:[%s8000] sm:$0xff]
        %v8002 = vld [vmem:[%s8000 + $0x8] sm:$0xff]
        %v8003 = vld [vmem:[%s8000 + $0x10] sm:$0xf]
        %v8005 = vsel %vm4677, %v7968, 0
        %v8008 = vsel %vm4677, %v7969, 0
        %v8011 = vsel %vm4677, %v7970, 0
        %v8014 = vsel %vm4677, %v7971, 0
        %v8017 = vsel %vm4677, %v7972, 0
        %v8020 = vsel %vm4677, %v7973, 0
        %v8023 = vsel %vm4677, %v7974, 0
        %v8026 = vsel %vm4677, %v7975, 0
        %v8029 = vsel %vm4677, %v7976, 0
        %v8032 = vsel %vm4677, %v7977, 0
        %v8035 = vsel %vm4677, %v7978, 0
        %v8038 = vsel %vm4677, %v7979, 0
        %v8041 = vsel %vm4677, %v7980, 0
        %v8044 = vsel %vm4677, %v7981, 0
        %v8047 = vsel %vm4677, %v7982, 0
        %v8050 = vsel %vm4677, %v7983, 0
        %v8053 = vsel %vm4677, %v7984, 0
        %v8056 = vsel %vm4677, %v7985, 0
        %v8059 = vsel %vm4677, %v7986, 0
        %v8062 = vsel %vm4677, %v7987, 0
        %v8065 = vsel %vm4677, %v7988, 0
        %v8068 = vsel %vm4677, %v7989, 0
        %v8071 = vsel %vm4677, %v7990, 0
        %v8074 = vsel %vm4677, %v7991, 0
        %v8077 = vsel %vm4677, %v7992, 0
        %v8080 = vsel %vm4677, %v7993, 0
        %v8083 = vsel %vm4677, %v7994, 0
        %v8086 = vsel %vm4677, %v7995, 0
        %v8089 = vsel %vm4677, %v7996, 0
        %v8092 = vsel %vm4677, %v7997, 0
        %v8095 = vsel %vm4677, %v7998, 0
        %v8098 = vsel %vm4677, %v7999, 0
        %v8101 = vsel %vm478, %v8003, 0
        %8103 = vmatpush.msra.mxu0 0.0
        %8104 = vmatpush.msra.mxu0 0.0
        %8105 = vmatpush.msra.mxu0 0.0
        %8106 = vmatpush.msra.mxu0 0.0
        %8107 = vmatpush.msra.mxu0 0.0
        %8108 = vmatpush.msra.mxu0 0.0
        %8109 = vmatpush.msra.mxu0 0.0
        %8110 = vmatpush.msra.mxu0 0.0
        %8111 = vmatpush.msra.mxu0 0.0
        %8112 = vmatpush.msra.mxu0 0.0
        %8113 = vmatpush.msra.mxu0 0.0
        %8114 = vmatpush.msra.mxu0 0.0
        %8115 = vmatpush.msra.mxu0 0.0
        %8116 = vmatpush.msra.mxu0 %v8101
        %8117 = vmatpush.msra.mxu0 %v8002
        %8118 = vmatpush.msra.mxu0 %v8001
        %8119 = vmatmul.f32.gmra.mxu0 %v8005
        %v8120 = vpop.f32.mrf.mxu0
        %v8121 = vadd.f32 0.0, %v8120
        %8122 = vmatmul.f32.gmra.mxu0 %v8008
        %v8123 = vpop.f32.mrf.mxu0
        %v8124 = vadd.f32 0.0, %v8123
        %8125 = vmatmul.f32.gmra.mxu0 %v8011
        %v8126 = vpop.f32.mrf.mxu0
        %v8127 = vadd.f32 0.0, %v8126
        %8128 = vmatmul.f32.gmra.mxu0 %v8014
        %v8129 = vpop.f32.mrf.mxu0
        %v8130 = vadd.f32 0.0, %v8129
        %8131 = vmatmul.f32.gmra.mxu0 %v8017
        %v8132 = vpop.f32.mrf.mxu0
        %v8133 = vadd.f32 0.0, %v8132
        %8134 = vmatmul.f32.gmra.mxu0 %v8020
        %v8135 = vpop.f32.mrf.mxu0
        %v8136 = vadd.f32 0.0, %v8135
        %8137 = vmatmul.f32.gmra.mxu0 %v8023
        %v8138 = vpop.f32.mrf.mxu0
        %v8139 = vadd.f32 0.0, %v8138
        %8140 = vmatmul.f32.gmra.mxu0 %v8026
        %v8141 = vpop.f32.mrf.mxu0
        %v8142 = vadd.f32 0.0, %v8141
        %8143 = vmatmul.f32.gmra.mxu0 %v8029
        %v8144 = vpop.f32.mrf.mxu0
        %v8145 = vadd.f32 0.0, %v8144
        %8146 = vmatmul.f32.gmra.mxu0 %v8032
        %v8147 = vpop.f32.mrf.mxu0
        %v8148 = vadd.f32 0.0, %v8147
        %8149 = vmatmul.f32.gmra.mxu0 %v8035
        %v8150 = vpop.f32.mrf.mxu0
        %v8151 = vadd.f32 0.0, %v8150
        %8152 = vmatmul.f32.gmra.mxu0 %v8038
        %v8153 = vpop.f32.mrf.mxu0
        %v8154 = vadd.f32 0.0, %v8153
        %8155 = vmatmul.f32.gmra.mxu0 %v8041
        %v8156 = vpop.f32.mrf.mxu0
        %v8157 = vadd.f32 0.0, %v8156
        %8158 = vmatmul.f32.gmra.mxu0 %v8044
        %v8159 = vpop.f32.mrf.mxu0
        %v8160 = vadd.f32 0.0, %v8159
        %8161 = vmatmul.f32.gmra.mxu0 %v8047
        %v8162 = vpop.f32.mrf.mxu0
        %v8163 = vadd.f32 0.0, %v8162
        %8164 = vmatmul.f32.gmra.mxu0 %v8050
        %v8165 = vpop.f32.mrf.mxu0
        %v8166 = vadd.f32 0.0, %v8165
        %8167 = vmatmul.f32.gmra.mxu0 %v8053
        %v8168 = vpop.f32.mrf.mxu0
        %v8169 = vadd.f32 0.0, %v8168
        %8170 = vmatmul.f32.gmra.mxu0 %v8056
        %v8171 = vpop.f32.mrf.mxu0
        %v8172 = vadd.f32 0.0, %v8171
        %8173 = vmatmul.f32.gmra.mxu0 %v8059
        %v8174 = vpop.f32.mrf.mxu0
        %v8175 = vadd.f32 0.0, %v8174
        %8176 = vmatmul.f32.gmra.mxu0 %v8062
        %v8177 = vpop.f32.mrf.mxu0
        %v8178 = vadd.f32 0.0, %v8177
        %8179 = vmatmul.f32.gmra.mxu0 %v8065
        %v8180 = vpop.f32.mrf.mxu0
        %v8181 = vadd.f32 0.0, %v8180
        %8182 = vmatmul.f32.gmra.mxu0 %v8068
        %v8183 = vpop.f32.mrf.mxu0
        %v8184 = vadd.f32 0.0, %v8183
        %8185 = vmatmul.f32.gmra.mxu0 %v8071
        %v8186 = vpop.f32.mrf.mxu0
        %v8187 = vadd.f32 0.0, %v8186
        %8188 = vmatmul.f32.gmra.mxu0 %v8074
        %v8189 = vpop.f32.mrf.mxu0
        %v8190 = vadd.f32 0.0, %v8189
        %8191 = vmatmul.f32.gmra.mxu0 %v8077
        %v8192 = vpop.f32.mrf.mxu0
        %v8193 = vadd.f32 0.0, %v8192
        %8194 = vmatmul.f32.gmra.mxu0 %v8080
        %v8195 = vpop.f32.mrf.mxu0
        %v8196 = vadd.f32 0.0, %v8195
        %8197 = vmatmul.f32.gmra.mxu0 %v8083
        %v8198 = vpop.f32.mrf.mxu0
        %v8199 = vadd.f32 0.0, %v8198
        %8200 = vmatmul.f32.gmra.mxu0 %v8086
        %v8201 = vpop.f32.mrf.mxu0
        %v8202 = vadd.f32 0.0, %v8201
        %8203 = vmatmul.f32.gmra.mxu0 %v8089
        %v8204 = vpop.f32.mrf.mxu0
        %v8205 = vadd.f32 0.0, %v8204
        %8206 = vmatmul.f32.gmra.mxu0 %v8092
        %v8207 = vpop.f32.mrf.mxu0
        %v8208 = vadd.f32 0.0, %v8207
        %8209 = vmatmul.f32.gmra.mxu0 %v8095
        %v8210 = vpop.f32.mrf.mxu0
        %v8211 = vadd.f32 0.0, %v8210
        %8212 = vmatmul.f32.gmra.mxu0 %v8098
        %v8213 = vpop.f32.mrf.mxu0
        %v8214 = vadd.f32 0.0, %v8213
        %8215 = vdwg.mxu0
        %v8216 = vadd.f32 %v7167, %v8121
        %v8217 = vadd.f32 %v7168, %v8124
        %v8218 = vadd.f32 %v7169, %v8127
        %v8219 = vadd.f32 %v7170, %v8130
        %v8220 = vadd.f32 %v7171, %v8133
        %v8221 = vadd.f32 %v7172, %v8136
        %v8222 = vadd.f32 %v7173, %v8139
        %v8223 = vadd.f32 %v7174, %v8142
        %v8224 = vadd.f32 %v7175, %v8145
        %v8225 = vadd.f32 %v7176, %v8148
        %v8226 = vadd.f32 %v7177, %v8151
        %v8227 = vadd.f32 %v7178, %v8154
        %v8228 = vadd.f32 %v7179, %v8157
        %v8229 = vadd.f32 %v7180, %v8160
        %v8230 = vadd.f32 %v7181, %v8163
        %v8231 = vadd.f32 %v7182, %v8166
        %v8232 = vadd.f32 %v7183, %v8169
        %v8233 = vadd.f32 %v7184, %v8172
        %v8234 = vadd.f32 %v7185, %v8175
        %v8235 = vadd.f32 %v7186, %v8178
        %v8236 = vadd.f32 %v7187, %v8181
        %v8237 = vadd.f32 %v7188, %v8184
        %v8238 = vadd.f32 %v7189, %v8187
        %v8239 = vadd.f32 %v7190, %v8190
        %v8240 = vadd.f32 %v7191, %v8193
        %v8241 = vadd.f32 %v7192, %v8196
        %v8242 = vadd.f32 %v7193, %v8199
        %v8243 = vadd.f32 %v7194, %v8202
        %v8244 = vadd.f32 %v7195, %v8205
        %v8245 = vadd.f32 %v7196, %v8208
        %v8246 = vadd.f32 %v7197, %v8211
        %v8247 = vadd.f32 %v7198, %v8214
        %v8248 = vld [vmem:[%s6] sm:$0x1]
        %v8250 = vperm.slane %v8248, 0
        %v8252 = vadd.f32 %v8216, %v8250
        %v8253 = vadd.f32 %v8217, %v8250
        %v8254 = vadd.f32 %v8218, %v8250
        %v8255 = vadd.f32 %v8219, %v8250
        %v8256 = vadd.f32 %v8220, %v8250
        %v8257 = vadd.f32 %v8221, %v8250
        %v8258 = vadd.f32 %v8222, %v8250
        %v8259 = vadd.f32 %v8223, %v8250
        %v8260 = vadd.f32 %v8224, %v8250
        %v8261 = vadd.f32 %v8225, %v8250
        %v8262 = vadd.f32 %v8226, %v8250
        %v8263 = vadd.f32 %v8227, %v8250
        %v8264 = vadd.f32 %v8228, %v8250
        %v8265 = vadd.f32 %v8229, %v8250
        %v8266 = vadd.f32 %v8230, %v8250
        %v8267 = vadd.f32 %v8231, %v8250
        %v8268 = vadd.f32 %v8232, %v8250
        %v8269 = vadd.f32 %v8233, %v8250
        %v8270 = vadd.f32 %v8234, %v8250
        %v8271 = vadd.f32 %v8235, %v8250
        %v8272 = vadd.f32 %v8236, %v8250
        %v8273 = vadd.f32 %v8237, %v8250
        %v8274 = vadd.f32 %v8238, %v8250
        %v8275 = vadd.f32 %v8239, %v8250
        %v8276 = vadd.f32 %v8240, %v8250
        %v8277 = vadd.f32 %v8241, %v8250
        %v8278 = vadd.f32 %v8242, %v8250
        %v8279 = vadd.f32 %v8243, %v8250
        %v8280 = vadd.f32 %v8244, %v8250
        %v8281 = vadd.f32 %v8245, %v8250
        %v8282 = vadd.f32 %v8246, %v8250
        %v8283 = vadd.f32 %v8247, %v8250
        %v8284 = vmax.f32 %v8252, 0.0
        %v8285 = vmax.f32 %v8253, 0.0
        %v8286 = vmax.f32 %v8254, 0.0
        %v8287 = vmax.f32 %v8255, 0.0
        %v8288 = vmax.f32 %v8256, 0.0
        %v8289 = vmax.f32 %v8257, 0.0
        %v8290 = vmax.f32 %v8258, 0.0
        %v8291 = vmax.f32 %v8259, 0.0
        %v8292 = vmax.f32 %v8260, 0.0
        %v8293 = vmax.f32 %v8261, 0.0
        %v8294 = vmax.f32 %v8262, 0.0
        %v8295 = vmax.f32 %v8263, 0.0
        %v8296 = vmax.f32 %v8264, 0.0
        %v8297 = vmax.f32 %v8265, 0.0
        %v8298 = vmax.f32 %v8266, 0.0
        %v8299 = vmax.f32 %v8267, 0.0
        %v8300 = vmax.f32 %v8268, 0.0
        %v8301 = vmax.f32 %v8269, 0.0
        %v8302 = vmax.f32 %v8270, 0.0
        %v8303 = vmax.f32 %v8271, 0.0
        %v8304 = vmax.f32 %v8272, 0.0
        %v8305 = vmax.f32 %v8273, 0.0
        %v8306 = vmax.f32 %v8274, 0.0
        %v8307 = vmax.f32 %v8275, 0.0
        %v8308 = vmax.f32 %v8276, 0.0
        %v8309 = vmax.f32 %v8277, 0.0
        %v8310 = vmax.f32 %v8278, 0.0
        %v8311 = vmax.f32 %v8279, 0.0
        %v8312 = vmax.f32 %v8280, 0.0
        %v8313 = vmax.f32 %v8281, 0.0
        %v8314 = vmax.f32 %v8282, 0.0
        %v8315 = vmax.f32 %v8283, 0.0
        %s8316 = scalar_lea.vmem [#allocation4], 24
        %8317 = vst.msk [vmem:[%s8316 + $0x1] sm:$0xff] %vm381, %v331
        %8318 = vst.msk [vmem:[%s8316 + $0x9] sm:$0xff] %vm381, %v332
        %8319 = vst.msk [vmem:[%s8316 + $0x19] sm:$0xff] %vm381, %v333
        %8320 = vst.msk [vmem:[%s8316 + $0x21] sm:$0xff] %vm381, %v334
        %8321 = vst.msk [vmem:[%s8316 + $0x31] sm:$0xff] %vm381, %v335
        %8322 = vst.msk [vmem:[%s8316 + $0x39] sm:$0xff] %vm381, %v336
        %8323 = vst.msk [vmem:[%s8316 + $0x49] sm:$0xff] %vm381, %v337
        %8324 = vst.msk [vmem:[%s8316 + $0x51] sm:$0xff] %vm381, %v338
        %8325 = vst.msk [vmem:[%s8316 + $0x61] sm:$0xff] %vm381, %v339
        %8326 = vst.msk [vmem:[%s8316 + $0x69] sm:$0xff] %vm381, %v340
        %8327 = vst.msk [vmem:[%s8316 + $0x79] sm:$0xff] %vm381, %v341
        %8328 = vst.msk [vmem:[%s8316 + $0x81] sm:$0xff] %vm381, %v342
        %8329 = vst.msk [vmem:[%s8316 + $0x91] sm:$0xff] %vm381, %v343
        %8330 = vst.msk [vmem:[%s8316 + $0x99] sm:$0xff] %vm381, %v344
        %8331 = vst.msk [vmem:[%s8316 + $0xa9] sm:$0xff] %vm381, %v345
        %8332 = vst.msk [vmem:[%s8316 + $0xb1] sm:$0xff] %vm381, %v346
        %8333 = vst.msk [vmem:[%s8316 + $0xc1] sm:$0xff] %vm381, %v347
        %8334 = vst.msk [vmem:[%s8316 + $0xc9] sm:$0xff] %vm381, %v348
        %8335 = vst.msk [vmem:[%s8316 + $0xd9] sm:$0xff] %vm381, %v349
        %8336 = vst.msk [vmem:[%s8316 + $0xe1] sm:$0xff] %vm381, %v350
        %8337 = vst.msk [vmem:[%s8316 + $0xf1] sm:$0xff] %vm381, %v351
        %8338 = vst.msk [vmem:[%s8316 + $0xf9] sm:$0xff] %vm381, %v352
        %8339 = vst.msk [vmem:[%s8316 + $0x109] sm:$0xff] %vm381, %v353
        %8340 = vst.msk [vmem:[%s8316 + $0x111] sm:$0xff] %vm381, %v354
        %8341 = vst.msk [vmem:[%s8316 + $0x121] sm:$0xff] %vm381, %v355
        %8342 = vst.msk [vmem:[%s8316 + $0x129] sm:$0xff] %vm381, %v356
        %8343 = vst.msk [vmem:[%s8316 + $0x139] sm:$0xff] %vm381, %v357
        %8344 = vst.msk [vmem:[%s8316 + $0x141] sm:$0xff] %vm381, %v358
        %8345 = vst.msk [vmem:[%s8316 + $0x151] sm:$0xff] %vm381, %v359
        %8346 = vst.msk [vmem:[%s8316 + $0x159] sm:$0xff] %vm381, %v360
        %8347 = vst.msk [vmem:[%s8316 + $0x169] sm:$0xff] %vm381, %v361
        %8348 = vst.msk [vmem:[%s8316 + $0x171] sm:$0xff] %vm381, %v362
        %8349 = vst.msk [vmem:[#allocation4] sm:$0xff] %vm381, -inf
        %8350 = vst.msk [vmem:[#allocation4 + $0x8] sm:$0xff] %vm381, -inf
        %8351 = vst.msk [vmem:[#allocation4 + $0x10] sm:$0x3] %vm955, -inf
        %s8352 = scalar_lea.vmem [#allocation4], 408
        %8353 = vst.msk [vmem:[%s8352] sm:$0xff] %vm381, -inf
        %8354 = vst.msk [vmem:[%s8352 + $0x8] sm:$0xff] %vm381, -inf
        %8355 = vst.msk [vmem:[%s8352 + $0x10] sm:$0x3] %vm955, -inf
        %8356 = vst.msk [vmem:[%s8316] sm:$0x1] %vm961, -inf
        %8357 = vst.msk [vmem:[%s8316 + $0x18] sm:$0x1] %vm961, -inf
        %8358 = vst.msk [vmem:[%s8316 + $0x30] sm:$0x1] %vm961, -inf
        %8359 = vst.msk [vmem:[%s8316 + $0x48] sm:$0x1] %vm961, -inf
        %8360 = vst.msk [vmem:[%s8316 + $0x60] sm:$0x1] %vm961, -inf
        %8361 = vst.msk [vmem:[%s8316 + $0x78] sm:$0x1] %vm961, -inf
        %8362 = vst.msk [vmem:[%s8316 + $0x90] sm:$0x1] %vm961, -inf
        %8363 = vst.msk [vmem:[%s8316 + $0xa8] sm:$0x1] %vm961, -inf
        %8364 = vst.msk [vmem:[%s8316 + $0xc0] sm:$0x1] %vm961, -inf
        %8365 = vst.msk [vmem:[%s8316 + $0xd8] sm:$0x1] %vm961, -inf
        %8366 = vst.msk [vmem:[%s8316 + $0xf0] sm:$0x1] %vm961, -inf
        %8367 = vst.msk [vmem:[%s8316 + $0x108] sm:$0x1] %vm961, -inf
        %8368 = vst.msk [vmem:[%s8316 + $0x120] sm:$0x1] %vm961, -inf
        %8369 = vst.msk [vmem:[%s8316 + $0x138] sm:$0x1] %vm961, -inf
        %8370 = vst.msk [vmem:[%s8316 + $0x150] sm:$0x1] %vm961, -inf
        %8371 = vst.msk [vmem:[%s8316 + $0x168] sm:$0x1] %vm961, -inf
        %8372 = vst.msk [vmem:[%s8316 + $0x11] sm:$0x1] %vm961, -inf
        %8373 = vst.msk [vmem:[%s8316 + $0x29] sm:$0x1] %vm961, -inf
        %8374 = vst.msk [vmem:[%s8316 + $0x41] sm:$0x1] %vm961, -inf
        %8375 = vst.msk [vmem:[%s8316 + $0x59] sm:$0x1] %vm961, -inf
        %8376 = vst.msk [vmem:[%s8316 + $0x71] sm:$0x1] %vm961, -inf
        %8377 = vst.msk [vmem:[%s8316 + $0x89] sm:$0x1] %vm961, -inf
        %8378 = vst.msk [vmem:[%s8316 + $0xa1] sm:$0x1] %vm961, -inf
        %8379 = vst.msk [vmem:[%s8316 + $0xb9] sm:$0x1] %vm961, -inf
        %8380 = vst.msk [vmem:[%s8316 + $0xd1] sm:$0x1] %vm961, -inf
        %8381 = vst.msk [vmem:[%s8316 + $0xe9] sm:$0x1] %vm961, -inf
        %8382 = vst.msk [vmem:[%s8316 + $0x101] sm:$0x1] %vm961, -inf
        %8383 = vst.msk [vmem:[%s8316 + $0x119] sm:$0x1] %vm961, -inf
        %8384 = vst.msk [vmem:[%s8316 + $0x131] sm:$0x1] %vm961, -inf
        %8385 = vst.msk [vmem:[%s8316 + $0x149] sm:$0x1] %vm961, -inf
        %8386 = vst.msk [vmem:[%s8316 + $0x161] sm:$0x1] %vm961, -inf
        %8387 = vst.msk [vmem:[%s8316 + $0x179] sm:$0x1] %vm961, -inf
        %v8388 = vld [vmem:[#allocation4] sm:$0xff]
        %v8389 = vld [vmem:[#allocation4 + $0x8] sm:$0xff]
        %v8390 = vld [vmem:[#allocation4 + $0x18] sm:$0xff]
        %v8391 = vld [vmem:[#allocation4 + $0x20] sm:$0xff]
        %v8392 = vld [vmem:[#allocation4 + $0x30] sm:$0xff]
        %v8393 = vld [vmem:[#allocation4 + $0x38] sm:$0xff]
        %v8394 = vld [vmem:[#allocation4 + $0x48] sm:$0xff]
        %v8395 = vld [vmem:[#allocation4 + $0x50] sm:$0xff]
        %v8396 = vld [vmem:[#allocation4 + $0x60] sm:$0xff]
        %v8397 = vld [vmem:[#allocation4 + $0x68] sm:$0xff]
        %v8398 = vld [vmem:[#allocation4 + $0x78] sm:$0xff]
        %v8399 = vld [vmem:[#allocation4 + $0x80] sm:$0xff]
        %v8400 = vld [vmem:[#allocation4 + $0x90] sm:$0xff]
        %v8401 = vld [vmem:[#allocation4 + $0x98] sm:$0xff]
        %v8402 = vld [vmem:[#allocation4 + $0xa8] sm:$0xff]
        %v8403 = vld [vmem:[#allocation4 + $0xb0] sm:$0xff]
        %v8404 = vld [vmem:[#allocation4 + $0xc0] sm:$0xff]
        %v8405 = vld [vmem:[#allocation4 + $0xc8] sm:$0xff]
        %v8406 = vld [vmem:[#allocation4 + $0xd8] sm:$0xff]
        %v8407 = vld [vmem:[#allocation4 + $0xe0] sm:$0xff]
        %v8408 = vld [vmem:[#allocation4 + $0xf0] sm:$0xff]
        %v8409 = vld [vmem:[#allocation4 + $0xf8] sm:$0xff]
        %v8410 = vld [vmem:[#allocation4 + $0x108] sm:$0xff]
        %v8411 = vld [vmem:[#allocation4 + $0x110] sm:$0xff]
        %v8412 = vld [vmem:[#allocation4 + $0x120] sm:$0xff]
        %v8413 = vld [vmem:[#allocation4 + $0x128] sm:$0xff]
        %v8414 = vld [vmem:[#allocation4 + $0x138] sm:$0xff]
        %v8415 = vld [vmem:[#allocation4 + $0x140] sm:$0xff]
        %v8416 = vld [vmem:[#allocation4 + $0x150] sm:$0xff]
        %v8417 = vld [vmem:[#allocation4 + $0x158] sm:$0xff]
        %v8418 = vld [vmem:[#allocation4 + $0x168] sm:$0xff]
        %v8419 = vld [vmem:[#allocation4 + $0x170] sm:$0xff]
        %v8420 = vld [vmem:[#allocation4 + $0x180] sm:$0xff]
        %v8421 = vld [vmem:[#allocation4 + $0x188] sm:$0xff]
        %v8422 = vld [vmem:[#allocation4 + $0x198] sm:$0xff]
        %v8423 = vld [vmem:[#allocation4 + $0x1a0] sm:$0xff]
        %v8424 = vld [vmem:[#allocation4 + $0x1] sm:$0xff]
        %v8425 = vld [vmem:[#allocation4 + $0x9] sm:$0xff]
        %v8426 = vld [vmem:[#allocation4 + $0x19] sm:$0xff]
        %v8427 = vld [vmem:[#allocation4 + $0x21] sm:$0xff]
        %v8428 = vld [vmem:[#allocation4 + $0x31] sm:$0xff]
        %v8429 = vld [vmem:[#allocation4 + $0x39] sm:$0xff]
        %v8430 = vld [vmem:[#allocation4 + $0x49] sm:$0xff]
        %v8431 = vld [vmem:[#allocation4 + $0x51] sm:$0xff]
        %v8432 = vld [vmem:[#allocation4 + $0x61] sm:$0xff]
        %v8433 = vld [vmem:[#allocation4 + $0x69] sm:$0xff]
        %v8434 = vld [vmem:[#allocation4 + $0x79] sm:$0xff]
        %v8435 = vld [vmem:[#allocation4 + $0x81] sm:$0xff]
        %v8436 = vld [vmem:[#allocation4 + $0x91] sm:$0xff]
        %v8437 = vld [vmem:[#allocation4 + $0x99] sm:$0xff]
        %v8438 = vld [vmem:[#allocation4 + $0xa9] sm:$0xff]
        %v8439 = vld [vmem:[#allocation4 + $0xb1] sm:$0xff]
        %v8440 = vld [vmem:[#allocation4 + $0xc1] sm:$0xff]
        %v8441 = vld [vmem:[#allocation4 + $0xc9] sm:$0xff]
        %v8442 = vld [vmem:[#allocation4 + $0xd9] sm:$0xff]
        %v8443 = vld [vmem:[#allocation4 + $0xe1] sm:$0xff]
        %v8444 = vld [vmem:[#allocation4 + $0xf1] sm:$0xff]
        %v8445 = vld [vmem:[#allocation4 + $0xf9] sm:$0xff]
        %v8446 = vld [vmem:[#allocation4 + $0x109] sm:$0xff]
        %v8447 = vld [vmem:[#allocation4 + $0x111] sm:$0xff]
        %v8448 = vld [vmem:[#allocation4 + $0x121] sm:$0xff]
        %v8449 = vld [vmem:[#allocation4 + $0x129] sm:$0xff]
        %v8450 = vld [vmem:[#allocation4 + $0x139] sm:$0xff]
        %v8451 = vld [vmem:[#allocation4 + $0x141] sm:$0xff]
        %v8452 = vld [vmem:[#allocation4 + $0x151] sm:$0xff]
        %v8453 = vld [vmem:[#allocation4 + $0x159] sm:$0xff]
        %v8454 = vld [vmem:[#allocation4 + $0x169] sm:$0xff]
        %v8455 = vld [vmem:[#allocation4 + $0x171] sm:$0xff]
        %v8456 = vld [vmem:[#allocation4 + $0x181] sm:$0xff]
        %v8457 = vld [vmem:[#allocation4 + $0x189] sm:$0xff]
        %v8458 = vld [vmem:[#allocation4 + $0x199] sm:$0xff]
        %v8459 = vld [vmem:[#allocation4 + $0x1a1] sm:$0xff]
        %v8460 = vmax.f32 %v8388, %v8424
        %v8461 = vmax.f32 %v8389, %v8425
        %v8462 = vmax.f32 %v8390, %v8426
        %v8463 = vmax.f32 %v8391, %v8427
        %v8464 = vmax.f32 %v8392, %v8428
        %v8465 = vmax.f32 %v8393, %v8429
        %v8466 = vmax.f32 %v8394, %v8430
        %v8467 = vmax.f32 %v8395, %v8431
        %v8468 = vmax.f32 %v8396, %v8432
        %v8469 = vmax.f32 %v8397, %v8433
        %v8470 = vmax.f32 %v8398, %v8434
        %v8471 = vmax.f32 %v8399, %v8435
        %v8472 = vmax.f32 %v8400, %v8436
        %v8473 = vmax.f32 %v8401, %v8437
        %v8474 = vmax.f32 %v8402, %v8438
        %v8475 = vmax.f32 %v8403, %v8439
        %v8476 = vmax.f32 %v8404, %v8440
        %v8477 = vmax.f32 %v8405, %v8441
        %v8478 = vmax.f32 %v8406, %v8442
        %v8479 = vmax.f32 %v8407, %v8443
        %v8480 = vmax.f32 %v8408, %v8444
        %v8481 = vmax.f32 %v8409, %v8445
        %v8482 = vmax.f32 %v8410, %v8446
        %v8483 = vmax.f32 %v8411, %v8447
        %v8484 = vmax.f32 %v8412, %v8448
        %v8485 = vmax.f32 %v8413, %v8449
        %v8486 = vmax.f32 %v8414, %v8450
        %v8487 = vmax.f32 %v8415, %v8451
        %v8488 = vmax.f32 %v8416, %v8452
        %v8489 = vmax.f32 %v8417, %v8453
        %v8490 = vmax.f32 %v8418, %v8454
        %v8491 = vmax.f32 %v8419, %v8455
        %v8492 = vmax.f32 %v8420, %v8456
        %v8493 = vmax.f32 %v8421, %v8457
        %v8494 = vmax.f32 %v8422, %v8458
        %v8495 = vmax.f32 %v8423, %v8459
        %v8496 = vld [vmem:[#allocation4 + $0x2] sm:$0xff]
        %v8497 = vld [vmem:[#allocation4 + $0xa] sm:$0xff]
        %v8498 = vld [vmem:[#allocation4 + $0x1a] sm:$0xff]
        %v8499 = vld [vmem:[#allocation4 + $0x22] sm:$0xff]
        %v8500 = vld [vmem:[#allocation4 + $0x32] sm:$0xff]
        %v8501 = vld [vmem:[#allocation4 + $0x3a] sm:$0xff]
        %v8502 = vld [vmem:[#allocation4 + $0x4a] sm:$0xff]
        %v8503 = vld [vmem:[#allocation4 + $0x52] sm:$0xff]
        %v8504 = vld [vmem:[#allocation4 + $0x62] sm:$0xff]
        %v8505 = vld [vmem:[#allocation4 + $0x6a] sm:$0xff]
        %v8506 = vld [vmem:[#allocation4 + $0x7a] sm:$0xff]
        %v8507 = vld [vmem:[#allocation4 + $0x82] sm:$0xff]
        %v8508 = vld [vmem:[#allocation4 + $0x92] sm:$0xff]
        %v8509 = vld [vmem:[#allocation4 + $0x9a] sm:$0xff]
        %v8510 = vld [vmem:[#allocation4 + $0xaa] sm:$0xff]
        %v8511 = vld [vmem:[#allocation4 + $0xb2] sm:$0xff]
        %v8512 = vld [vmem:[#allocation4 + $0xc2] sm:$0xff]
        %v8513 = vld [vmem:[#allocation4 + $0xca] sm:$0xff]
        %v8514 = vld [vmem:[#allocation4 + $0xda] sm:$0xff]
        %v8515 = vld [vmem:[#allocation4 + $0xe2] sm:$0xff]
        %v8516 = vld [vmem:[#allocation4 + $0xf2] sm:$0xff]
        %v8517 = vld [vmem:[#allocation4 + $0xfa] sm:$0xff]
        %v8518 = vld [vmem:[#allocation4 + $0x10a] sm:$0xff]
        %v8519 = vld [vmem:[#allocation4 + $0x112] sm:$0xff]
        %v8520 = vld [vmem:[#allocation4 + $0x122] sm:$0xff]
        %v8521 = vld [vmem:[#allocation4 + $0x12a] sm:$0xff]
        %v8522 = vld [vmem:[#allocation4 + $0x13a] sm:$0xff]
        %v8523 = vld [vmem:[#allocation4 + $0x142] sm:$0xff]
        %v8524 = vld [vmem:[#allocation4 + $0x152] sm:$0xff]
        %v8525 = vld [vmem:[#allocation4 + $0x15a] sm:$0xff]
        %v8526 = vld [vmem:[#allocation4 + $0x16a] sm:$0xff]
        %v8527 = vld [vmem:[#allocation4 + $0x172] sm:$0xff]
        %v8528 = vld [vmem:[#allocation4 + $0x182] sm:$0xff]
        %v8529 = vld [vmem:[#allocation4 + $0x18a] sm:$0xff]
        %v8530 = vld [vmem:[#allocation4 + $0x19a] sm:$0xff]
        %v8531 = vld [vmem:[#allocation4 + $0x1a2] sm:$0xff]
        %v8532 = vmax.f32 %v8460, %v8496
        %v8533 = vmax.f32 %v8461, %v8497
        %v8534 = vmax.f32 %v8462, %v8498
        %v8535 = vmax.f32 %v8463, %v8499
        %v8536 = vmax.f32 %v8464, %v8500
        %v8537 = vmax.f32 %v8465, %v8501
        %v8538 = vmax.f32 %v8466, %v8502
        %v8539 = vmax.f32 %v8467, %v8503
        %v8540 = vmax.f32 %v8468, %v8504
        %v8541 = vmax.f32 %v8469, %v8505
        %v8542 = vmax.f32 %v8470, %v8506
        %v8543 = vmax.f32 %v8471, %v8507
        %v8544 = vmax.f32 %v8472, %v8508
        %v8545 = vmax.f32 %v8473, %v8509
        %v8546 = vmax.f32 %v8474, %v8510
        %v8547 = vmax.f32 %v8475, %v8511
        %v8548 = vmax.f32 %v8476, %v8512
        %v8549 = vmax.f32 %v8477, %v8513
        %v8550 = vmax.f32 %v8478, %v8514
        %v8551 = vmax.f32 %v8479, %v8515
        %v8552 = vmax.f32 %v8480, %v8516
        %v8553 = vmax.f32 %v8481, %v8517
        %v8554 = vmax.f32 %v8482, %v8518
        %v8555 = vmax.f32 %v8483, %v8519
        %v8556 = vmax.f32 %v8484, %v8520
        %v8557 = vmax.f32 %v8485, %v8521
        %v8558 = vmax.f32 %v8486, %v8522
        %v8559 = vmax.f32 %v8487, %v8523
        %v8560 = vmax.f32 %v8488, %v8524
        %v8561 = vmax.f32 %v8489, %v8525
        %v8562 = vmax.f32 %v8490, %v8526
        %v8563 = vmax.f32 %v8491, %v8527
        %v8564 = vmax.f32 %v8492, %v8528
        %v8565 = vmax.f32 %v8493, %v8529
        %v8566 = vmax.f32 %v8494, %v8530
        %v8567 = vmax.f32 %v8495, %v8531
        %v8568 = vmax.f32 %v8532, %v8534
        %v8569 = vmax.f32 %v8533, %v8535
        %v8570 = vmax.f32 %v8534, %v8536
        %v8571 = vmax.f32 %v8535, %v8537
        %v8572 = vmax.f32 %v8536, %v8538
        %v8573 = vmax.f32 %v8537, %v8539
        %v8574 = vmax.f32 %v8538, %v8540
        %v8575 = vmax.f32 %v8539, %v8541
        %v8576 = vmax.f32 %v8540, %v8542
        %v8577 = vmax.f32 %v8541, %v8543
        %v8578 = vmax.f32 %v8542, %v8544
        %v8579 = vmax.f32 %v8543, %v8545
        %v8580 = vmax.f32 %v8544, %v8546
        %v8581 = vmax.f32 %v8545, %v8547
        %v8582 = vmax.f32 %v8546, %v8548
        %v8583 = vmax.f32 %v8547, %v8549
        %v8584 = vmax.f32 %v8548, %v8550
        %v8585 = vmax.f32 %v8549, %v8551
        %v8586 = vmax.f32 %v8550, %v8552
        %v8587 = vmax.f32 %v8551, %v8553
        %v8588 = vmax.f32 %v8552, %v8554
        %v8589 = vmax.f32 %v8553, %v8555
        %v8590 = vmax.f32 %v8554, %v8556
        %v8591 = vmax.f32 %v8555, %v8557
        %v8592 = vmax.f32 %v8556, %v8558
        %v8593 = vmax.f32 %v8557, %v8559
        %v8594 = vmax.f32 %v8558, %v8560
        %v8595 = vmax.f32 %v8559, %v8561
        %v8596 = vmax.f32 %v8560, %v8562
        %v8597 = vmax.f32 %v8561, %v8563
        %v8598 = vmax.f32 %v8562, %v8564
        %v8599 = vmax.f32 %v8563, %v8565
        %v8600 = vmax.f32 %v8568, %v8536
        %v8601 = vmax.f32 %v8569, %v8537
        %v8602 = vmax.f32 %v8570, %v8538
        %v8603 = vmax.f32 %v8571, %v8539
        %v8604 = vmax.f32 %v8572, %v8540
        %v8605 = vmax.f32 %v8573, %v8541
        %v8606 = vmax.f32 %v8574, %v8542
        %v8607 = vmax.f32 %v8575, %v8543
        %v8608 = vmax.f32 %v8576, %v8544
        %v8609 = vmax.f32 %v8577, %v8545
        %v8610 = vmax.f32 %v8578, %v8546
        %v8611 = vmax.f32 %v8579, %v8547
        %v8612 = vmax.f32 %v8580, %v8548
        %v8613 = vmax.f32 %v8581, %v8549
        %v8614 = vmax.f32 %v8582, %v8550
        %v8615 = vmax.f32 %v8583, %v8551
        %v8616 = vmax.f32 %v8584, %v8552
        %v8617 = vmax.f32 %v8585, %v8553
        %v8618 = vmax.f32 %v8586, %v8554
        %v8619 = vmax.f32 %v8587, %v8555
        %v8620 = vmax.f32 %v8588, %v8556
        %v8621 = vmax.f32 %v8589, %v8557
        %v8622 = vmax.f32 %v8590, %v8558
        %v8623 = vmax.f32 %v8591, %v8559
        %v8624 = vmax.f32 %v8592, %v8560
        %v8625 = vmax.f32 %v8593, %v8561
        %v8626 = vmax.f32 %v8594, %v8562
        %v8627 = vmax.f32 %v8595, %v8563
        %v8628 = vmax.f32 %v8596, %v8564
        %v8629 = vmax.f32 %v8597, %v8565
        %v8630 = vmax.f32 %v8598, %v8566
        %v8631 = vmax.f32 %v8599, %v8567
        %v8632 = vld [vmem:[%s7] sm:$0xf]
        %v8633 = vld [vmem:[%s8] sm:$0x1]
        %v8635 = vperm.slane %v8633, 0
        %v8638 = vsel %vm381, %v8600, 0
        %v8641 = vsel %vm381, %v8601, 0
        %v8644 = vsel %vm381, %v8602, 0
        %v8647 = vsel %vm381, %v8603, 0
        %v8650 = vsel %vm381, %v8604, 0
        %v8653 = vsel %vm381, %v8605, 0
        %v8656 = vsel %vm381, %v8606, 0
        %v8659 = vsel %vm381, %v8607, 0
        %v8662 = vsel %vm381, %v8608, 0
        %v8665 = vsel %vm381, %v8609, 0
        %v8668 = vsel %vm381, %v8610, 0
        %v8671 = vsel %vm381, %v8611, 0
        %v8674 = vsel %vm381, %v8612, 0
        %v8677 = vsel %vm381, %v8613, 0
        %v8680 = vsel %vm381, %v8614, 0
        %v8683 = vsel %vm381, %v8615, 0
        %v8686 = vsel %vm381, %v8616, 0
        %v8689 = vsel %vm381, %v8617, 0
        %v8692 = vsel %vm381, %v8618, 0
        %v8695 = vsel %vm381, %v8619, 0
        %v8698 = vsel %vm381, %v8620, 0
        %v8701 = vsel %vm381, %v8621, 0
        %v8704 = vsel %vm381, %v8622, 0
        %v8707 = vsel %vm381, %v8623, 0
        %v8710 = vsel %vm381, %v8624, 0
        %v8713 = vsel %vm381, %v8625, 0
        %v8716 = vsel %vm381, %v8626, 0
        %v8719 = vsel %vm381, %v8627, 0
        %v8722 = vsel %vm381, %v8628, 0
        %v8725 = vsel %vm381, %v8629, 0
        %v8728 = vsel %vm381, %v8630, 0
        %v8731 = vsel %vm381, %v8631, 0
        %v8734 = vsel %vm478, %v8632, 0
        %8736 = vmatpush.msra.mxu0 0.0
        %8737 = vmatpush.msra.mxu0 0.0
        %8738 = vmatpush.msra.mxu0 0.0
        %8739 = vmatpush.msra.mxu0 0.0
        %8740 = vmatpush.msra.mxu0 0.0
        %8741 = vmatpush.msra.mxu0 0.0
        %8742 = vmatpush.msra.mxu0 0.0
        %8743 = vmatpush.msra.mxu0 0.0
        %8744 = vmatpush.msra.mxu0 0.0
        %8745 = vmatpush.msra.mxu0 0.0
        %8746 = vmatpush.msra.mxu0 0.0
        %8747 = vmatpush.msra.mxu0 0.0
        %8748 = vmatpush.msra.mxu0 0.0
        %8749 = vmatpush.msra.mxu0 0.0
        %8750 = vmatpush.msra.mxu0 0.0
        %8751 = vmatpush.msra.mxu0 %v8734
        %8752 = vmatmul.f32.gmra.mxu0 %v8638
        %v8753 = vpop.f32.mrf.mxu0
        %v8754 = vadd.f32 %v8635, %v8753
        %8755 = vmatmul.f32.gmra.mxu0 %v8641
        %v8756 = vpop.f32.mrf.mxu0
        %v8757 = vadd.f32 %v8635, %v8756
        %8758 = vmatmul.f32.gmra.mxu0 %v8644
        %v8759 = vpop.f32.mrf.mxu0
        %v8760 = vadd.f32 %v8635, %v8759
        %8761 = vmatmul.f32.gmra.mxu0 %v8647
        %v8762 = vpop.f32.mrf.mxu0
        %v8763 = vadd.f32 %v8635, %v8762
        %8764 = vmatmul.f32.gmra.mxu0 %v8650
        %v8765 = vpop.f32.mrf.mxu0
        %v8766 = vadd.f32 %v8635, %v8765
        %8767 = vmatmul.f32.gmra.mxu0 %v8653
        %v8768 = vpop.f32.mrf.mxu0
        %v8769 = vadd.f32 %v8635, %v8768
        %8770 = vmatmul.f32.gmra.mxu0 %v8656
        %v8771 = vpop.f32.mrf.mxu0
        %v8772 = vadd.f32 %v8635, %v8771
        %8773 = vmatmul.f32.gmra.mxu0 %v8659
        %v8774 = vpop.f32.mrf.mxu0
        %v8775 = vadd.f32 %v8635, %v8774
        %8776 = vmatmul.f32.gmra.mxu0 %v8662
        %v8777 = vpop.f32.mrf.mxu0
        %v8778 = vadd.f32 %v8635, %v8777
        %8779 = vmatmul.f32.gmra.mxu0 %v8665
        %v8780 = vpop.f32.mrf.mxu0
        %v8781 = vadd.f32 %v8635, %v8780
        %8782 = vmatmul.f32.gmra.mxu0 %v8668
        %v8783 = vpop.f32.mrf.mxu0
        %v8784 = vadd.f32 %v8635, %v8783
        %8785 = vmatmul.f32.gmra.mxu0 %v8671
        %v8786 = vpop.f32.mrf.mxu0
        %v8787 = vadd.f32 %v8635, %v8786
        %8788 = vmatmul.f32.gmra.mxu0 %v8674
        %v8789 = vpop.f32.mrf.mxu0
        %v8790 = vadd.f32 %v8635, %v8789
        %8791 = vmatmul.f32.gmra.mxu0 %v8677
        %v8792 = vpop.f32.mrf.mxu0
        %v8793 = vadd.f32 %v8635, %v8792
        %8794 = vmatmul.f32.gmra.mxu0 %v8680
        %v8795 = vpop.f32.mrf.mxu0
        %v8796 = vadd.f32 %v8635, %v8795
        %8797 = vmatmul.f32.gmra.mxu0 %v8683
        %v8798 = vpop.f32.mrf.mxu0
        %v8799 = vadd.f32 %v8635, %v8798
        %8800 = vmatmul.f32.gmra.mxu0 %v8686
        %v8801 = vpop.f32.mrf.mxu0
        %v8802 = vadd.f32 %v8635, %v8801
        %8803 = vmatmul.f32.gmra.mxu0 %v8689
        %v8804 = vpop.f32.mrf.mxu0
        %v8805 = vadd.f32 %v8635, %v8804
        %8806 = vmatmul.f32.gmra.mxu0 %v8692
        %v8807 = vpop.f32.mrf.mxu0
        %v8808 = vadd.f32 %v8635, %v8807
        %8809 = vmatmul.f32.gmra.mxu0 %v8695
        %v8810 = vpop.f32.mrf.mxu0
        %v8811 = vadd.f32 %v8635, %v8810
        %8812 = vmatmul.f32.gmra.mxu0 %v8698
        %v8813 = vpop.f32.mrf.mxu0
        %v8814 = vadd.f32 %v8635, %v8813
        %8815 = vmatmul.f32.gmra.mxu0 %v8701
        %v8816 = vpop.f32.mrf.mxu0
        %v8817 = vadd.f32 %v8635, %v8816
        %8818 = vmatmul.f32.gmra.mxu0 %v8704
        %v8819 = vpop.f32.mrf.mxu0
        %v8820 = vadd.f32 %v8635, %v8819
        %8821 = vmatmul.f32.gmra.mxu0 %v8707
        %v8822 = vpop.f32.mrf.mxu0
        %v8823 = vadd.f32 %v8635, %v8822
        %8824 = vmatmul.f32.gmra.mxu0 %v8710
        %v8825 = vpop.f32.mrf.mxu0
        %v8826 = vadd.f32 %v8635, %v8825
        %8827 = vmatmul.f32.gmra.mxu0 %v8713
        %v8828 = vpop.f32.mrf.mxu0
        %v8829 = vadd.f32 %v8635, %v8828
        %8830 = vmatmul.f32.gmra.mxu0 %v8716
        %v8831 = vpop.f32.mrf.mxu0
        %v8832 = vadd.f32 %v8635, %v8831
        %8833 = vmatmul.f32.gmra.mxu0 %v8719
        %v8834 = vpop.f32.mrf.mxu0
        %v8835 = vadd.f32 %v8635, %v8834
        %8836 = vmatmul.f32.gmra.mxu0 %v8722
        %v8837 = vpop.f32.mrf.mxu0
        %v8838 = vadd.f32 %v8635, %v8837
        %8839 = vmatmul.f32.gmra.mxu0 %v8725
        %v8840 = vpop.f32.mrf.mxu0
        %v8841 = vadd.f32 %v8635, %v8840
        %8842 = vmatmul.f32.gmra.mxu0 %v8728
        %v8843 = vpop.f32.mrf.mxu0
        %v8844 = vadd.f32 %v8635, %v8843
        %8845 = vmatmul.f32.gmra.mxu0 %v8731
        %v8846 = vpop.f32.mrf.mxu0
        %v8847 = vadd.f32 %v8635, %v8846
        %8848 = vdwg.mxu0
        %v8849 = vmax.f32 %v8754, 0.0
        %v8850 = vmax.f32 %v8757, 0.0
        %v8851 = vmax.f32 %v8760, 0.0
        %v8852 = vmax.f32 %v8763, 0.0
        %v8853 = vmax.f32 %v8766, 0.0
        %v8854 = vmax.f32 %v8769, 0.0
        %v8855 = vmax.f32 %v8772, 0.0
        %v8856 = vmax.f32 %v8775, 0.0
        %v8857 = vmax.f32 %v8778, 0.0
        %v8858 = vmax.f32 %v8781, 0.0
        %v8859 = vmax.f32 %v8784, 0.0
        %v8860 = vmax.f32 %v8787, 0.0
        %v8861 = vmax.f32 %v8790, 0.0
        %v8862 = vmax.f32 %v8793, 0.0
        %v8863 = vmax.f32 %v8796, 0.0
        %v8864 = vmax.f32 %v8799, 0.0
        %v8865 = vmax.f32 %v8802, 0.0
        %v8866 = vmax.f32 %v8805, 0.0
        %v8867 = vmax.f32 %v8808, 0.0
        %v8868 = vmax.f32 %v8811, 0.0
        %v8869 = vmax.f32 %v8814, 0.0
        %v8870 = vmax.f32 %v8817, 0.0
        %v8871 = vmax.f32 %v8820, 0.0
        %v8872 = vmax.f32 %v8823, 0.0
        %v8873 = vmax.f32 %v8826, 0.0
        %v8874 = vmax.f32 %v8829, 0.0
        %v8875 = vmax.f32 %v8832, 0.0
        %v8876 = vmax.f32 %v8835, 0.0
        %v8877 = vmax.f32 %v8838, 0.0
        %v8878 = vmax.f32 %v8841, 0.0
        %v8879 = vmax.f32 %v8844, 0.0
        %v8880 = vmax.f32 %v8847, 0.0
        %8913 = vrot.lane.b32.xlu0 %v2957, 8
        %v8914 = vpop.permute.xlu0 %8913
        %8915 = vrot.lane.b32.xlu0 %v2958, 8
        %v8916 = vpop.permute.xlu0 %8915
        %8917 = vrot.lane.b32.xlu0 %v2959, 8
        %v8918 = vpop.permute.xlu0 %8917
        %8919 = vrot.lane.b32.xlu0 %v2960, 8
        %v8920 = vpop.permute.xlu0 %8919
        %8921 = vrot.lane.b32.xlu0 %v2961, 8
        %v8922 = vpop.permute.xlu0 %8921
        %8923 = vrot.lane.b32.xlu0 %v2962, 8
        %v8924 = vpop.permute.xlu0 %8923
        %8925 = vrot.lane.b32.xlu0 %v2963, 8
        %v8926 = vpop.permute.xlu0 %8925
        %8927 = vrot.lane.b32.xlu0 %v2964, 8
        %v8928 = vpop.permute.xlu0 %8927
        %8929 = vrot.lane.b32.xlu0 %v2965, 8
        %v8930 = vpop.permute.xlu0 %8929
        %8931 = vrot.lane.b32.xlu0 %v2966, 8
        %v8932 = vpop.permute.xlu0 %8931
        %8933 = vrot.lane.b32.xlu0 %v2967, 8
        %v8934 = vpop.permute.xlu0 %8933
        %8935 = vrot.lane.b32.xlu0 %v2968, 8
        %v8936 = vpop.permute.xlu0 %8935
        %8937 = vrot.lane.b32.xlu0 %v2969, 8
        %v8938 = vpop.permute.xlu0 %8937
        %8939 = vrot.lane.b32.xlu0 %v2970, 8
        %v8940 = vpop.permute.xlu0 %8939
        %8941 = vrot.lane.b32.xlu0 %v2971, 8
        %v8942 = vpop.permute.xlu0 %8941
        %8943 = vrot.lane.b32.xlu0 %v2972, 8
        %v8944 = vpop.permute.xlu0 %8943
        %8945 = vrot.lane.b32.xlu0 %v2973, 8
        %v8946 = vpop.permute.xlu0 %8945
        %8947 = vrot.lane.b32.xlu0 %v2974, 8
        %v8948 = vpop.permute.xlu0 %8947
        %8949 = vrot.lane.b32.xlu0 %v2975, 8
        %v8950 = vpop.permute.xlu0 %8949
        %8951 = vrot.lane.b32.xlu0 %v2976, 8
        %v8952 = vpop.permute.xlu0 %8951
        %8953 = vrot.lane.b32.xlu0 %v2977, 8
        %v8954 = vpop.permute.xlu0 %8953
        %8955 = vrot.lane.b32.xlu0 %v2978, 8
        %v8956 = vpop.permute.xlu0 %8955
        %8957 = vrot.lane.b32.xlu0 %v2979, 8
        %v8958 = vpop.permute.xlu0 %8957
        %8959 = vrot.lane.b32.xlu0 %v2980, 8
        %v8960 = vpop.permute.xlu0 %8959
        %8961 = vrot.lane.b32.xlu0 %v2981, 8
        %v8962 = vpop.permute.xlu0 %8961
        %8963 = vrot.lane.b32.xlu0 %v2982, 8
        %v8964 = vpop.permute.xlu0 %8963
        %8965 = vrot.lane.b32.xlu0 %v2983, 8
        %v8966 = vpop.permute.xlu0 %8965
        %8967 = vrot.lane.b32.xlu0 %v2984, 8
        %v8968 = vpop.permute.xlu0 %8967
        %8969 = vrot.lane.b32.xlu0 %v2985, 8
        %v8970 = vpop.permute.xlu0 %8969
        %8971 = vrot.lane.b32.xlu0 %v2986, 8
        %v8972 = vpop.permute.xlu0 %8971
        %8973 = vrot.lane.b32.xlu0 %v2987, 8
        %v8974 = vpop.permute.xlu0 %8973
        %8975 = vrot.lane.b32.xlu0 %v2988, 8
        %v8976 = vpop.permute.xlu0 %8975
        %9041 = vrot.lane.b32.xlu0 %v8284, 16
        %v9042 = vpop.permute.xlu0 %9041
        %9043 = vrot.lane.b32.xlu0 %v8285, 16
        %v9044 = vpop.permute.xlu0 %9043
        %9045 = vrot.lane.b32.xlu0 %v8286, 16
        %v9046 = vpop.permute.xlu0 %9045
        %9047 = vrot.lane.b32.xlu0 %v8287, 16
        %v9048 = vpop.permute.xlu0 %9047
        %9049 = vrot.lane.b32.xlu0 %v8288, 16
        %v9050 = vpop.permute.xlu0 %9049
        %9051 = vrot.lane.b32.xlu0 %v8289, 16
        %v9052 = vpop.permute.xlu0 %9051
        %9053 = vrot.lane.b32.xlu0 %v8290, 16
        %v9054 = vpop.permute.xlu0 %9053
        %9055 = vrot.lane.b32.xlu0 %v8291, 16
        %v9056 = vpop.permute.xlu0 %9055
        %9057 = vrot.lane.b32.xlu0 %v8292, 16
        %v9058 = vpop.permute.xlu0 %9057
        %9059 = vrot.lane.b32.xlu0 %v8293, 16
        %v9060 = vpop.permute.xlu0 %9059
        %9061 = vrot.lane.b32.xlu0 %v8294, 16
        %v9062 = vpop.permute.xlu0 %9061
        %9063 = vrot.lane.b32.xlu0 %v8295, 16
        %v9064 = vpop.permute.xlu0 %9063
        %9065 = vrot.lane.b32.xlu0 %v8296, 16
        %v9066 = vpop.permute.xlu0 %9065
        %9067 = vrot.lane.b32.xlu0 %v8297, 16
        %v9068 = vpop.permute.xlu0 %9067
        %9069 = vrot.lane.b32.xlu0 %v8298, 16
        %v9070 = vpop.permute.xlu0 %9069
        %9071 = vrot.lane.b32.xlu0 %v8299, 16
        %v9072 = vpop.permute.xlu0 %9071
        %9073 = vrot.lane.b32.xlu0 %v8300, 16
        %v9074 = vpop.permute.xlu0 %9073
        %9075 = vrot.lane.b32.xlu0 %v8301, 16
        %v9076 = vpop.permute.xlu0 %9075
        %9077 = vrot.lane.b32.xlu0 %v8302, 16
        %v9078 = vpop.permute.xlu0 %9077
        %9079 = vrot.lane.b32.xlu0 %v8303, 16
        %v9080 = vpop.permute.xlu0 %9079
        %9081 = vrot.lane.b32.xlu0 %v8304, 16
        %v9082 = vpop.permute.xlu0 %9081
        %9083 = vrot.lane.b32.xlu0 %v8305, 16
        %v9084 = vpop.permute.xlu0 %9083
        %9085 = vrot.lane.b32.xlu0 %v8306, 16
        %v9086 = vpop.permute.xlu0 %9085
        %9087 = vrot.lane.b32.xlu0 %v8307, 16
        %v9088 = vpop.permute.xlu0 %9087
        %9089 = vrot.lane.b32.xlu0 %v8308, 16
        %v9090 = vpop.permute.xlu0 %9089
        %9091 = vrot.lane.b32.xlu0 %v8309, 16
        %v9092 = vpop.permute.xlu0 %9091
        %9093 = vrot.lane.b32.xlu0 %v8310, 16
        %v9094 = vpop.permute.xlu0 %9093
        %9095 = vrot.lane.b32.xlu0 %v8311, 16
        %v9096 = vpop.permute.xlu0 %9095
        %9097 = vrot.lane.b32.xlu0 %v8312, 16
        %v9098 = vpop.permute.xlu0 %9097
        %9099 = vrot.lane.b32.xlu0 %v8313, 16
        %v9100 = vpop.permute.xlu0 %9099
        %9101 = vrot.lane.b32.xlu0 %v8314, 16
        %v9102 = vpop.permute.xlu0 %9101
        %9103 = vrot.lane.b32.xlu0 %v8315, 16
        %v9104 = vpop.permute.xlu0 %9103
        %9169 = vrot.lane.b32.xlu0 %v8849, 24
        %v9170 = vpop.permute.xlu0 %9169
        %9171 = vrot.lane.b32.xlu0 %v8850, 24
        %v9172 = vpop.permute.xlu0 %9171
        %9173 = vrot.lane.b32.xlu0 %v8851, 24
        %v9174 = vpop.permute.xlu0 %9173
        %9175 = vrot.lane.b32.xlu0 %v8852, 24
        %v9176 = vpop.permute.xlu0 %9175
        %9177 = vrot.lane.b32.xlu0 %v8853, 24
        %v9178 = vpop.permute.xlu0 %9177
        %9179 = vrot.lane.b32.xlu0 %v8854, 24
        %v9180 = vpop.permute.xlu0 %9179
        %9181 = vrot.lane.b32.xlu0 %v8855, 24
        %v9182 = vpop.permute.xlu0 %9181
        %9183 = vrot.lane.b32.xlu0 %v8856, 24
        %v9184 = vpop.permute.xlu0 %9183
        %9185 = vrot.lane.b32.xlu0 %v8857, 24
        %v9186 = vpop.permute.xlu0 %9185
        %9187 = vrot.lane.b32.xlu0 %v8858, 24
        %v9188 = vpop.permute.xlu0 %9187
        %9189 = vrot.lane.b32.xlu0 %v8859, 24
        %v9190 = vpop.permute.xlu0 %9189
        %9191 = vrot.lane.b32.xlu0 %v8860, 24
        %v9192 = vpop.permute.xlu0 %9191
        %9193 = vrot.lane.b32.xlu0 %v8861, 24
        %v9194 = vpop.permute.xlu0 %9193
        %9195 = vrot.lane.b32.xlu0 %v8862, 24
        %v9196 = vpop.permute.xlu0 %9195
        %9197 = vrot.lane.b32.xlu0 %v8863, 24
        %v9198 = vpop.permute.xlu0 %9197
        %9199 = vrot.lane.b32.xlu0 %v8864, 24
        %v9200 = vpop.permute.xlu0 %9199
        %9201 = vrot.lane.b32.xlu0 %v8865, 24
        %v9202 = vpop.permute.xlu0 %9201
        %9203 = vrot.lane.b32.xlu0 %v8866, 24
        %v9204 = vpop.permute.xlu0 %9203
        %9205 = vrot.lane.b32.xlu0 %v8867, 24
        %v9206 = vpop.permute.xlu0 %9205
        %9207 = vrot.lane.b32.xlu0 %v8868, 24
        %v9208 = vpop.permute.xlu0 %9207
        %9209 = vrot.lane.b32.xlu0 %v8869, 24
        %v9210 = vpop.permute.xlu0 %9209
        %9211 = vrot.lane.b32.xlu0 %v8870, 24
        %v9212 = vpop.permute.xlu0 %9211
        %9213 = vrot.lane.b32.xlu0 %v8871, 24
        %v9214 = vpop.permute.xlu0 %9213
        %9215 = vrot.lane.b32.xlu0 %v8872, 24
        %v9216 = vpop.permute.xlu0 %9215
        %9217 = vrot.lane.b32.xlu0 %v8873, 24
        %v9218 = vpop.permute.xlu0 %9217
        %9219 = vrot.lane.b32.xlu0 %v8874, 24
        %v9220 = vpop.permute.xlu0 %9219
        %9221 = vrot.lane.b32.xlu0 %v8875, 24
        %v9222 = vpop.permute.xlu0 %9221
        %9223 = vrot.lane.b32.xlu0 %v8876, 24
        %v9224 = vpop.permute.xlu0 %9223
        %9225 = vrot.lane.b32.xlu0 %v8877, 24
        %v9226 = vpop.permute.xlu0 %9225
        %9227 = vrot.lane.b32.xlu0 %v8878, 24
        %v9228 = vpop.permute.xlu0 %9227
        %9229 = vrot.lane.b32.xlu0 %v8879, 24
        %v9230 = vpop.permute.xlu0 %9229
        %9231 = vrot.lane.b32.xlu0 %v8880, 24
        %v9232 = vpop.permute.xlu0 %9231
        %v9265 = vsel %vm1378, %v824, %v8914
        %v9266 = vsel %vm1378, %v827, %v8916
        %v9267 = vsel %vm1378, %v830, %v8918
        %v9268 = vsel %vm1378, %v833, %v8920
        %v9269 = vsel %vm1378, %v836, %v8922
        %v9270 = vsel %vm1378, %v839, %v8924
        %v9271 = vsel %vm1378, %v842, %v8926
        %v9272 = vsel %vm1378, %v845, %v8928
        %v9273 = vsel %vm1378, %v848, %v8930
        %v9274 = vsel %vm1378, %v851, %v8932
        %v9275 = vsel %vm1378, %v854, %v8934
        %v9276 = vsel %vm1378, %v857, %v8936
        %v9277 = vsel %vm1378, %v860, %v8938
        %v9278 = vsel %vm1378, %v863, %v8940
        %v9279 = vsel %vm1378, %v866, %v8942
        %v9280 = vsel %vm1378, %v869, %v8944
        %v9281 = vsel %vm1378, %v872, %v8946
        %v9282 = vsel %vm1378, %v875, %v8948
        %v9283 = vsel %vm1378, %v878, %v8950
        %v9284 = vsel %vm1378, %v881, %v8952
        %v9285 = vsel %vm1378, %v884, %v8954
        %v9286 = vsel %vm1378, %v887, %v8956
        %v9287 = vsel %vm1378, %v890, %v8958
        %v9288 = vsel %vm1378, %v893, %v8960
        %v9289 = vsel %vm1378, %v896, %v8962
        %v9290 = vsel %vm1378, %v899, %v8964
        %v9291 = vsel %vm1378, %v902, %v8966
        %v9292 = vsel %vm1378, %v905, %v8968
        %v9293 = vsel %vm1378, %v908, %v8970
        %v9294 = vsel %vm1378, %v911, %v8972
        %v9295 = vsel %vm1378, %v914, %v8974
        %v9296 = vsel %vm1378, %v917, %v8976
        %v9297 = vsel %vm3836, %v9265, %v9042
        %v9298 = vsel %vm3836, %v9266, %v9044
        %v9299 = vsel %vm3836, %v9267, %v9046
        %v9300 = vsel %vm3836, %v9268, %v9048
        %v9301 = vsel %vm3836, %v9269, %v9050
        %v9302 = vsel %vm3836, %v9270, %v9052
        %v9303 = vsel %vm3836, %v9271, %v9054
        %v9304 = vsel %vm3836, %v9272, %v9056
        %v9305 = vsel %vm3836, %v9273, %v9058
        %v9306 = vsel %vm3836, %v9274, %v9060
        %v9307 = vsel %vm3836, %v9275, %v9062
        %v9308 = vsel %vm3836, %v9276, %v9064
        %v9309 = vsel %vm3836, %v9277, %v9066
        %v9310 = vsel %vm3836, %v9278, %v9068
        %v9311 = vsel %vm3836, %v9279, %v9070
        %v9312 = vsel %vm3836, %v9280, %v9072
        %v9313 = vsel %vm3836, %v9281, %v9074
        %v9314 = vsel %vm3836, %v9282, %v9076
        %v9315 = vsel %vm3836, %v9283, %v9078
        %v9316 = vsel %vm3836, %v9284, %v9080
        %v9317 = vsel %vm3836, %v9285, %v9082
        %v9318 = vsel %vm3836, %v9286, %v9084
        %v9319 = vsel %vm3836, %v9287, %v9086
        %v9320 = vsel %vm3836, %v9288, %v9088
        %v9321 = vsel %vm3836, %v9289, %v9090
        %v9322 = vsel %vm3836, %v9290, %v9092
        %v9323 = vsel %vm3836, %v9291, %v9094
        %v9324 = vsel %vm3836, %v9292, %v9096
        %v9325 = vsel %vm3836, %v9293, %v9098
        %v9326 = vsel %vm3836, %v9294, %v9100
        %v9327 = vsel %vm3836, %v9295, %v9102
        %v9328 = vsel %vm3836, %v9296, %v9104
        %vm9329 = vcmask 195584
        %v9330 = vsel %vm9329, %v9297, %v9170
        %v9331 = vsel %vm9329, %v9298, %v9172
        %v9332 = vsel %vm9329, %v9299, %v9174
        %v9333 = vsel %vm9329, %v9300, %v9176
        %v9334 = vsel %vm9329, %v9301, %v9178
        %v9335 = vsel %vm9329, %v9302, %v9180
        %v9336 = vsel %vm9329, %v9303, %v9182
        %v9337 = vsel %vm9329, %v9304, %v9184
        %v9338 = vsel %vm9329, %v9305, %v9186
        %v9339 = vsel %vm9329, %v9306, %v9188
        %v9340 = vsel %vm9329, %v9307, %v9190
        %v9341 = vsel %vm9329, %v9308, %v9192
        %v9342 = vsel %vm9329, %v9309, %v9194
        %v9343 = vsel %vm9329, %v9310, %v9196
        %v9344 = vsel %vm9329, %v9311, %v9198
        %v9345 = vsel %vm9329, %v9312, %v9200
        %v9346 = vsel %vm9329, %v9313, %v9202
        %v9347 = vsel %vm9329, %v9314, %v9204
        %v9348 = vsel %vm9329, %v9315, %v9206
        %v9349 = vsel %vm9329, %v9316, %v9208
        %v9350 = vsel %vm9329, %v9317, %v9210
        %v9351 = vsel %vm9329, %v9318, %v9212
        %v9352 = vsel %vm9329, %v9319, %v9214
        %v9353 = vsel %vm9329, %v9320, %v9216
        %v9354 = vsel %vm9329, %v9321, %v9218
        %v9355 = vsel %vm9329, %v9322, %v9220
        %v9356 = vsel %vm9329, %v9323, %v9222
        %v9357 = vsel %vm9329, %v9324, %v9224
        %v9358 = vsel %vm9329, %v9325, %v9226
        %v9359 = vsel %vm9329, %v9326, %v9228
        %v9360 = vsel %vm9329, %v9327, %v9230
        %v9361 = vsel %vm9329, %v9328, %v9232
        %vm9362 = vcmask 261120
        %9363 = vst.msk [vmem:[%s325] sm:$0xff] %vm9362, %v9330
        %9364 = vst.msk [vmem:[%s325 + $0x8] sm:$0xff] %vm9362, %v9331
        %9365 = vst.msk [vmem:[%s325 + $0x10] sm:$0xff] %vm9362, %v9332
        %9366 = vst.msk [vmem:[%s325 + $0x18] sm:$0xff] %vm9362, %v9333
        %9367 = vst.msk [vmem:[%s325 + $0x20] sm:$0xff] %vm9362, %v9334
        %9368 = vst.msk [vmem:[%s325 + $0x28] sm:$0xff] %vm9362, %v9335
        %9369 = vst.msk [vmem:[%s325 + $0x30] sm:$0xff] %vm9362, %v9336
        %9370 = vst.msk [vmem:[%s325 + $0x38] sm:$0xff] %vm9362, %v9337
        %9371 = vst.msk [vmem:[%s325 + $0x40] sm:$0xff] %vm9362, %v9338
        %9372 = vst.msk [vmem:[%s325 + $0x48] sm:$0xff] %vm9362, %v9339
        %9373 = vst.msk [vmem:[%s325 + $0x50] sm:$0xff] %vm9362, %v9340
        %9374 = vst.msk [vmem:[%s325 + $0x58] sm:$0xff] %vm9362, %v9341
        %9375 = vst.msk [vmem:[%s325 + $0x60] sm:$0xff] %vm9362, %v9342
        %9376 = vst.msk [vmem:[%s325 + $0x68] sm:$0xff] %vm9362, %v9343
        %9377 = vst.msk [vmem:[%s325 + $0x70] sm:$0xff] %vm9362, %v9344
        %9378 = vst.msk [vmem:[%s325 + $0x78] sm:$0xff] %vm9362, %v9345
        %9379 = vst.msk [vmem:[%s325 + $0x80] sm:$0xff] %vm9362, %v9346
        %9380 = vst.msk [vmem:[%s325 + $0x88] sm:$0xff] %vm9362, %v9347
        %9381 = vst.msk [vmem:[%s325 + $0x90] sm:$0xff] %vm9362, %v9348
        %9382 = vst.msk [vmem:[%s325 + $0x98] sm:$0xff] %vm9362, %v9349
        %9383 = vst.msk [vmem:[%s325 + $0xa0] sm:$0xff] %vm9362, %v9350
        %9384 = vst.msk [vmem:[%s325 + $0xa8] sm:$0xff] %vm9362, %v9351
        %9385 = vst.msk [vmem:[%s325 + $0xb0] sm:$0xff] %vm9362, %v9352
        %9386 = vst.msk [vmem:[%s325 + $0xb8] sm:$0xff] %vm9362, %v9353
        %9387 = vst.msk [vmem:[%s325 + $0xc0] sm:$0xff] %vm9362, %v9354
        %9388 = vst.msk [vmem:[%s325 + $0xc8] sm:$0xff] %vm9362, %v9355
        %9389 = vst.msk [vmem:[%s325 + $0xd0] sm:$0xff] %vm9362, %v9356
        %9390 = vst.msk [vmem:[%s325 + $0xd8] sm:$0xff] %vm9362, %v9357
        %9391 = vst.msk [vmem:[%s325 + $0xe0] sm:$0xff] %vm9362, %v9358
        %9392 = vst.msk [vmem:[%s325 + $0xe8] sm:$0xff] %vm9362, %v9359
        %9393 = vst.msk [vmem:[%s325 + $0xf0] sm:$0xff] %vm9362, %v9360
        %9394 = vst.msk [vmem:[%s325 + $0xf8] sm:$0xff] %vm9362, %v9361
        %s9395 = sand.u32 %s225, 1
        %s9396 = scalar_lea.sflag [#allocation6], %s9395
        %s9397 = sand.u32 %s225, 1
        %s9398 = smul.addr %s9397, 256
        %s9399 = scalar_lea.vmem [#allocation5], %s9398
        // Predicated region
        $region57: #{inception_block_forward.1} parent=55 // pred_check
          %p9400 = pneg %p235
        $region58: #{inception_block_forward.1} parent=55 // pred_check_branch
          %9402 = sbr.rel (%p9400) target = $region60
        $region59: #{inception_block_forward.1} parent=55 // pred_region
          %9404 = vsyncadd %s9396, 0
          %s9405 = smul.addr %s23, 32
          %s9406 = smul.addr %s9405, 8
          %s9407 = scalar_lea.hbm %s9, %s9406
          %s9408 = sshll.u32 %s9399, 4
          %s9409 = int_to_ptr.vmem [resolvable:$true] %s9408
          %s9410 = sshll.u32 %s9407, 4
          %s9411 = int_to_ptr.hbm [resolvable:$true] %s9410
          %9416 = dma.vmem_to_hbm [thread:$0]  %s9409, 4096, %s9411, %s9396, 128, 128, 8
        $region60: #{inception_block_forward.1} parent=55 // pred_fallthru
          _
      $region56: #{inception_block_forward.1} parent=5 // pred_fallthru
        _
      %p9417 = scmp.le.s32.totalorder 2, %s18
      // Predicated region
      $region61: #{inception_block_forward.1} parent=5 // pred_check
        %p9418 = pneg %p9417
      $region62: #{inception_block_forward.1} parent=5 // pred_check_branch
        %9420 = sbr.rel (%p9418) target = $region64
      $region63: #{inception_block_forward.1} parent=5 // pred_region
        %s9421 = ssub.s32 %s18, 2
        // Predicated region
        $region65: #{inception_block_forward.1} parent=63 // pred_check
          %p9422 = pneg %p241
        $region66: #{inception_block_forward.1} parent=63 // pred_check_branch
          %9424 = sbr.rel (%p9422) target = $region68
        $region67: #{inception_block_forward.1} parent=63 // pred_region
          %s9425 = sand.u32 %s226, 1
          %s9426 = scalar_lea.sflag [#allocation6], %s9425
          %s9427 = sand.u32 %s226, 1
          %s9428 = smul.addr %s9427, 256
          %s9429 = scalar_lea.vmem [#allocation5], %s9428
          %9431 = dma.done %s9426, 4096
        $region68: #{inception_block_forward.1} parent=63 // pred_fallthru
          _
      $region64: #{inception_block_forward.1} parent=5 // pred_fallthru
        _
    $region6: #{inception_block_forward.1} parent=1 // loop_footer
      %s22 = sadd.s32 1, %s18
    $region7: #{inception_block_forward.1} parent=1 // loop_footer_branch
      %17 = sbr.rel target = $region3
    $region8: #{inception_block_forward.1} parent=1 // loop_exit
      _
    %9432 = vsyncpa [#allocation6], 1
    %s9433 = scalar_lea.sflag [#allocation6], 1
    %9434 = vsyncpa %s9433, 1

</llo_original>
